<compile_context>
chip_gen: v7x
topology: tpu7x:2x2x1
jax: 0.10.0
libtpu: 0.0.40
codegen_flags: <defaults>
</compile_context>

<pallas_src>
import jax
import jax.numpy as jnp
from jax.experimental import pallas as pl
from jax.experimental.pallas import tpu as pltpu


def _round_up(x, m):
    return ((x + m - 1) // m) * m


# --------------------------------------------------------------------------
# Kernel 1: fused conv (as im2col matmul) + bias + sigmoid + bernoulli + 2x2 maxpool.
#   cols_ref : (4, TM, Kp)  bf16   -- im2col patches, one row-block per pool phase
#   u_ref    : (4, TM, 128) f32    -- uniforms for the Bernoulli draw (one per phase)
#   w_ref    : (Kp, 128)    bf16   -- weight, Cout padded to 128 lanes
#   b_ref    : (1, 128)     f32
#   o_ref    : (TM, 128)    bf16   -- pooled binary activation, lane-dense
# --------------------------------------------------------------------------
def _conv_bs_pool_kernel(cols_ref, u_ref, w_ref, b_ref, o_ref):
    w = w_ref[...]
    b = b_ref[...]

    def bs_phase(p):
        y = jnp.dot(cols_ref[p], w, preferred_element_type=jnp.float32) + b
        sig = 1.0 / (1.0 + jnp.exp(-y))                 # sigmoid in f32
        return (u_ref[p] < sig).astype(jnp.float32)     # Bernoulli(sigmoid(y))

    pooled = jnp.maximum(jnp.maximum(bs_phase(0), bs_phase(1)),
                         jnp.maximum(bs_phase(2), bs_phase(3)))
    o_ref[...] = pooled.astype(o_ref.dtype)


# --------------------------------------------------------------------------
# Kernel 2: fused fc1 -> BS -> fc2 -> BS -> fc3.  All weights resident in VMEM.
# --------------------------------------------------------------------------
def _fc_stack_kernel(x_ref, w3_ref, b3_ref, u1_ref, w4_ref, b4_ref, u2_ref,
                     w5_ref, b5_ref, o_ref):
    def bs(y, u):
        sig = 1.0 / (1.0 + jnp.exp(-y))
        return (u < sig).astype(jnp.float32).astype(jnp.bfloat16)

    h = jnp.dot(x_ref[...], w3_ref[...], preferred_element_type=jnp.float32) + b3_ref[...]
    h = bs(h, u1_ref[...])
    h = jnp.dot(h, w4_ref[...], preferred_element_type=jnp.float32) + b4_ref[...]
    h = bs(h, u2_ref[...])
    y = jnp.dot(h, w5_ref[...], preferred_element_type=jnp.float32) + b5_ref[...]
    o_ref[...] = y


# --------------------------------------------------------------------------
# Wrappers
# --------------------------------------------------------------------------
def conv_bs_pool(x, w_eff, b_eff, key, *, pad):
    """x: (N, H, W, C) NHWC.  5x5/stride-1 conv -> sigmoid().bernoulli() -> 2x2 maxpool.

    Returns (N, OH//2, OW//2, 128) bf16; lanes >= real Cout hold junk that is cancelled
    by zero weight rows downstream."""
    N, H, W, C = x.shape
    KH = KW = 5
    if pad:
        x = jnp.pad(x, ((0, 0), (pad, pad), (pad, pad), (0, 0)))
    Hp, Wp = H + 2 * pad, W + 2 * pad
    OH, OW = Hp - KH + 1, Wp - KW + 1
    OH2, OW2 = OH // 2, OW // 2
    Mp = N * OH2 * OW2
    K = KH * KW * C
    Kp = w_eff.shape[0]                      # K padded to a multiple of 8

    # im2col, grouped by pool phase (p1, p2) so the pool is a max over 4 row blocks.
    # NHWC + channel-last concat -> the reshape to (Mp, K) is a free row-major reshape.
    phases = []
    for p1 in range(2):
        for p2 in range(2):
            chunks = [x[:, p1 + i: p1 + i + 2 * OH2 - 1: 2,
                           p2 + j: p2 + j + 2 * OW2 - 1: 2, :]
                      for i in range(KH) for j in range(KW)]
            cols = jnp.concatenate(chunks, axis=-1)       # (N, OH2, OW2, K)
            phases.append(cols.reshape(Mp, K))
    cols4 = jnp.stack(phases, axis=0)                     # (4, Mp, K)

    tm = min(256, _round_up(Mp, 8))
    Mp_pad = _round_up(Mp, tm)
    cols4 = jnp.pad(cols4, ((0, 0), (0, Mp_pad - Mp), (0, Kp - K))).astype(jnp.bfloat16)
    u4 = jax.random.uniform(key, (4, Mp_pad, 128), jnp.float32)

    out = pl.pallas_call(
        _conv_bs_pool_kernel,
        out_shape=jax.ShapeDtypeStruct((Mp_pad, 128), jnp.bfloat16),
        grid=(Mp_pad // tm,),
        in_specs=[
            pl.BlockSpec((4, tm, Kp), lambda i: (0, i, 0)),
            pl.BlockSpec((4, tm, 128), lambda i: (0, i, 0)),
            pl.BlockSpec((Kp, 128), lambda i: (0, 0)),
            pl.BlockSpec((1, 128), lambda i: (0, 0)),
        ],
        out_specs=pl.BlockSpec((tm, 128), lambda i: (i, 0)),
        compiler_params=pltpu.CompilerParams(dimension_semantics=("parallel",)),
    )(cols4, u4, w_eff, b_eff)
    return out[:Mp].reshape(N, OH2, OW2, 128)


def fc_stack(x, prep, key):
    """x: (N, Kin) bf16 features.  Fused fc1 -> BS -> fc2 -> BS -> fc3 -> (N, 10) f32."""
    N, Kin = x.shape
    k1, k2 = jax.random.split(key)
    tm = min(256, _round_up(N, 8))
    Mp = _round_up(N, tm)
    x = jnp.pad(x, ((0, Mp - N), (0, 0)))
    u1 = jax.random.uniform(k1, (Mp, 128), jnp.float32)
    u2 = jax.random.uniform(k2, (Mp, 128), jnp.float32)

    out = pl.pallas_call(
        _fc_stack_kernel,
        out_shape=jax.ShapeDtypeStruct((Mp, 128), jnp.float32),
        grid=(Mp // tm,),
        in_specs=[
            pl.BlockSpec((tm, Kin), lambda i: (i, 0)),
            pl.BlockSpec(prep["w3"].shape, lambda i: (0, 0)),
            pl.BlockSpec((1, 128), lambda i: (0, 0)),
            pl.BlockSpec((tm, 128), lambda i: (i, 0)),
            pl.BlockSpec((128, 128), lambda i: (0, 0)),
            pl.BlockSpec((1, 128), lambda i: (0, 0)),
            pl.BlockSpec((tm, 128), lambda i: (i, 0)),
            pl.BlockSpec((128, 128), lambda i: (0, 0)),
            pl.BlockSpec((1, 128), lambda i: (0, 0)),
        ],
        out_specs=pl.BlockSpec((tm, 128), lambda i: (i, 0)),
        compiler_params=pltpu.CompilerParams(dimension_semantics=("parallel",)),
    )(x, prep["w3"], prep["b3"], u1, prep["w4"], prep["b4"], u2,
      prep["w5"], prep["b5"])
    return out[:N, :10]


# --------------------------------------------------------------------------
# Parameters: torch-layout init + one-time repack into kernel layout.
# --------------------------------------------------------------------------
def _uniform(key, shape, bound):
    return jax.random.uniform(key, shape, jnp.float32, -bound, bound)


def init_params(key):
    """PyTorch-style uniform(-1/sqrt(fan_in), +) init, torch tensor layouts."""
    ks = jax.random.split(key, 10)
    p = {}
    f = (1 * 5 * 5) ** -0.5
    p["w1"] = _uniform(ks[0], (6, 1, 5, 5), f);   p["b1"] = _uniform(ks[1], (6,), f)
    f = (6 * 5 * 5) ** -0.5
    p["w2"] = _uniform(ks[2], (16, 6, 5, 5), f);  p["b2"] = _uniform(ks[3], (16,), f)
    f = 400 ** -0.5
    p["w3"] = _uniform(ks[4], (120, 400), f);     p["b3"] = _uniform(ks[5], (120,), f)
    f = 120 ** -0.5
    p["w4"] = _uniform(ks[6], (84, 120), f);      p["b4"] = _uniform(ks[7], (84,), f)
    f = 84 ** -0.5
    p["w5"] = _uniform(ks[8], (10, 84), f);       p["b5"] = _uniform(ks[9], (10,), f)
    return p


def prepare_params(p):
    """One-time repack: weights transposed/zero-padded to kernel layout (lane-dense,
    K multiple of 8), biases padded to (1, 128).  Zero rows/cols make padded lanes inert."""
    bf16, f32 = jnp.bfloat16, jnp.float32

    def pad_to(a, shape):
        return jnp.pad(a, [(0, s - d) for d, s in zip(a.shape, shape)])

    prep = {}
    # conv1: (6,1,5,5) -> rows ordered (i, j, c), K = 25 padded to 32, Cout -> 128 lanes.
    w1 = p["w1"].transpose(2, 3, 1, 0).reshape(25, 6)
    prep["w1"] = pad_to(w1, (32, 128)).astype(bf16)
    prep["b1"] = pad_to(p["b1"].reshape(1, 6), (1, 128)).astype(f32)

    # conv2: (16,6,5,5), input channels padded 6 -> 8 (rows for c=6,7 are zero).
    w2 = p["w2"].transpose(2, 3, 1, 0)                       # (5,5,6,16)
    w2 = jnp.pad(w2, ((0, 0), (0, 0), (0, 2), (0, 0)))       # (5,5,8,16)
    prep["w2"] = pad_to(w2.reshape(200, 16), (200, 128)).astype(bf16)
    prep["b2"] = pad_to(p["b2"].reshape(1, 16), (1, 128)).astype(f32)

    # fc1: torch feature order is (c, h, w); our NHWC features are (h, w, c) with c
    # padded to 128 -> remap rows once, zero rows for c >= 16.
    w3 = p["w3"].reshape(120, 16, 5, 5).transpose(2, 3, 1, 0)   # (h, w, c, out)
    w3 = jnp.pad(w3, ((0, 0), (0, 0), (0, 112), (0, 0)))         # (5,5,128,120)
    prep["w3"] = pad_to(w3.reshape(5 * 5 * 128, 120), (3200, 128)).astype(bf16)
    prep["b3"] = pad_to(p["b3"].reshape(1, 120), (1, 128)).astype(f32)

    # fc2 / fc3: pre-transposed, padded to (128, 128); padded rows are zero so junk in
    # the padded activation lanes never propagates.
    prep["w4"] = pad_to(p["w4"].T, (128, 128)).astype(bf16)
    prep["b4"] = pad_to(p["b4"].reshape(1, 84), (1, 128)).astype(f32)
    prep["w5"] = pad_to(p["w5"].T, (128, 128)).astype(bf16)
    prep["b5"] = pad_to(p["b5"].reshape(1, 10), (1, 128)).astype(f32)
    return prep


# --------------------------------------------------------------------------
# Lenet5.forward
# --------------------------------------------------------------------------
def lenet5_forward(prep, x, key):
    """x: (N, 1, 28, 28) NCHW f32 (PyTorch convention at the module boundary)."""
    N = x.shape[0]
    k1, k2, k3 = jax.random.split(key, 3)
    x = jnp.transpose(x, (0, 2, 3, 1))                        # NCHW -> NHWC, once
    a1 = conv_bs_pool(x, prep["w1"], prep["b1"], k1, pad=2)   # (N, 14, 14, 128) bf16
    a1 = a1[..., :8]                                          # 6 real ch (+2 zero-weighted)
    a2 = conv_bs_pool(a1, prep["w2"], prep["b2"], k2, pad=0)  # (N, 5, 5, 128) bf16
    feats = a2.reshape(N, 5 * 5 * 128)                        # free NHWC flatten
    return fc_stack(feats, prep, k3)                          # (N, 10) f32


if __name__ == "__main__":
    key = jax.random.PRNGKey(0)
    pkey, xkey, skey = jax.random.split(key, 3)
    params = init_params(pkey)
    prep = prepare_params(params)
    # LeNet-5 forward implies 1x28x28 inputs (fc1 expects 16*5*5 = 400 features).
    x = jax.random.normal(xkey, (2, 1, 28, 28), jnp.float32)

    fwd = jax.jit(lenet5_forward)
    out = fwd(prep, x, skey)
    jax.block_until_ready(out)
    assert out.shape == (2, 10) and out.dtype == jnp.float32
    print("KERNEL_OK")
</pallas_src>

<mosaic_0001>
module attributes {stable_mosaic.version = 11 : i64} {
  func.func @_conv_bs_pool_kernel(%arg0: i32, %arg1: memref<4x256x32xbf16, #tpu.memory_space<vmem>>, %arg2: memref<4x256x128xf32, #tpu.memory_space<vmem>>, %arg3: memref<32x128xbf16, #tpu.memory_space<vmem>>, %arg4: memref<1x128xf32, #tpu.memory_space<vmem>>, %arg5: memref<256x128xbf16, #tpu.memory_space<vmem>>) attributes {dimension_semantics = [#tpu.dimension_semantics<parallel>], iteration_bounds = array<i64: 2>, scalar_prefetch = 0 : i64, scratch_operands = 0 : i64, tpu.core_type = #tpu.core_type<tc>, window_params = [{transform_indices = @transform_0, window_bounds = array<i64: 4, 256, 32>}, {transform_indices = @transform_1, window_bounds = array<i64: 4, 256, 128>}, {pipeline_mode = #tpu.pipeline_mode<synchronous>, transform_indices = @transform_2, window_bounds = array<i64: 32, 128>}, {pipeline_mode = #tpu.pipeline_mode<synchronous>, transform_indices = @transform_3, window_bounds = array<i64: 1, 128>}, {transform_indices = @transform_4, window_bounds = array<i64: 256, 128>}]} {
    %c0 = arith.constant 0 : index
    %c0_0 = arith.constant 0 : index
    %0 = vector.load %arg3[%c0, %c0_0] : memref<32x128xbf16, #tpu.memory_space<vmem>>, vector<32x128xbf16>
    %c0_1 = arith.constant 0 : index
    %c0_2 = arith.constant 0 : index
    %1 = vector.load %arg4[%c0_1, %c0_2] : memref<1x128xf32, #tpu.memory_space<vmem>>, vector<1x128xf32>
    %c0_3 = arith.constant 0 : index
    %c0_4 = arith.constant 0 : index
    %c0_5 = arith.constant 0 : index
    %2 = vector.load %arg1[%c0_3, %c0_4, %c0_5] : memref<4x256x32xbf16, #tpu.memory_space<vmem>>, vector<1x256x32xbf16>
    %3 = vector.shape_cast %2 : vector<1x256x32xbf16> to vector<256x32xbf16>
    %cst = arith.constant dense<0.000000e+00> : vector<256x128xf32>
    %4 = tpu.matmul %3, %0, %cst {dimension_numbers = #tpu.dot_dimension_numbers<[1], [0], [0], [1], [0, 0, 1, 1], [], []>} : vector<256x32xbf16>, vector<32x128xbf16>, vector<256x128xf32> -> vector<256x128xf32>
    %5 = vector.broadcast %1 : vector<1x128xf32> to vector<256x128xf32>
    %6 = arith.addf %4, %5 : vector<256x128xf32>
    %cst_6 = arith.constant 0.000000e+00 : f32
    %7 = vector.broadcast %cst_6 : f32 to vector<256x128xf32>
    %8 = arith.subf %7, %6 : vector<256x128xf32>
    %9 = math.exp %8 : vector<256x128xf32>
    %cst_7 = arith.constant 1.000000e+00 : f32
    %10 = vector.broadcast %cst_7 : f32 to vector<256x128xf32>
    %11 = arith.addf %10, %9 : vector<256x128xf32>
    %cst_8 = arith.constant 1.000000e+00 : f32
    %12 = vector.broadcast %cst_8 : f32 to vector<256x128xf32>
    %13 = arith.divf %12, %11 : vector<256x128xf32>
    %c0_9 = arith.constant 0 : index
    %c0_10 = arith.constant 0 : index
    %c0_11 = arith.constant 0 : index
    %14 = vector.load %arg2[%c0_9, %c0_10, %c0_11] : memref<4x256x128xf32, #tpu.memory_space<vmem>>, vector<1x256x128xf32>
    %15 = vector.shape_cast %14 : vector<1x256x128xf32> to vector<256x128xf32>
    %16 = arith.cmpf olt, %15, %13 : vector<256x128xf32>
    %17 = arith.extui %16 : vector<256x128xi1> to vector<256x128xi32>
    %18 = arith.sitofp %17 : vector<256x128xi32> to vector<256x128xf32>
    %c1 = arith.constant 1 : index
    %c0_12 = arith.constant 0 : index
    %c0_13 = arith.constant 0 : index
    %19 = vector.load %arg1[%c1, %c0_12, %c0_13] : memref<4x256x32xbf16, #tpu.memory_space<vmem>>, vector<1x256x32xbf16>
    %20 = vector.shape_cast %19 : vector<1x256x32xbf16> to vector<256x32xbf16>
    %cst_14 = arith.constant dense<0.000000e+00> : vector<256x128xf32>
    %21 = tpu.matmul %20, %0, %cst_14 {dimension_numbers = #tpu.dot_dimension_numbers<[1], [0], [0], [1], [0, 0, 1, 1], [], []>} : vector<256x32xbf16>, vector<32x128xbf16>, vector<256x128xf32> -> vector<256x128xf32>
    %22 = vector.broadcast %1 : vector<1x128xf32> to vector<256x128xf32>
    %23 = arith.addf %21, %22 : vector<256x128xf32>
    %cst_15 = arith.constant 0.000000e+00 : f32
    %24 = vector.broadcast %cst_15 : f32 to vector<256x128xf32>
    %25 = arith.subf %24, %23 : vector<256x128xf32>
    %26 = math.exp %25 : vector<256x128xf32>
    %cst_16 = arith.constant 1.000000e+00 : f32
    %27 = vector.broadcast %cst_16 : f32 to vector<256x128xf32>
    %28 = arith.addf %27, %26 : vector<256x128xf32>
    %cst_17 = arith.constant 1.000000e+00 : f32
    %29 = vector.broadcast %cst_17 : f32 to vector<256x128xf32>
    %30 = arith.divf %29, %28 : vector<256x128xf32>
    %c1_18 = arith.constant 1 : index
    %c0_19 = arith.constant 0 : index
    %c0_20 = arith.constant 0 : index
    %31 = vector.load %arg2[%c1_18, %c0_19, %c0_20] : memref<4x256x128xf32, #tpu.memory_space<vmem>>, vector<1x256x128xf32>
    %32 = vector.shape_cast %31 : vector<1x256x128xf32> to vector<256x128xf32>
    %33 = arith.cmpf olt, %32, %30 : vector<256x128xf32>
    %34 = arith.extui %33 : vector<256x128xi1> to vector<256x128xi32>
    %35 = arith.sitofp %34 : vector<256x128xi32> to vector<256x128xf32>
    %36 = arith.maximumf %18, %35 : vector<256x128xf32>
    %c2 = arith.constant 2 : index
    %c0_21 = arith.constant 0 : index
    %c0_22 = arith.constant 0 : index
    %37 = vector.load %arg1[%c2, %c0_21, %c0_22] : memref<4x256x32xbf16, #tpu.memory_space<vmem>>, vector<1x256x32xbf16>
    %38 = vector.shape_cast %37 : vector<1x256x32xbf16> to vector<256x32xbf16>
    %cst_23 = arith.constant dense<0.000000e+00> : vector<256x128xf32>
    %39 = tpu.matmul %38, %0, %cst_23 {dimension_numbers = #tpu.dot_dimension_numbers<[1], [0], [0], [1], [0, 0, 1, 1], [], []>} : vector<256x32xbf16>, vector<32x128xbf16>, vector<256x128xf32> -> vector<256x128xf32>
    %40 = vector.broadcast %1 : vector<1x128xf32> to vector<256x128xf32>
    %41 = arith.addf %39, %40 : vector<256x128xf32>
    %cst_24 = arith.constant 0.000000e+00 : f32
    %42 = vector.broadcast %cst_24 : f32 to vector<256x128xf32>
    %43 = arith.subf %42, %41 : vector<256x128xf32>
    %44 = math.exp %43 : vector<256x128xf32>
    %cst_25 = arith.constant 1.000000e+00 : f32
    %45 = vector.broadcast %cst_25 : f32 to vector<256x128xf32>
    %46 = arith.addf %45, %44 : vector<256x128xf32>
    %cst_26 = arith.constant 1.000000e+00 : f32
    %47 = vector.broadcast %cst_26 : f32 to vector<256x128xf32>
    %48 = arith.divf %47, %46 : vector<256x128xf32>
    %c2_27 = arith.constant 2 : index
    %c0_28 = arith.constant 0 : index
    %c0_29 = arith.constant 0 : index
    %49 = vector.load %arg2[%c2_27, %c0_28, %c0_29] : memref<4x256x128xf32, #tpu.memory_space<vmem>>, vector<1x256x128xf32>
    %50 = vector.shape_cast %49 : vector<1x256x128xf32> to vector<256x128xf32>
    %51 = arith.cmpf olt, %50, %48 : vector<256x128xf32>
    %52 = arith.extui %51 : vector<256x128xi1> to vector<256x128xi32>
    %53 = arith.sitofp %52 : vector<256x128xi32> to vector<256x128xf32>
    %c3 = arith.constant 3 : index
    %c0_30 = arith.constant 0 : index
    %c0_31 = arith.constant 0 : index
    %54 = vector.load %arg1[%c3, %c0_30, %c0_31] : memref<4x256x32xbf16, #tpu.memory_space<vmem>>, vector<1x256x32xbf16>
    %55 = vector.shape_cast %54 : vector<1x256x32xbf16> to vector<256x32xbf16>
    %cst_32 = arith.constant dense<0.000000e+00> : vector<256x128xf32>
    %56 = tpu.matmul %55, %0, %cst_32 {dimension_numbers = #tpu.dot_dimension_numbers<[1], [0], [0], [1], [0, 0, 1, 1], [], []>} : vector<256x32xbf16>, vector<32x128xbf16>, vector<256x128xf32> -> vector<256x128xf32>
    %57 = vector.broadcast %1 : vector<1x128xf32> to vector<256x128xf32>
    %58 = arith.addf %56, %57 : vector<256x128xf32>
    %cst_33 = arith.constant 0.000000e+00 : f32
    %59 = vector.broadcast %cst_33 : f32 to vector<256x128xf32>
    %60 = arith.subf %59, %58 : vector<256x128xf32>
    %61 = math.exp %60 : vector<256x128xf32>
    %cst_34 = arith.constant 1.000000e+00 : f32
    %62 = vector.broadcast %cst_34 : f32 to vector<256x128xf32>
    %63 = arith.addf %62, %61 : vector<256x128xf32>
    %cst_35 = arith.constant 1.000000e+00 : f32
    %64 = vector.broadcast %cst_35 : f32 to vector<256x128xf32>
    %65 = arith.divf %64, %63 : vector<256x128xf32>
    %c3_36 = arith.constant 3 : index
    %c0_37 = arith.constant 0 : index
    %c0_38 = arith.constant 0 : index
    %66 = vector.load %arg2[%c3_36, %c0_37, %c0_38] : memref<4x256x128xf32, #tpu.memory_space<vmem>>, vector<1x256x128xf32>
    %67 = vector.shape_cast %66 : vector<1x256x128xf32> to vector<256x128xf32>
    %68 = arith.cmpf olt, %67, %65 : vector<256x128xf32>
    %69 = arith.extui %68 : vector<256x128xi1> to vector<256x128xi32>
    %70 = arith.sitofp %69 : vector<256x128xi32> to vector<256x128xf32>
    %71 = arith.maximumf %53, %70 : vector<256x128xf32>
    %72 = arith.maximumf %36, %71 : vector<256x128xf32>
    %73 = arith.truncf %72 : vector<256x128xf32> to vector<256x128xbf16>
    %c0_39 = arith.constant 0 : index
    %c0_40 = arith.constant 0 : index
    %74 = vector.load %arg5[%c0_39, %c0_40] : memref<256x128xbf16, #tpu.memory_space<vmem>>, vector<256x128xbf16>
    tpu.vector_store %arg5[%c0_39, %c0_40], %73 {strides = array<i32>} : memref<256x128xbf16, #tpu.memory_space<vmem>>, vector<256x128xbf16>,
    return
  }
  func.func @transform_0(%arg0: i32) -> (i32, i32, i32) {
    %c0_i32 = arith.constant 0 : i32
    %c0_i32_0 = arith.constant 0 : i32
    %c0_i32_1 = arith.constant 0 : i32
    return %c0_i32, %arg0, %c0_i32_0 : i32, i32, i32
  }
  func.func @transform_1(%arg0: i32) -> (i32, i32, i32) {
    %c0_i32 = arith.constant 0 : i32
    %c0_i32_0 = arith.constant 0 : i32
    %c0_i32_1 = arith.constant 0 : i32
    return %c0_i32, %arg0, %c0_i32_0 : i32, i32, i32
  }
  func.func @transform_2(%arg0: i32) -> (i32, i32) {
    %c0_i32 = arith.constant 0 : i32
    %c0_i32_0 = arith.constant 0 : i32
    %c0_i32_1 = arith.constant 0 : i32
    return %c0_i32, %c0_i32_0 : i32, i32
  }
  func.func @transform_3(%arg0: i32) -> (i32, i32) {
    %c0_i32 = arith.constant 0 : i32
    %c0_i32_0 = arith.constant 0 : i32
    %c0_i32_1 = arith.constant 0 : i32
    return %c0_i32, %c0_i32_0 : i32, i32
  }
  func.func @transform_4(%arg0: i32) -> (i32, i32) {
    %c0_i32 = arith.constant 0 : i32
    %c0_i32_0 = arith.constant 0 : i32
    return %arg0, %c0_i32 : i32, i32
  }
}

module attributes {stable_mosaic.version = 11 : i64} {
  func.func @_conv_bs_pool_kernel(%arg0: i32, %arg1: memref<4x56x200xbf16, #tpu.memory_space<vmem>>, %arg2: memref<4x56x128xf32, #tpu.memory_space<vmem>>, %arg3: memref<200x128xbf16, #tpu.memory_space<vmem>>, %arg4: memref<1x128xf32, #tpu.memory_space<vmem>>, %arg5: memref<56x128xbf16, #tpu.memory_space<vmem>>) attributes {dimension_semantics = [#tpu.dimension_semantics<parallel>], iteration_bounds = array<i64: 1>, scalar_prefetch = 0 : i64, scratch_operands = 0 : i64, tpu.core_type = #tpu.core_type<tc>, window_params = [{transform_indices = @transform_0, window_bounds = array<i64: 4, 56, 200>}, {transform_indices = @transform_1, window_bounds = array<i64: 4, 56, 128>}, {pipeline_mode = #tpu.pipeline_mode<synchronous>, transform_indices = @transform_2, window_bounds = array<i64: 200, 128>}, {pipeline_mode = #tpu.pipeline_mode<synchronous>, transform_indices = @transform_3, window_bounds = array<i64: 1, 128>}, {transform_indices = @transform_4, window_bounds = array<i64: 56, 128>}]} {
    %c0 = arith.constant 0 : index
    %c0_0 = arith.constant 0 : index
    %0 = vector.load %arg3[%c0, %c0_0] : memref<200x128xbf16, #tpu.memory_space<vmem>>, vector<200x128xbf16>
    %c0_1 = arith.constant 0 : index
    %c0_2 = arith.constant 0 : index
    %1 = vector.load %arg4[%c0_1, %c0_2] : memref<1x128xf32, #tpu.memory_space<vmem>>, vector<1x128xf32>
    %c0_3 = arith.constant 0 : index
    %c0_4 = arith.constant 0 : index
    %c0_5 = arith.constant 0 : index
    %2 = vector.load %arg1[%c0_3, %c0_4, %c0_5] : memref<4x56x200xbf16, #tpu.memory_space<vmem>>, vector<1x56x200xbf16>
    %3 = vector.shape_cast %2 : vector<1x56x200xbf16> to vector<56x200xbf16>
    %cst = arith.constant dense<0.000000e+00> : vector<56x128xf32>
    %4 = tpu.matmul %3, %0, %cst {dimension_numbers = #tpu.dot_dimension_numbers<[1], [0], [0], [1], [0, 0, 1, 1], [], []>} : vector<56x200xbf16>, vector<200x128xbf16>, vector<56x128xf32> -> vector<56x128xf32>
    %5 = vector.broadcast %1 : vector<1x128xf32> to vector<56x128xf32>
    %6 = arith.addf %4, %5 : vector<56x128xf32>
    %cst_6 = arith.constant 0.000000e+00 : f32
    %7 = vector.broadcast %cst_6 : f32 to vector<56x128xf32>
    %8 = arith.subf %7, %6 : vector<56x128xf32>
    %9 = math.exp %8 : vector<56x128xf32>
    %cst_7 = arith.constant 1.000000e+00 : f32
    %10 = vector.broadcast %cst_7 : f32 to vector<56x128xf32>
    %11 = arith.addf %10, %9 : vector<56x128xf32>
    %cst_8 = arith.constant 1.000000e+00 : f32
    %12 = vector.broadcast %cst_8 : f32 to vector<56x128xf32>
    %13 = arith.divf %12, %11 : vector<56x128xf32>
    %c0_9 = arith.constant 0 : index
    %c0_10 = arith.constant 0 : index
    %c0_11 = arith.constant 0 : index
    %14 = vector.load %arg2[%c0_9, %c0_10, %c0_11] : memref<4x56x128xf32, #tpu.memory_space<vmem>>, vector<1x56x128xf32>
    %15 = vector.shape_cast %14 : vector<1x56x128xf32> to vector<56x128xf32>
    %16 = arith.cmpf olt, %15, %13 : vector<56x128xf32>
    %17 = arith.extui %16 : vector<56x128xi1> to vector<56x128xi32>
    %18 = arith.sitofp %17 : vector<56x128xi32> to vector<56x128xf32>
    %c1 = arith.constant 1 : index
    %c0_12 = arith.constant 0 : index
    %c0_13 = arith.constant 0 : index
    %19 = vector.load %arg1[%c1, %c0_12, %c0_13] : memref<4x56x200xbf16, #tpu.memory_space<vmem>>, vector<1x56x200xbf16>
    %20 = vector.shape_cast %19 : vector<1x56x200xbf16> to vector<56x200xbf16>
    %cst_14 = arith.constant dense<0.000000e+00> : vector<56x128xf32>
    %21 = tpu.matmul %20, %0, %cst_14 {dimension_numbers = #tpu.dot_dimension_numbers<[1], [0], [0], [1], [0, 0, 1, 1], [], []>} : vector<56x200xbf16>, vector<200x128xbf16>, vector<56x128xf32> -> vector<56x128xf32>
    %22 = vector.broadcast %1 : vector<1x128xf32> to vector<56x128xf32>
    %23 = arith.addf %21, %22 : vector<56x128xf32>
    %cst_15 = arith.constant 0.000000e+00 : f32
    %24 = vector.broadcast %cst_15 : f32 to vector<56x128xf32>
    %25 = arith.subf %24, %23 : vector<56x128xf32>
    %26 = math.exp %25 : vector<56x128xf32>
    %cst_16 = arith.constant 1.000000e+00 : f32
    %27 = vector.broadcast %cst_16 : f32 to vector<56x128xf32>
    %28 = arith.addf %27, %26 : vector<56x128xf32>
    %cst_17 = arith.constant 1.000000e+00 : f32
    %29 = vector.broadcast %cst_17 : f32 to vector<56x128xf32>
    %30 = arith.divf %29, %28 : vector<56x128xf32>
    %c1_18 = arith.constant 1 : index
    %c0_19 = arith.constant 0 : index
    %c0_20 = arith.constant 0 : index
    %31 = vector.load %arg2[%c1_18, %c0_19, %c0_20] : memref<4x56x128xf32, #tpu.memory_space<vmem>>, vector<1x56x128xf32>
    %32 = vector.shape_cast %31 : vector<1x56x128xf32> to vector<56x128xf32>
    %33 = arith.cmpf olt, %32, %30 : vector<56x128xf32>
    %34 = arith.extui %33 : vector<56x128xi1> to vector<56x128xi32>
    %35 = arith.sitofp %34 : vector<56x128xi32> to vector<56x128xf32>
    %36 = arith.maximumf %18, %35 : vector<56x128xf32>
    %c2 = arith.constant 2 : index
    %c0_21 = arith.constant 0 : index
    %c0_22 = arith.constant 0 : index
    %37 = vector.load %arg1[%c2, %c0_21, %c0_22] : memref<4x56x200xbf16, #tpu.memory_space<vmem>>, vector<1x56x200xbf16>
    %38 = vector.shape_cast %37 : vector<1x56x200xbf16> to vector<56x200xbf16>
    %cst_23 = arith.constant dense<0.000000e+00> : vector<56x128xf32>
    %39 = tpu.matmul %38, %0, %cst_23 {dimension_numbers = #tpu.dot_dimension_numbers<[1], [0], [0], [1], [0, 0, 1, 1], [], []>} : vector<56x200xbf16>, vector<200x128xbf16>, vector<56x128xf32> -> vector<56x128xf32>
    %40 = vector.broadcast %1 : vector<1x128xf32> to vector<56x128xf32>
    %41 = arith.addf %39, %40 : vector<56x128xf32>
    %cst_24 = arith.constant 0.000000e+00 : f32
    %42 = vector.broadcast %cst_24 : f32 to vector<56x128xf32>
    %43 = arith.subf %42, %41 : vector<56x128xf32>
    %44 = math.exp %43 : vector<56x128xf32>
    %cst_25 = arith.constant 1.000000e+00 : f32
    %45 = vector.broadcast %cst_25 : f32 to vector<56x128xf32>
    %46 = arith.addf %45, %44 : vector<56x128xf32>
    %cst_26 = arith.constant 1.000000e+00 : f32
    %47 = vector.broadcast %cst_26 : f32 to vector<56x128xf32>
    %48 = arith.divf %47, %46 : vector<56x128xf32>
    %c2_27 = arith.constant 2 : index
    %c0_28 = arith.constant 0 : index
    %c0_29 = arith.constant 0 : index
    %49 = vector.load %arg2[%c2_27, %c0_28, %c0_29] : memref<4x56x128xf32, #tpu.memory_space<vmem>>, vector<1x56x128xf32>
    %50 = vector.shape_cast %49 : vector<1x56x128xf32> to vector<56x128xf32>
    %51 = arith.cmpf olt, %50, %48 : vector<56x128xf32>
    %52 = arith.extui %51 : vector<56x128xi1> to vector<56x128xi32>
    %53 = arith.sitofp %52 : vector<56x128xi32> to vector<56x128xf32>
    %c3 = arith.constant 3 : index
    %c0_30 = arith.constant 0 : index
    %c0_31 = arith.constant 0 : index
    %54 = vector.load %arg1[%c3, %c0_30, %c0_31] : memref<4x56x200xbf16, #tpu.memory_space<vmem>>, vector<1x56x200xbf16>
    %55 = vector.shape_cast %54 : vector<1x56x200xbf16> to vector<56x200xbf16>
    %cst_32 = arith.constant dense<0.000000e+00> : vector<56x128xf32>
    %56 = tpu.matmul %55, %0, %cst_32 {dimension_numbers = #tpu.dot_dimension_numbers<[1], [0], [0], [1], [0, 0, 1, 1], [], []>} : vector<56x200xbf16>, vector<200x128xbf16>, vector<56x128xf32> -> vector<56x128xf32>
    %57 = vector.broadcast %1 : vector<1x128xf32> to vector<56x128xf32>
    %58 = arith.addf %56, %57 : vector<56x128xf32>
    %cst_33 = arith.constant 0.000000e+00 : f32
    %59 = vector.broadcast %cst_33 : f32 to vector<56x128xf32>
    %60 = arith.subf %59, %58 : vector<56x128xf32>
    %61 = math.exp %60 : vector<56x128xf32>
    %cst_34 = arith.constant 1.000000e+00 : f32
    %62 = vector.broadcast %cst_34 : f32 to vector<56x128xf32>
    %63 = arith.addf %62, %61 : vector<56x128xf32>
    %cst_35 = arith.constant 1.000000e+00 : f32
    %64 = vector.broadcast %cst_35 : f32 to vector<56x128xf32>
    %65 = arith.divf %64, %63 : vector<56x128xf32>
    %c3_36 = arith.constant 3 : index
    %c0_37 = arith.constant 0 : index
    %c0_38 = arith.constant 0 : index
    %66 = vector.load %arg2[%c3_36, %c0_37, %c0_38] : memref<4x56x128xf32, #tpu.memory_space<vmem>>, vector<1x56x128xf32>
    %67 = vector.shape_cast %66 : vector<1x56x128xf32> to vector<56x128xf32>
    %68 = arith.cmpf olt, %67, %65 : vector<56x128xf32>
    %69 = arith.extui %68 : vector<56x128xi1> to vector<56x128xi32>
    %70 = arith.sitofp %69 : vector<56x128xi32> to vector<56x128xf32>
    %71 = arith.maximumf %53, %70 : vector<56x128xf32>
    %72 = arith.maximumf %36, %71 : vector<56x128xf32>
    %73 = arith.truncf %72 : vector<56x128xf32> to vector<56x128xbf16>
    %c0_39 = arith.constant 0 : index
    %c0_40 = arith.constant 0 : index
    %74 = vector.load %arg5[%c0_39, %c0_40] : memref<56x128xbf16, #tpu.memory_space<vmem>>, vector<56x128xbf16>
    tpu.vector_store %arg5[%c0_39, %c0_40], %73 {strides = array<i32>} : memref<56x128xbf16, #tpu.memory_space<vmem>>, vector<56x128xbf16>,
    return
  }
  func.func @transform_0(%arg0: i32) -> (i32, i32, i32) {
    %c0_i32 = arith.constant 0 : i32
    %c0_i32_0 = arith.constant 0 : i32
    %c0_i32_1 = arith.constant 0 : i32
    return %c0_i32, %arg0, %c0_i32_0 : i32, i32, i32
  }
  func.func @transform_1(%arg0: i32) -> (i32, i32, i32) {
    %c0_i32 = arith.constant 0 : i32
    %c0_i32_0 = arith.constant 0 : i32
    %c0_i32_1 = arith.constant 0 : i32
    return %c0_i32, %arg0, %c0_i32_0 : i32, i32, i32
  }
  func.func @transform_2(%arg0: i32) -> (i32, i32) {
    %c0_i32 = arith.constant 0 : i32
    %c0_i32_0 = arith.constant 0 : i32
    %c0_i32_1 = arith.constant 0 : i32
    return %c0_i32, %c0_i32_0 : i32, i32
  }
  func.func @transform_3(%arg0: i32) -> (i32, i32) {
    %c0_i32 = arith.constant 0 : i32
    %c0_i32_0 = arith.constant 0 : i32
    %c0_i32_1 = arith.constant 0 : i32
    return %c0_i32, %c0_i32_0 : i32, i32
  }
  func.func @transform_4(%arg0: i32) -> (i32, i32) {
    %c0_i32 = arith.constant 0 : i32
    %c0_i32_0 = arith.constant 0 : i32
    return %arg0, %c0_i32 : i32, i32
  }
}

module attributes {stable_mosaic.version = 11 : i64} {
  func.func @_fc_stack_kernel(%arg0: i32, %arg1: memref<8x3200xbf16, #tpu.memory_space<vmem>>, %arg2: memref<3200x128xbf16, #tpu.memory_space<vmem>>, %arg3: memref<1x128xf32, #tpu.memory_space<vmem>>, %arg4: memref<8x128xf32, #tpu.memory_space<vmem>>, %arg5: memref<128x128xbf16, #tpu.memory_space<vmem>>, %arg6: memref<1x128xf32, #tpu.memory_space<vmem>>, %arg7: memref<8x128xf32, #tpu.memory_space<vmem>>, %arg8: memref<128x128xbf16, #tpu.memory_space<vmem>>, %arg9: memref<1x128xf32, #tpu.memory_space<vmem>>, %arg10: memref<8x128xf32, #tpu.memory_space<vmem>>) attributes {dimension_semantics = [#tpu.dimension_semantics<parallel>], iteration_bounds = array<i64: 1>, scalar_prefetch = 0 : i64, scratch_operands = 0 : i64, tpu.core_type = #tpu.core_type<tc>, window_params = [{transform_indices = @transform_0, window_bounds = array<i64: 8, 3200>}, {pipeline_mode = #tpu.pipeline_mode<synchronous>, transform_indices = @transform_1, window_bounds = array<i64: 3200, 128>}, {pipeline_mode = #tpu.pipeline_mode<synchronous>, transform_indices = @transform_2, window_bounds = array<i64: 1, 128>}, {transform_indices = @transform_3, window_bounds = array<i64: 8, 128>}, {pipeline_mode = #tpu.pipeline_mode<synchronous>, transform_indices = @transform_4, window_bounds = array<i64: 128, 128>}, {pipeline_mode = #tpu.pipeline_mode<synchronous>, transform_indices = @transform_5, window_bounds = array<i64: 1, 128>}, {transform_indices = @transform_6, window_bounds = array<i64: 8, 128>}, {pipeline_mode = #tpu.pipeline_mode<synchronous>, transform_indices = @transform_7, window_bounds = array<i64: 128, 128>}, {pipeline_mode = #tpu.pipeline_mode<synchronous>, transform_indices = @transform_8, window_bounds = array<i64: 1, 128>}, {transform_indices = @transform_9, window_bounds = array<i64: 8, 128>}]} {
    %c0 = arith.constant 0 : index
    %c0_0 = arith.constant 0 : index
    %0 = vector.load %arg1[%c0, %c0_0] : memref<8x3200xbf16, #tpu.memory_space<vmem>>, vector<8x3200xbf16>
    %c0_1 = arith.constant 0 : index
    %c0_2 = arith.constant 0 : index
    %1 = vector.load %arg2[%c0_1, %c0_2] : memref<3200x128xbf16, #tpu.memory_space<vmem>>, vector<3200x128xbf16>
    %cst = arith.constant dense<0.000000e+00> : vector<8x128xf32>
    %2 = tpu.matmul %0, %1, %cst {dimension_numbers = #tpu.dot_dimension_numbers<[1], [0], [0], [1], [0, 0, 1, 1], [], []>} : vector<8x3200xbf16>, vector<3200x128xbf16>, vector<8x128xf32> -> vector<8x128xf32>
    %c0_3 = arith.constant 0 : index
    %c0_4 = arith.constant 0 : index
    %3 = vector.load %arg3[%c0_3, %c0_4] : memref<1x128xf32, #tpu.memory_space<vmem>>, vector<1x128xf32>
    %4 = vector.broadcast %3 : vector<1x128xf32> to vector<8x128xf32>
    %5 = arith.addf %2, %4 : vector<8x128xf32>
    %c0_5 = arith.constant 0 : index
    %c0_6 = arith.constant 0 : index
    %6 = vector.load %arg4[%c0_5, %c0_6] : memref<8x128xf32, #tpu.memory_space<vmem>>, vector<8x128xf32>
    %cst_7 = arith.constant 0.000000e+00 : f32
    %7 = vector.broadcast %cst_7 : f32 to vector<8x128xf32>
    %8 = arith.subf %7, %5 : vector<8x128xf32>
    %9 = math.exp %8 : vector<8x128xf32>
    %cst_8 = arith.constant 1.000000e+00 : f32
    %10 = vector.broadcast %cst_8 : f32 to vector<8x128xf32>
    %11 = arith.addf %10, %9 : vector<8x128xf32>
    %cst_9 = arith.constant 1.000000e+00 : f32
    %12 = vector.broadcast %cst_9 : f32 to vector<8x128xf32>
    %13 = arith.divf %12, %11 : vector<8x128xf32>
    %14 = arith.cmpf olt, %6, %13 : vector<8x128xf32>
    %15 = arith.extui %14 : vector<8x128xi1> to vector<8x128xi32>
    %16 = arith.sitofp %15 : vector<8x128xi32> to vector<8x128xf32>
    %17 = arith.truncf %16 : vector<8x128xf32> to vector<8x128xbf16>
    %c0_10 = arith.constant 0 : index
    %c0_11 = arith.constant 0 : index
    %18 = vector.load %arg5[%c0_10, %c0_11] : memref<128x128xbf16, #tpu.memory_space<vmem>>, vector<128x128xbf16>
    %cst_12 = arith.constant dense<0.000000e+00> : vector<8x128xf32>
    %19 = tpu.matmul %17, %18, %cst_12 {dimension_numbers = #tpu.dot_dimension_numbers<[1], [0], [0], [1], [0, 0, 1, 1], [], []>} : vector<8x128xbf16>, vector<128x128xbf16>, vector<8x128xf32> -> vector<8x128xf32>
    %c0_13 = arith.constant 0 : index
    %c0_14 = arith.constant 0 : index
    %20 = vector.load %arg6[%c0_13, %c0_14] : memref<1x128xf32, #tpu.memory_space<vmem>>, vector<1x128xf32>
    %21 = vector.broadcast %20 : vector<1x128xf32> to vector<8x128xf32>
    %22 = arith.addf %19, %21 : vector<8x128xf32>
    %c0_15 = arith.constant 0 : index
    %c0_16 = arith.constant 0 : index
    %23 = vector.load %arg7[%c0_15, %c0_16] : memref<8x128xf32, #tpu.memory_space<vmem>>, vector<8x128xf32>
    %cst_17 = arith.constant 0.000000e+00 : f32
    %24 = vector.broadcast %cst_17 : f32 to vector<8x128xf32>
    %25 = arith.subf %24, %22 : vector<8x128xf32>
    %26 = math.exp %25 : vector<8x128xf32>
    %cst_18 = arith.constant 1.000000e+00 : f32
    %27 = vector.broadcast %cst_18 : f32 to vector<8x128xf32>
    %28 = arith.addf %27, %26 : vector<8x128xf32>
    %cst_19 = arith.constant 1.000000e+00 : f32
    %29 = vector.broadcast %cst_19 : f32 to vector<8x128xf32>
    %30 = arith.divf %29, %28 : vector<8x128xf32>
    %31 = arith.cmpf olt, %23, %30 : vector<8x128xf32>
    %32 = arith.extui %31 : vector<8x128xi1> to vector<8x128xi32>
    %33 = arith.sitofp %32 : vector<8x128xi32> to vector<8x128xf32>
    %34 = arith.truncf %33 : vector<8x128xf32> to vector<8x128xbf16>
    %c0_20 = arith.constant 0 : index
    %c0_21 = arith.constant 0 : index
    %35 = vector.load %arg8[%c0_20, %c0_21] : memref<128x128xbf16, #tpu.memory_space<vmem>>, vector<128x128xbf16>
    %cst_22 = arith.constant dense<0.000000e+00> : vector<8x128xf32>
    %36 = tpu.matmul %34, %35, %cst_22 {dimension_numbers = #tpu.dot_dimension_numbers<[1], [0], [0], [1], [0, 0, 1, 1], [], []>} : vector<8x128xbf16>, vector<128x128xbf16>, vector<8x128xf32> -> vector<8x128xf32>
    %c0_23 = arith.constant 0 : index
    %c0_24 = arith.constant 0 : index
    %37 = vector.load %arg9[%c0_23, %c0_24] : memref<1x128xf32, #tpu.memory_space<vmem>>, vector<1x128xf32>
    %38 = vector.broadcast %37 : vector<1x128xf32> to vector<8x128xf32>
    %39 = arith.addf %36, %38 : vector<8x128xf32>
    %c0_25 = arith.constant 0 : index
    %c0_26 = arith.constant 0 : index
    %40 = vector.load %arg10[%c0_25, %c0_26] : memref<8x128xf32, #tpu.memory_space<vmem>>, vector<8x128xf32>
    tpu.vector_store %arg10[%c0_25, %c0_26], %39 {strides = array<i32>} : memref<8x128xf32, #tpu.memory_space<vmem>>, vector<8x128xf32>,
    return
  }
  func.func @transform_0(%arg0: i32) -> (i32, i32) {
    %c0_i32 = arith.constant 0 : i32
    %c0_i32_0 = arith.constant 0 : i32
    return %arg0, %c0_i32 : i32, i32
  }
  func.func @transform_1(%arg0: i32) -> (i32, i32) {
    %c0_i32 = arith.constant 0 : i32
    %c0_i32_0 = arith.constant 0 : i32
    %c0_i32_1 = arith.constant 0 : i32
    return %c0_i32, %c0_i32_0 : i32, i32
  }
  func.func @transform_2(%arg0: i32) -> (i32, i32) {
    %c0_i32 = arith.constant 0 : i32
    %c0_i32_0 = arith.constant 0 : i32
    %c0_i32_1 = arith.constant 0 : i32
    return %c0_i32, %c0_i32_0 : i32, i32
  }
  func.func @transform_3(%arg0: i32) -> (i32, i32) {
    %c0_i32 = arith.constant 0 : i32
    %c0_i32_0 = arith.constant 0 : i32
    return %arg0, %c0_i32 : i32, i32
  }
  func.func @transform_4(%arg0: i32) -> (i32, i32) {
    %c0_i32 = arith.constant 0 : i32
    %c0_i32_0 = arith.constant 0 : i32
    %c0_i32_1 = arith.constant 0 : i32
    return %c0_i32, %c0_i32_0 : i32, i32
  }
  func.func @transform_5(%arg0: i32) -> (i32, i32) {
    %c0_i32 = arith.constant 0 : i32
    %c0_i32_0 = arith.constant 0 : i32
    %c0_i32_1 = arith.constant 0 : i32
    return %c0_i32, %c0_i32_0 : i32, i32
  }
  func.func @transform_6(%arg0: i32) -> (i32, i32) {
    %c0_i32 = arith.constant 0 : i32
    %c0_i32_0 = arith.constant 0 : i32
    return %arg0, %c0_i32 : i32, i32
  }
  func.func @transform_7(%arg0: i32) -> (i32, i32) {
    %c0_i32 = arith.constant 0 : i32
    %c0_i32_0 = arith.constant 0 : i32
    %c0_i32_1 = arith.constant 0 : i32
    return %c0_i32, %c0_i32_0 : i32, i32
  }
  func.func @transform_8(%arg0: i32) -> (i32, i32) {
    %c0_i32 = arith.constant 0 : i32
    %c0_i32_0 = arith.constant 0 : i32
    %c0_i32_1 = arith.constant 0 : i32
    return %c0_i32, %c0_i32_0 : i32, i32
  }
  func.func @transform_9(%arg0: i32) -> (i32, i32) {
    %c0_i32 = arith.constant 0 : i32
    %c0_i32_0 = arith.constant 0 : i32
    return %arg0, %c0_i32 : i32, i32
  }
}

</mosaic_0001>

<llo_original>
// kernel: lenet5_forward.5
$region0: #{lenet5_forward.5}
  #allocation0 [shape = 'u32[]', space=smem, size = 0x4, offset = 0x4, fixed_abs, tag = 'smem constant byte address 0x4 - core index']
  #allocation1 [shape = 'u32[144,128]{1,0:T(1,128)}', space=vmem, size = 0x12000, scoped, tag = 'internal scratch']
  %s0 = inlined_call_operand.vmem [shape: bf16[4,512,32], index: 0, kind: input, shape index: {}]
  %s1 = inlined_call_operand.vmem [shape: f32[4,512,128], index: 1, kind: input, shape index: {}]
  %s2 = inlined_call_operand.vmem [shape: bf16[32,128], index: 2, kind: input, shape index: {}]
  %s3 = inlined_call_operand.vmem [shape: f32[1,128], index: 3, kind: input, shape index: {}]
  %s4 = inlined_call_operand.vmem [shape: bf16[512,128], index: 4, kind: output, shape index: {}]
  %s5 = sld [smem:[#allocation0]]
  $region128: #{lenet5_forward.5} parent=0
    _
  %s7 = ssub.s32 1, %s5
  %s8 = scalar_select 0, %s7, %s5
  $region1: #{lenet5_forward.5} parent=0
    #allocation2 [shape = 'u8[524288]{0}', space=vmem, size = 0x80000, scoped, tag = 'input window, operand 0']
    #allocation3 [shape = 'u8[1048576]{0}', space=vmem, size = 0x100000, scoped, tag = 'input window, operand 1']
    loop: start=0, step=1, limit=4
    $region2: #{lenet5_forward.5} parent=1 // loop_pre_header
      _
    $region3: #{lenet5_forward.5} parent=1 // loop_header
      %s10 = sphi 0, %s14
      %p11 = scmp.ge.s32.totalorder %s10, 4
      %s20 = sphi 0, %s22
      %s23 = sphi 0, %s20
      %s24 = sphi 0, %s23
      %s40 = sphi 0, %s24
      %s46 = sphi 0, %s48
      %s49 = sphi 0, %s46
      %s50 = sphi 0, %s49
      %s66 = sphi 0, %s50
      %s70 = sphi 0, %s70
      %s72 = sphi 0, %s70
      %s73 = sphi 0, %s72
      %s87 = sphi 0, %s73
      %s91 = sphi 0, %s91
      %s93 = sphi 0, %s91
      %s94 = sphi 0, %s93
      %s108 = sphi 0, %s94
      %s114 = sphi 0, %s116
      %s117 = sphi 0, %s114
      %s118 = sphi 0, %s117
      %s134 = sphi 0, %s118
    $region4: #{lenet5_forward.5} parent=1 // loop_header_branch
      %13 = sbr.rel (%p11) target = $region8
    $region5: #{lenet5_forward.5} parent=1 // loop_body
      %s15 = ssub.s32 %s10, 1
      %s16 = ssub.s32 %s10, 2
      %s17 = sadd.s32 %s10, 1
      %s18 = ssub.s32 %s10, %s17
      %p19 = scmp.eq.s32.totalorder %s18, 0
      %s21 = sadd.s32 %s20, 1
      %s22 = scalar_select %p19, %s20, %s21
      %p25 = pneg %p19
      %p26 = scmp.eq.s32.totalorder %s10, 1
      %p27 = por %p25, %p26
      %p28 = scmp.ne.s32.totalorder %s20, %s23
      %p29 = scmp.eq.s32.totalorder %s10, 0
      %p30 = por %p28, %p29
      %p31 = scmp.ne.s32.totalorder %s20, %s23
      %p32 = scmp.eq.s32.totalorder %s15, 1
      %p33 = por %p31, %p32
      %p34 = scmp.ne.s32.totalorder %s23, %s24
      %p35 = scmp.eq.s32.totalorder %s15, 0
      %p36 = por %p34, %p35
      %p37 = scmp.ne.s32.totalorder %s23, %s24
      %p38 = scmp.eq.s32.totalorder %s16, 1
      %p39 = por %p37, %p38
      %p41 = scmp.ne.s32.totalorder %s24, %s40
      %p42 = scmp.eq.s32.totalorder %s16, 0
      %p43 = por %p41, %p42
      %s44 = ssub.s32 %s10, %s17
      %p45 = scmp.eq.s32.totalorder %s44, 0
      %s47 = sadd.s32 %s46, 1
      %s48 = scalar_select %p45, %s46, %s47
      %p51 = pneg %p45
      %p52 = scmp.eq.s32.totalorder %s10, 1
      %p53 = por %p51, %p52
      %p54 = scmp.ne.s32.totalorder %s46, %s49
      %p55 = scmp.eq.s32.totalorder %s10, 0
      %p56 = por %p54, %p55
      %p57 = scmp.ne.s32.totalorder %s46, %s49
      %p58 = scmp.eq.s32.totalorder %s15, 1
      %p59 = por %p57, %p58
      %p60 = scmp.ne.s32.totalorder %s49, %s50
      %p61 = scmp.eq.s32.totalorder %s15, 0
      %p62 = por %p60, %p61
      %p63 = scmp.ne.s32.totalorder %s49, %s50
      %p64 = scmp.eq.s32.totalorder %s16, 1
      %p65 = por %p63, %p64
      %p67 = scmp.ne.s32.totalorder %s50, %s66
      %p68 = scmp.eq.s32.totalorder %s16, 0
      %p69 = por %p67, %p68
      %s71 = sadd.s32 %s70, 1
      %p74 = scmp.eq.s32.totalorder %s10, 1
      %p75 = scmp.ne.s32.totalorder %s70, %s72
      %p76 = scmp.eq.s32.totalorder %s10, 0
      %p77 = por %p75, %p76
      %p78 = scmp.ne.s32.totalorder %s70, %s72
      %p79 = scmp.eq.s32.totalorder %s15, 1
      %p80 = por %p78, %p79
      %p81 = scmp.ne.s32.totalorder %s72, %s73
      %p82 = scmp.eq.s32.totalorder %s15, 0
      %p83 = por %p81, %p82
      %p84 = scmp.ne.s32.totalorder %s72, %s73
      %p85 = scmp.eq.s32.totalorder %s16, 1
      %p86 = por %p84, %p85
      %p88 = scmp.ne.s32.totalorder %s73, %s87
      %p89 = scmp.eq.s32.totalorder %s16, 0
      %p90 = por %p88, %p89
      %s92 = sadd.s32 %s91, 1
      %p95 = scmp.eq.s32.totalorder %s10, 1
      %p96 = scmp.ne.s32.totalorder %s91, %s93
      %p97 = scmp.eq.s32.totalorder %s10, 0
      %p98 = por %p96, %p97
      %p99 = scmp.ne.s32.totalorder %s91, %s93
      %p100 = scmp.eq.s32.totalorder %s15, 1
      %p101 = por %p99, %p100
      %p102 = scmp.ne.s32.totalorder %s93, %s94
      %p103 = scmp.eq.s32.totalorder %s15, 0
      %p104 = por %p102, %p103
      %p105 = scmp.ne.s32.totalorder %s93, %s94
      %p106 = scmp.eq.s32.totalorder %s16, 1
      %p107 = por %p105, %p106
      %p109 = scmp.ne.s32.totalorder %s94, %s108
      %p110 = scmp.eq.s32.totalorder %s16, 0
      %p111 = por %p109, %p110
      %s112 = ssub.s32 %s10, %s17
      %p113 = scmp.eq.s32.totalorder %s112, 0
      %s115 = sadd.s32 %s114, 1
      %s116 = scalar_select %p113, %s114, %s115
      %p119 = pneg %p113
      %p120 = scmp.eq.s32.totalorder %s10, 1
      %p121 = por %p119, %p120
      %p122 = scmp.ne.s32.totalorder %s114, %s117
      %p123 = scmp.eq.s32.totalorder %s10, 0
      %p124 = por %p122, %p123
      %p125 = scmp.ne.s32.totalorder %s114, %s117
      %p126 = scmp.eq.s32.totalorder %s15, 1
      %p127 = por %p125, %p126
      %p128 = scmp.ne.s32.totalorder %s117, %s118
      %p129 = scmp.eq.s32.totalorder %s15, 0
      %p130 = por %p128, %p129
      %p131 = scmp.ne.s32.totalorder %s117, %s118
      %p132 = scmp.eq.s32.totalorder %s16, 1
      %p133 = por %p131, %p132
      %p135 = scmp.ne.s32.totalorder %s118, %s134
      %p136 = scmp.eq.s32.totalorder %s16, 0
      %p137 = por %p135, %p136
      %p138 = scmp.le.s32.totalorder 1, %s10
      %p139 = scmp.lt.s32.totalorder %s10, 3
      %p140 = pnand %p138, %p139
      %p141 = pneg %p140
      // Predicated region
      $region9: #{lenet5_forward.5} parent=5 // pred_check
        _
      $region10: #{lenet5_forward.5} parent=5 // pred_check_branch
        %143 = sbr.rel (%p140) target = $region12
      $region11: #{lenet5_forward.5} parent=5 // pred_region
        %s144 = ssub.s32 %s10, 1
        // Predicated region
        $region13: #{lenet5_forward.5} parent=11 // pred_check
          %p145 = pneg %p83
        $region14: #{lenet5_forward.5} parent=11 // pred_check_branch
          %147 = sbr.rel (%p145) target = $region16
        $region15: #{lenet5_forward.5} parent=11 // pred_region
          _
        $region16: #{lenet5_forward.5} parent=11 // pred_fallthru
          _
        // Predicated region
        $region17: #{lenet5_forward.5} parent=11 // pred_check
          %p148 = pneg %p104
        $region18: #{lenet5_forward.5} parent=11 // pred_check_branch
          %150 = sbr.rel (%p148) target = $region20
        $region19: #{lenet5_forward.5} parent=11 // pred_region
          _
        $region20: #{lenet5_forward.5} parent=11 // pred_fallthru
          _
      $region12: #{lenet5_forward.5} parent=5 // pred_fallthru
        _
      %p151 = scmp.lt.s32.totalorder %s10, 2
      // Predicated region
      $region21: #{lenet5_forward.5} parent=5 // pred_check
        %p152 = pneg %p151
      $region22: #{lenet5_forward.5} parent=5 // pred_check_branch
        %154 = sbr.rel (%p152) target = $region24
      $region23: #{lenet5_forward.5} parent=5 // pred_region
        // Predicated region
        $region25: #{lenet5_forward.5} parent=23 // pred_check
          %p155 = pneg %p30
        $region26: #{lenet5_forward.5} parent=23 // pred_check_branch
          %157 = sbr.rel (%p155) target = $region28
        $region27: #{lenet5_forward.5} parent=23 // pred_region
          %s158 = sand.u32 %s20, 1
          %s159 = sand.u32 %s20, 1
          %s160 = smul.addr %s159, 512
          %s161 = scalar_lea.vmem [#allocation2], %s160
          %s162 = smul.u32 32, %s10
          %s163 = smul.addr %s162, 4
          %s164 = scalar_lea.vmem %s0, %s163
          // Predicated region
          $region29: #{lenet5_forward.5} parent=27 // pred_check
            _
          $region30: #{lenet5_forward.5} parent=27 // pred_check_branch
            %166 = sbr.rel (0) target = $region32
          $region31: #{lenet5_forward.5} parent=27 // pred_region
            // Predicated region
            $region33: #{lenet5_forward.5} parent=31 // pred_check
              _
            $region34: #{lenet5_forward.5} parent=31 // pred_check_branch
              %168 = sbr.rel target = $region36
            $region35: #{lenet5_forward.5} parent=31 // pred_region
              // Predicated region
              $region48: #{lenet5_forward.5} parent=35 // pred_check
                _
              $region49: #{lenet5_forward.5} parent=35 // pred_check_branch
                %437 = sbr.rel (0) target = $region51
              $region50: #{lenet5_forward.5} parent=35 // pred_region
                loop: start=0, step=1, limit=1
                $region52: #{lenet5_forward.5} parent=50 // loop_pre_header
                  _
                $region53: #{lenet5_forward.5} parent=50 // loop_header
                  %s439 = sphi 0, %s443
                  %p440 = scmp.ge.s32.totalorder %s439, 1
                  %s444 = sphi %s164, %s164
                  %s445 = sphi %s161, %s161
                $region54: #{lenet5_forward.5} parent=50 // loop_header_branch
                  %442 = sbr.rel (%p440) target = $region58
                $region55: #{lenet5_forward.5} parent=50 // loop_body
                  _
                $region56: #{lenet5_forward.5} parent=50 // loop_footer
                  %s443 = sadd.s32 1, %s439
                $region57: #{lenet5_forward.5} parent=50 // loop_footer_branch
                  %438 = sbr.rel target = $region53
                $region58: #{lenet5_forward.5} parent=50 // loop_exit
                  _
                loop: start=0, step=1, limit=1
                $region59: #{lenet5_forward.5} parent=50 // loop_pre_header
                  _
                $region60: #{lenet5_forward.5} parent=50 // loop_header
                  %s448 = sphi 0, %s452
                  %p449 = scmp.ge.s32.totalorder %s448, 1
                  %s453 = sphi %s164, %s164
                  %s454 = sphi %s161, %s161
                $region61: #{lenet5_forward.5} parent=50 // loop_header_branch
                  %451 = sbr.rel (%p449) target = $region65
                $region62: #{lenet5_forward.5} parent=50 // loop_body
                  %v455 = vld [vmem:[%s453] sm:$0xf]
                  %456 = vst [vmem:[%s454] sm:$0xf] %v455
                  %v457 = vld [vmem:[%s453 + $0x4] sm:$0xf]
                  %458 = vst [vmem:[%s454 + $0x4] sm:$0xf] %v457
                  %v459 = vld [vmem:[%s453 + $0x8] sm:$0xf]
                  %460 = vst [vmem:[%s454 + $0x8] sm:$0xf] %v459
                  %v461 = vld [vmem:[%s453 + $0xc] sm:$0xf]
                  %462 = vst [vmem:[%s454 + $0xc] sm:$0xf] %v461
                  %v463 = vld [vmem:[%s453 + $0x10] sm:$0xf]
                  %464 = vst [vmem:[%s454 + $0x10] sm:$0xf] %v463
                  %v465 = vld [vmem:[%s453 + $0x14] sm:$0xf]
                  %466 = vst [vmem:[%s454 + $0x14] sm:$0xf] %v465
                  %v467 = vld [vmem:[%s453 + $0x18] sm:$0xf]
                  %468 = vst [vmem:[%s454 + $0x18] sm:$0xf] %v467
                  %v469 = vld [vmem:[%s453 + $0x1c] sm:$0xf]
                  %470 = vst [vmem:[%s454 + $0x1c] sm:$0xf] %v469
                  %v471 = vld [vmem:[%s453 + $0x20] sm:$0xf]
                  %472 = vst [vmem:[%s454 + $0x20] sm:$0xf] %v471
                  %v473 = vld [vmem:[%s453 + $0x24] sm:$0xf]
                  %474 = vst [vmem:[%s454 + $0x24] sm:$0xf] %v473
                  %v475 = vld [vmem:[%s453 + $0x28] sm:$0xf]
                  %476 = vst [vmem:[%s454 + $0x28] sm:$0xf] %v475
                  %v477 = vld [vmem:[%s453 + $0x2c] sm:$0xf]
                  %478 = vst [vmem:[%s454 + $0x2c] sm:$0xf] %v477
                  %v479 = vld [vmem:[%s453 + $0x30] sm:$0xf]
                  %480 = vst [vmem:[%s454 + $0x30] sm:$0xf] %v479
                  %v481 = vld [vmem:[%s453 + $0x34] sm:$0xf]
                  %482 = vst [vmem:[%s454 + $0x34] sm:$0xf] %v481
                  %v483 = vld [vmem:[%s453 + $0x38] sm:$0xf]
                  %484 = vst [vmem:[%s454 + $0x38] sm:$0xf] %v483
                  %v485 = vld [vmem:[%s453 + $0x3c] sm:$0xf]
                  %486 = vst [vmem:[%s454 + $0x3c] sm:$0xf] %v485
                  %v487 = vld [vmem:[%s453 + $0x40] sm:$0xf]
                  %488 = vst [vmem:[%s454 + $0x40] sm:$0xf] %v487
                  %v489 = vld [vmem:[%s453 + $0x44] sm:$0xf]
                  %490 = vst [vmem:[%s454 + $0x44] sm:$0xf] %v489
                  %v491 = vld [vmem:[%s453 + $0x48] sm:$0xf]
                  %492 = vst [vmem:[%s454 + $0x48] sm:$0xf] %v491
                  %v493 = vld [vmem:[%s453 + $0x4c] sm:$0xf]
                  %494 = vst [vmem:[%s454 + $0x4c] sm:$0xf] %v493
                  %v495 = vld [vmem:[%s453 + $0x50] sm:$0xf]
                  %496 = vst [vmem:[%s454 + $0x50] sm:$0xf] %v495
                  %v497 = vld [vmem:[%s453 + $0x54] sm:$0xf]
                  %498 = vst [vmem:[%s454 + $0x54] sm:$0xf] %v497
                  %v499 = vld [vmem:[%s453 + $0x58] sm:$0xf]
                  %500 = vst [vmem:[%s454 + $0x58] sm:$0xf] %v499
                  %v501 = vld [vmem:[%s453 + $0x5c] sm:$0xf]
                  %502 = vst [vmem:[%s454 + $0x5c] sm:$0xf] %v501
                  %v503 = vld [vmem:[%s453 + $0x60] sm:$0xf]
                  %504 = vst [vmem:[%s454 + $0x60] sm:$0xf] %v503
                  %v505 = vld [vmem:[%s453 + $0x64] sm:$0xf]
                  %506 = vst [vmem:[%s454 + $0x64] sm:$0xf] %v505
                  %v507 = vld [vmem:[%s453 + $0x68] sm:$0xf]
                  %508 = vst [vmem:[%s454 + $0x68] sm:$0xf] %v507
                  %v509 = vld [vmem:[%s453 + $0x6c] sm:$0xf]
                  %510 = vst [vmem:[%s454 + $0x6c] sm:$0xf] %v509
                  %v511 = vld [vmem:[%s453 + $0x70] sm:$0xf]
                  %512 = vst [vmem:[%s454 + $0x70] sm:$0xf] %v511
                  %v513 = vld [vmem:[%s453 + $0x74] sm:$0xf]
                  %514 = vst [vmem:[%s454 + $0x74] sm:$0xf] %v513
                  %v515 = vld [vmem:[%s453 + $0x78] sm:$0xf]
                  %516 = vst [vmem:[%s454 + $0x78] sm:$0xf] %v515
                  %v517 = vld [vmem:[%s453 + $0x7c] sm:$0xf]
                  %518 = vst [vmem:[%s454 + $0x7c] sm:$0xf] %v517
                  %v519 = vld [vmem:[%s453 + $0x100] sm:$0xf]
                  %520 = vst [vmem:[%s454 + $0x80] sm:$0xf] %v519
                  %v521 = vld [vmem:[%s453 + $0x104] sm:$0xf]
                  %522 = vst [vmem:[%s454 + $0x84] sm:$0xf] %v521
                  %v523 = vld [vmem:[%s453 + $0x108] sm:$0xf]
                  %524 = vst [vmem:[%s454 + $0x88] sm:$0xf] %v523
                  %v525 = vld [vmem:[%s453 + $0x10c] sm:$0xf]
                  %526 = vst [vmem:[%s454 + $0x8c] sm:$0xf] %v525
                  %v527 = vld [vmem:[%s453 + $0x110] sm:$0xf]
                  %528 = vst [vmem:[%s454 + $0x90] sm:$0xf] %v527
                  %v529 = vld [vmem:[%s453 + $0x114] sm:$0xf]
                  %530 = vst [vmem:[%s454 + $0x94] sm:$0xf] %v529
                  %v531 = vld [vmem:[%s453 + $0x118] sm:$0xf]
                  %532 = vst [vmem:[%s454 + $0x98] sm:$0xf] %v531
                  %v533 = vld [vmem:[%s453 + $0x11c] sm:$0xf]
                  %534 = vst [vmem:[%s454 + $0x9c] sm:$0xf] %v533
                  %v535 = vld [vmem:[%s453 + $0x120] sm:$0xf]
                  %536 = vst [vmem:[%s454 + $0xa0] sm:$0xf] %v535
                  %v537 = vld [vmem:[%s453 + $0x124] sm:$0xf]
                  %538 = vst [vmem:[%s454 + $0xa4] sm:$0xf] %v537
                  %v539 = vld [vmem:[%s453 + $0x128] sm:$0xf]
                  %540 = vst [vmem:[%s454 + $0xa8] sm:$0xf] %v539
                  %v541 = vld [vmem:[%s453 + $0x12c] sm:$0xf]
                  %542 = vst [vmem:[%s454 + $0xac] sm:$0xf] %v541
                  %v543 = vld [vmem:[%s453 + $0x130] sm:$0xf]
                  %544 = vst [vmem:[%s454 + $0xb0] sm:$0xf] %v543
                  %v545 = vld [vmem:[%s453 + $0x134] sm:$0xf]
                  %546 = vst [vmem:[%s454 + $0xb4] sm:$0xf] %v545
                  %v547 = vld [vmem:[%s453 + $0x138] sm:$0xf]
                  %548 = vst [vmem:[%s454 + $0xb8] sm:$0xf] %v547
                  %v549 = vld [vmem:[%s453 + $0x13c] sm:$0xf]
                  %550 = vst [vmem:[%s454 + $0xbc] sm:$0xf] %v549
                  %v551 = vld [vmem:[%s453 + $0x140] sm:$0xf]
                  %552 = vst [vmem:[%s454 + $0xc0] sm:$0xf] %v551
                  %v553 = vld [vmem:[%s453 + $0x144] sm:$0xf]
                  %554 = vst [vmem:[%s454 + $0xc4] sm:$0xf] %v553
                  %v555 = vld [vmem:[%s453 + $0x148] sm:$0xf]
                  %556 = vst [vmem:[%s454 + $0xc8] sm:$0xf] %v555
                  %v557 = vld [vmem:[%s453 + $0x14c] sm:$0xf]
                  %558 = vst [vmem:[%s454 + $0xcc] sm:$0xf] %v557
                  %v559 = vld [vmem:[%s453 + $0x150] sm:$0xf]
                  %560 = vst [vmem:[%s454 + $0xd0] sm:$0xf] %v559
                  %v561 = vld [vmem:[%s453 + $0x154] sm:$0xf]
                  %562 = vst [vmem:[%s454 + $0xd4] sm:$0xf] %v561
                  %v563 = vld [vmem:[%s453 + $0x158] sm:$0xf]
                  %564 = vst [vmem:[%s454 + $0xd8] sm:$0xf] %v563
                  %v565 = vld [vmem:[%s453 + $0x15c] sm:$0xf]
                  %566 = vst [vmem:[%s454 + $0xdc] sm:$0xf] %v565
                  %v567 = vld [vmem:[%s453 + $0x160] sm:$0xf]
                  %568 = vst [vmem:[%s454 + $0xe0] sm:$0xf] %v567
                  %v569 = vld [vmem:[%s453 + $0x164] sm:$0xf]
                  %570 = vst [vmem:[%s454 + $0xe4] sm:$0xf] %v569
                  %v571 = vld [vmem:[%s453 + $0x168] sm:$0xf]
                  %572 = vst [vmem:[%s454 + $0xe8] sm:$0xf] %v571
                  %v573 = vld [vmem:[%s453 + $0x16c] sm:$0xf]
                  %574 = vst [vmem:[%s454 + $0xec] sm:$0xf] %v573
                  %v575 = vld [vmem:[%s453 + $0x170] sm:$0xf]
                  %576 = vst [vmem:[%s454 + $0xf0] sm:$0xf] %v575
                  %v577 = vld [vmem:[%s453 + $0x174] sm:$0xf]
                  %578 = vst [vmem:[%s454 + $0xf4] sm:$0xf] %v577
                  %v579 = vld [vmem:[%s453 + $0x178] sm:$0xf]
                  %580 = vst [vmem:[%s454 + $0xf8] sm:$0xf] %v579
                  %v581 = vld [vmem:[%s453 + $0x17c] sm:$0xf]
                  %582 = vst [vmem:[%s454 + $0xfc] sm:$0xf] %v581
                  %v583 = vld [vmem:[%s453 + $0x200] sm:$0xf]
                  %584 = vst [vmem:[%s454 + $0x100] sm:$0xf] %v583
                  %v585 = vld [vmem:[%s453 + $0x204] sm:$0xf]
                  %586 = vst [vmem:[%s454 + $0x104] sm:$0xf] %v585
                  %v587 = vld [vmem:[%s453 + $0x208] sm:$0xf]
                  %588 = vst [vmem:[%s454 + $0x108] sm:$0xf] %v587
                  %v589 = vld [vmem:[%s453 + $0x20c] sm:$0xf]
                  %590 = vst [vmem:[%s454 + $0x10c] sm:$0xf] %v589
                  %v591 = vld [vmem:[%s453 + $0x210] sm:$0xf]
                  %592 = vst [vmem:[%s454 + $0x110] sm:$0xf] %v591
                  %v593 = vld [vmem:[%s453 + $0x214] sm:$0xf]
                  %594 = vst [vmem:[%s454 + $0x114] sm:$0xf] %v593
                  %v595 = vld [vmem:[%s453 + $0x218] sm:$0xf]
                  %596 = vst [vmem:[%s454 + $0x118] sm:$0xf] %v595
                  %v597 = vld [vmem:[%s453 + $0x21c] sm:$0xf]
                  %598 = vst [vmem:[%s454 + $0x11c] sm:$0xf] %v597
                  %v599 = vld [vmem:[%s453 + $0x220] sm:$0xf]
                  %600 = vst [vmem:[%s454 + $0x120] sm:$0xf] %v599
                  %v601 = vld [vmem:[%s453 + $0x224] sm:$0xf]
                  %602 = vst [vmem:[%s454 + $0x124] sm:$0xf] %v601
                  %v603 = vld [vmem:[%s453 + $0x228] sm:$0xf]
                  %604 = vst [vmem:[%s454 + $0x128] sm:$0xf] %v603
                  %v605 = vld [vmem:[%s453 + $0x22c] sm:$0xf]
                  %606 = vst [vmem:[%s454 + $0x12c] sm:$0xf] %v605
                  %v607 = vld [vmem:[%s453 + $0x230] sm:$0xf]
                  %608 = vst [vmem:[%s454 + $0x130] sm:$0xf] %v607
                  %v609 = vld [vmem:[%s453 + $0x234] sm:$0xf]
                  %610 = vst [vmem:[%s454 + $0x134] sm:$0xf] %v609
                  %v611 = vld [vmem:[%s453 + $0x238] sm:$0xf]
                  %612 = vst [vmem:[%s454 + $0x138] sm:$0xf] %v611
                  %v613 = vld [vmem:[%s453 + $0x23c] sm:$0xf]
                  %614 = vst [vmem:[%s454 + $0x13c] sm:$0xf] %v613
                  %v615 = vld [vmem:[%s453 + $0x240] sm:$0xf]
                  %616 = vst [vmem:[%s454 + $0x140] sm:$0xf] %v615
                  %v617 = vld [vmem:[%s453 + $0x244] sm:$0xf]
                  %618 = vst [vmem:[%s454 + $0x144] sm:$0xf] %v617
                  %v619 = vld [vmem:[%s453 + $0x248] sm:$0xf]
                  %620 = vst [vmem:[%s454 + $0x148] sm:$0xf] %v619
                  %v621 = vld [vmem:[%s453 + $0x24c] sm:$0xf]
                  %622 = vst [vmem:[%s454 + $0x14c] sm:$0xf] %v621
                  %v623 = vld [vmem:[%s453 + $0x250] sm:$0xf]
                  %624 = vst [vmem:[%s454 + $0x150] sm:$0xf] %v623
                  %v625 = vld [vmem:[%s453 + $0x254] sm:$0xf]
                  %626 = vst [vmem:[%s454 + $0x154] sm:$0xf] %v625
                  %v627 = vld [vmem:[%s453 + $0x258] sm:$0xf]
                  %628 = vst [vmem:[%s454 + $0x158] sm:$0xf] %v627
                  %v629 = vld [vmem:[%s453 + $0x25c] sm:$0xf]
                  %630 = vst [vmem:[%s454 + $0x15c] sm:$0xf] %v629
                  %v631 = vld [vmem:[%s453 + $0x260] sm:$0xf]
                  %632 = vst [vmem:[%s454 + $0x160] sm:$0xf] %v631
                  %v633 = vld [vmem:[%s453 + $0x264] sm:$0xf]
                  %634 = vst [vmem:[%s454 + $0x164] sm:$0xf] %v633
                  %v635 = vld [vmem:[%s453 + $0x268] sm:$0xf]
                  %636 = vst [vmem:[%s454 + $0x168] sm:$0xf] %v635
                  %v637 = vld [vmem:[%s453 + $0x26c] sm:$0xf]
                  %638 = vst [vmem:[%s454 + $0x16c] sm:$0xf] %v637
                  %v639 = vld [vmem:[%s453 + $0x270] sm:$0xf]
                  %640 = vst [vmem:[%s454 + $0x170] sm:$0xf] %v639
                  %v641 = vld [vmem:[%s453 + $0x274] sm:$0xf]
                  %642 = vst [vmem:[%s454 + $0x174] sm:$0xf] %v641
                  %v643 = vld [vmem:[%s453 + $0x278] sm:$0xf]
                  %644 = vst [vmem:[%s454 + $0x178] sm:$0xf] %v643
                  %v645 = vld [vmem:[%s453 + $0x27c] sm:$0xf]
                  %646 = vst [vmem:[%s454 + $0x17c] sm:$0xf] %v645
                  %v647 = vld [vmem:[%s453 + $0x300] sm:$0xf]
                  %648 = vst [vmem:[%s454 + $0x180] sm:$0xf] %v647
                  %v649 = vld [vmem:[%s453 + $0x304] sm:$0xf]
                  %650 = vst [vmem:[%s454 + $0x184] sm:$0xf] %v649
                  %v651 = vld [vmem:[%s453 + $0x308] sm:$0xf]
                  %652 = vst [vmem:[%s454 + $0x188] sm:$0xf] %v651
                  %v653 = vld [vmem:[%s453 + $0x30c] sm:$0xf]
                  %654 = vst [vmem:[%s454 + $0x18c] sm:$0xf] %v653
                  %v655 = vld [vmem:[%s453 + $0x310] sm:$0xf]
                  %656 = vst [vmem:[%s454 + $0x190] sm:$0xf] %v655
                  %v657 = vld [vmem:[%s453 + $0x314] sm:$0xf]
                  %658 = vst [vmem:[%s454 + $0x194] sm:$0xf] %v657
                  %v659 = vld [vmem:[%s453 + $0x318] sm:$0xf]
                  %660 = vst [vmem:[%s454 + $0x198] sm:$0xf] %v659
                  %v661 = vld [vmem:[%s453 + $0x31c] sm:$0xf]
                  %662 = vst [vmem:[%s454 + $0x19c] sm:$0xf] %v661
                  %v663 = vld [vmem:[%s453 + $0x320] sm:$0xf]
                  %664 = vst [vmem:[%s454 + $0x1a0] sm:$0xf] %v663
                  %v665 = vld [vmem:[%s453 + $0x324] sm:$0xf]
                  %666 = vst [vmem:[%s454 + $0x1a4] sm:$0xf] %v665
                  %v667 = vld [vmem:[%s453 + $0x328] sm:$0xf]
                  %668 = vst [vmem:[%s454 + $0x1a8] sm:$0xf] %v667
                  %v669 = vld [vmem:[%s453 + $0x32c] sm:$0xf]
                  %670 = vst [vmem:[%s454 + $0x1ac] sm:$0xf] %v669
                  %v671 = vld [vmem:[%s453 + $0x330] sm:$0xf]
                  %672 = vst [vmem:[%s454 + $0x1b0] sm:$0xf] %v671
                  %v673 = vld [vmem:[%s453 + $0x334] sm:$0xf]
                  %674 = vst [vmem:[%s454 + $0x1b4] sm:$0xf] %v673
                  %v675 = vld [vmem:[%s453 + $0x338] sm:$0xf]
                  %676 = vst [vmem:[%s454 + $0x1b8] sm:$0xf] %v675
                  %v677 = vld [vmem:[%s453 + $0x33c] sm:$0xf]
                  %678 = vst [vmem:[%s454 + $0x1bc] sm:$0xf] %v677
                  %v679 = vld [vmem:[%s453 + $0x340] sm:$0xf]
                  %680 = vst [vmem:[%s454 + $0x1c0] sm:$0xf] %v679
                  %v681 = vld [vmem:[%s453 + $0x344] sm:$0xf]
                  %682 = vst [vmem:[%s454 + $0x1c4] sm:$0xf] %v681
                  %v683 = vld [vmem:[%s453 + $0x348] sm:$0xf]
                  %684 = vst [vmem:[%s454 + $0x1c8] sm:$0xf] %v683
                  %v685 = vld [vmem:[%s453 + $0x34c] sm:$0xf]
                  %686 = vst [vmem:[%s454 + $0x1cc] sm:$0xf] %v685
                  %v687 = vld [vmem:[%s453 + $0x350] sm:$0xf]
                  %688 = vst [vmem:[%s454 + $0x1d0] sm:$0xf] %v687
                  %v689 = vld [vmem:[%s453 + $0x354] sm:$0xf]
                  %690 = vst [vmem:[%s454 + $0x1d4] sm:$0xf] %v689
                  %v691 = vld [vmem:[%s453 + $0x358] sm:$0xf]
                  %692 = vst [vmem:[%s454 + $0x1d8] sm:$0xf] %v691
                  %v693 = vld [vmem:[%s453 + $0x35c] sm:$0xf]
                  %694 = vst [vmem:[%s454 + $0x1dc] sm:$0xf] %v693
                  %v695 = vld [vmem:[%s453 + $0x360] sm:$0xf]
                  %696 = vst [vmem:[%s454 + $0x1e0] sm:$0xf] %v695
                  %v697 = vld [vmem:[%s453 + $0x364] sm:$0xf]
                  %698 = vst [vmem:[%s454 + $0x1e4] sm:$0xf] %v697
                  %v699 = vld [vmem:[%s453 + $0x368] sm:$0xf]
                  %700 = vst [vmem:[%s454 + $0x1e8] sm:$0xf] %v699
                  %v701 = vld [vmem:[%s453 + $0x36c] sm:$0xf]
                  %702 = vst [vmem:[%s454 + $0x1ec] sm:$0xf] %v701
                  %v703 = vld [vmem:[%s453 + $0x370] sm:$0xf]
                  %704 = vst [vmem:[%s454 + $0x1f0] sm:$0xf] %v703
                  %v705 = vld [vmem:[%s453 + $0x374] sm:$0xf]
                  %706 = vst [vmem:[%s454 + $0x1f4] sm:$0xf] %v705
                  %v707 = vld [vmem:[%s453 + $0x378] sm:$0xf]
                  %708 = vst [vmem:[%s454 + $0x1f8] sm:$0xf] %v707
                  %v709 = vld [vmem:[%s453 + $0x37c] sm:$0xf]
                  %710 = vst [vmem:[%s454 + $0x1fc] sm:$0xf] %v709
                $region63: #{lenet5_forward.5} parent=50 // loop_footer
                  %s452 = sadd.s32 1, %s448
                $region64: #{lenet5_forward.5} parent=50 // loop_footer_branch
                  %447 = sbr.rel target = $region60
                $region65: #{lenet5_forward.5} parent=50 // loop_exit
                  _
              $region51: #{lenet5_forward.5} parent=35 // pred_fallthru
                _
            $region36: #{lenet5_forward.5} parent=31 // pred_fallthru
              _
            // Predicated region
            $region37: #{lenet5_forward.5} parent=31 // pred_check
              _
            $region38: #{lenet5_forward.5} parent=31 // pred_check_branch
              %170 = sbr.rel (0) target = $region40
            $region39: #{lenet5_forward.5} parent=31 // pred_region
              loop: start=0, step=1, limit=1
              $region41: #{lenet5_forward.5} parent=39 // loop_pre_header
                _
              $region42: #{lenet5_forward.5} parent=39 // loop_header
                %s173 = sphi 0, %s177
                %p174 = scmp.ge.s32.totalorder %s173, 1
                %s178 = sphi %s164, %s164
                %s179 = sphi %s161, %s161
              $region43: #{lenet5_forward.5} parent=39 // loop_header_branch
                %176 = sbr.rel (%p174) target = $region47
              $region44: #{lenet5_forward.5} parent=39 // loop_body
                %v180 = vld [vmem:[%s178] sm:$0xf]
                %181 = vst [vmem:[%s179] sm:$0xf] %v180
                %v182 = vld [vmem:[%s178 + $0x4] sm:$0xf]
                %183 = vst [vmem:[%s179 + $0x4] sm:$0xf] %v182
                %v184 = vld [vmem:[%s178 + $0x8] sm:$0xf]
                %185 = vst [vmem:[%s179 + $0x8] sm:$0xf] %v184
                %v186 = vld [vmem:[%s178 + $0xc] sm:$0xf]
                %187 = vst [vmem:[%s179 + $0xc] sm:$0xf] %v186
                %v188 = vld [vmem:[%s178 + $0x10] sm:$0xf]
                %189 = vst [vmem:[%s179 + $0x10] sm:$0xf] %v188
                %v190 = vld [vmem:[%s178 + $0x14] sm:$0xf]
                %191 = vst [vmem:[%s179 + $0x14] sm:$0xf] %v190
                %v192 = vld [vmem:[%s178 + $0x18] sm:$0xf]
                %193 = vst [vmem:[%s179 + $0x18] sm:$0xf] %v192
                %v194 = vld [vmem:[%s178 + $0x1c] sm:$0xf]
                %195 = vst [vmem:[%s179 + $0x1c] sm:$0xf] %v194
                %v196 = vld [vmem:[%s178 + $0x20] sm:$0xf]
                %197 = vst [vmem:[%s179 + $0x20] sm:$0xf] %v196
                %v198 = vld [vmem:[%s178 + $0x24] sm:$0xf]
                %199 = vst [vmem:[%s179 + $0x24] sm:$0xf] %v198
                %v200 = vld [vmem:[%s178 + $0x28] sm:$0xf]
                %201 = vst [vmem:[%s179 + $0x28] sm:$0xf] %v200
                %v202 = vld [vmem:[%s178 + $0x2c] sm:$0xf]
                %203 = vst [vmem:[%s179 + $0x2c] sm:$0xf] %v202
                %v204 = vld [vmem:[%s178 + $0x30] sm:$0xf]
                %205 = vst [vmem:[%s179 + $0x30] sm:$0xf] %v204
                %v206 = vld [vmem:[%s178 + $0x34] sm:$0xf]
                %207 = vst [vmem:[%s179 + $0x34] sm:$0xf] %v206
                %v208 = vld [vmem:[%s178 + $0x38] sm:$0xf]
                %209 = vst [vmem:[%s179 + $0x38] sm:$0xf] %v208
                %v210 = vld [vmem:[%s178 + $0x3c] sm:$0xf]
                %211 = vst [vmem:[%s179 + $0x3c] sm:$0xf] %v210
                %v212 = vld [vmem:[%s178 + $0x40] sm:$0xf]
                %213 = vst [vmem:[%s179 + $0x40] sm:$0xf] %v212
                %v214 = vld [vmem:[%s178 + $0x44] sm:$0xf]
                %215 = vst [vmem:[%s179 + $0x44] sm:$0xf] %v214
                %v216 = vld [vmem:[%s178 + $0x48] sm:$0xf]
                %217 = vst [vmem:[%s179 + $0x48] sm:$0xf] %v216
                %v218 = vld [vmem:[%s178 + $0x4c] sm:$0xf]
                %219 = vst [vmem:[%s179 + $0x4c] sm:$0xf] %v218
                %v220 = vld [vmem:[%s178 + $0x50] sm:$0xf]
                %221 = vst [vmem:[%s179 + $0x50] sm:$0xf] %v220
                %v222 = vld [vmem:[%s178 + $0x54] sm:$0xf]
                %223 = vst [vmem:[%s179 + $0x54] sm:$0xf] %v222
                %v224 = vld [vmem:[%s178 + $0x58] sm:$0xf]
                %225 = vst [vmem:[%s179 + $0x58] sm:$0xf] %v224
                %v226 = vld [vmem:[%s178 + $0x5c] sm:$0xf]
                %227 = vst [vmem:[%s179 + $0x5c] sm:$0xf] %v226
                %v228 = vld [vmem:[%s178 + $0x60] sm:$0xf]
                %229 = vst [vmem:[%s179 + $0x60] sm:$0xf] %v228
                %v230 = vld [vmem:[%s178 + $0x64] sm:$0xf]
                %231 = vst [vmem:[%s179 + $0x64] sm:$0xf] %v230
                %v232 = vld [vmem:[%s178 + $0x68] sm:$0xf]
                %233 = vst [vmem:[%s179 + $0x68] sm:$0xf] %v232
                %v234 = vld [vmem:[%s178 + $0x6c] sm:$0xf]
                %235 = vst [vmem:[%s179 + $0x6c] sm:$0xf] %v234
                %v236 = vld [vmem:[%s178 + $0x70] sm:$0xf]
                %237 = vst [vmem:[%s179 + $0x70] sm:$0xf] %v236
                %v238 = vld [vmem:[%s178 + $0x74] sm:$0xf]
                %239 = vst [vmem:[%s179 + $0x74] sm:$0xf] %v238
                %v240 = vld [vmem:[%s178 + $0x78] sm:$0xf]
                %241 = vst [vmem:[%s179 + $0x78] sm:$0xf] %v240
                %v242 = vld [vmem:[%s178 + $0x7c] sm:$0xf]
                %243 = vst [vmem:[%s179 + $0x7c] sm:$0xf] %v242
                %v244 = vld [vmem:[%s178 + $0x100] sm:$0xf]
                %245 = vst [vmem:[%s179 + $0x80] sm:$0xf] %v244
                %v246 = vld [vmem:[%s178 + $0x104] sm:$0xf]
                %247 = vst [vmem:[%s179 + $0x84] sm:$0xf] %v246
                %v248 = vld [vmem:[%s178 + $0x108] sm:$0xf]
                %249 = vst [vmem:[%s179 + $0x88] sm:$0xf] %v248
                %v250 = vld [vmem:[%s178 + $0x10c] sm:$0xf]
                %251 = vst [vmem:[%s179 + $0x8c] sm:$0xf] %v250
                %v252 = vld [vmem:[%s178 + $0x110] sm:$0xf]
                %253 = vst [vmem:[%s179 + $0x90] sm:$0xf] %v252
                %v254 = vld [vmem:[%s178 + $0x114] sm:$0xf]
                %255 = vst [vmem:[%s179 + $0x94] sm:$0xf] %v254
                %v256 = vld [vmem:[%s178 + $0x118] sm:$0xf]
                %257 = vst [vmem:[%s179 + $0x98] sm:$0xf] %v256
                %v258 = vld [vmem:[%s178 + $0x11c] sm:$0xf]
                %259 = vst [vmem:[%s179 + $0x9c] sm:$0xf] %v258
                %v260 = vld [vmem:[%s178 + $0x120] sm:$0xf]
                %261 = vst [vmem:[%s179 + $0xa0] sm:$0xf] %v260
                %v262 = vld [vmem:[%s178 + $0x124] sm:$0xf]
                %263 = vst [vmem:[%s179 + $0xa4] sm:$0xf] %v262
                %v264 = vld [vmem:[%s178 + $0x128] sm:$0xf]
                %265 = vst [vmem:[%s179 + $0xa8] sm:$0xf] %v264
                %v266 = vld [vmem:[%s178 + $0x12c] sm:$0xf]
                %267 = vst [vmem:[%s179 + $0xac] sm:$0xf] %v266
                %v268 = vld [vmem:[%s178 + $0x130] sm:$0xf]
                %269 = vst [vmem:[%s179 + $0xb0] sm:$0xf] %v268
                %v270 = vld [vmem:[%s178 + $0x134] sm:$0xf]
                %271 = vst [vmem:[%s179 + $0xb4] sm:$0xf] %v270
                %v272 = vld [vmem:[%s178 + $0x138] sm:$0xf]
                %273 = vst [vmem:[%s179 + $0xb8] sm:$0xf] %v272
                %v274 = vld [vmem:[%s178 + $0x13c] sm:$0xf]
                %275 = vst [vmem:[%s179 + $0xbc] sm:$0xf] %v274
                %v276 = vld [vmem:[%s178 + $0x140] sm:$0xf]
                %277 = vst [vmem:[%s179 + $0xc0] sm:$0xf] %v276
                %v278 = vld [vmem:[%s178 + $0x144] sm:$0xf]
                %279 = vst [vmem:[%s179 + $0xc4] sm:$0xf] %v278
                %v280 = vld [vmem:[%s178 + $0x148] sm:$0xf]
                %281 = vst [vmem:[%s179 + $0xc8] sm:$0xf] %v280
                %v282 = vld [vmem:[%s178 + $0x14c] sm:$0xf]
                %283 = vst [vmem:[%s179 + $0xcc] sm:$0xf] %v282
                %v284 = vld [vmem:[%s178 + $0x150] sm:$0xf]
                %285 = vst [vmem:[%s179 + $0xd0] sm:$0xf] %v284
                %v286 = vld [vmem:[%s178 + $0x154] sm:$0xf]
                %287 = vst [vmem:[%s179 + $0xd4] sm:$0xf] %v286
                %v288 = vld [vmem:[%s178 + $0x158] sm:$0xf]
                %289 = vst [vmem:[%s179 + $0xd8] sm:$0xf] %v288
                %v290 = vld [vmem:[%s178 + $0x15c] sm:$0xf]
                %291 = vst [vmem:[%s179 + $0xdc] sm:$0xf] %v290
                %v292 = vld [vmem:[%s178 + $0x160] sm:$0xf]
                %293 = vst [vmem:[%s179 + $0xe0] sm:$0xf] %v292
                %v294 = vld [vmem:[%s178 + $0x164] sm:$0xf]
                %295 = vst [vmem:[%s179 + $0xe4] sm:$0xf] %v294
                %v296 = vld [vmem:[%s178 + $0x168] sm:$0xf]
                %297 = vst [vmem:[%s179 + $0xe8] sm:$0xf] %v296
                %v298 = vld [vmem:[%s178 + $0x16c] sm:$0xf]
                %299 = vst [vmem:[%s179 + $0xec] sm:$0xf] %v298
                %v300 = vld [vmem:[%s178 + $0x170] sm:$0xf]
                %301 = vst [vmem:[%s179 + $0xf0] sm:$0xf] %v300
                %v302 = vld [vmem:[%s178 + $0x174] sm:$0xf]
                %303 = vst [vmem:[%s179 + $0xf4] sm:$0xf] %v302
                %v304 = vld [vmem:[%s178 + $0x178] sm:$0xf]
                %305 = vst [vmem:[%s179 + $0xf8] sm:$0xf] %v304
                %v306 = vld [vmem:[%s178 + $0x17c] sm:$0xf]
                %307 = vst [vmem:[%s179 + $0xfc] sm:$0xf] %v306
                %v308 = vld [vmem:[%s178 + $0x200] sm:$0xf]
                %309 = vst [vmem:[%s179 + $0x100] sm:$0xf] %v308
                %v310 = vld [vmem:[%s178 + $0x204] sm:$0xf]
                %311 = vst [vmem:[%s179 + $0x104] sm:$0xf] %v310
                %v312 = vld [vmem:[%s178 + $0x208] sm:$0xf]
                %313 = vst [vmem:[%s179 + $0x108] sm:$0xf] %v312
                %v314 = vld [vmem:[%s178 + $0x20c] sm:$0xf]
                %315 = vst [vmem:[%s179 + $0x10c] sm:$0xf] %v314
                %v316 = vld [vmem:[%s178 + $0x210] sm:$0xf]
                %317 = vst [vmem:[%s179 + $0x110] sm:$0xf] %v316
                %v318 = vld [vmem:[%s178 + $0x214] sm:$0xf]
                %319 = vst [vmem:[%s179 + $0x114] sm:$0xf] %v318
                %v320 = vld [vmem:[%s178 + $0x218] sm:$0xf]
                %321 = vst [vmem:[%s179 + $0x118] sm:$0xf] %v320
                %v322 = vld [vmem:[%s178 + $0x21c] sm:$0xf]
                %323 = vst [vmem:[%s179 + $0x11c] sm:$0xf] %v322
                %v324 = vld [vmem:[%s178 + $0x220] sm:$0xf]
                %325 = vst [vmem:[%s179 + $0x120] sm:$0xf] %v324
                %v326 = vld [vmem:[%s178 + $0x224] sm:$0xf]
                %327 = vst [vmem:[%s179 + $0x124] sm:$0xf] %v326
                %v328 = vld [vmem:[%s178 + $0x228] sm:$0xf]
                %329 = vst [vmem:[%s179 + $0x128] sm:$0xf] %v328
                %v330 = vld [vmem:[%s178 + $0x22c] sm:$0xf]
                %331 = vst [vmem:[%s179 + $0x12c] sm:$0xf] %v330
                %v332 = vld [vmem:[%s178 + $0x230] sm:$0xf]
                %333 = vst [vmem:[%s179 + $0x130] sm:$0xf] %v332
                %v334 = vld [vmem:[%s178 + $0x234] sm:$0xf]
                %335 = vst [vmem:[%s179 + $0x134] sm:$0xf] %v334
                %v336 = vld [vmem:[%s178 + $0x238] sm:$0xf]
                %337 = vst [vmem:[%s179 + $0x138] sm:$0xf] %v336
                %v338 = vld [vmem:[%s178 + $0x23c] sm:$0xf]
                %339 = vst [vmem:[%s179 + $0x13c] sm:$0xf] %v338
                %v340 = vld [vmem:[%s178 + $0x240] sm:$0xf]
                %341 = vst [vmem:[%s179 + $0x140] sm:$0xf] %v340
                %v342 = vld [vmem:[%s178 + $0x244] sm:$0xf]
                %343 = vst [vmem:[%s179 + $0x144] sm:$0xf] %v342
                %v344 = vld [vmem:[%s178 + $0x248] sm:$0xf]
                %345 = vst [vmem:[%s179 + $0x148] sm:$0xf] %v344
                %v346 = vld [vmem:[%s178 + $0x24c] sm:$0xf]
                %347 = vst [vmem:[%s179 + $0x14c] sm:$0xf] %v346
                %v348 = vld [vmem:[%s178 + $0x250] sm:$0xf]
                %349 = vst [vmem:[%s179 + $0x150] sm:$0xf] %v348
                %v350 = vld [vmem:[%s178 + $0x254] sm:$0xf]
                %351 = vst [vmem:[%s179 + $0x154] sm:$0xf] %v350
                %v352 = vld [vmem:[%s178 + $0x258] sm:$0xf]
                %353 = vst [vmem:[%s179 + $0x158] sm:$0xf] %v352
                %v354 = vld [vmem:[%s178 + $0x25c] sm:$0xf]
                %355 = vst [vmem:[%s179 + $0x15c] sm:$0xf] %v354
                %v356 = vld [vmem:[%s178 + $0x260] sm:$0xf]
                %357 = vst [vmem:[%s179 + $0x160] sm:$0xf] %v356
                %v358 = vld [vmem:[%s178 + $0x264] sm:$0xf]
                %359 = vst [vmem:[%s179 + $0x164] sm:$0xf] %v358
                %v360 = vld [vmem:[%s178 + $0x268] sm:$0xf]
                %361 = vst [vmem:[%s179 + $0x168] sm:$0xf] %v360
                %v362 = vld [vmem:[%s178 + $0x26c] sm:$0xf]
                %363 = vst [vmem:[%s179 + $0x16c] sm:$0xf] %v362
                %v364 = vld [vmem:[%s178 + $0x270] sm:$0xf]
                %365 = vst [vmem:[%s179 + $0x170] sm:$0xf] %v364
                %v366 = vld [vmem:[%s178 + $0x274] sm:$0xf]
                %367 = vst [vmem:[%s179 + $0x174] sm:$0xf] %v366
                %v368 = vld [vmem:[%s178 + $0x278] sm:$0xf]
                %369 = vst [vmem:[%s179 + $0x178] sm:$0xf] %v368
                %v370 = vld [vmem:[%s178 + $0x27c] sm:$0xf]
                %371 = vst [vmem:[%s179 + $0x17c] sm:$0xf] %v370
                %v372 = vld [vmem:[%s178 + $0x300] sm:$0xf]
                %373 = vst [vmem:[%s179 + $0x180] sm:$0xf] %v372
                %v374 = vld [vmem:[%s178 + $0x304] sm:$0xf]
                %375 = vst [vmem:[%s179 + $0x184] sm:$0xf] %v374
                %v376 = vld [vmem:[%s178 + $0x308] sm:$0xf]
                %377 = vst [vmem:[%s179 + $0x188] sm:$0xf] %v376
                %v378 = vld [vmem:[%s178 + $0x30c] sm:$0xf]
                %379 = vst [vmem:[%s179 + $0x18c] sm:$0xf] %v378
                %v380 = vld [vmem:[%s178 + $0x310] sm:$0xf]
                %381 = vst [vmem:[%s179 + $0x190] sm:$0xf] %v380
                %v382 = vld [vmem:[%s178 + $0x314] sm:$0xf]
                %383 = vst [vmem:[%s179 + $0x194] sm:$0xf] %v382
                %v384 = vld [vmem:[%s178 + $0x318] sm:$0xf]
                %385 = vst [vmem:[%s179 + $0x198] sm:$0xf] %v384
                %v386 = vld [vmem:[%s178 + $0x31c] sm:$0xf]
                %387 = vst [vmem:[%s179 + $0x19c] sm:$0xf] %v386
                %v388 = vld [vmem:[%s178 + $0x320] sm:$0xf]
                %389 = vst [vmem:[%s179 + $0x1a0] sm:$0xf] %v388
                %v390 = vld [vmem:[%s178 + $0x324] sm:$0xf]
                %391 = vst [vmem:[%s179 + $0x1a4] sm:$0xf] %v390
                %v392 = vld [vmem:[%s178 + $0x328] sm:$0xf]
                %393 = vst [vmem:[%s179 + $0x1a8] sm:$0xf] %v392
                %v394 = vld [vmem:[%s178 + $0x32c] sm:$0xf]
                %395 = vst [vmem:[%s179 + $0x1ac] sm:$0xf] %v394
                %v396 = vld [vmem:[%s178 + $0x330] sm:$0xf]
                %397 = vst [vmem:[%s179 + $0x1b0] sm:$0xf] %v396
                %v398 = vld [vmem:[%s178 + $0x334] sm:$0xf]
                %399 = vst [vmem:[%s179 + $0x1b4] sm:$0xf] %v398
                %v400 = vld [vmem:[%s178 + $0x338] sm:$0xf]
                %401 = vst [vmem:[%s179 + $0x1b8] sm:$0xf] %v400
                %v402 = vld [vmem:[%s178 + $0x33c] sm:$0xf]
                %403 = vst [vmem:[%s179 + $0x1bc] sm:$0xf] %v402
                %v404 = vld [vmem:[%s178 + $0x340] sm:$0xf]
                %405 = vst [vmem:[%s179 + $0x1c0] sm:$0xf] %v404
                %v406 = vld [vmem:[%s178 + $0x344] sm:$0xf]
                %407 = vst [vmem:[%s179 + $0x1c4] sm:$0xf] %v406
                %v408 = vld [vmem:[%s178 + $0x348] sm:$0xf]
                %409 = vst [vmem:[%s179 + $0x1c8] sm:$0xf] %v408
                %v410 = vld [vmem:[%s178 + $0x34c] sm:$0xf]
                %411 = vst [vmem:[%s179 + $0x1cc] sm:$0xf] %v410
                %v412 = vld [vmem:[%s178 + $0x350] sm:$0xf]
                %413 = vst [vmem:[%s179 + $0x1d0] sm:$0xf] %v412
                %v414 = vld [vmem:[%s178 + $0x354] sm:$0xf]
                %415 = vst [vmem:[%s179 + $0x1d4] sm:$0xf] %v414
                %v416 = vld [vmem:[%s178 + $0x358] sm:$0xf]
                %417 = vst [vmem:[%s179 + $0x1d8] sm:$0xf] %v416
                %v418 = vld [vmem:[%s178 + $0x35c] sm:$0xf]
                %419 = vst [vmem:[%s179 + $0x1dc] sm:$0xf] %v418
                %v420 = vld [vmem:[%s178 + $0x360] sm:$0xf]
                %421 = vst [vmem:[%s179 + $0x1e0] sm:$0xf] %v420
                %v422 = vld [vmem:[%s178 + $0x364] sm:$0xf]
                %423 = vst [vmem:[%s179 + $0x1e4] sm:$0xf] %v422
                %v424 = vld [vmem:[%s178 + $0x368] sm:$0xf]
                %425 = vst [vmem:[%s179 + $0x1e8] sm:$0xf] %v424
                %v426 = vld [vmem:[%s178 + $0x36c] sm:$0xf]
                %427 = vst [vmem:[%s179 + $0x1ec] sm:$0xf] %v426
                %v428 = vld [vmem:[%s178 + $0x370] sm:$0xf]
                %429 = vst [vmem:[%s179 + $0x1f0] sm:$0xf] %v428
                %v430 = vld [vmem:[%s178 + $0x374] sm:$0xf]
                %431 = vst [vmem:[%s179 + $0x1f4] sm:$0xf] %v430
                %v432 = vld [vmem:[%s178 + $0x378] sm:$0xf]
                %433 = vst [vmem:[%s179 + $0x1f8] sm:$0xf] %v432
                %v434 = vld [vmem:[%s178 + $0x37c] sm:$0xf]
                %435 = vst [vmem:[%s179 + $0x1fc] sm:$0xf] %v434
              $region45: #{lenet5_forward.5} parent=39 // loop_footer
                %s177 = sadd.s32 1, %s173
              $region46: #{lenet5_forward.5} parent=39 // loop_footer_branch
                %172 = sbr.rel target = $region42
              $region47: #{lenet5_forward.5} parent=39 // loop_exit
                _
            $region40: #{lenet5_forward.5} parent=31 // pred_fallthru
              _
          $region32: #{lenet5_forward.5} parent=27 // pred_fallthru
            _
          %711 = vnop
        $region28: #{lenet5_forward.5} parent=23 // pred_fallthru
          _
        // Predicated region
        $region66: #{lenet5_forward.5} parent=23 // pred_check
          %p712 = pneg %p56
        $region67: #{lenet5_forward.5} parent=23 // pred_check_branch
          %714 = sbr.rel (%p712) target = $region69
        $region68: #{lenet5_forward.5} parent=23 // pred_region
          %s715 = sand.u32 %s46, 1
          %s716 = sand.u32 %s46, 1
          %s717 = smul.addr %s716, 1024
          %s718 = scalar_lea.vmem [#allocation3], %s717
          %s719 = smul.u32 32, %s10
          %s720 = smul.addr %s719, 8
          %s721 = scalar_lea.vmem %s1, %s720
          // Predicated region
          $region70: #{lenet5_forward.5} parent=68 // pred_check
            _
          $region71: #{lenet5_forward.5} parent=68 // pred_check_branch
            %723 = sbr.rel (0) target = $region73
          $region72: #{lenet5_forward.5} parent=68 // pred_region
            // Predicated region
            $region74: #{lenet5_forward.5} parent=72 // pred_check
              _
            $region75: #{lenet5_forward.5} parent=72 // pred_check_branch
              %725 = sbr.rel (0) target = $region77
            $region76: #{lenet5_forward.5} parent=72 // pred_region
              // Predicated region
              $region89: #{lenet5_forward.5} parent=76 // pred_check
                _
              $region90: #{lenet5_forward.5} parent=76 // pred_check_branch
                %994 = sbr.rel (0) target = $region92
              $region91: #{lenet5_forward.5} parent=76 // pred_region
                loop: start=0, step=1, limit=1
                $region93: #{lenet5_forward.5} parent=91 // loop_pre_header
                  _
                $region94: #{lenet5_forward.5} parent=91 // loop_header
                  %s996 = sphi 0, %s1000
                  %p997 = scmp.ge.s32.totalorder %s996, 1
                  %s1001 = sphi %s721, %s721
                  %s1002 = sphi %s718, %s718
                $region95: #{lenet5_forward.5} parent=91 // loop_header_branch
                  %999 = sbr.rel (%p997) target = $region99
                $region96: #{lenet5_forward.5} parent=91 // loop_body
                  %v1003 = vld [vmem:[%s1001] sm:$0xff]
                  %1004 = vst [vmem:[%s1002] sm:$0xff] %v1003
                  %v1005 = vld [vmem:[%s1001 + $0x8] sm:$0xff]
                  %1006 = vst [vmem:[%s1002 + $0x8] sm:$0xff] %v1005
                  %v1007 = vld [vmem:[%s1001 + $0x10] sm:$0xff]
                  %1008 = vst [vmem:[%s1002 + $0x10] sm:$0xff] %v1007
                  %v1009 = vld [vmem:[%s1001 + $0x18] sm:$0xff]
                  %1010 = vst [vmem:[%s1002 + $0x18] sm:$0xff] %v1009
                  %v1011 = vld [vmem:[%s1001 + $0x20] sm:$0xff]
                  %1012 = vst [vmem:[%s1002 + $0x20] sm:$0xff] %v1011
                  %v1013 = vld [vmem:[%s1001 + $0x28] sm:$0xff]
                  %1014 = vst [vmem:[%s1002 + $0x28] sm:$0xff] %v1013
                  %v1015 = vld [vmem:[%s1001 + $0x30] sm:$0xff]
                  %1016 = vst [vmem:[%s1002 + $0x30] sm:$0xff] %v1015
                  %v1017 = vld [vmem:[%s1001 + $0x38] sm:$0xff]
                  %1018 = vst [vmem:[%s1002 + $0x38] sm:$0xff] %v1017
                  %v1019 = vld [vmem:[%s1001 + $0x40] sm:$0xff]
                  %1020 = vst [vmem:[%s1002 + $0x40] sm:$0xff] %v1019
                  %v1021 = vld [vmem:[%s1001 + $0x48] sm:$0xff]
                  %1022 = vst [vmem:[%s1002 + $0x48] sm:$0xff] %v1021
                  %v1023 = vld [vmem:[%s1001 + $0x50] sm:$0xff]
                  %1024 = vst [vmem:[%s1002 + $0x50] sm:$0xff] %v1023
                  %v1025 = vld [vmem:[%s1001 + $0x58] sm:$0xff]
                  %1026 = vst [vmem:[%s1002 + $0x58] sm:$0xff] %v1025
                  %v1027 = vld [vmem:[%s1001 + $0x60] sm:$0xff]
                  %1028 = vst [vmem:[%s1002 + $0x60] sm:$0xff] %v1027
                  %v1029 = vld [vmem:[%s1001 + $0x68] sm:$0xff]
                  %1030 = vst [vmem:[%s1002 + $0x68] sm:$0xff] %v1029
                  %v1031 = vld [vmem:[%s1001 + $0x70] sm:$0xff]
                  %1032 = vst [vmem:[%s1002 + $0x70] sm:$0xff] %v1031
                  %v1033 = vld [vmem:[%s1001 + $0x78] sm:$0xff]
                  %1034 = vst [vmem:[%s1002 + $0x78] sm:$0xff] %v1033
                  %v1035 = vld [vmem:[%s1001 + $0x80] sm:$0xff]
                  %1036 = vst [vmem:[%s1002 + $0x80] sm:$0xff] %v1035
                  %v1037 = vld [vmem:[%s1001 + $0x88] sm:$0xff]
                  %1038 = vst [vmem:[%s1002 + $0x88] sm:$0xff] %v1037
                  %v1039 = vld [vmem:[%s1001 + $0x90] sm:$0xff]
                  %1040 = vst [vmem:[%s1002 + $0x90] sm:$0xff] %v1039
                  %v1041 = vld [vmem:[%s1001 + $0x98] sm:$0xff]
                  %1042 = vst [vmem:[%s1002 + $0x98] sm:$0xff] %v1041
                  %v1043 = vld [vmem:[%s1001 + $0xa0] sm:$0xff]
                  %1044 = vst [vmem:[%s1002 + $0xa0] sm:$0xff] %v1043
                  %v1045 = vld [vmem:[%s1001 + $0xa8] sm:$0xff]
                  %1046 = vst [vmem:[%s1002 + $0xa8] sm:$0xff] %v1045
                  %v1047 = vld [vmem:[%s1001 + $0xb0] sm:$0xff]
                  %1048 = vst [vmem:[%s1002 + $0xb0] sm:$0xff] %v1047
                  %v1049 = vld [vmem:[%s1001 + $0xb8] sm:$0xff]
                  %1050 = vst [vmem:[%s1002 + $0xb8] sm:$0xff] %v1049
                  %v1051 = vld [vmem:[%s1001 + $0xc0] sm:$0xff]
                  %1052 = vst [vmem:[%s1002 + $0xc0] sm:$0xff] %v1051
                  %v1053 = vld [vmem:[%s1001 + $0xc8] sm:$0xff]
                  %1054 = vst [vmem:[%s1002 + $0xc8] sm:$0xff] %v1053
                  %v1055 = vld [vmem:[%s1001 + $0xd0] sm:$0xff]
                  %1056 = vst [vmem:[%s1002 + $0xd0] sm:$0xff] %v1055
                  %v1057 = vld [vmem:[%s1001 + $0xd8] sm:$0xff]
                  %1058 = vst [vmem:[%s1002 + $0xd8] sm:$0xff] %v1057
                  %v1059 = vld [vmem:[%s1001 + $0xe0] sm:$0xff]
                  %1060 = vst [vmem:[%s1002 + $0xe0] sm:$0xff] %v1059
                  %v1061 = vld [vmem:[%s1001 + $0xe8] sm:$0xff]
                  %1062 = vst [vmem:[%s1002 + $0xe8] sm:$0xff] %v1061
                  %v1063 = vld [vmem:[%s1001 + $0xf0] sm:$0xff]
                  %1064 = vst [vmem:[%s1002 + $0xf0] sm:$0xff] %v1063
                  %v1065 = vld [vmem:[%s1001 + $0xf8] sm:$0xff]
                  %1066 = vst [vmem:[%s1002 + $0xf8] sm:$0xff] %v1065
                  %v1067 = vld [vmem:[%s1001 + $0x200] sm:$0xff]
                  %1068 = vst [vmem:[%s1002 + $0x100] sm:$0xff] %v1067
                  %v1069 = vld [vmem:[%s1001 + $0x208] sm:$0xff]
                  %1070 = vst [vmem:[%s1002 + $0x108] sm:$0xff] %v1069
                  %v1071 = vld [vmem:[%s1001 + $0x210] sm:$0xff]
                  %1072 = vst [vmem:[%s1002 + $0x110] sm:$0xff] %v1071
                  %v1073 = vld [vmem:[%s1001 + $0x218] sm:$0xff]
                  %1074 = vst [vmem:[%s1002 + $0x118] sm:$0xff] %v1073
                  %v1075 = vld [vmem:[%s1001 + $0x220] sm:$0xff]
                  %1076 = vst [vmem:[%s1002 + $0x120] sm:$0xff] %v1075
                  %v1077 = vld [vmem:[%s1001 + $0x228] sm:$0xff]
                  %1078 = vst [vmem:[%s1002 + $0x128] sm:$0xff] %v1077
                  %v1079 = vld [vmem:[%s1001 + $0x230] sm:$0xff]
                  %1080 = vst [vmem:[%s1002 + $0x130] sm:$0xff] %v1079
                  %v1081 = vld [vmem:[%s1001 + $0x238] sm:$0xff]
                  %1082 = vst [vmem:[%s1002 + $0x138] sm:$0xff] %v1081
                  %v1083 = vld [vmem:[%s1001 + $0x240] sm:$0xff]
                  %1084 = vst [vmem:[%s1002 + $0x140] sm:$0xff] %v1083
                  %v1085 = vld [vmem:[%s1001 + $0x248] sm:$0xff]
                  %1086 = vst [vmem:[%s1002 + $0x148] sm:$0xff] %v1085
                  %v1087 = vld [vmem:[%s1001 + $0x250] sm:$0xff]
                  %1088 = vst [vmem:[%s1002 + $0x150] sm:$0xff] %v1087
                  %v1089 = vld [vmem:[%s1001 + $0x258] sm:$0xff]
                  %1090 = vst [vmem:[%s1002 + $0x158] sm:$0xff] %v1089
                  %v1091 = vld [vmem:[%s1001 + $0x260] sm:$0xff]
                  %1092 = vst [vmem:[%s1002 + $0x160] sm:$0xff] %v1091
                  %v1093 = vld [vmem:[%s1001 + $0x268] sm:$0xff]
                  %1094 = vst [vmem:[%s1002 + $0x168] sm:$0xff] %v1093
                  %v1095 = vld [vmem:[%s1001 + $0x270] sm:$0xff]
                  %1096 = vst [vmem:[%s1002 + $0x170] sm:$0xff] %v1095
                  %v1097 = vld [vmem:[%s1001 + $0x278] sm:$0xff]
                  %1098 = vst [vmem:[%s1002 + $0x178] sm:$0xff] %v1097
                  %v1099 = vld [vmem:[%s1001 + $0x280] sm:$0xff]
                  %1100 = vst [vmem:[%s1002 + $0x180] sm:$0xff] %v1099
                  %v1101 = vld [vmem:[%s1001 + $0x288] sm:$0xff]
                  %1102 = vst [vmem:[%s1002 + $0x188] sm:$0xff] %v1101
                  %v1103 = vld [vmem:[%s1001 + $0x290] sm:$0xff]
                  %1104 = vst [vmem:[%s1002 + $0x190] sm:$0xff] %v1103
                  %v1105 = vld [vmem:[%s1001 + $0x298] sm:$0xff]
                  %1106 = vst [vmem:[%s1002 + $0x198] sm:$0xff] %v1105
                  %v1107 = vld [vmem:[%s1001 + $0x2a0] sm:$0xff]
                  %1108 = vst [vmem:[%s1002 + $0x1a0] sm:$0xff] %v1107
                  %v1109 = vld [vmem:[%s1001 + $0x2a8] sm:$0xff]
                  %1110 = vst [vmem:[%s1002 + $0x1a8] sm:$0xff] %v1109
                  %v1111 = vld [vmem:[%s1001 + $0x2b0] sm:$0xff]
                  %1112 = vst [vmem:[%s1002 + $0x1b0] sm:$0xff] %v1111
                  %v1113 = vld [vmem:[%s1001 + $0x2b8] sm:$0xff]
                  %1114 = vst [vmem:[%s1002 + $0x1b8] sm:$0xff] %v1113
                  %v1115 = vld [vmem:[%s1001 + $0x2c0] sm:$0xff]
                  %1116 = vst [vmem:[%s1002 + $0x1c0] sm:$0xff] %v1115
                  %v1117 = vld [vmem:[%s1001 + $0x2c8] sm:$0xff]
                  %1118 = vst [vmem:[%s1002 + $0x1c8] sm:$0xff] %v1117
                  %v1119 = vld [vmem:[%s1001 + $0x2d0] sm:$0xff]
                  %1120 = vst [vmem:[%s1002 + $0x1d0] sm:$0xff] %v1119
                  %v1121 = vld [vmem:[%s1001 + $0x2d8] sm:$0xff]
                  %1122 = vst [vmem:[%s1002 + $0x1d8] sm:$0xff] %v1121
                  %v1123 = vld [vmem:[%s1001 + $0x2e0] sm:$0xff]
                  %1124 = vst [vmem:[%s1002 + $0x1e0] sm:$0xff] %v1123
                  %v1125 = vld [vmem:[%s1001 + $0x2e8] sm:$0xff]
                  %1126 = vst [vmem:[%s1002 + $0x1e8] sm:$0xff] %v1125
                  %v1127 = vld [vmem:[%s1001 + $0x2f0] sm:$0xff]
                  %1128 = vst [vmem:[%s1002 + $0x1f0] sm:$0xff] %v1127
                  %v1129 = vld [vmem:[%s1001 + $0x2f8] sm:$0xff]
                  %1130 = vst [vmem:[%s1002 + $0x1f8] sm:$0xff] %v1129
                  %v1131 = vld [vmem:[%s1001 + $0x400] sm:$0xff]
                  %1132 = vst [vmem:[%s1002 + $0x200] sm:$0xff] %v1131
                  %v1133 = vld [vmem:[%s1001 + $0x408] sm:$0xff]
                  %1134 = vst [vmem:[%s1002 + $0x208] sm:$0xff] %v1133
                  %v1135 = vld [vmem:[%s1001 + $0x410] sm:$0xff]
                  %1136 = vst [vmem:[%s1002 + $0x210] sm:$0xff] %v1135
                  %v1137 = vld [vmem:[%s1001 + $0x418] sm:$0xff]
                  %1138 = vst [vmem:[%s1002 + $0x218] sm:$0xff] %v1137
                  %v1139 = vld [vmem:[%s1001 + $0x420] sm:$0xff]
                  %1140 = vst [vmem:[%s1002 + $0x220] sm:$0xff] %v1139
                  %v1141 = vld [vmem:[%s1001 + $0x428] sm:$0xff]
                  %1142 = vst [vmem:[%s1002 + $0x228] sm:$0xff] %v1141
                  %v1143 = vld [vmem:[%s1001 + $0x430] sm:$0xff]
                  %1144 = vst [vmem:[%s1002 + $0x230] sm:$0xff] %v1143
                  %v1145 = vld [vmem:[%s1001 + $0x438] sm:$0xff]
                  %1146 = vst [vmem:[%s1002 + $0x238] sm:$0xff] %v1145
                  %v1147 = vld [vmem:[%s1001 + $0x440] sm:$0xff]
                  %1148 = vst [vmem:[%s1002 + $0x240] sm:$0xff] %v1147
                  %v1149 = vld [vmem:[%s1001 + $0x448] sm:$0xff]
                  %1150 = vst [vmem:[%s1002 + $0x248] sm:$0xff] %v1149
                  %v1151 = vld [vmem:[%s1001 + $0x450] sm:$0xff]
                  %1152 = vst [vmem:[%s1002 + $0x250] sm:$0xff] %v1151
                  %v1153 = vld [vmem:[%s1001 + $0x458] sm:$0xff]
                  %1154 = vst [vmem:[%s1002 + $0x258] sm:$0xff] %v1153
                  %v1155 = vld [vmem:[%s1001 + $0x460] sm:$0xff]
                  %1156 = vst [vmem:[%s1002 + $0x260] sm:$0xff] %v1155
                  %v1157 = vld [vmem:[%s1001 + $0x468] sm:$0xff]
                  %1158 = vst [vmem:[%s1002 + $0x268] sm:$0xff] %v1157
                  %v1159 = vld [vmem:[%s1001 + $0x470] sm:$0xff]
                  %1160 = vst [vmem:[%s1002 + $0x270] sm:$0xff] %v1159
                  %v1161 = vld [vmem:[%s1001 + $0x478] sm:$0xff]
                  %1162 = vst [vmem:[%s1002 + $0x278] sm:$0xff] %v1161
                  %v1163 = vld [vmem:[%s1001 + $0x480] sm:$0xff]
                  %1164 = vst [vmem:[%s1002 + $0x280] sm:$0xff] %v1163
                  %v1165 = vld [vmem:[%s1001 + $0x488] sm:$0xff]
                  %1166 = vst [vmem:[%s1002 + $0x288] sm:$0xff] %v1165
                  %v1167 = vld [vmem:[%s1001 + $0x490] sm:$0xff]
                  %1168 = vst [vmem:[%s1002 + $0x290] sm:$0xff] %v1167
                  %v1169 = vld [vmem:[%s1001 + $0x498] sm:$0xff]
                  %1170 = vst [vmem:[%s1002 + $0x298] sm:$0xff] %v1169
                  %v1171 = vld [vmem:[%s1001 + $0x4a0] sm:$0xff]
                  %1172 = vst [vmem:[%s1002 + $0x2a0] sm:$0xff] %v1171
                  %v1173 = vld [vmem:[%s1001 + $0x4a8] sm:$0xff]
                  %1174 = vst [vmem:[%s1002 + $0x2a8] sm:$0xff] %v1173
                  %v1175 = vld [vmem:[%s1001 + $0x4b0] sm:$0xff]
                  %1176 = vst [vmem:[%s1002 + $0x2b0] sm:$0xff] %v1175
                  %v1177 = vld [vmem:[%s1001 + $0x4b8] sm:$0xff]
                  %1178 = vst [vmem:[%s1002 + $0x2b8] sm:$0xff] %v1177
                  %v1179 = vld [vmem:[%s1001 + $0x4c0] sm:$0xff]
                  %1180 = vst [vmem:[%s1002 + $0x2c0] sm:$0xff] %v1179
                  %v1181 = vld [vmem:[%s1001 + $0x4c8] sm:$0xff]
                  %1182 = vst [vmem:[%s1002 + $0x2c8] sm:$0xff] %v1181
                  %v1183 = vld [vmem:[%s1001 + $0x4d0] sm:$0xff]
                  %1184 = vst [vmem:[%s1002 + $0x2d0] sm:$0xff] %v1183
                  %v1185 = vld [vmem:[%s1001 + $0x4d8] sm:$0xff]
                  %1186 = vst [vmem:[%s1002 + $0x2d8] sm:$0xff] %v1185
                  %v1187 = vld [vmem:[%s1001 + $0x4e0] sm:$0xff]
                  %1188 = vst [vmem:[%s1002 + $0x2e0] sm:$0xff] %v1187
                  %v1189 = vld [vmem:[%s1001 + $0x4e8] sm:$0xff]
                  %1190 = vst [vmem:[%s1002 + $0x2e8] sm:$0xff] %v1189
                  %v1191 = vld [vmem:[%s1001 + $0x4f0] sm:$0xff]
                  %1192 = vst [vmem:[%s1002 + $0x2f0] sm:$0xff] %v1191
                  %v1193 = vld [vmem:[%s1001 + $0x4f8] sm:$0xff]
                  %1194 = vst [vmem:[%s1002 + $0x2f8] sm:$0xff] %v1193
                  %v1195 = vld [vmem:[%s1001 + $0x600] sm:$0xff]
                  %1196 = vst [vmem:[%s1002 + $0x300] sm:$0xff] %v1195
                  %v1197 = vld [vmem:[%s1001 + $0x608] sm:$0xff]
                  %1198 = vst [vmem:[%s1002 + $0x308] sm:$0xff] %v1197
                  %v1199 = vld [vmem:[%s1001 + $0x610] sm:$0xff]
                  %1200 = vst [vmem:[%s1002 + $0x310] sm:$0xff] %v1199
                  %v1201 = vld [vmem:[%s1001 + $0x618] sm:$0xff]
                  %1202 = vst [vmem:[%s1002 + $0x318] sm:$0xff] %v1201
                  %v1203 = vld [vmem:[%s1001 + $0x620] sm:$0xff]
                  %1204 = vst [vmem:[%s1002 + $0x320] sm:$0xff] %v1203
                  %v1205 = vld [vmem:[%s1001 + $0x628] sm:$0xff]
                  %1206 = vst [vmem:[%s1002 + $0x328] sm:$0xff] %v1205
                  %v1207 = vld [vmem:[%s1001 + $0x630] sm:$0xff]
                  %1208 = vst [vmem:[%s1002 + $0x330] sm:$0xff] %v1207
                  %v1209 = vld [vmem:[%s1001 + $0x638] sm:$0xff]
                  %1210 = vst [vmem:[%s1002 + $0x338] sm:$0xff] %v1209
                  %v1211 = vld [vmem:[%s1001 + $0x640] sm:$0xff]
                  %1212 = vst [vmem:[%s1002 + $0x340] sm:$0xff] %v1211
                  %v1213 = vld [vmem:[%s1001 + $0x648] sm:$0xff]
                  %1214 = vst [vmem:[%s1002 + $0x348] sm:$0xff] %v1213
                  %v1215 = vld [vmem:[%s1001 + $0x650] sm:$0xff]
                  %1216 = vst [vmem:[%s1002 + $0x350] sm:$0xff] %v1215
                  %v1217 = vld [vmem:[%s1001 + $0x658] sm:$0xff]
                  %1218 = vst [vmem:[%s1002 + $0x358] sm:$0xff] %v1217
                  %v1219 = vld [vmem:[%s1001 + $0x660] sm:$0xff]
                  %1220 = vst [vmem:[%s1002 + $0x360] sm:$0xff] %v1219
                  %v1221 = vld [vmem:[%s1001 + $0x668] sm:$0xff]
                  %1222 = vst [vmem:[%s1002 + $0x368] sm:$0xff] %v1221
                  %v1223 = vld [vmem:[%s1001 + $0x670] sm:$0xff]
                  %1224 = vst [vmem:[%s1002 + $0x370] sm:$0xff] %v1223
                  %v1225 = vld [vmem:[%s1001 + $0x678] sm:$0xff]
                  %1226 = vst [vmem:[%s1002 + $0x378] sm:$0xff] %v1225
                  %v1227 = vld [vmem:[%s1001 + $0x680] sm:$0xff]
                  %1228 = vst [vmem:[%s1002 + $0x380] sm:$0xff] %v1227
                  %v1229 = vld [vmem:[%s1001 + $0x688] sm:$0xff]
                  %1230 = vst [vmem:[%s1002 + $0x388] sm:$0xff] %v1229
                  %v1231 = vld [vmem:[%s1001 + $0x690] sm:$0xff]
                  %1232 = vst [vmem:[%s1002 + $0x390] sm:$0xff] %v1231
                  %v1233 = vld [vmem:[%s1001 + $0x698] sm:$0xff]
                  %1234 = vst [vmem:[%s1002 + $0x398] sm:$0xff] %v1233
                  %v1235 = vld [vmem:[%s1001 + $0x6a0] sm:$0xff]
                  %1236 = vst [vmem:[%s1002 + $0x3a0] sm:$0xff] %v1235
                  %v1237 = vld [vmem:[%s1001 + $0x6a8] sm:$0xff]
                  %1238 = vst [vmem:[%s1002 + $0x3a8] sm:$0xff] %v1237
                  %v1239 = vld [vmem:[%s1001 + $0x6b0] sm:$0xff]
                  %1240 = vst [vmem:[%s1002 + $0x3b0] sm:$0xff] %v1239
                  %v1241 = vld [vmem:[%s1001 + $0x6b8] sm:$0xff]
                  %1242 = vst [vmem:[%s1002 + $0x3b8] sm:$0xff] %v1241
                  %v1243 = vld [vmem:[%s1001 + $0x6c0] sm:$0xff]
                  %1244 = vst [vmem:[%s1002 + $0x3c0] sm:$0xff] %v1243
                  %v1245 = vld [vmem:[%s1001 + $0x6c8] sm:$0xff]
                  %1246 = vst [vmem:[%s1002 + $0x3c8] sm:$0xff] %v1245
                  %v1247 = vld [vmem:[%s1001 + $0x6d0] sm:$0xff]
                  %1248 = vst [vmem:[%s1002 + $0x3d0] sm:$0xff] %v1247
                  %v1249 = vld [vmem:[%s1001 + $0x6d8] sm:$0xff]
                  %1250 = vst [vmem:[%s1002 + $0x3d8] sm:$0xff] %v1249
                  %v1251 = vld [vmem:[%s1001 + $0x6e0] sm:$0xff]
                  %1252 = vst [vmem:[%s1002 + $0x3e0] sm:$0xff] %v1251
                  %v1253 = vld [vmem:[%s1001 + $0x6e8] sm:$0xff]
                  %1254 = vst [vmem:[%s1002 + $0x3e8] sm:$0xff] %v1253
                  %v1255 = vld [vmem:[%s1001 + $0x6f0] sm:$0xff]
                  %1256 = vst [vmem:[%s1002 + $0x3f0] sm:$0xff] %v1255
                  %v1257 = vld [vmem:[%s1001 + $0x6f8] sm:$0xff]
                  %1258 = vst [vmem:[%s1002 + $0x3f8] sm:$0xff] %v1257
                $region97: #{lenet5_forward.5} parent=91 // loop_footer
                  %s1000 = sadd.s32 1, %s996
                $region98: #{lenet5_forward.5} parent=91 // loop_footer_branch
                  %995 = sbr.rel target = $region94
                $region99: #{lenet5_forward.5} parent=91 // loop_exit
                  _
              $region92: #{lenet5_forward.5} parent=76 // pred_fallthru
                _
              // Predicated region
              $region100: #{lenet5_forward.5} parent=76 // pred_check
                _
              $region101: #{lenet5_forward.5} parent=76 // pred_check_branch
                %1260 = sbr.rel target = $region103
              $region102: #{lenet5_forward.5} parent=76 // pred_region
                _
              $region103: #{lenet5_forward.5} parent=76 // pred_fallthru
                _
            $region77: #{lenet5_forward.5} parent=72 // pred_fallthru
              _
            // Predicated region
            $region78: #{lenet5_forward.5} parent=72 // pred_check
              _
            $region79: #{lenet5_forward.5} parent=72 // pred_check_branch
              %727 = sbr.rel target = $region81
            $region80: #{lenet5_forward.5} parent=72 // pred_region
              loop: start=0, step=1, limit=1
              $region82: #{lenet5_forward.5} parent=80 // loop_pre_header
                _
              $region83: #{lenet5_forward.5} parent=80 // loop_header
                %s730 = sphi 0, %s734
                %p731 = scmp.ge.s32.totalorder %s730, 1
                %s735 = sphi %s721, %s721
                %s736 = sphi %s718, %s718
              $region84: #{lenet5_forward.5} parent=80 // loop_header_branch
                %733 = sbr.rel (%p731) target = $region88
              $region85: #{lenet5_forward.5} parent=80 // loop_body
                %v737 = vld [vmem:[%s735] sm:$0xff]
                %738 = vst [vmem:[%s736] sm:$0xff] %v737
                %v739 = vld [vmem:[%s735 + $0x8] sm:$0xff]
                %740 = vst [vmem:[%s736 + $0x8] sm:$0xff] %v739
                %v741 = vld [vmem:[%s735 + $0x10] sm:$0xff]
                %742 = vst [vmem:[%s736 + $0x10] sm:$0xff] %v741
                %v743 = vld [vmem:[%s735 + $0x18] sm:$0xff]
                %744 = vst [vmem:[%s736 + $0x18] sm:$0xff] %v743
                %v745 = vld [vmem:[%s735 + $0x20] sm:$0xff]
                %746 = vst [vmem:[%s736 + $0x20] sm:$0xff] %v745
                %v747 = vld [vmem:[%s735 + $0x28] sm:$0xff]
                %748 = vst [vmem:[%s736 + $0x28] sm:$0xff] %v747
                %v749 = vld [vmem:[%s735 + $0x30] sm:$0xff]
                %750 = vst [vmem:[%s736 + $0x30] sm:$0xff] %v749
                %v751 = vld [vmem:[%s735 + $0x38] sm:$0xff]
                %752 = vst [vmem:[%s736 + $0x38] sm:$0xff] %v751
                %v753 = vld [vmem:[%s735 + $0x40] sm:$0xff]
                %754 = vst [vmem:[%s736 + $0x40] sm:$0xff] %v753
                %v755 = vld [vmem:[%s735 + $0x48] sm:$0xff]
                %756 = vst [vmem:[%s736 + $0x48] sm:$0xff] %v755
                %v757 = vld [vmem:[%s735 + $0x50] sm:$0xff]
                %758 = vst [vmem:[%s736 + $0x50] sm:$0xff] %v757
                %v759 = vld [vmem:[%s735 + $0x58] sm:$0xff]
                %760 = vst [vmem:[%s736 + $0x58] sm:$0xff] %v759
                %v761 = vld [vmem:[%s735 + $0x60] sm:$0xff]
                %762 = vst [vmem:[%s736 + $0x60] sm:$0xff] %v761
                %v763 = vld [vmem:[%s735 + $0x68] sm:$0xff]
                %764 = vst [vmem:[%s736 + $0x68] sm:$0xff] %v763
                %v765 = vld [vmem:[%s735 + $0x70] sm:$0xff]
                %766 = vst [vmem:[%s736 + $0x70] sm:$0xff] %v765
                %v767 = vld [vmem:[%s735 + $0x78] sm:$0xff]
                %768 = vst [vmem:[%s736 + $0x78] sm:$0xff] %v767
                %v769 = vld [vmem:[%s735 + $0x80] sm:$0xff]
                %770 = vst [vmem:[%s736 + $0x80] sm:$0xff] %v769
                %v771 = vld [vmem:[%s735 + $0x88] sm:$0xff]
                %772 = vst [vmem:[%s736 + $0x88] sm:$0xff] %v771
                %v773 = vld [vmem:[%s735 + $0x90] sm:$0xff]
                %774 = vst [vmem:[%s736 + $0x90] sm:$0xff] %v773
                %v775 = vld [vmem:[%s735 + $0x98] sm:$0xff]
                %776 = vst [vmem:[%s736 + $0x98] sm:$0xff] %v775
                %v777 = vld [vmem:[%s735 + $0xa0] sm:$0xff]
                %778 = vst [vmem:[%s736 + $0xa0] sm:$0xff] %v777
                %v779 = vld [vmem:[%s735 + $0xa8] sm:$0xff]
                %780 = vst [vmem:[%s736 + $0xa8] sm:$0xff] %v779
                %v781 = vld [vmem:[%s735 + $0xb0] sm:$0xff]
                %782 = vst [vmem:[%s736 + $0xb0] sm:$0xff] %v781
                %v783 = vld [vmem:[%s735 + $0xb8] sm:$0xff]
                %784 = vst [vmem:[%s736 + $0xb8] sm:$0xff] %v783
                %v785 = vld [vmem:[%s735 + $0xc0] sm:$0xff]
                %786 = vst [vmem:[%s736 + $0xc0] sm:$0xff] %v785
                %v787 = vld [vmem:[%s735 + $0xc8] sm:$0xff]
                %788 = vst [vmem:[%s736 + $0xc8] sm:$0xff] %v787
                %v789 = vld [vmem:[%s735 + $0xd0] sm:$0xff]
                %790 = vst [vmem:[%s736 + $0xd0] sm:$0xff] %v789
                %v791 = vld [vmem:[%s735 + $0xd8] sm:$0xff]
                %792 = vst [vmem:[%s736 + $0xd8] sm:$0xff] %v791
                %v793 = vld [vmem:[%s735 + $0xe0] sm:$0xff]
                %794 = vst [vmem:[%s736 + $0xe0] sm:$0xff] %v793
                %v795 = vld [vmem:[%s735 + $0xe8] sm:$0xff]
                %796 = vst [vmem:[%s736 + $0xe8] sm:$0xff] %v795
                %v797 = vld [vmem:[%s735 + $0xf0] sm:$0xff]
                %798 = vst [vmem:[%s736 + $0xf0] sm:$0xff] %v797
                %v799 = vld [vmem:[%s735 + $0xf8] sm:$0xff]
                %800 = vst [vmem:[%s736 + $0xf8] sm:$0xff] %v799
                %v801 = vld [vmem:[%s735 + $0x200] sm:$0xff]
                %802 = vst [vmem:[%s736 + $0x100] sm:$0xff] %v801
                %v803 = vld [vmem:[%s735 + $0x208] sm:$0xff]
                %804 = vst [vmem:[%s736 + $0x108] sm:$0xff] %v803
                %v805 = vld [vmem:[%s735 + $0x210] sm:$0xff]
                %806 = vst [vmem:[%s736 + $0x110] sm:$0xff] %v805
                %v807 = vld [vmem:[%s735 + $0x218] sm:$0xff]
                %808 = vst [vmem:[%s736 + $0x118] sm:$0xff] %v807
                %v809 = vld [vmem:[%s735 + $0x220] sm:$0xff]
                %810 = vst [vmem:[%s736 + $0x120] sm:$0xff] %v809
                %v811 = vld [vmem:[%s735 + $0x228] sm:$0xff]
                %812 = vst [vmem:[%s736 + $0x128] sm:$0xff] %v811
                %v813 = vld [vmem:[%s735 + $0x230] sm:$0xff]
                %814 = vst [vmem:[%s736 + $0x130] sm:$0xff] %v813
                %v815 = vld [vmem:[%s735 + $0x238] sm:$0xff]
                %816 = vst [vmem:[%s736 + $0x138] sm:$0xff] %v815
                %v817 = vld [vmem:[%s735 + $0x240] sm:$0xff]
                %818 = vst [vmem:[%s736 + $0x140] sm:$0xff] %v817
                %v819 = vld [vmem:[%s735 + $0x248] sm:$0xff]
                %820 = vst [vmem:[%s736 + $0x148] sm:$0xff] %v819
                %v821 = vld [vmem:[%s735 + $0x250] sm:$0xff]
                %822 = vst [vmem:[%s736 + $0x150] sm:$0xff] %v821
                %v823 = vld [vmem:[%s735 + $0x258] sm:$0xff]
                %824 = vst [vmem:[%s736 + $0x158] sm:$0xff] %v823
                %v825 = vld [vmem:[%s735 + $0x260] sm:$0xff]
                %826 = vst [vmem:[%s736 + $0x160] sm:$0xff] %v825
                %v827 = vld [vmem:[%s735 + $0x268] sm:$0xff]
                %828 = vst [vmem:[%s736 + $0x168] sm:$0xff] %v827
                %v829 = vld [vmem:[%s735 + $0x270] sm:$0xff]
                %830 = vst [vmem:[%s736 + $0x170] sm:$0xff] %v829
                %v831 = vld [vmem:[%s735 + $0x278] sm:$0xff]
                %832 = vst [vmem:[%s736 + $0x178] sm:$0xff] %v831
                %v833 = vld [vmem:[%s735 + $0x280] sm:$0xff]
                %834 = vst [vmem:[%s736 + $0x180] sm:$0xff] %v833
                %v835 = vld [vmem:[%s735 + $0x288] sm:$0xff]
                %836 = vst [vmem:[%s736 + $0x188] sm:$0xff] %v835
                %v837 = vld [vmem:[%s735 + $0x290] sm:$0xff]
                %838 = vst [vmem:[%s736 + $0x190] sm:$0xff] %v837
                %v839 = vld [vmem:[%s735 + $0x298] sm:$0xff]
                %840 = vst [vmem:[%s736 + $0x198] sm:$0xff] %v839
                %v841 = vld [vmem:[%s735 + $0x2a0] sm:$0xff]
                %842 = vst [vmem:[%s736 + $0x1a0] sm:$0xff] %v841
                %v843 = vld [vmem:[%s735 + $0x2a8] sm:$0xff]
                %844 = vst [vmem:[%s736 + $0x1a8] sm:$0xff] %v843
                %v845 = vld [vmem:[%s735 + $0x2b0] sm:$0xff]
                %846 = vst [vmem:[%s736 + $0x1b0] sm:$0xff] %v845
                %v847 = vld [vmem:[%s735 + $0x2b8] sm:$0xff]
                %848 = vst [vmem:[%s736 + $0x1b8] sm:$0xff] %v847
                %v849 = vld [vmem:[%s735 + $0x2c0] sm:$0xff]
                %850 = vst [vmem:[%s736 + $0x1c0] sm:$0xff] %v849
                %v851 = vld [vmem:[%s735 + $0x2c8] sm:$0xff]
                %852 = vst [vmem:[%s736 + $0x1c8] sm:$0xff] %v851
                %v853 = vld [vmem:[%s735 + $0x2d0] sm:$0xff]
                %854 = vst [vmem:[%s736 + $0x1d0] sm:$0xff] %v853
                %v855 = vld [vmem:[%s735 + $0x2d8] sm:$0xff]
                %856 = vst [vmem:[%s736 + $0x1d8] sm:$0xff] %v855
                %v857 = vld [vmem:[%s735 + $0x2e0] sm:$0xff]
                %858 = vst [vmem:[%s736 + $0x1e0] sm:$0xff] %v857
                %v859 = vld [vmem:[%s735 + $0x2e8] sm:$0xff]
                %860 = vst [vmem:[%s736 + $0x1e8] sm:$0xff] %v859
                %v861 = vld [vmem:[%s735 + $0x2f0] sm:$0xff]
                %862 = vst [vmem:[%s736 + $0x1f0] sm:$0xff] %v861
                %v863 = vld [vmem:[%s735 + $0x2f8] sm:$0xff]
                %864 = vst [vmem:[%s736 + $0x1f8] sm:$0xff] %v863
                %v865 = vld [vmem:[%s735 + $0x400] sm:$0xff]
                %866 = vst [vmem:[%s736 + $0x200] sm:$0xff] %v865
                %v867 = vld [vmem:[%s735 + $0x408] sm:$0xff]
                %868 = vst [vmem:[%s736 + $0x208] sm:$0xff] %v867
                %v869 = vld [vmem:[%s735 + $0x410] sm:$0xff]
                %870 = vst [vmem:[%s736 + $0x210] sm:$0xff] %v869
                %v871 = vld [vmem:[%s735 + $0x418] sm:$0xff]
                %872 = vst [vmem:[%s736 + $0x218] sm:$0xff] %v871
                %v873 = vld [vmem:[%s735 + $0x420] sm:$0xff]
                %874 = vst [vmem:[%s736 + $0x220] sm:$0xff] %v873
                %v875 = vld [vmem:[%s735 + $0x428] sm:$0xff]
                %876 = vst [vmem:[%s736 + $0x228] sm:$0xff] %v875
                %v877 = vld [vmem:[%s735 + $0x430] sm:$0xff]
                %878 = vst [vmem:[%s736 + $0x230] sm:$0xff] %v877
                %v879 = vld [vmem:[%s735 + $0x438] sm:$0xff]
                %880 = vst [vmem:[%s736 + $0x238] sm:$0xff] %v879
                %v881 = vld [vmem:[%s735 + $0x440] sm:$0xff]
                %882 = vst [vmem:[%s736 + $0x240] sm:$0xff] %v881
                %v883 = vld [vmem:[%s735 + $0x448] sm:$0xff]
                %884 = vst [vmem:[%s736 + $0x248] sm:$0xff] %v883
                %v885 = vld [vmem:[%s735 + $0x450] sm:$0xff]
                %886 = vst [vmem:[%s736 + $0x250] sm:$0xff] %v885
                %v887 = vld [vmem:[%s735 + $0x458] sm:$0xff]
                %888 = vst [vmem:[%s736 + $0x258] sm:$0xff] %v887
                %v889 = vld [vmem:[%s735 + $0x460] sm:$0xff]
                %890 = vst [vmem:[%s736 + $0x260] sm:$0xff] %v889
                %v891 = vld [vmem:[%s735 + $0x468] sm:$0xff]
                %892 = vst [vmem:[%s736 + $0x268] sm:$0xff] %v891
                %v893 = vld [vmem:[%s735 + $0x470] sm:$0xff]
                %894 = vst [vmem:[%s736 + $0x270] sm:$0xff] %v893
                %v895 = vld [vmem:[%s735 + $0x478] sm:$0xff]
                %896 = vst [vmem:[%s736 + $0x278] sm:$0xff] %v895
                %v897 = vld [vmem:[%s735 + $0x480] sm:$0xff]
                %898 = vst [vmem:[%s736 + $0x280] sm:$0xff] %v897
                %v899 = vld [vmem:[%s735 + $0x488] sm:$0xff]
                %900 = vst [vmem:[%s736 + $0x288] sm:$0xff] %v899
                %v901 = vld [vmem:[%s735 + $0x490] sm:$0xff]
                %902 = vst [vmem:[%s736 + $0x290] sm:$0xff] %v901
                %v903 = vld [vmem:[%s735 + $0x498] sm:$0xff]
                %904 = vst [vmem:[%s736 + $0x298] sm:$0xff] %v903
                %v905 = vld [vmem:[%s735 + $0x4a0] sm:$0xff]
                %906 = vst [vmem:[%s736 + $0x2a0] sm:$0xff] %v905
                %v907 = vld [vmem:[%s735 + $0x4a8] sm:$0xff]
                %908 = vst [vmem:[%s736 + $0x2a8] sm:$0xff] %v907
                %v909 = vld [vmem:[%s735 + $0x4b0] sm:$0xff]
                %910 = vst [vmem:[%s736 + $0x2b0] sm:$0xff] %v909
                %v911 = vld [vmem:[%s735 + $0x4b8] sm:$0xff]
                %912 = vst [vmem:[%s736 + $0x2b8] sm:$0xff] %v911
                %v913 = vld [vmem:[%s735 + $0x4c0] sm:$0xff]
                %914 = vst [vmem:[%s736 + $0x2c0] sm:$0xff] %v913
                %v915 = vld [vmem:[%s735 + $0x4c8] sm:$0xff]
                %916 = vst [vmem:[%s736 + $0x2c8] sm:$0xff] %v915
                %v917 = vld [vmem:[%s735 + $0x4d0] sm:$0xff]
                %918 = vst [vmem:[%s736 + $0x2d0] sm:$0xff] %v917
                %v919 = vld [vmem:[%s735 + $0x4d8] sm:$0xff]
                %920 = vst [vmem:[%s736 + $0x2d8] sm:$0xff] %v919
                %v921 = vld [vmem:[%s735 + $0x4e0] sm:$0xff]
                %922 = vst [vmem:[%s736 + $0x2e0] sm:$0xff] %v921
                %v923 = vld [vmem:[%s735 + $0x4e8] sm:$0xff]
                %924 = vst [vmem:[%s736 + $0x2e8] sm:$0xff] %v923
                %v925 = vld [vmem:[%s735 + $0x4f0] sm:$0xff]
                %926 = vst [vmem:[%s736 + $0x2f0] sm:$0xff] %v925
                %v927 = vld [vmem:[%s735 + $0x4f8] sm:$0xff]
                %928 = vst [vmem:[%s736 + $0x2f8] sm:$0xff] %v927
                %v929 = vld [vmem:[%s735 + $0x600] sm:$0xff]
                %930 = vst [vmem:[%s736 + $0x300] sm:$0xff] %v929
                %v931 = vld [vmem:[%s735 + $0x608] sm:$0xff]
                %932 = vst [vmem:[%s736 + $0x308] sm:$0xff] %v931
                %v933 = vld [vmem:[%s735 + $0x610] sm:$0xff]
                %934 = vst [vmem:[%s736 + $0x310] sm:$0xff] %v933
                %v935 = vld [vmem:[%s735 + $0x618] sm:$0xff]
                %936 = vst [vmem:[%s736 + $0x318] sm:$0xff] %v935
                %v937 = vld [vmem:[%s735 + $0x620] sm:$0xff]
                %938 = vst [vmem:[%s736 + $0x320] sm:$0xff] %v937
                %v939 = vld [vmem:[%s735 + $0x628] sm:$0xff]
                %940 = vst [vmem:[%s736 + $0x328] sm:$0xff] %v939
                %v941 = vld [vmem:[%s735 + $0x630] sm:$0xff]
                %942 = vst [vmem:[%s736 + $0x330] sm:$0xff] %v941
                %v943 = vld [vmem:[%s735 + $0x638] sm:$0xff]
                %944 = vst [vmem:[%s736 + $0x338] sm:$0xff] %v943
                %v945 = vld [vmem:[%s735 + $0x640] sm:$0xff]
                %946 = vst [vmem:[%s736 + $0x340] sm:$0xff] %v945
                %v947 = vld [vmem:[%s735 + $0x648] sm:$0xff]
                %948 = vst [vmem:[%s736 + $0x348] sm:$0xff] %v947
                %v949 = vld [vmem:[%s735 + $0x650] sm:$0xff]
                %950 = vst [vmem:[%s736 + $0x350] sm:$0xff] %v949
                %v951 = vld [vmem:[%s735 + $0x658] sm:$0xff]
                %952 = vst [vmem:[%s736 + $0x358] sm:$0xff] %v951
                %v953 = vld [vmem:[%s735 + $0x660] sm:$0xff]
                %954 = vst [vmem:[%s736 + $0x360] sm:$0xff] %v953
                %v955 = vld [vmem:[%s735 + $0x668] sm:$0xff]
                %956 = vst [vmem:[%s736 + $0x368] sm:$0xff] %v955
                %v957 = vld [vmem:[%s735 + $0x670] sm:$0xff]
                %958 = vst [vmem:[%s736 + $0x370] sm:$0xff] %v957
                %v959 = vld [vmem:[%s735 + $0x678] sm:$0xff]
                %960 = vst [vmem:[%s736 + $0x378] sm:$0xff] %v959
                %v961 = vld [vmem:[%s735 + $0x680] sm:$0xff]
                %962 = vst [vmem:[%s736 + $0x380] sm:$0xff] %v961
                %v963 = vld [vmem:[%s735 + $0x688] sm:$0xff]
                %964 = vst [vmem:[%s736 + $0x388] sm:$0xff] %v963
                %v965 = vld [vmem:[%s735 + $0x690] sm:$0xff]
                %966 = vst [vmem:[%s736 + $0x390] sm:$0xff] %v965
                %v967 = vld [vmem:[%s735 + $0x698] sm:$0xff]
                %968 = vst [vmem:[%s736 + $0x398] sm:$0xff] %v967
                %v969 = vld [vmem:[%s735 + $0x6a0] sm:$0xff]
                %970 = vst [vmem:[%s736 + $0x3a0] sm:$0xff] %v969
                %v971 = vld [vmem:[%s735 + $0x6a8] sm:$0xff]
                %972 = vst [vmem:[%s736 + $0x3a8] sm:$0xff] %v971
                %v973 = vld [vmem:[%s735 + $0x6b0] sm:$0xff]
                %974 = vst [vmem:[%s736 + $0x3b0] sm:$0xff] %v973
                %v975 = vld [vmem:[%s735 + $0x6b8] sm:$0xff]
                %976 = vst [vmem:[%s736 + $0x3b8] sm:$0xff] %v975
                %v977 = vld [vmem:[%s735 + $0x6c0] sm:$0xff]
                %978 = vst [vmem:[%s736 + $0x3c0] sm:$0xff] %v977
                %v979 = vld [vmem:[%s735 + $0x6c8] sm:$0xff]
                %980 = vst [vmem:[%s736 + $0x3c8] sm:$0xff] %v979
                %v981 = vld [vmem:[%s735 + $0x6d0] sm:$0xff]
                %982 = vst [vmem:[%s736 + $0x3d0] sm:$0xff] %v981
                %v983 = vld [vmem:[%s735 + $0x6d8] sm:$0xff]
                %984 = vst [vmem:[%s736 + $0x3d8] sm:$0xff] %v983
                %v985 = vld [vmem:[%s735 + $0x6e0] sm:$0xff]
                %986 = vst [vmem:[%s736 + $0x3e0] sm:$0xff] %v985
                %v987 = vld [vmem:[%s735 + $0x6e8] sm:$0xff]
                %988 = vst [vmem:[%s736 + $0x3e8] sm:$0xff] %v987
                %v989 = vld [vmem:[%s735 + $0x6f0] sm:$0xff]
                %990 = vst [vmem:[%s736 + $0x3f0] sm:$0xff] %v989
                %v991 = vld [vmem:[%s735 + $0x6f8] sm:$0xff]
                %992 = vst [vmem:[%s736 + $0x3f8] sm:$0xff] %v991
              $region86: #{lenet5_forward.5} parent=80 // loop_footer
                %s734 = sadd.s32 1, %s730
              $region87: #{lenet5_forward.5} parent=80 // loop_footer_branch
                %729 = sbr.rel target = $region83
              $region88: #{lenet5_forward.5} parent=80 // loop_exit
                _
            $region81: #{lenet5_forward.5} parent=72 // pred_fallthru
              _
          $region73: #{lenet5_forward.5} parent=68 // pred_fallthru
            _
          %1261 = vnop
        $region69: #{lenet5_forward.5} parent=23 // pred_fallthru
          _
      $region24: #{lenet5_forward.5} parent=5 // pred_fallthru
        _
      %p1262 = scmp.le.s32.totalorder 1, %s10
      %p1263 = scmp.lt.s32.totalorder %s10, 3
      %p1264 = pnand %p1262, %p1263
      %p1265 = pneg %p1264
      // Predicated region
      $region104: #{lenet5_forward.5} parent=5 // pred_check
        _
      $region105: #{lenet5_forward.5} parent=5 // pred_check_branch
        %1267 = sbr.rel (%p1264) target = $region107
      $region106: #{lenet5_forward.5} parent=5 // pred_region
        %s1268 = ssub.s32 %s10, 1
        %s1269 = sand.u32 %s23, 1
        %s1270 = sand.u32 %s23, 1
        %s1271 = smul.addr %s1270, 512
        %s1272 = scalar_lea.vmem [#allocation2], %s1271
        // Predicated region
        $region108: #{lenet5_forward.5} parent=106 // pred_check
          %p1273 = pneg %p36
        $region109: #{lenet5_forward.5} parent=106 // pred_check_branch
          %1275 = sbr.rel (%p1273) target = $region111
        $region110: #{lenet5_forward.5} parent=106 // pred_region
          _
        $region111: #{lenet5_forward.5} parent=106 // pred_fallthru
          _
        %s1276 = sand.u32 %s49, 1
        %s1277 = sand.u32 %s49, 1
        %s1278 = smul.addr %s1277, 1024
        %s1279 = scalar_lea.vmem [#allocation3], %s1278
        // Predicated region
        $region112: #{lenet5_forward.5} parent=106 // pred_check
          %p1280 = pneg %p62
        $region113: #{lenet5_forward.5} parent=106 // pred_check_branch
          %1282 = sbr.rel (%p1280) target = $region115
        $region114: #{lenet5_forward.5} parent=106 // pred_region
          _
        $region115: #{lenet5_forward.5} parent=106 // pred_fallthru
          _
        %s1283 = sand.u32 %s23, 1
        %s1284 = sand.u32 %s23, 1
        %s1285 = smul.addr %s1284, 512
        %s1286 = scalar_lea.vmem [#allocation2], %s1285
        %p1287 = pneg %p36
        %p1288 = pneg %p33
        %s1289 = sand.u32 %s49, 1
        %s1290 = sand.u32 %s49, 1
        %s1291 = smul.addr %s1290, 1024
        %s1292 = scalar_lea.vmem [#allocation3], %s1291
        %p1293 = pneg %p62
        %p1294 = pneg %p59
        %p1295 = pneg %p83
        %p1296 = pneg %p80
        %p1297 = pneg %p104
        %p1298 = pneg %p101
        %p1299 = pneg %p130
        %p1300 = pneg %p127
        %s1301 = smul.u32 32, %s15
        %p1302 = scmp.lt.s32.totalorder %s1301, 63
        %s1303 = scalar_select %p1302, %s1301, 63
        %s1304 = smul.addr %s1303, 4
        %s1305 = scalar_lea.vmem %s4, %s1304
        %s1306 = smul.u32 32, %s15
        %s1307 = smul.u32 32, %s15
        %s1308 = smul.u32 32, %s15
        %p1309 = scmp.lt.s32.totalorder %s1308, 63
        %s1310 = scalar_select %p1309, %s1308, 63
        %s1311 = smul.addr %s1310, 4
        %s1312 = scalar_lea.vmem %s4, %s1311
        %s1313 = smul.u32 32, %s15
        %v1315 = vld [vmem:[%s2] sm:$0xf]
        %v1316 = vld [vmem:[%s2 + $0x4] sm:$0xf]
        %v1317 = vld [vmem:[%s2 + $0x8] sm:$0xf]
        %v1318 = vld [vmem:[%s2 + $0xc] sm:$0xf]
        %v1319 = vld [vmem:[%s3] sm:$0x1]
        %v1320 = vld [vmem:[%s1272] sm:$0xf]
        %v1321 = vld [vmem:[%s1272 + $0x4] sm:$0xf]
        %v1322 = vld [vmem:[%s1272 + $0x8] sm:$0xf]
        %v1323 = vld [vmem:[%s1272 + $0xc] sm:$0xf]
        %v1324 = vld [vmem:[%s1272 + $0x10] sm:$0xf]
        %v1325 = vld [vmem:[%s1272 + $0x14] sm:$0xf]
        %v1326 = vld [vmem:[%s1272 + $0x18] sm:$0xf]
        %v1327 = vld [vmem:[%s1272 + $0x1c] sm:$0xf]
        %v1328 = vld [vmem:[%s1272 + $0x20] sm:$0xf]
        %v1329 = vld [vmem:[%s1272 + $0x24] sm:$0xf]
        %v1330 = vld [vmem:[%s1272 + $0x28] sm:$0xf]
        %v1331 = vld [vmem:[%s1272 + $0x2c] sm:$0xf]
        %v1332 = vld [vmem:[%s1272 + $0x30] sm:$0xf]
        %v1333 = vld [vmem:[%s1272 + $0x34] sm:$0xf]
        %v1334 = vld [vmem:[%s1272 + $0x38] sm:$0xf]
        %v1335 = vld [vmem:[%s1272 + $0x3c] sm:$0xf]
        %v1336 = vld [vmem:[%s1272 + $0x40] sm:$0xf]
        %v1337 = vld [vmem:[%s1272 + $0x44] sm:$0xf]
        %v1338 = vld [vmem:[%s1272 + $0x48] sm:$0xf]
        %v1339 = vld [vmem:[%s1272 + $0x4c] sm:$0xf]
        %v1340 = vld [vmem:[%s1272 + $0x50] sm:$0xf]
        %v1341 = vld [vmem:[%s1272 + $0x54] sm:$0xf]
        %v1342 = vld [vmem:[%s1272 + $0x58] sm:$0xf]
        %v1343 = vld [vmem:[%s1272 + $0x5c] sm:$0xf]
        %v1344 = vld [vmem:[%s1272 + $0x60] sm:$0xf]
        %v1345 = vld [vmem:[%s1272 + $0x64] sm:$0xf]
        %v1346 = vld [vmem:[%s1272 + $0x68] sm:$0xf]
        %v1347 = vld [vmem:[%s1272 + $0x6c] sm:$0xf]
        %v1348 = vld [vmem:[%s1272 + $0x70] sm:$0xf]
        %v1349 = vld [vmem:[%s1272 + $0x74] sm:$0xf]
        %v1350 = vld [vmem:[%s1272 + $0x78] sm:$0xf]
        %v1351 = vld [vmem:[%s1272 + $0x7c] sm:$0xf]
        %v1353 = vlaneseq
        %v1354 = vshrl.u32 %v1353, 7
        %v1355 = vsub.s32 0, %v1354
        %v1356 = vrot.slane %v1319, %v1355
        %v1390 = vunpack.c.l.b16 %v1320
        %v1391 = vunpack.c.l.b16 %v1321
        %v1392 = vunpack.c.l.b16 %v1322
        %v1393 = vunpack.c.l.b16 %v1323
        %v1394 = vunpack.c.l.b16 %v1324
        %v1395 = vunpack.c.l.b16 %v1325
        %v1396 = vunpack.c.l.b16 %v1326
        %v1397 = vunpack.c.l.b16 %v1327
        %v1398 = vunpack.c.l.b16 %v1328
        %v1399 = vunpack.c.l.b16 %v1329
        %v1400 = vunpack.c.l.b16 %v1330
        %v1401 = vunpack.c.l.b16 %v1331
        %v1402 = vunpack.c.l.b16 %v1332
        %v1403 = vunpack.c.l.b16 %v1333
        %v1404 = vunpack.c.l.b16 %v1334
        %v1405 = vunpack.c.l.b16 %v1335
        %v1406 = vunpack.c.l.b16 %v1336
        %v1407 = vunpack.c.l.b16 %v1337
        %v1408 = vunpack.c.l.b16 %v1338
        %v1409 = vunpack.c.l.b16 %v1339
        %v1410 = vunpack.c.l.b16 %v1340
        %v1411 = vunpack.c.l.b16 %v1341
        %v1412 = vunpack.c.l.b16 %v1342
        %v1413 = vunpack.c.l.b16 %v1343
        %v1414 = vunpack.c.l.b16 %v1344
        %v1415 = vunpack.c.l.b16 %v1345
        %v1416 = vunpack.c.l.b16 %v1346
        %v1417 = vunpack.c.l.b16 %v1347
        %v1418 = vunpack.c.l.b16 %v1348
        %v1419 = vunpack.c.l.b16 %v1349
        %v1420 = vunpack.c.l.b16 %v1350
        %v1421 = vunpack.c.l.b16 %v1351
        %v1422 = vpack.c.b16 %v1391, %v1390
        %v1423 = vpack.c.b16 %v1393, %v1392
        %v1424 = vpack.c.b16 %v1395, %v1394
        %v1425 = vpack.c.b16 %v1397, %v1396
        %v1426 = vpack.c.b16 %v1399, %v1398
        %v1427 = vpack.c.b16 %v1401, %v1400
        %v1428 = vpack.c.b16 %v1403, %v1402
        %v1429 = vpack.c.b16 %v1405, %v1404
        %v1430 = vpack.c.b16 %v1407, %v1406
        %v1431 = vpack.c.b16 %v1409, %v1408
        %v1432 = vpack.c.b16 %v1411, %v1410
        %v1433 = vpack.c.b16 %v1413, %v1412
        %v1434 = vpack.c.b16 %v1415, %v1414
        %v1435 = vpack.c.b16 %v1417, %v1416
        %v1436 = vpack.c.b16 %v1419, %v1418
        %v1437 = vpack.c.b16 %v1421, %v1420
        %v1442 = vunpack.c.l.b16 %v1315
        %v1443 = vunpack.c.l.b16 %v1316
        %v1444 = vunpack.c.l.b16 %v1317
        %v1445 = vunpack.c.l.b16 %v1318
        %v1446 = vpack.c.b16 %v1443, %v1442
        %v1447 = vpack.c.b16 %v1445, %v1444
        %vm1450 = vcmask 261120
        %v1452 = vsel %vm1450, %v1422, 0
        %v1455 = vsel %vm1450, %v1423, 0
        %v1458 = vsel %vm1450, %v1424, 0
        %v1461 = vsel %vm1450, %v1425, 0
        %v1464 = vsel %vm1450, %v1426, 0
        %v1467 = vsel %vm1450, %v1427, 0
        %v1470 = vsel %vm1450, %v1428, 0
        %v1473 = vsel %vm1450, %v1429, 0
        %v1476 = vsel %vm1450, %v1430, 0
        %v1479 = vsel %vm1450, %v1431, 0
        %v1482 = vsel %vm1450, %v1432, 0
        %v1485 = vsel %vm1450, %v1433, 0
        %v1488 = vsel %vm1450, %v1434, 0
        %v1491 = vsel %vm1450, %v1435, 0
        %v1494 = vsel %vm1450, %v1436, 0
        %v1497 = vsel %vm1450, %v1437, 0
        %1499 = vmatprep.subr.bf16.mxu0 0
        %1500 = vmatpush1.bf16.msra.mxu0 %v1446
        %1501 = vmatprep.subr.bf16.mxu0 0
        %1502 = vmatpush1.bf16.msra.mxu0 %v1447
        %1503 = vmatprep.subr.bf16.mxu0 0
        %1504 = vmatpush1.bf16.msra.mxu0 0
        %1505 = vmatprep.subr.bf16.mxu0 0
        %1506 = vmatpush1.bf16.msra.mxu0 0
        %1507 = vmatprep.subr.bf16.mxu0 0
        %1508 = vmatpush1.bf16.msra.mxu0 0
        %1509 = vmatprep.subr.bf16.mxu0 0
        %1510 = vmatpush1.bf16.msra.mxu0 0
        %1511 = vmatprep.subr.bf16.mxu0 0
        %1512 = vmatpush1.bf16.msra.mxu0 0
        %1513 = vmatprep.subr.bf16.mxu0 0
        %1514 = vmatpush1.bf16.msra.mxu0 0
        %1515 = vmatprep.subr.bf16.mxu0 0
        %1516 = vmatpush1.bf16.msra.mxu0 0
        %1517 = vmatprep.subr.bf16.mxu0 0
        %1518 = vmatpush1.bf16.msra.mxu0 0
        %1519 = vmatprep.subr.bf16.mxu0 0
        %1520 = vmatpush1.bf16.msra.mxu0 0
        %1521 = vmatprep.subr.bf16.mxu0 0
        %1522 = vmatpush1.bf16.msra.mxu0 0
        %1523 = vmatprep.subr.bf16.mxu0 0
        %1524 = vmatpush1.bf16.msra.mxu0 0
        %1525 = vmatprep.subr.bf16.mxu0 0
        %1526 = vmatpush1.bf16.msra.mxu0 0
        %1527 = vmatprep.subr.bf16.mxu0 0
        %1528 = vmatpush1.bf16.msra.mxu0 0
        %1529 = vmatprep.subr.bf16.mxu0 0
        %1530 = vmatpush1.bf16.msra.mxu0 0
        %1531 = vmatprep.mubr.bf16.mxu0 0
        %1532 = vmatmul.mubr.bf16.gmra.mrb[0].mxu0 %v1452
        %v1533 = vpop.f32.mrb[0].mxu0
        %v1534 = vadd.f32 %v1356, %v1533
        %v1535 = vpop.f32.mrb[0].mxu0
        %v1536 = vpop.f32.mrb[0].mxu0
        %v1537 = vadd.f32 %v1356, %v1536
        %v1538 = vpop.f32.mrb[0].mxu0
        %1539 = vmatprep.mubr.bf16.mxu0 0
        %1540 = vmatmul.mubr.bf16.gmra.mrb[0].mxu0 %v1455
        %v1541 = vpop.f32.mrb[0].mxu0
        %v1542 = vadd.f32 %v1356, %v1541
        %v1543 = vpop.f32.mrb[0].mxu0
        %v1544 = vpop.f32.mrb[0].mxu0
        %v1545 = vadd.f32 %v1356, %v1544
        %v1546 = vpop.f32.mrb[0].mxu0
        %1547 = vmatprep.mubr.bf16.mxu0 0
        %1548 = vmatmul.mubr.bf16.gmra.mrb[0].mxu0 %v1458
        %v1549 = vpop.f32.mrb[0].mxu0
        %v1550 = vadd.f32 %v1356, %v1549
        %v1551 = vpop.f32.mrb[0].mxu0
        %v1552 = vpop.f32.mrb[0].mxu0
        %v1553 = vadd.f32 %v1356, %v1552
        %v1554 = vpop.f32.mrb[0].mxu0
        %1555 = vmatprep.mubr.bf16.mxu0 0
        %1556 = vmatmul.mubr.bf16.gmra.mrb[0].mxu0 %v1461
        %v1557 = vpop.f32.mrb[0].mxu0
        %v1558 = vadd.f32 %v1356, %v1557
        %v1559 = vpop.f32.mrb[0].mxu0
        %v1560 = vpop.f32.mrb[0].mxu0
        %v1561 = vadd.f32 %v1356, %v1560
        %v1562 = vpop.f32.mrb[0].mxu0
        %1563 = vmatprep.mubr.bf16.mxu0 0
        %1564 = vmatmul.mubr.bf16.gmra.mrb[0].mxu0 %v1464
        %v1565 = vpop.f32.mrb[0].mxu0
        %v1566 = vadd.f32 %v1356, %v1565
        %v1567 = vpop.f32.mrb[0].mxu0
        %v1568 = vpop.f32.mrb[0].mxu0
        %v1569 = vadd.f32 %v1356, %v1568
        %v1570 = vpop.f32.mrb[0].mxu0
        %1571 = vmatprep.mubr.bf16.mxu0 0
        %1572 = vmatmul.mubr.bf16.gmra.mrb[0].mxu0 %v1467
        %v1573 = vpop.f32.mrb[0].mxu0
        %v1574 = vadd.f32 %v1356, %v1573
        %v1575 = vpop.f32.mrb[0].mxu0
        %v1576 = vpop.f32.mrb[0].mxu0
        %v1577 = vadd.f32 %v1356, %v1576
        %v1578 = vpop.f32.mrb[0].mxu0
        %1579 = vmatprep.mubr.bf16.mxu0 0
        %1580 = vmatmul.mubr.bf16.gmra.mrb[0].mxu0 %v1470
        %v1581 = vpop.f32.mrb[0].mxu0
        %v1582 = vadd.f32 %v1356, %v1581
        %v1583 = vpop.f32.mrb[0].mxu0
        %v1584 = vpop.f32.mrb[0].mxu0
        %v1585 = vadd.f32 %v1356, %v1584
        %v1586 = vpop.f32.mrb[0].mxu0
        %1587 = vmatprep.mubr.bf16.mxu0 0
        %1588 = vmatmul.mubr.bf16.gmra.mrb[0].mxu0 %v1473
        %v1589 = vpop.f32.mrb[0].mxu0
        %v1590 = vadd.f32 %v1356, %v1589
        %v1591 = vpop.f32.mrb[0].mxu0
        %v1592 = vpop.f32.mrb[0].mxu0
        %v1593 = vadd.f32 %v1356, %v1592
        %v1594 = vpop.f32.mrb[0].mxu0
        %1595 = vmatprep.mubr.bf16.mxu0 0
        %1596 = vmatmul.mubr.bf16.gmra.mrb[0].mxu0 %v1476
        %v1597 = vpop.f32.mrb[0].mxu0
        %v1598 = vadd.f32 %v1356, %v1597
        %v1599 = vpop.f32.mrb[0].mxu0
        %v1600 = vpop.f32.mrb[0].mxu0
        %v1601 = vadd.f32 %v1356, %v1600
        %v1602 = vpop.f32.mrb[0].mxu0
        %1603 = vmatprep.mubr.bf16.mxu0 0
        %1604 = vmatmul.mubr.bf16.gmra.mrb[0].mxu0 %v1479
        %v1605 = vpop.f32.mrb[0].mxu0
        %v1606 = vadd.f32 %v1356, %v1605
        %v1607 = vpop.f32.mrb[0].mxu0
        %v1608 = vpop.f32.mrb[0].mxu0
        %v1609 = vadd.f32 %v1356, %v1608
        %v1610 = vpop.f32.mrb[0].mxu0
        %1611 = vmatprep.mubr.bf16.mxu0 0
        %1612 = vmatmul.mubr.bf16.gmra.mrb[0].mxu0 %v1482
        %v1613 = vpop.f32.mrb[0].mxu0
        %v1614 = vadd.f32 %v1356, %v1613
        %v1615 = vpop.f32.mrb[0].mxu0
        %v1616 = vpop.f32.mrb[0].mxu0
        %v1617 = vadd.f32 %v1356, %v1616
        %v1618 = vpop.f32.mrb[0].mxu0
        %1619 = vmatprep.mubr.bf16.mxu0 0
        %1620 = vmatmul.mubr.bf16.gmra.mrb[0].mxu0 %v1485
        %v1621 = vpop.f32.mrb[0].mxu0
        %v1622 = vadd.f32 %v1356, %v1621
        %v1623 = vpop.f32.mrb[0].mxu0
        %v1624 = vpop.f32.mrb[0].mxu0
        %v1625 = vadd.f32 %v1356, %v1624
        %v1626 = vpop.f32.mrb[0].mxu0
        %1627 = vmatprep.mubr.bf16.mxu0 0
        %1628 = vmatmul.mubr.bf16.gmra.mrb[0].mxu0 %v1488
        %v1629 = vpop.f32.mrb[0].mxu0
        %v1630 = vadd.f32 %v1356, %v1629
        %v1631 = vpop.f32.mrb[0].mxu0
        %v1632 = vpop.f32.mrb[0].mxu0
        %v1633 = vadd.f32 %v1356, %v1632
        %v1634 = vpop.f32.mrb[0].mxu0
        %1635 = vmatprep.mubr.bf16.mxu0 0
        %1636 = vmatmul.mubr.bf16.gmra.mrb[0].mxu0 %v1491
        %v1637 = vpop.f32.mrb[0].mxu0
        %v1638 = vadd.f32 %v1356, %v1637
        %v1639 = vpop.f32.mrb[0].mxu0
        %v1640 = vpop.f32.mrb[0].mxu0
        %v1641 = vadd.f32 %v1356, %v1640
        %v1642 = vpop.f32.mrb[0].mxu0
        %1643 = vmatprep.mubr.bf16.mxu0 0
        %1644 = vmatmul.mubr.bf16.gmra.mrb[0].mxu0 %v1494
        %v1645 = vpop.f32.mrb[0].mxu0
        %v1646 = vadd.f32 %v1356, %v1645
        %v1647 = vpop.f32.mrb[0].mxu0
        %v1648 = vpop.f32.mrb[0].mxu0
        %v1649 = vadd.f32 %v1356, %v1648
        %v1650 = vpop.f32.mrb[0].mxu0
        %1651 = vmatprep.mubr.bf16.mxu0 0
        %1652 = vmatmul.mubr.bf16.gmra.mrb[0].mxu0 %v1497
        %v1653 = vpop.f32.mrb[0].mxu0
        %v1654 = vadd.f32 %v1356, %v1653
        %v1655 = vpop.f32.mrb[0].mxu0
        %v1656 = vpop.f32.mrb[0].mxu0
        %v1657 = vadd.f32 %v1356, %v1656
        %v1658 = vpop.f32.mrb[0].mxu0
        %1659 = vdwg.mxu0
        %v1660 = vsub.f32 0.0, %v1534
        %v1661 = vsub.f32 0.0, %v1537
        %v1662 = vsub.f32 0.0, %v1542
        %v1663 = vsub.f32 0.0, %v1545
        %v1664 = vsub.f32 0.0, %v1550
        %v1665 = vsub.f32 0.0, %v1553
        %v1666 = vsub.f32 0.0, %v1558
        %v1667 = vsub.f32 0.0, %v1561
        %v1668 = vsub.f32 0.0, %v1566
        %v1669 = vsub.f32 0.0, %v1569
        %v1670 = vsub.f32 0.0, %v1574
        %v1671 = vsub.f32 0.0, %v1577
        %v1672 = vsub.f32 0.0, %v1582
        %v1673 = vsub.f32 0.0, %v1585
        %v1674 = vsub.f32 0.0, %v1590
        %v1675 = vsub.f32 0.0, %v1593
        %v1676 = vsub.f32 0.0, %v1598
        %v1677 = vsub.f32 0.0, %v1601
        %v1678 = vsub.f32 0.0, %v1606
        %v1679 = vsub.f32 0.0, %v1609
        %v1680 = vsub.f32 0.0, %v1614
        %v1681 = vsub.f32 0.0, %v1617
        %v1682 = vsub.f32 0.0, %v1622
        %v1683 = vsub.f32 0.0, %v1625
        %v1684 = vsub.f32 0.0, %v1630
        %v1685 = vsub.f32 0.0, %v1633
        %v1686 = vsub.f32 0.0, %v1638
        %v1687 = vsub.f32 0.0, %v1641
        %v1688 = vsub.f32 0.0, %v1646
        %v1689 = vsub.f32 0.0, %v1649
        %v1690 = vsub.f32 0.0, %v1654
        %v1691 = vsub.f32 0.0, %v1657
        %v1692 = vmul.f32 %v1660, 1.442695
        %v1693 = vpow.pop %v1692
        %v1694 = vmul.f32 %v1661, 1.442695
        %v1695 = vpow.pop %v1694
        %v1696 = vmul.f32 %v1662, 1.442695
        %v1697 = vpow.pop %v1696
        %v1698 = vmul.f32 %v1663, 1.442695
        %v1699 = vpow.pop %v1698
        %v1700 = vmul.f32 %v1664, 1.442695
        %v1701 = vpow.pop %v1700
        %v1702 = vmul.f32 %v1665, 1.442695
        %v1703 = vpow.pop %v1702
        %v1704 = vmul.f32 %v1666, 1.442695
        %v1705 = vpow.pop %v1704
        %v1706 = vmul.f32 %v1667, 1.442695
        %v1707 = vpow.pop %v1706
        %v1708 = vmul.f32 %v1668, 1.442695
        %v1709 = vpow.pop %v1708
        %v1710 = vmul.f32 %v1669, 1.442695
        %v1711 = vpow.pop %v1710
        %v1712 = vmul.f32 %v1670, 1.442695
        %v1713 = vpow.pop %v1712
        %v1714 = vmul.f32 %v1671, 1.442695
        %v1715 = vpow.pop %v1714
        %v1716 = vmul.f32 %v1672, 1.442695
        %v1717 = vpow.pop %v1716
        %v1718 = vmul.f32 %v1673, 1.442695
        %v1719 = vpow.pop %v1718
        %v1720 = vmul.f32 %v1674, 1.442695
        %v1721 = vpow.pop %v1720
        %v1722 = vmul.f32 %v1675, 1.442695
        %v1723 = vpow.pop %v1722
        %v1724 = vmul.f32 %v1676, 1.442695
        %v1725 = vpow.pop %v1724
        %v1726 = vmul.f32 %v1677, 1.442695
        %v1727 = vpow.pop %v1726
        %v1728 = vmul.f32 %v1678, 1.442695
        %v1729 = vpow.pop %v1728
        %v1730 = vmul.f32 %v1679, 1.442695
        %v1731 = vpow.pop %v1730
        %v1732 = vmul.f32 %v1680, 1.442695
        %v1733 = vpow.pop %v1732
        %v1734 = vmul.f32 %v1681, 1.442695
        %v1735 = vpow.pop %v1734
        %v1736 = vmul.f32 %v1682, 1.442695
        %v1737 = vpow.pop %v1736
        %v1738 = vmul.f32 %v1683, 1.442695
        %v1739 = vpow.pop %v1738
        %v1740 = vmul.f32 %v1684, 1.442695
        %v1741 = vpow.pop %v1740
        %v1742 = vmul.f32 %v1685, 1.442695
        %v1743 = vpow.pop %v1742
        %v1744 = vmul.f32 %v1686, 1.442695
        %v1745 = vpow.pop %v1744
        %v1746 = vmul.f32 %v1687, 1.442695
        %v1747 = vpow.pop %v1746
        %v1748 = vmul.f32 %v1688, 1.442695
        %v1749 = vpow.pop %v1748
        %v1750 = vmul.f32 %v1689, 1.442695
        %v1751 = vpow.pop %v1750
        %v1752 = vmul.f32 %v1690, 1.442695
        %v1753 = vpow.pop %v1752
        %v1754 = vmul.f32 %v1691, 1.442695
        %v1755 = vpow.pop %v1754
        %v1756 = vadd.f32 %v1693, 1.0
        %v1757 = vadd.f32 %v1695, 1.0
        %v1758 = vadd.f32 %v1697, 1.0
        %v1759 = vadd.f32 %v1699, 1.0
        %v1760 = vadd.f32 %v1701, 1.0
        %v1761 = vadd.f32 %v1703, 1.0
        %v1762 = vadd.f32 %v1705, 1.0
        %v1763 = vadd.f32 %v1707, 1.0
        %v1764 = vadd.f32 %v1709, 1.0
        %v1765 = vadd.f32 %v1711, 1.0
        %v1766 = vadd.f32 %v1713, 1.0
        %v1767 = vadd.f32 %v1715, 1.0
        %v1768 = vadd.f32 %v1717, 1.0
        %v1769 = vadd.f32 %v1719, 1.0
        %v1770 = vadd.f32 %v1721, 1.0
        %v1771 = vadd.f32 %v1723, 1.0
        %v1772 = vadd.f32 %v1725, 1.0
        %v1773 = vadd.f32 %v1727, 1.0
        %v1774 = vadd.f32 %v1729, 1.0
        %v1775 = vadd.f32 %v1731, 1.0
        %v1776 = vadd.f32 %v1733, 1.0
        %v1777 = vadd.f32 %v1735, 1.0
        %v1778 = vadd.f32 %v1737, 1.0
        %v1779 = vadd.f32 %v1739, 1.0
        %v1780 = vadd.f32 %v1741, 1.0
        %v1781 = vadd.f32 %v1743, 1.0
        %v1782 = vadd.f32 %v1745, 1.0
        %v1783 = vadd.f32 %v1747, 1.0
        %v1784 = vadd.f32 %v1749, 1.0
        %v1785 = vadd.f32 %v1751, 1.0
        %v1786 = vadd.f32 %v1753, 1.0
        %v1787 = vadd.f32 %v1755, 1.0
        %v1788 = vrcp.pop %v1756
        %v1789 = vmul.f32 1.0, %v1788
        %v1790 = vrcp.pop %v1757
        %v1791 = vmul.f32 1.0, %v1790
        %v1792 = vrcp.pop %v1758
        %v1793 = vmul.f32 1.0, %v1792
        %v1794 = vrcp.pop %v1759
        %v1795 = vmul.f32 1.0, %v1794
        %v1796 = vrcp.pop %v1760
        %v1797 = vmul.f32 1.0, %v1796
        %v1798 = vrcp.pop %v1761
        %v1799 = vmul.f32 1.0, %v1798
        %v1800 = vrcp.pop %v1762
        %v1801 = vmul.f32 1.0, %v1800
        %v1802 = vrcp.pop %v1763
        %v1803 = vmul.f32 1.0, %v1802
        %v1804 = vrcp.pop %v1764
        %v1805 = vmul.f32 1.0, %v1804
        %v1806 = vrcp.pop %v1765
        %v1807 = vmul.f32 1.0, %v1806
        %v1808 = vrcp.pop %v1766
        %v1809 = vmul.f32 1.0, %v1808
        %v1810 = vrcp.pop %v1767
        %v1811 = vmul.f32 1.0, %v1810
        %v1812 = vrcp.pop %v1768
        %v1813 = vmul.f32 1.0, %v1812
        %v1814 = vrcp.pop %v1769
        %v1815 = vmul.f32 1.0, %v1814
        %v1816 = vrcp.pop %v1770
        %v1817 = vmul.f32 1.0, %v1816
        %v1818 = vrcp.pop %v1771
        %v1819 = vmul.f32 1.0, %v1818
        %v1820 = vrcp.pop %v1772
        %v1821 = vmul.f32 1.0, %v1820
        %v1822 = vrcp.pop %v1773
        %v1823 = vmul.f32 1.0, %v1822
        %v1824 = vrcp.pop %v1774
        %v1825 = vmul.f32 1.0, %v1824
        %v1826 = vrcp.pop %v1775
        %v1827 = vmul.f32 1.0, %v1826
        %v1828 = vrcp.pop %v1776
        %v1829 = vmul.f32 1.0, %v1828
        %v1830 = vrcp.pop %v1777
        %v1831 = vmul.f32 1.0, %v1830
        %v1832 = vrcp.pop %v1778
        %v1833 = vmul.f32 1.0, %v1832
        %v1834 = vrcp.pop %v1779
        %v1835 = vmul.f32 1.0, %v1834
        %v1836 = vrcp.pop %v1780
        %v1837 = vmul.f32 1.0, %v1836
        %v1838 = vrcp.pop %v1781
        %v1839 = vmul.f32 1.0, %v1838
        %v1840 = vrcp.pop %v1782
        %v1841 = vmul.f32 1.0, %v1840
        %v1842 = vrcp.pop %v1783
        %v1843 = vmul.f32 1.0, %v1842
        %v1844 = vrcp.pop %v1784
        %v1845 = vmul.f32 1.0, %v1844
        %v1846 = vrcp.pop %v1785
        %v1847 = vmul.f32 1.0, %v1846
        %v1848 = vrcp.pop %v1786
        %v1849 = vmul.f32 1.0, %v1848
        %v1850 = vrcp.pop %v1787
        %v1851 = vmul.f32 1.0, %v1850
        %v1852 = vld [vmem:[%s1279] sm:$0xff]
        %v1853 = vld [vmem:[%s1279 + $0x8] sm:$0xff]
        %v1854 = vld [vmem:[%s1279 + $0x10] sm:$0xff]
        %v1855 = vld [vmem:[%s1279 + $0x18] sm:$0xff]
        %v1856 = vld [vmem:[%s1279 + $0x20] sm:$0xff]
        %v1857 = vld [vmem:[%s1279 + $0x28] sm:$0xff]
        %v1858 = vld [vmem:[%s1279 + $0x30] sm:$0xff]
        %v1859 = vld [vmem:[%s1279 + $0x38] sm:$0xff]
        %v1860 = vld [vmem:[%s1279 + $0x40] sm:$0xff]
        %v1861 = vld [vmem:[%s1279 + $0x48] sm:$0xff]
        %v1862 = vld [vmem:[%s1279 + $0x50] sm:$0xff]
        %v1863 = vld [vmem:[%s1279 + $0x58] sm:$0xff]
        %v1864 = vld [vmem:[%s1279 + $0x60] sm:$0xff]
        %v1865 = vld [vmem:[%s1279 + $0x68] sm:$0xff]
        %v1866 = vld [vmem:[%s1279 + $0x70] sm:$0xff]
        %v1867 = vld [vmem:[%s1279 + $0x78] sm:$0xff]
        %v1868 = vld [vmem:[%s1279 + $0x80] sm:$0xff]
        %v1869 = vld [vmem:[%s1279 + $0x88] sm:$0xff]
        %v1870 = vld [vmem:[%s1279 + $0x90] sm:$0xff]
        %v1871 = vld [vmem:[%s1279 + $0x98] sm:$0xff]
        %v1872 = vld [vmem:[%s1279 + $0xa0] sm:$0xff]
        %v1873 = vld [vmem:[%s1279 + $0xa8] sm:$0xff]
        %v1874 = vld [vmem:[%s1279 + $0xb0] sm:$0xff]
        %v1875 = vld [vmem:[%s1279 + $0xb8] sm:$0xff]
        %v1876 = vld [vmem:[%s1279 + $0xc0] sm:$0xff]
        %v1877 = vld [vmem:[%s1279 + $0xc8] sm:$0xff]
        %v1878 = vld [vmem:[%s1279 + $0xd0] sm:$0xff]
        %v1879 = vld [vmem:[%s1279 + $0xd8] sm:$0xff]
        %v1880 = vld [vmem:[%s1279 + $0xe0] sm:$0xff]
        %v1881 = vld [vmem:[%s1279 + $0xe8] sm:$0xff]
        %v1882 = vld [vmem:[%s1279 + $0xf0] sm:$0xff]
        %v1883 = vld [vmem:[%s1279 + $0xf8] sm:$0xff]
        %vm1884 = vcmp.lt.f32.partialorder %v1852, %v1789
        %vm1885 = vcmp.lt.f32.partialorder %v1853, %v1791
        %vm1886 = vcmp.lt.f32.partialorder %v1854, %v1793
        %vm1887 = vcmp.lt.f32.partialorder %v1855, %v1795
        %vm1888 = vcmp.lt.f32.partialorder %v1856, %v1797
        %vm1889 = vcmp.lt.f32.partialorder %v1857, %v1799
        %vm1890 = vcmp.lt.f32.partialorder %v1858, %v1801
        %vm1891 = vcmp.lt.f32.partialorder %v1859, %v1803
        %vm1892 = vcmp.lt.f32.partialorder %v1860, %v1805
        %vm1893 = vcmp.lt.f32.partialorder %v1861, %v1807
        %vm1894 = vcmp.lt.f32.partialorder %v1862, %v1809
        %vm1895 = vcmp.lt.f32.partialorder %v1863, %v1811
        %vm1896 = vcmp.lt.f32.partialorder %v1864, %v1813
        %vm1897 = vcmp.lt.f32.partialorder %v1865, %v1815
        %vm1898 = vcmp.lt.f32.partialorder %v1866, %v1817
        %vm1899 = vcmp.lt.f32.partialorder %v1867, %v1819
        %vm1900 = vcmp.lt.f32.partialorder %v1868, %v1821
        %vm1901 = vcmp.lt.f32.partialorder %v1869, %v1823
        %vm1902 = vcmp.lt.f32.partialorder %v1870, %v1825
        %vm1903 = vcmp.lt.f32.partialorder %v1871, %v1827
        %vm1904 = vcmp.lt.f32.partialorder %v1872, %v1829
        %vm1905 = vcmp.lt.f32.partialorder %v1873, %v1831
        %vm1906 = vcmp.lt.f32.partialorder %v1874, %v1833
        %vm1907 = vcmp.lt.f32.partialorder %v1875, %v1835
        %vm1908 = vcmp.lt.f32.partialorder %v1876, %v1837
        %vm1909 = vcmp.lt.f32.partialorder %v1877, %v1839
        %vm1910 = vcmp.lt.f32.partialorder %v1878, %v1841
        %vm1911 = vcmp.lt.f32.partialorder %v1879, %v1843
        %vm1912 = vcmp.lt.f32.partialorder %v1880, %v1845
        %vm1913 = vcmp.lt.f32.partialorder %v1881, %v1847
        %vm1914 = vcmp.lt.f32.partialorder %v1882, %v1849
        %vm1915 = vcmp.lt.f32.partialorder %v1883, %v1851
        %v1916 = vsel %vm1884, 1, 0
        %v1917 = vsel %vm1885, 1, 0
        %v1918 = vsel %vm1886, 1, 0
        %v1919 = vsel %vm1887, 1, 0
        %v1920 = vsel %vm1888, 1, 0
        %v1921 = vsel %vm1889, 1, 0
        %v1922 = vsel %vm1890, 1, 0
        %v1923 = vsel %vm1891, 1, 0
        %v1924 = vsel %vm1892, 1, 0
        %v1925 = vsel %vm1893, 1, 0
        %v1926 = vsel %vm1894, 1, 0
        %v1927 = vsel %vm1895, 1, 0
        %v1928 = vsel %vm1896, 1, 0
        %v1929 = vsel %vm1897, 1, 0
        %v1930 = vsel %vm1898, 1, 0
        %v1931 = vsel %vm1899, 1, 0
        %v1932 = vsel %vm1900, 1, 0
        %v1933 = vsel %vm1901, 1, 0
        %v1934 = vsel %vm1902, 1, 0
        %v1935 = vsel %vm1903, 1, 0
        %v1936 = vsel %vm1904, 1, 0
        %v1937 = vsel %vm1905, 1, 0
        %v1938 = vsel %vm1906, 1, 0
        %v1939 = vsel %vm1907, 1, 0
        %v1940 = vsel %vm1908, 1, 0
        %v1941 = vsel %vm1909, 1, 0
        %v1942 = vsel %vm1910, 1, 0
        %v1943 = vsel %vm1911, 1, 0
        %v1944 = vsel %vm1912, 1, 0
        %v1945 = vsel %vm1913, 1, 0
        %v1946 = vsel %vm1914, 1, 0
        %v1947 = vsel %vm1915, 1, 0
        %v1948 = vcvt.s32.f32 %v1916
        %v1949 = vcvt.s32.f32 %v1917
        %v1950 = vcvt.s32.f32 %v1918
        %v1951 = vcvt.s32.f32 %v1919
        %v1952 = vcvt.s32.f32 %v1920
        %v1953 = vcvt.s32.f32 %v1921
        %v1954 = vcvt.s32.f32 %v1922
        %v1955 = vcvt.s32.f32 %v1923
        %v1956 = vcvt.s32.f32 %v1924
        %v1957 = vcvt.s32.f32 %v1925
        %v1958 = vcvt.s32.f32 %v1926
        %v1959 = vcvt.s32.f32 %v1927
        %v1960 = vcvt.s32.f32 %v1928
        %v1961 = vcvt.s32.f32 %v1929
        %v1962 = vcvt.s32.f32 %v1930
        %v1963 = vcvt.s32.f32 %v1931
        %v1964 = vcvt.s32.f32 %v1932
        %v1965 = vcvt.s32.f32 %v1933
        %v1966 = vcvt.s32.f32 %v1934
        %v1967 = vcvt.s32.f32 %v1935
        %v1968 = vcvt.s32.f32 %v1936
        %v1969 = vcvt.s32.f32 %v1937
        %v1970 = vcvt.s32.f32 %v1938
        %v1971 = vcvt.s32.f32 %v1939
        %v1972 = vcvt.s32.f32 %v1940
        %v1973 = vcvt.s32.f32 %v1941
        %v1974 = vcvt.s32.f32 %v1942
        %v1975 = vcvt.s32.f32 %v1943
        %v1976 = vcvt.s32.f32 %v1944
        %v1977 = vcvt.s32.f32 %v1945
        %v1978 = vcvt.s32.f32 %v1946
        %v1979 = vcvt.s32.f32 %v1947
        %s1980 = scalar_lea.vmem %s1272, 128 [#allocation2]
        %v1981 = vld [vmem:[%s1980] sm:$0xf]
        %v1982 = vld [vmem:[%s1980 + $0x4] sm:$0xf]
        %v1983 = vld [vmem:[%s1980 + $0x8] sm:$0xf]
        %v1984 = vld [vmem:[%s1980 + $0xc] sm:$0xf]
        %v1985 = vld [vmem:[%s1980 + $0x10] sm:$0xf]
        %v1986 = vld [vmem:[%s1980 + $0x14] sm:$0xf]
        %v1987 = vld [vmem:[%s1980 + $0x18] sm:$0xf]
        %v1988 = vld [vmem:[%s1980 + $0x1c] sm:$0xf]
        %v1989 = vld [vmem:[%s1980 + $0x20] sm:$0xf]
        %v1990 = vld [vmem:[%s1980 + $0x24] sm:$0xf]
        %v1991 = vld [vmem:[%s1980 + $0x28] sm:$0xf]
        %v1992 = vld [vmem:[%s1980 + $0x2c] sm:$0xf]
        %v1993 = vld [vmem:[%s1980 + $0x30] sm:$0xf]
        %v1994 = vld [vmem:[%s1980 + $0x34] sm:$0xf]
        %v1995 = vld [vmem:[%s1980 + $0x38] sm:$0xf]
        %v1996 = vld [vmem:[%s1980 + $0x3c] sm:$0xf]
        %v1997 = vld [vmem:[%s1980 + $0x40] sm:$0xf]
        %v1998 = vld [vmem:[%s1980 + $0x44] sm:$0xf]
        %v1999 = vld [vmem:[%s1980 + $0x48] sm:$0xf]
        %v2000 = vld [vmem:[%s1980 + $0x4c] sm:$0xf]
        %v2001 = vld [vmem:[%s1980 + $0x50] sm:$0xf]
        %v2002 = vld [vmem:[%s1980 + $0x54] sm:$0xf]
        %v2003 = vld [vmem:[%s1980 + $0x58] sm:$0xf]
        %v2004 = vld [vmem:[%s1980 + $0x5c] sm:$0xf]
        %v2005 = vld [vmem:[%s1980 + $0x60] sm:$0xf]
        %v2006 = vld [vmem:[%s1980 + $0x64] sm:$0xf]
        %v2007 = vld [vmem:[%s1980 + $0x68] sm:$0xf]
        %v2008 = vld [vmem:[%s1980 + $0x6c] sm:$0xf]
        %v2009 = vld [vmem:[%s1980 + $0x70] sm:$0xf]
        %v2010 = vld [vmem:[%s1980 + $0x74] sm:$0xf]
        %v2011 = vld [vmem:[%s1980 + $0x78] sm:$0xf]
        %v2012 = vld [vmem:[%s1980 + $0x7c] sm:$0xf]
        %v2045 = vunpack.c.l.b16 %v1981
        %v2046 = vunpack.c.l.b16 %v1982
        %v2047 = vunpack.c.l.b16 %v1983
        %v2048 = vunpack.c.l.b16 %v1984
        %v2049 = vunpack.c.l.b16 %v1985
        %v2050 = vunpack.c.l.b16 %v1986
        %v2051 = vunpack.c.l.b16 %v1987
        %v2052 = vunpack.c.l.b16 %v1988
        %v2053 = vunpack.c.l.b16 %v1989
        %v2054 = vunpack.c.l.b16 %v1990
        %v2055 = vunpack.c.l.b16 %v1991
        %v2056 = vunpack.c.l.b16 %v1992
        %v2057 = vunpack.c.l.b16 %v1993
        %v2058 = vunpack.c.l.b16 %v1994
        %v2059 = vunpack.c.l.b16 %v1995
        %v2060 = vunpack.c.l.b16 %v1996
        %v2061 = vunpack.c.l.b16 %v1997
        %v2062 = vunpack.c.l.b16 %v1998
        %v2063 = vunpack.c.l.b16 %v1999
        %v2064 = vunpack.c.l.b16 %v2000
        %v2065 = vunpack.c.l.b16 %v2001
        %v2066 = vunpack.c.l.b16 %v2002
        %v2067 = vunpack.c.l.b16 %v2003
        %v2068 = vunpack.c.l.b16 %v2004
        %v2069 = vunpack.c.l.b16 %v2005
        %v2070 = vunpack.c.l.b16 %v2006
        %v2071 = vunpack.c.l.b16 %v2007
        %v2072 = vunpack.c.l.b16 %v2008
        %v2073 = vunpack.c.l.b16 %v2009
        %v2074 = vunpack.c.l.b16 %v2010
        %v2075 = vunpack.c.l.b16 %v2011
        %v2076 = vunpack.c.l.b16 %v2012
        %v2077 = vpack.c.b16 %v2046, %v2045
        %v2078 = vpack.c.b16 %v2048, %v2047
        %v2079 = vpack.c.b16 %v2050, %v2049
        %v2080 = vpack.c.b16 %v2052, %v2051
        %v2081 = vpack.c.b16 %v2054, %v2053
        %v2082 = vpack.c.b16 %v2056, %v2055
        %v2083 = vpack.c.b16 %v2058, %v2057
        %v2084 = vpack.c.b16 %v2060, %v2059
        %v2085 = vpack.c.b16 %v2062, %v2061
        %v2086 = vpack.c.b16 %v2064, %v2063
        %v2087 = vpack.c.b16 %v2066, %v2065
        %v2088 = vpack.c.b16 %v2068, %v2067
        %v2089 = vpack.c.b16 %v2070, %v2069
        %v2090 = vpack.c.b16 %v2072, %v2071
        %v2091 = vpack.c.b16 %v2074, %v2073
        %v2092 = vpack.c.b16 %v2076, %v2075
        %v2094 = vsel %vm1450, %v2077, 0
        %v2097 = vsel %vm1450, %v2078, 0
        %v2100 = vsel %vm1450, %v2079, 0
        %v2103 = vsel %vm1450, %v2080, 0
        %v2106 = vsel %vm1450, %v2081, 0
        %v2109 = vsel %vm1450, %v2082, 0
        %v2112 = vsel %vm1450, %v2083, 0
        %v2115 = vsel %vm1450, %v2084, 0
        %v2118 = vsel %vm1450, %v2085, 0
        %v2121 = vsel %vm1450, %v2086, 0
        %v2124 = vsel %vm1450, %v2087, 0
        %v2127 = vsel %vm1450, %v2088, 0
        %v2130 = vsel %vm1450, %v2089, 0
        %v2133 = vsel %vm1450, %v2090, 0
        %v2136 = vsel %vm1450, %v2091, 0
        %v2139 = vsel %vm1450, %v2092, 0
        %2141 = vmatprep.subr.bf16.mxu0 0
        %2142 = vmatpush1.bf16.msra.mxu0 %v1446
        %2143 = vmatprep.subr.bf16.mxu0 0
        %2144 = vmatpush1.bf16.msra.mxu0 %v1447
        %2145 = vmatprep.subr.bf16.mxu0 0
        %2146 = vmatpush1.bf16.msra.mxu0 0
        %2147 = vmatprep.subr.bf16.mxu0 0
        %2148 = vmatpush1.bf16.msra.mxu0 0
        %2149 = vmatprep.subr.bf16.mxu0 0
        %2150 = vmatpush1.bf16.msra.mxu0 0
        %2151 = vmatprep.subr.bf16.mxu0 0
        %2152 = vmatpush1.bf16.msra.mxu0 0
        %2153 = vmatprep.subr.bf16.mxu0 0
        %2154 = vmatpush1.bf16.msra.mxu0 0
        %2155 = vmatprep.subr.bf16.mxu0 0
        %2156 = vmatpush1.bf16.msra.mxu0 0
        %2157 = vmatprep.subr.bf16.mxu0 0
        %2158 = vmatpush1.bf16.msra.mxu0 0
        %2159 = vmatprep.subr.bf16.mxu0 0
        %2160 = vmatpush1.bf16.msra.mxu0 0
        %2161 = vmatprep.subr.bf16.mxu0 0
        %2162 = vmatpush1.bf16.msra.mxu0 0
        %2163 = vmatprep.subr.bf16.mxu0 0
        %2164 = vmatpush1.bf16.msra.mxu0 0
        %2165 = vmatprep.subr.bf16.mxu0 0
        %2166 = vmatpush1.bf16.msra.mxu0 0
        %2167 = vmatprep.subr.bf16.mxu0 0
        %2168 = vmatpush1.bf16.msra.mxu0 0
        %2169 = vmatprep.subr.bf16.mxu0 0
        %2170 = vmatpush1.bf16.msra.mxu0 0
        %2171 = vmatprep.subr.bf16.mxu0 0
        %2172 = vmatpush1.bf16.msra.mxu0 0
        %2173 = vmatprep.mubr.bf16.mxu0 0
        %2174 = vmatmul.mubr.bf16.gmra.mrb[0].mxu0 %v2094
        %v2175 = vpop.f32.mrb[0].mxu0
        %v2176 = vadd.f32 %v1356, %v2175
        %v2177 = vpop.f32.mrb[0].mxu0
        %v2178 = vpop.f32.mrb[0].mxu0
        %v2179 = vadd.f32 %v1356, %v2178
        %v2180 = vpop.f32.mrb[0].mxu0
        %2181 = vmatprep.mubr.bf16.mxu0 0
        %2182 = vmatmul.mubr.bf16.gmra.mrb[0].mxu0 %v2097
        %v2183 = vpop.f32.mrb[0].mxu0
        %v2184 = vadd.f32 %v1356, %v2183
        %v2185 = vpop.f32.mrb[0].mxu0
        %v2186 = vpop.f32.mrb[0].mxu0
        %v2187 = vadd.f32 %v1356, %v2186
        %v2188 = vpop.f32.mrb[0].mxu0
        %2189 = vmatprep.mubr.bf16.mxu0 0
        %2190 = vmatmul.mubr.bf16.gmra.mrb[0].mxu0 %v2100
        %v2191 = vpop.f32.mrb[0].mxu0
        %v2192 = vadd.f32 %v1356, %v2191
        %v2193 = vpop.f32.mrb[0].mxu0
        %v2194 = vpop.f32.mrb[0].mxu0
        %v2195 = vadd.f32 %v1356, %v2194
        %v2196 = vpop.f32.mrb[0].mxu0
        %2197 = vmatprep.mubr.bf16.mxu0 0
        %2198 = vmatmul.mubr.bf16.gmra.mrb[0].mxu0 %v2103
        %v2199 = vpop.f32.mrb[0].mxu0
        %v2200 = vadd.f32 %v1356, %v2199
        %v2201 = vpop.f32.mrb[0].mxu0
        %v2202 = vpop.f32.mrb[0].mxu0
        %v2203 = vadd.f32 %v1356, %v2202
        %v2204 = vpop.f32.mrb[0].mxu0
        %2205 = vmatprep.mubr.bf16.mxu0 0
        %2206 = vmatmul.mubr.bf16.gmra.mrb[0].mxu0 %v2106
        %v2207 = vpop.f32.mrb[0].mxu0
        %v2208 = vadd.f32 %v1356, %v2207
        %v2209 = vpop.f32.mrb[0].mxu0
        %v2210 = vpop.f32.mrb[0].mxu0
        %v2211 = vadd.f32 %v1356, %v2210
        %v2212 = vpop.f32.mrb[0].mxu0
        %2213 = vmatprep.mubr.bf16.mxu0 0
        %2214 = vmatmul.mubr.bf16.gmra.mrb[0].mxu0 %v2109
        %v2215 = vpop.f32.mrb[0].mxu0
        %v2216 = vadd.f32 %v1356, %v2215
        %v2217 = vpop.f32.mrb[0].mxu0
        %v2218 = vpop.f32.mrb[0].mxu0
        %v2219 = vadd.f32 %v1356, %v2218
        %v2220 = vpop.f32.mrb[0].mxu0
        %2221 = vmatprep.mubr.bf16.mxu0 0
        %2222 = vmatmul.mubr.bf16.gmra.mrb[0].mxu0 %v2112
        %v2223 = vpop.f32.mrb[0].mxu0
        %v2224 = vadd.f32 %v1356, %v2223
        %v2225 = vpop.f32.mrb[0].mxu0
        %v2226 = vpop.f32.mrb[0].mxu0
        %v2227 = vadd.f32 %v1356, %v2226
        %v2228 = vpop.f32.mrb[0].mxu0
        %2229 = vmatprep.mubr.bf16.mxu0 0
        %2230 = vmatmul.mubr.bf16.gmra.mrb[0].mxu0 %v2115
        %v2231 = vpop.f32.mrb[0].mxu0
        %v2232 = vadd.f32 %v1356, %v2231
        %v2233 = vpop.f32.mrb[0].mxu0
        %v2234 = vpop.f32.mrb[0].mxu0
        %v2235 = vadd.f32 %v1356, %v2234
        %v2236 = vpop.f32.mrb[0].mxu0
        %2237 = vmatprep.mubr.bf16.mxu0 0
        %2238 = vmatmul.mubr.bf16.gmra.mrb[0].mxu0 %v2118
        %v2239 = vpop.f32.mrb[0].mxu0
        %v2240 = vadd.f32 %v1356, %v2239
        %v2241 = vpop.f32.mrb[0].mxu0
        %v2242 = vpop.f32.mrb[0].mxu0
        %v2243 = vadd.f32 %v1356, %v2242
        %v2244 = vpop.f32.mrb[0].mxu0
        %2245 = vmatprep.mubr.bf16.mxu0 0
        %2246 = vmatmul.mubr.bf16.gmra.mrb[0].mxu0 %v2121
        %v2247 = vpop.f32.mrb[0].mxu0
        %v2248 = vadd.f32 %v1356, %v2247
        %v2249 = vpop.f32.mrb[0].mxu0
        %v2250 = vpop.f32.mrb[0].mxu0
        %v2251 = vadd.f32 %v1356, %v2250
        %v2252 = vpop.f32.mrb[0].mxu0
        %2253 = vmatprep.mubr.bf16.mxu0 0
        %2254 = vmatmul.mubr.bf16.gmra.mrb[0].mxu0 %v2124
        %v2255 = vpop.f32.mrb[0].mxu0
        %v2256 = vadd.f32 %v1356, %v2255
        %v2257 = vpop.f32.mrb[0].mxu0
        %v2258 = vpop.f32.mrb[0].mxu0
        %v2259 = vadd.f32 %v1356, %v2258
        %v2260 = vpop.f32.mrb[0].mxu0
        %2261 = vmatprep.mubr.bf16.mxu0 0
        %2262 = vmatmul.mubr.bf16.gmra.mrb[0].mxu0 %v2127
        %v2263 = vpop.f32.mrb[0].mxu0
        %v2264 = vadd.f32 %v1356, %v2263
        %v2265 = vpop.f32.mrb[0].mxu0
        %v2266 = vpop.f32.mrb[0].mxu0
        %v2267 = vadd.f32 %v1356, %v2266
        %v2268 = vpop.f32.mrb[0].mxu0
        %2269 = vmatprep.mubr.bf16.mxu0 0
        %2270 = vmatmul.mubr.bf16.gmra.mrb[0].mxu0 %v2130
        %v2271 = vpop.f32.mrb[0].mxu0
        %v2272 = vadd.f32 %v1356, %v2271
        %v2273 = vpop.f32.mrb[0].mxu0
        %v2274 = vpop.f32.mrb[0].mxu0
        %v2275 = vadd.f32 %v1356, %v2274
        %v2276 = vpop.f32.mrb[0].mxu0
        %2277 = vmatprep.mubr.bf16.mxu0 0
        %2278 = vmatmul.mubr.bf16.gmra.mrb[0].mxu0 %v2133
        %v2279 = vpop.f32.mrb[0].mxu0
        %v2280 = vadd.f32 %v1356, %v2279
        %v2281 = vpop.f32.mrb[0].mxu0
        %v2282 = vpop.f32.mrb[0].mxu0
        %v2283 = vadd.f32 %v1356, %v2282
        %v2284 = vpop.f32.mrb[0].mxu0
        %2285 = vmatprep.mubr.bf16.mxu0 0
        %2286 = vmatmul.mubr.bf16.gmra.mrb[0].mxu0 %v2136
        %v2287 = vpop.f32.mrb[0].mxu0
        %v2288 = vadd.f32 %v1356, %v2287
        %v2289 = vpop.f32.mrb[0].mxu0
        %v2290 = vpop.f32.mrb[0].mxu0
        %v2291 = vadd.f32 %v1356, %v2290
        %v2292 = vpop.f32.mrb[0].mxu0
        %2293 = vmatprep.mubr.bf16.mxu0 0
        %2294 = vmatmul.mubr.bf16.gmra.mrb[0].mxu0 %v2139
        %v2295 = vpop.f32.mrb[0].mxu0
        %v2296 = vadd.f32 %v1356, %v2295
        %v2297 = vpop.f32.mrb[0].mxu0
        %v2298 = vpop.f32.mrb[0].mxu0
        %v2299 = vadd.f32 %v1356, %v2298
        %v2300 = vpop.f32.mrb[0].mxu0
        %2301 = vdwg.mxu0
        %v2302 = vsub.f32 0.0, %v2176
        %v2303 = vsub.f32 0.0, %v2179
        %v2304 = vsub.f32 0.0, %v2184
        %v2305 = vsub.f32 0.0, %v2187
        %v2306 = vsub.f32 0.0, %v2192
        %v2307 = vsub.f32 0.0, %v2195
        %v2308 = vsub.f32 0.0, %v2200
        %v2309 = vsub.f32 0.0, %v2203
        %v2310 = vsub.f32 0.0, %v2208
        %v2311 = vsub.f32 0.0, %v2211
        %v2312 = vsub.f32 0.0, %v2216
        %v2313 = vsub.f32 0.0, %v2219
        %v2314 = vsub.f32 0.0, %v2224
        %v2315 = vsub.f32 0.0, %v2227
        %v2316 = vsub.f32 0.0, %v2232
        %v2317 = vsub.f32 0.0, %v2235
        %v2318 = vsub.f32 0.0, %v2240
        %v2319 = vsub.f32 0.0, %v2243
        %v2320 = vsub.f32 0.0, %v2248
        %v2321 = vsub.f32 0.0, %v2251
        %v2322 = vsub.f32 0.0, %v2256
        %v2323 = vsub.f32 0.0, %v2259
        %v2324 = vsub.f32 0.0, %v2264
        %v2325 = vsub.f32 0.0, %v2267
        %v2326 = vsub.f32 0.0, %v2272
        %v2327 = vsub.f32 0.0, %v2275
        %v2328 = vsub.f32 0.0, %v2280
        %v2329 = vsub.f32 0.0, %v2283
        %v2330 = vsub.f32 0.0, %v2288
        %v2331 = vsub.f32 0.0, %v2291
        %v2332 = vsub.f32 0.0, %v2296
        %v2333 = vsub.f32 0.0, %v2299
        %v2334 = vmul.f32 %v2302, 1.442695
        %v2335 = vpow.pop %v2334
        %v2336 = vmul.f32 %v2303, 1.442695
        %v2337 = vpow.pop %v2336
        %v2338 = vmul.f32 %v2304, 1.442695
        %v2339 = vpow.pop %v2338
        %v2340 = vmul.f32 %v2305, 1.442695
        %v2341 = vpow.pop %v2340
        %v2342 = vmul.f32 %v2306, 1.442695
        %v2343 = vpow.pop %v2342
        %v2344 = vmul.f32 %v2307, 1.442695
        %v2345 = vpow.pop %v2344
        %v2346 = vmul.f32 %v2308, 1.442695
        %v2347 = vpow.pop %v2346
        %v2348 = vmul.f32 %v2309, 1.442695
        %v2349 = vpow.pop %v2348
        %v2350 = vmul.f32 %v2310, 1.442695
        %v2351 = vpow.pop %v2350
        %v2352 = vmul.f32 %v2311, 1.442695
        %v2353 = vpow.pop %v2352
        %v2354 = vmul.f32 %v2312, 1.442695
        %v2355 = vpow.pop %v2354
        %v2356 = vmul.f32 %v2313, 1.442695
        %v2357 = vpow.pop %v2356
        %v2358 = vmul.f32 %v2314, 1.442695
        %v2359 = vpow.pop %v2358
        %v2360 = vmul.f32 %v2315, 1.442695
        %v2361 = vpow.pop %v2360
        %v2362 = vmul.f32 %v2316, 1.442695
        %v2363 = vpow.pop %v2362
        %v2364 = vmul.f32 %v2317, 1.442695
        %v2365 = vpow.pop %v2364
        %v2366 = vmul.f32 %v2318, 1.442695
        %v2367 = vpow.pop %v2366
        %v2368 = vmul.f32 %v2319, 1.442695
        %v2369 = vpow.pop %v2368
        %v2370 = vmul.f32 %v2320, 1.442695
        %v2371 = vpow.pop %v2370
        %v2372 = vmul.f32 %v2321, 1.442695
        %v2373 = vpow.pop %v2372
        %v2374 = vmul.f32 %v2322, 1.442695
        %v2375 = vpow.pop %v2374
        %v2376 = vmul.f32 %v2323, 1.442695
        %v2377 = vpow.pop %v2376
        %v2378 = vmul.f32 %v2324, 1.442695
        %v2379 = vpow.pop %v2378
        %v2380 = vmul.f32 %v2325, 1.442695
        %v2381 = vpow.pop %v2380
        %v2382 = vmul.f32 %v2326, 1.442695
        %v2383 = vpow.pop %v2382
        %v2384 = vmul.f32 %v2327, 1.442695
        %v2385 = vpow.pop %v2384
        %v2386 = vmul.f32 %v2328, 1.442695
        %v2387 = vpow.pop %v2386
        %v2388 = vmul.f32 %v2329, 1.442695
        %v2389 = vpow.pop %v2388
        %v2390 = vmul.f32 %v2330, 1.442695
        %v2391 = vpow.pop %v2390
        %v2392 = vmul.f32 %v2331, 1.442695
        %v2393 = vpow.pop %v2392
        %v2394 = vmul.f32 %v2332, 1.442695
        %v2395 = vpow.pop %v2394
        %v2396 = vmul.f32 %v2333, 1.442695
        %v2397 = vpow.pop %v2396
        %v2398 = vadd.f32 %v2335, 1.0
        %v2399 = vadd.f32 %v2337, 1.0
        %v2400 = vadd.f32 %v2339, 1.0
        %v2401 = vadd.f32 %v2341, 1.0
        %v2402 = vadd.f32 %v2343, 1.0
        %v2403 = vadd.f32 %v2345, 1.0
        %v2404 = vadd.f32 %v2347, 1.0
        %v2405 = vadd.f32 %v2349, 1.0
        %v2406 = vadd.f32 %v2351, 1.0
        %v2407 = vadd.f32 %v2353, 1.0
        %v2408 = vadd.f32 %v2355, 1.0
        %v2409 = vadd.f32 %v2357, 1.0
        %v2410 = vadd.f32 %v2359, 1.0
        %v2411 = vadd.f32 %v2361, 1.0
        %v2412 = vadd.f32 %v2363, 1.0
        %v2413 = vadd.f32 %v2365, 1.0
        %v2414 = vadd.f32 %v2367, 1.0
        %v2415 = vadd.f32 %v2369, 1.0
        %v2416 = vadd.f32 %v2371, 1.0
        %v2417 = vadd.f32 %v2373, 1.0
        %v2418 = vadd.f32 %v2375, 1.0
        %v2419 = vadd.f32 %v2377, 1.0
        %v2420 = vadd.f32 %v2379, 1.0
        %v2421 = vadd.f32 %v2381, 1.0
        %v2422 = vadd.f32 %v2383, 1.0
        %v2423 = vadd.f32 %v2385, 1.0
        %v2424 = vadd.f32 %v2387, 1.0
        %v2425 = vadd.f32 %v2389, 1.0
        %v2426 = vadd.f32 %v2391, 1.0
        %v2427 = vadd.f32 %v2393, 1.0
        %v2428 = vadd.f32 %v2395, 1.0
        %v2429 = vadd.f32 %v2397, 1.0
        %v2430 = vrcp.pop %v2398
        %v2431 = vmul.f32 1.0, %v2430
        %v2432 = vrcp.pop %v2399
        %v2433 = vmul.f32 1.0, %v2432
        %v2434 = vrcp.pop %v2400
        %v2435 = vmul.f32 1.0, %v2434
        %v2436 = vrcp.pop %v2401
        %v2437 = vmul.f32 1.0, %v2436
        %v2438 = vrcp.pop %v2402
        %v2439 = vmul.f32 1.0, %v2438
        %v2440 = vrcp.pop %v2403
        %v2441 = vmul.f32 1.0, %v2440
        %v2442 = vrcp.pop %v2404
        %v2443 = vmul.f32 1.0, %v2442
        %v2444 = vrcp.pop %v2405
        %v2445 = vmul.f32 1.0, %v2444
        %v2446 = vrcp.pop %v2406
        %v2447 = vmul.f32 1.0, %v2446
        %v2448 = vrcp.pop %v2407
        %v2449 = vmul.f32 1.0, %v2448
        %v2450 = vrcp.pop %v2408
        %v2451 = vmul.f32 1.0, %v2450
        %v2452 = vrcp.pop %v2409
        %v2453 = vmul.f32 1.0, %v2452
        %v2454 = vrcp.pop %v2410
        %v2455 = vmul.f32 1.0, %v2454
        %v2456 = vrcp.pop %v2411
        %v2457 = vmul.f32 1.0, %v2456
        %v2458 = vrcp.pop %v2412
        %v2459 = vmul.f32 1.0, %v2458
        %v2460 = vrcp.pop %v2413
        %v2461 = vmul.f32 1.0, %v2460
        %v2462 = vrcp.pop %v2414
        %v2463 = vmul.f32 1.0, %v2462
        %v2464 = vrcp.pop %v2415
        %v2465 = vmul.f32 1.0, %v2464
        %v2466 = vrcp.pop %v2416
        %v2467 = vmul.f32 1.0, %v2466
        %v2468 = vrcp.pop %v2417
        %v2469 = vmul.f32 1.0, %v2468
        %v2470 = vrcp.pop %v2418
        %v2471 = vmul.f32 1.0, %v2470
        %v2472 = vrcp.pop %v2419
        %v2473 = vmul.f32 1.0, %v2472
        %v2474 = vrcp.pop %v2420
        %v2475 = vmul.f32 1.0, %v2474
        %v2476 = vrcp.pop %v2421
        %v2477 = vmul.f32 1.0, %v2476
        %v2478 = vrcp.pop %v2422
        %v2479 = vmul.f32 1.0, %v2478
        %v2480 = vrcp.pop %v2423
        %v2481 = vmul.f32 1.0, %v2480
        %v2482 = vrcp.pop %v2424
        %v2483 = vmul.f32 1.0, %v2482
        %v2484 = vrcp.pop %v2425
        %v2485 = vmul.f32 1.0, %v2484
        %v2486 = vrcp.pop %v2426
        %v2487 = vmul.f32 1.0, %v2486
        %v2488 = vrcp.pop %v2427
        %v2489 = vmul.f32 1.0, %v2488
        %v2490 = vrcp.pop %v2428
        %v2491 = vmul.f32 1.0, %v2490
        %v2492 = vrcp.pop %v2429
        %v2493 = vmul.f32 1.0, %v2492
        %s2494 = scalar_lea.vmem %s1279, 256 [#allocation3]
        %v2495 = vld [vmem:[%s2494] sm:$0xff]
        %v2496 = vld [vmem:[%s2494 + $0x8] sm:$0xff]
        %v2497 = vld [vmem:[%s2494 + $0x10] sm:$0xff]
        %v2498 = vld [vmem:[%s2494 + $0x18] sm:$0xff]
        %v2499 = vld [vmem:[%s2494 + $0x20] sm:$0xff]
        %v2500 = vld [vmem:[%s2494 + $0x28] sm:$0xff]
        %v2501 = vld [vmem:[%s2494 + $0x30] sm:$0xff]
        %v2502 = vld [vmem:[%s2494 + $0x38] sm:$0xff]
        %v2503 = vld [vmem:[%s2494 + $0x40] sm:$0xff]
        %v2504 = vld [vmem:[%s2494 + $0x48] sm:$0xff]
        %v2505 = vld [vmem:[%s2494 + $0x50] sm:$0xff]
        %v2506 = vld [vmem:[%s2494 + $0x58] sm:$0xff]
        %v2507 = vld [vmem:[%s2494 + $0x60] sm:$0xff]
        %v2508 = vld [vmem:[%s2494 + $0x68] sm:$0xff]
        %v2509 = vld [vmem:[%s2494 + $0x70] sm:$0xff]
        %v2510 = vld [vmem:[%s2494 + $0x78] sm:$0xff]
        %v2511 = vld [vmem:[%s2494 + $0x80] sm:$0xff]
        %v2512 = vld [vmem:[%s2494 + $0x88] sm:$0xff]
        %v2513 = vld [vmem:[%s2494 + $0x90] sm:$0xff]
        %v2514 = vld [vmem:[%s2494 + $0x98] sm:$0xff]
        %v2515 = vld [vmem:[%s2494 + $0xa0] sm:$0xff]
        %v2516 = vld [vmem:[%s2494 + $0xa8] sm:$0xff]
        %v2517 = vld [vmem:[%s2494 + $0xb0] sm:$0xff]
        %v2518 = vld [vmem:[%s2494 + $0xb8] sm:$0xff]
        %v2519 = vld [vmem:[%s2494 + $0xc0] sm:$0xff]
        %v2520 = vld [vmem:[%s2494 + $0xc8] sm:$0xff]
        %v2521 = vld [vmem:[%s2494 + $0xd0] sm:$0xff]
        %v2522 = vld [vmem:[%s2494 + $0xd8] sm:$0xff]
        %v2523 = vld [vmem:[%s2494 + $0xe0] sm:$0xff]
        %v2524 = vld [vmem:[%s2494 + $0xe8] sm:$0xff]
        %v2525 = vld [vmem:[%s2494 + $0xf0] sm:$0xff]
        %v2526 = vld [vmem:[%s2494 + $0xf8] sm:$0xff]
        %vm2527 = vcmp.lt.f32.partialorder %v2495, %v2431
        %vm2528 = vcmp.lt.f32.partialorder %v2496, %v2433
        %vm2529 = vcmp.lt.f32.partialorder %v2497, %v2435
        %vm2530 = vcmp.lt.f32.partialorder %v2498, %v2437
        %vm2531 = vcmp.lt.f32.partialorder %v2499, %v2439
        %vm2532 = vcmp.lt.f32.partialorder %v2500, %v2441
        %vm2533 = vcmp.lt.f32.partialorder %v2501, %v2443
        %vm2534 = vcmp.lt.f32.partialorder %v2502, %v2445
        %vm2535 = vcmp.lt.f32.partialorder %v2503, %v2447
        %vm2536 = vcmp.lt.f32.partialorder %v2504, %v2449
        %vm2537 = vcmp.lt.f32.partialorder %v2505, %v2451
        %vm2538 = vcmp.lt.f32.partialorder %v2506, %v2453
        %vm2539 = vcmp.lt.f32.partialorder %v2507, %v2455
        %vm2540 = vcmp.lt.f32.partialorder %v2508, %v2457
        %vm2541 = vcmp.lt.f32.partialorder %v2509, %v2459
        %vm2542 = vcmp.lt.f32.partialorder %v2510, %v2461
        %vm2543 = vcmp.lt.f32.partialorder %v2511, %v2463
        %vm2544 = vcmp.lt.f32.partialorder %v2512, %v2465
        %vm2545 = vcmp.lt.f32.partialorder %v2513, %v2467
        %vm2546 = vcmp.lt.f32.partialorder %v2514, %v2469
        %vm2547 = vcmp.lt.f32.partialorder %v2515, %v2471
        %vm2548 = vcmp.lt.f32.partialorder %v2516, %v2473
        %vm2549 = vcmp.lt.f32.partialorder %v2517, %v2475
        %vm2550 = vcmp.lt.f32.partialorder %v2518, %v2477
        %vm2551 = vcmp.lt.f32.partialorder %v2519, %v2479
        %vm2552 = vcmp.lt.f32.partialorder %v2520, %v2481
        %vm2553 = vcmp.lt.f32.partialorder %v2521, %v2483
        %vm2554 = vcmp.lt.f32.partialorder %v2522, %v2485
        %vm2555 = vcmp.lt.f32.partialorder %v2523, %v2487
        %vm2556 = vcmp.lt.f32.partialorder %v2524, %v2489
        %vm2557 = vcmp.lt.f32.partialorder %v2525, %v2491
        %vm2558 = vcmp.lt.f32.partialorder %v2526, %v2493
        %v2559 = vsel %vm2527, 1, 0
        %v2560 = vsel %vm2528, 1, 0
        %v2561 = vsel %vm2529, 1, 0
        %v2562 = vsel %vm2530, 1, 0
        %v2563 = vsel %vm2531, 1, 0
        %v2564 = vsel %vm2532, 1, 0
        %v2565 = vsel %vm2533, 1, 0
        %v2566 = vsel %vm2534, 1, 0
        %v2567 = vsel %vm2535, 1, 0
        %v2568 = vsel %vm2536, 1, 0
        %v2569 = vsel %vm2537, 1, 0
        %v2570 = vsel %vm2538, 1, 0
        %v2571 = vsel %vm2539, 1, 0
        %v2572 = vsel %vm2540, 1, 0
        %v2573 = vsel %vm2541, 1, 0
        %v2574 = vsel %vm2542, 1, 0
        %v2575 = vsel %vm2543, 1, 0
        %v2576 = vsel %vm2544, 1, 0
        %v2577 = vsel %vm2545, 1, 0
        %v2578 = vsel %vm2546, 1, 0
        %v2579 = vsel %vm2547, 1, 0
        %v2580 = vsel %vm2548, 1, 0
        %v2581 = vsel %vm2549, 1, 0
        %v2582 = vsel %vm2550, 1, 0
        %v2583 = vsel %vm2551, 1, 0
        %v2584 = vsel %vm2552, 1, 0
        %v2585 = vsel %vm2553, 1, 0
        %v2586 = vsel %vm2554, 1, 0
        %v2587 = vsel %vm2555, 1, 0
        %v2588 = vsel %vm2556, 1, 0
        %v2589 = vsel %vm2557, 1, 0
        %v2590 = vsel %vm2558, 1, 0
        %v2591 = vcvt.s32.f32 %v2559
        %v2592 = vcvt.s32.f32 %v2560
        %v2593 = vcvt.s32.f32 %v2561
        %v2594 = vcvt.s32.f32 %v2562
        %v2595 = vcvt.s32.f32 %v2563
        %v2596 = vcvt.s32.f32 %v2564
        %v2597 = vcvt.s32.f32 %v2565
        %v2598 = vcvt.s32.f32 %v2566
        %v2599 = vcvt.s32.f32 %v2567
        %v2600 = vcvt.s32.f32 %v2568
        %v2601 = vcvt.s32.f32 %v2569
        %v2602 = vcvt.s32.f32 %v2570
        %v2603 = vcvt.s32.f32 %v2571
        %v2604 = vcvt.s32.f32 %v2572
        %v2605 = vcvt.s32.f32 %v2573
        %v2606 = vcvt.s32.f32 %v2574
        %v2607 = vcvt.s32.f32 %v2575
        %v2608 = vcvt.s32.f32 %v2576
        %v2609 = vcvt.s32.f32 %v2577
        %v2610 = vcvt.s32.f32 %v2578
        %v2611 = vcvt.s32.f32 %v2579
        %v2612 = vcvt.s32.f32 %v2580
        %v2613 = vcvt.s32.f32 %v2581
        %v2614 = vcvt.s32.f32 %v2582
        %v2615 = vcvt.s32.f32 %v2583
        %v2616 = vcvt.s32.f32 %v2584
        %v2617 = vcvt.s32.f32 %v2585
        %v2618 = vcvt.s32.f32 %v2586
        %v2619 = vcvt.s32.f32 %v2587
        %v2620 = vcvt.s32.f32 %v2588
        %v2621 = vcvt.s32.f32 %v2589
        %v2622 = vcvt.s32.f32 %v2590
        %v2623 = vmax.f32 %v1948, %v2591
        %v2624 = vmax.f32 %v1949, %v2592
        %v2625 = vmax.f32 %v1950, %v2593
        %v2626 = vmax.f32 %v1951, %v2594
        %v2627 = vmax.f32 %v1952, %v2595
        %v2628 = vmax.f32 %v1953, %v2596
        %v2629 = vmax.f32 %v1954, %v2597
        %v2630 = vmax.f32 %v1955, %v2598
        %v2631 = vmax.f32 %v1956, %v2599
        %v2632 = vmax.f32 %v1957, %v2600
        %v2633 = vmax.f32 %v1958, %v2601
        %v2634 = vmax.f32 %v1959, %v2602
        %v2635 = vmax.f32 %v1960, %v2603
        %v2636 = vmax.f32 %v1961, %v2604
        %v2637 = vmax.f32 %v1962, %v2605
        %v2638 = vmax.f32 %v1963, %v2606
        %v2639 = vmax.f32 %v1964, %v2607
        %v2640 = vmax.f32 %v1965, %v2608
        %v2641 = vmax.f32 %v1966, %v2609
        %v2642 = vmax.f32 %v1967, %v2610
        %v2643 = vmax.f32 %v1968, %v2611
        %v2644 = vmax.f32 %v1969, %v2612
        %v2645 = vmax.f32 %v1970, %v2613
        %v2646 = vmax.f32 %v1971, %v2614
        %v2647 = vmax.f32 %v1972, %v2615
        %v2648 = vmax.f32 %v1973, %v2616
        %v2649 = vmax.f32 %v1974, %v2617
        %v2650 = vmax.f32 %v1975, %v2618
        %v2651 = vmax.f32 %v1976, %v2619
        %v2652 = vmax.f32 %v1977, %v2620
        %v2653 = vmax.f32 %v1978, %v2621
        %v2654 = vmax.f32 %v1979, %v2622
        %s2655 = scalar_lea.vmem %s1272, 256 [#allocation2]
        %v2656 = vld [vmem:[%s2655] sm:$0xf]
        %v2657 = vld [vmem:[%s2655 + $0x4] sm:$0xf]
        %v2658 = vld [vmem:[%s2655 + $0x8] sm:$0xf]
        %v2659 = vld [vmem:[%s2655 + $0xc] sm:$0xf]
        %v2660 = vld [vmem:[%s2655 + $0x10] sm:$0xf]
        %v2661 = vld [vmem:[%s2655 + $0x14] sm:$0xf]
        %v2662 = vld [vmem:[%s2655 + $0x18] sm:$0xf]
        %v2663 = vld [vmem:[%s2655 + $0x1c] sm:$0xf]
        %v2664 = vld [vmem:[%s2655 + $0x20] sm:$0xf]
        %v2665 = vld [vmem:[%s2655 + $0x24] sm:$0xf]
        %v2666 = vld [vmem:[%s2655 + $0x28] sm:$0xf]
        %v2667 = vld [vmem:[%s2655 + $0x2c] sm:$0xf]
        %v2668 = vld [vmem:[%s2655 + $0x30] sm:$0xf]
        %v2669 = vld [vmem:[%s2655 + $0x34] sm:$0xf]
        %v2670 = vld [vmem:[%s2655 + $0x38] sm:$0xf]
        %v2671 = vld [vmem:[%s2655 + $0x3c] sm:$0xf]
        %v2672 = vld [vmem:[%s2655 + $0x40] sm:$0xf]
        %v2673 = vld [vmem:[%s2655 + $0x44] sm:$0xf]
        %v2674 = vld [vmem:[%s2655 + $0x48] sm:$0xf]
        %v2675 = vld [vmem:[%s2655 + $0x4c] sm:$0xf]
        %v2676 = vld [vmem:[%s2655 + $0x50] sm:$0xf]
        %v2677 = vld [vmem:[%s2655 + $0x54] sm:$0xf]
        %v2678 = vld [vmem:[%s2655 + $0x58] sm:$0xf]
        %v2679 = vld [vmem:[%s2655 + $0x5c] sm:$0xf]
        %v2680 = vld [vmem:[%s2655 + $0x60] sm:$0xf]
        %v2681 = vld [vmem:[%s2655 + $0x64] sm:$0xf]
        %v2682 = vld [vmem:[%s2655 + $0x68] sm:$0xf]
        %v2683 = vld [vmem:[%s2655 + $0x6c] sm:$0xf]
        %v2684 = vld [vmem:[%s2655 + $0x70] sm:$0xf]
        %v2685 = vld [vmem:[%s2655 + $0x74] sm:$0xf]
        %v2686 = vld [vmem:[%s2655 + $0x78] sm:$0xf]
        %v2687 = vld [vmem:[%s2655 + $0x7c] sm:$0xf]
        %v2720 = vunpack.c.l.b16 %v2656
        %v2721 = vunpack.c.l.b16 %v2657
        %v2722 = vunpack.c.l.b16 %v2658
        %v2723 = vunpack.c.l.b16 %v2659
        %v2724 = vunpack.c.l.b16 %v2660
        %v2725 = vunpack.c.l.b16 %v2661
        %v2726 = vunpack.c.l.b16 %v2662
        %v2727 = vunpack.c.l.b16 %v2663
        %v2728 = vunpack.c.l.b16 %v2664
        %v2729 = vunpack.c.l.b16 %v2665
        %v2730 = vunpack.c.l.b16 %v2666
        %v2731 = vunpack.c.l.b16 %v2667
        %v2732 = vunpack.c.l.b16 %v2668
        %v2733 = vunpack.c.l.b16 %v2669
        %v2734 = vunpack.c.l.b16 %v2670
        %v2735 = vunpack.c.l.b16 %v2671
        %v2736 = vunpack.c.l.b16 %v2672
        %v2737 = vunpack.c.l.b16 %v2673
        %v2738 = vunpack.c.l.b16 %v2674
        %v2739 = vunpack.c.l.b16 %v2675
        %v2740 = vunpack.c.l.b16 %v2676
        %v2741 = vunpack.c.l.b16 %v2677
        %v2742 = vunpack.c.l.b16 %v2678
        %v2743 = vunpack.c.l.b16 %v2679
        %v2744 = vunpack.c.l.b16 %v2680
        %v2745 = vunpack.c.l.b16 %v2681
        %v2746 = vunpack.c.l.b16 %v2682
        %v2747 = vunpack.c.l.b16 %v2683
        %v2748 = vunpack.c.l.b16 %v2684
        %v2749 = vunpack.c.l.b16 %v2685
        %v2750 = vunpack.c.l.b16 %v2686
        %v2751 = vunpack.c.l.b16 %v2687
        %v2752 = vpack.c.b16 %v2721, %v2720
        %v2753 = vpack.c.b16 %v2723, %v2722
        %v2754 = vpack.c.b16 %v2725, %v2724
        %v2755 = vpack.c.b16 %v2727, %v2726
        %v2756 = vpack.c.b16 %v2729, %v2728
        %v2757 = vpack.c.b16 %v2731, %v2730
        %v2758 = vpack.c.b16 %v2733, %v2732
        %v2759 = vpack.c.b16 %v2735, %v2734
        %v2760 = vpack.c.b16 %v2737, %v2736
        %v2761 = vpack.c.b16 %v2739, %v2738
        %v2762 = vpack.c.b16 %v2741, %v2740
        %v2763 = vpack.c.b16 %v2743, %v2742
        %v2764 = vpack.c.b16 %v2745, %v2744
        %v2765 = vpack.c.b16 %v2747, %v2746
        %v2766 = vpack.c.b16 %v2749, %v2748
        %v2767 = vpack.c.b16 %v2751, %v2750
        %v2769 = vsel %vm1450, %v2752, 0
        %v2772 = vsel %vm1450, %v2753, 0
        %v2775 = vsel %vm1450, %v2754, 0
        %v2778 = vsel %vm1450, %v2755, 0
        %v2781 = vsel %vm1450, %v2756, 0
        %v2784 = vsel %vm1450, %v2757, 0
        %v2787 = vsel %vm1450, %v2758, 0
        %v2790 = vsel %vm1450, %v2759, 0
        %v2793 = vsel %vm1450, %v2760, 0
        %v2796 = vsel %vm1450, %v2761, 0
        %v2799 = vsel %vm1450, %v2762, 0
        %v2802 = vsel %vm1450, %v2763, 0
        %v2805 = vsel %vm1450, %v2764, 0
        %v2808 = vsel %vm1450, %v2765, 0
        %v2811 = vsel %vm1450, %v2766, 0
        %v2814 = vsel %vm1450, %v2767, 0
        %2816 = vmatprep.subr.bf16.mxu0 0
        %2817 = vmatpush1.bf16.msra.mxu0 %v1446
        %2818 = vmatprep.subr.bf16.mxu0 0
        %2819 = vmatpush1.bf16.msra.mxu0 %v1447
        %2820 = vmatprep.subr.bf16.mxu0 0
        %2821 = vmatpush1.bf16.msra.mxu0 0
        %2822 = vmatprep.subr.bf16.mxu0 0
        %2823 = vmatpush1.bf16.msra.mxu0 0
        %2824 = vmatprep.subr.bf16.mxu0 0
        %2825 = vmatpush1.bf16.msra.mxu0 0
        %2826 = vmatprep.subr.bf16.mxu0 0
        %2827 = vmatpush1.bf16.msra.mxu0 0
        %2828 = vmatprep.subr.bf16.mxu0 0
        %2829 = vmatpush1.bf16.msra.mxu0 0
        %2830 = vmatprep.subr.bf16.mxu0 0
        %2831 = vmatpush1.bf16.msra.mxu0 0
        %2832 = vmatprep.subr.bf16.mxu0 0
        %2833 = vmatpush1.bf16.msra.mxu0 0
        %2834 = vmatprep.subr.bf16.mxu0 0
        %2835 = vmatpush1.bf16.msra.mxu0 0
        %2836 = vmatprep.subr.bf16.mxu0 0
        %2837 = vmatpush1.bf16.msra.mxu0 0
        %2838 = vmatprep.subr.bf16.mxu0 0
        %2839 = vmatpush1.bf16.msra.mxu0 0
        %2840 = vmatprep.subr.bf16.mxu0 0
        %2841 = vmatpush1.bf16.msra.mxu0 0
        %2842 = vmatprep.subr.bf16.mxu0 0
        %2843 = vmatpush1.bf16.msra.mxu0 0
        %2844 = vmatprep.subr.bf16.mxu0 0
        %2845 = vmatpush1.bf16.msra.mxu0 0
        %2846 = vmatprep.subr.bf16.mxu0 0
        %2847 = vmatpush1.bf16.msra.mxu0 0
        %2848 = vmatprep.mubr.bf16.mxu0 0
        %2849 = vmatmul.mubr.bf16.gmra.mrb[0].mxu0 %v2769
        %v2850 = vpop.f32.mrb[0].mxu0
        %v2851 = vadd.f32 %v1356, %v2850
        %v2852 = vpop.f32.mrb[0].mxu0
        %v2853 = vpop.f32.mrb[0].mxu0
        %v2854 = vadd.f32 %v1356, %v2853
        %v2855 = vpop.f32.mrb[0].mxu0
        %2856 = vmatprep.mubr.bf16.mxu0 0
        %2857 = vmatmul.mubr.bf16.gmra.mrb[0].mxu0 %v2772
        %v2858 = vpop.f32.mrb[0].mxu0
        %v2859 = vadd.f32 %v1356, %v2858
        %v2860 = vpop.f32.mrb[0].mxu0
        %v2861 = vpop.f32.mrb[0].mxu0
        %v2862 = vadd.f32 %v1356, %v2861
        %v2863 = vpop.f32.mrb[0].mxu0
        %2864 = vmatprep.mubr.bf16.mxu0 0
        %2865 = vmatmul.mubr.bf16.gmra.mrb[0].mxu0 %v2775
        %v2866 = vpop.f32.mrb[0].mxu0
        %v2867 = vadd.f32 %v1356, %v2866
        %v2868 = vpop.f32.mrb[0].mxu0
        %v2869 = vpop.f32.mrb[0].mxu0
        %v2870 = vadd.f32 %v1356, %v2869
        %v2871 = vpop.f32.mrb[0].mxu0
        %2872 = vmatprep.mubr.bf16.mxu0 0
        %2873 = vmatmul.mubr.bf16.gmra.mrb[0].mxu0 %v2778
        %v2874 = vpop.f32.mrb[0].mxu0
        %v2875 = vadd.f32 %v1356, %v2874
        %v2876 = vpop.f32.mrb[0].mxu0
        %v2877 = vpop.f32.mrb[0].mxu0
        %v2878 = vadd.f32 %v1356, %v2877
        %v2879 = vpop.f32.mrb[0].mxu0
        %2880 = vmatprep.mubr.bf16.mxu0 0
        %2881 = vmatmul.mubr.bf16.gmra.mrb[0].mxu0 %v2781
        %v2882 = vpop.f32.mrb[0].mxu0
        %v2883 = vadd.f32 %v1356, %v2882
        %v2884 = vpop.f32.mrb[0].mxu0
        %v2885 = vpop.f32.mrb[0].mxu0
        %v2886 = vadd.f32 %v1356, %v2885
        %v2887 = vpop.f32.mrb[0].mxu0
        %2888 = vmatprep.mubr.bf16.mxu0 0
        %2889 = vmatmul.mubr.bf16.gmra.mrb[0].mxu0 %v2784
        %v2890 = vpop.f32.mrb[0].mxu0
        %v2891 = vadd.f32 %v1356, %v2890
        %v2892 = vpop.f32.mrb[0].mxu0
        %v2893 = vpop.f32.mrb[0].mxu0
        %v2894 = vadd.f32 %v1356, %v2893
        %v2895 = vpop.f32.mrb[0].mxu0
        %2896 = vmatprep.mubr.bf16.mxu0 0
        %2897 = vmatmul.mubr.bf16.gmra.mrb[0].mxu0 %v2787
        %v2898 = vpop.f32.mrb[0].mxu0
        %v2899 = vadd.f32 %v1356, %v2898
        %v2900 = vpop.f32.mrb[0].mxu0
        %v2901 = vpop.f32.mrb[0].mxu0
        %v2902 = vadd.f32 %v1356, %v2901
        %v2903 = vpop.f32.mrb[0].mxu0
        %2904 = vmatprep.mubr.bf16.mxu0 0
        %2905 = vmatmul.mubr.bf16.gmra.mrb[0].mxu0 %v2790
        %v2906 = vpop.f32.mrb[0].mxu0
        %v2907 = vadd.f32 %v1356, %v2906
        %v2908 = vpop.f32.mrb[0].mxu0
        %v2909 = vpop.f32.mrb[0].mxu0
        %v2910 = vadd.f32 %v1356, %v2909
        %v2911 = vpop.f32.mrb[0].mxu0
        %2912 = vmatprep.mubr.bf16.mxu0 0
        %2913 = vmatmul.mubr.bf16.gmra.mrb[0].mxu0 %v2793
        %v2914 = vpop.f32.mrb[0].mxu0
        %v2915 = vadd.f32 %v1356, %v2914
        %v2916 = vpop.f32.mrb[0].mxu0
        %v2917 = vpop.f32.mrb[0].mxu0
        %v2918 = vadd.f32 %v1356, %v2917
        %v2919 = vpop.f32.mrb[0].mxu0
        %2920 = vmatprep.mubr.bf16.mxu0 0
        %2921 = vmatmul.mubr.bf16.gmra.mrb[0].mxu0 %v2796
        %v2922 = vpop.f32.mrb[0].mxu0
        %v2923 = vadd.f32 %v1356, %v2922
        %v2924 = vpop.f32.mrb[0].mxu0
        %v2925 = vpop.f32.mrb[0].mxu0
        %v2926 = vadd.f32 %v1356, %v2925
        %v2927 = vpop.f32.mrb[0].mxu0
        %2928 = vmatprep.mubr.bf16.mxu0 0
        %2929 = vmatmul.mubr.bf16.gmra.mrb[0].mxu0 %v2799
        %v2930 = vpop.f32.mrb[0].mxu0
        %v2931 = vadd.f32 %v1356, %v2930
        %v2932 = vpop.f32.mrb[0].mxu0
        %v2933 = vpop.f32.mrb[0].mxu0
        %v2934 = vadd.f32 %v1356, %v2933
        %v2935 = vpop.f32.mrb[0].mxu0
        %2936 = vmatprep.mubr.bf16.mxu0 0
        %2937 = vmatmul.mubr.bf16.gmra.mrb[0].mxu0 %v2802
        %v2938 = vpop.f32.mrb[0].mxu0
        %v2939 = vadd.f32 %v1356, %v2938
        %v2940 = vpop.f32.mrb[0].mxu0
        %v2941 = vpop.f32.mrb[0].mxu0
        %v2942 = vadd.f32 %v1356, %v2941
        %v2943 = vpop.f32.mrb[0].mxu0
        %2944 = vmatprep.mubr.bf16.mxu0 0
        %2945 = vmatmul.mubr.bf16.gmra.mrb[0].mxu0 %v2805
        %v2946 = vpop.f32.mrb[0].mxu0
        %v2947 = vadd.f32 %v1356, %v2946
        %v2948 = vpop.f32.mrb[0].mxu0
        %v2949 = vpop.f32.mrb[0].mxu0
        %v2950 = vadd.f32 %v1356, %v2949
        %v2951 = vpop.f32.mrb[0].mxu0
        %2952 = vmatprep.mubr.bf16.mxu0 0
        %2953 = vmatmul.mubr.bf16.gmra.mrb[0].mxu0 %v2808
        %v2954 = vpop.f32.mrb[0].mxu0
        %v2955 = vadd.f32 %v1356, %v2954
        %v2956 = vpop.f32.mrb[0].mxu0
        %v2957 = vpop.f32.mrb[0].mxu0
        %v2958 = vadd.f32 %v1356, %v2957
        %v2959 = vpop.f32.mrb[0].mxu0
        %2960 = vmatprep.mubr.bf16.mxu0 0
        %2961 = vmatmul.mubr.bf16.gmra.mrb[0].mxu0 %v2811
        %v2962 = vpop.f32.mrb[0].mxu0
        %v2963 = vadd.f32 %v1356, %v2962
        %v2964 = vpop.f32.mrb[0].mxu0
        %v2965 = vpop.f32.mrb[0].mxu0
        %v2966 = vadd.f32 %v1356, %v2965
        %v2967 = vpop.f32.mrb[0].mxu0
        %2968 = vmatprep.mubr.bf16.mxu0 0
        %2969 = vmatmul.mubr.bf16.gmra.mrb[0].mxu0 %v2814
        %v2970 = vpop.f32.mrb[0].mxu0
        %v2971 = vadd.f32 %v1356, %v2970
        %v2972 = vpop.f32.mrb[0].mxu0
        %v2973 = vpop.f32.mrb[0].mxu0
        %v2974 = vadd.f32 %v1356, %v2973
        %v2975 = vpop.f32.mrb[0].mxu0
        %2976 = vdwg.mxu0
        %v2977 = vsub.f32 0.0, %v2851
        %v2978 = vsub.f32 0.0, %v2854
        %v2979 = vsub.f32 0.0, %v2859
        %v2980 = vsub.f32 0.0, %v2862
        %v2981 = vsub.f32 0.0, %v2867
        %v2982 = vsub.f32 0.0, %v2870
        %v2983 = vsub.f32 0.0, %v2875
        %v2984 = vsub.f32 0.0, %v2878
        %v2985 = vsub.f32 0.0, %v2883
        %v2986 = vsub.f32 0.0, %v2886
        %v2987 = vsub.f32 0.0, %v2891
        %v2988 = vsub.f32 0.0, %v2894
        %v2989 = vsub.f32 0.0, %v2899
        %v2990 = vsub.f32 0.0, %v2902
        %v2991 = vsub.f32 0.0, %v2907
        %v2992 = vsub.f32 0.0, %v2910
        %v2993 = vsub.f32 0.0, %v2915
        %v2994 = vsub.f32 0.0, %v2918
        %v2995 = vsub.f32 0.0, %v2923
        %v2996 = vsub.f32 0.0, %v2926
        %v2997 = vsub.f32 0.0, %v2931
        %v2998 = vsub.f32 0.0, %v2934
        %v2999 = vsub.f32 0.0, %v2939
        %v3000 = vsub.f32 0.0, %v2942
        %v3001 = vsub.f32 0.0, %v2947
        %v3002 = vsub.f32 0.0, %v2950
        %v3003 = vsub.f32 0.0, %v2955
        %v3004 = vsub.f32 0.0, %v2958
        %v3005 = vsub.f32 0.0, %v2963
        %v3006 = vsub.f32 0.0, %v2966
        %v3007 = vsub.f32 0.0, %v2971
        %v3008 = vsub.f32 0.0, %v2974
        %v3009 = vmul.f32 %v2977, 1.442695
        %v3010 = vpow.pop %v3009
        %v3011 = vmul.f32 %v2978, 1.442695
        %v3012 = vpow.pop %v3011
        %v3013 = vmul.f32 %v2979, 1.442695
        %v3014 = vpow.pop %v3013
        %v3015 = vmul.f32 %v2980, 1.442695
        %v3016 = vpow.pop %v3015
        %v3017 = vmul.f32 %v2981, 1.442695
        %v3018 = vpow.pop %v3017
        %v3019 = vmul.f32 %v2982, 1.442695
        %v3020 = vpow.pop %v3019
        %v3021 = vmul.f32 %v2983, 1.442695
        %v3022 = vpow.pop %v3021
        %v3023 = vmul.f32 %v2984, 1.442695
        %v3024 = vpow.pop %v3023
        %v3025 = vmul.f32 %v2985, 1.442695
        %v3026 = vpow.pop %v3025
        %v3027 = vmul.f32 %v2986, 1.442695
        %v3028 = vpow.pop %v3027
        %v3029 = vmul.f32 %v2987, 1.442695
        %v3030 = vpow.pop %v3029
        %v3031 = vmul.f32 %v2988, 1.442695
        %v3032 = vpow.pop %v3031
        %v3033 = vmul.f32 %v2989, 1.442695
        %v3034 = vpow.pop %v3033
        %v3035 = vmul.f32 %v2990, 1.442695
        %v3036 = vpow.pop %v3035
        %v3037 = vmul.f32 %v2991, 1.442695
        %v3038 = vpow.pop %v3037
        %v3039 = vmul.f32 %v2992, 1.442695
        %v3040 = vpow.pop %v3039
        %v3041 = vmul.f32 %v2993, 1.442695
        %v3042 = vpow.pop %v3041
        %v3043 = vmul.f32 %v2994, 1.442695
        %v3044 = vpow.pop %v3043
        %v3045 = vmul.f32 %v2995, 1.442695
        %v3046 = vpow.pop %v3045
        %v3047 = vmul.f32 %v2996, 1.442695
        %v3048 = vpow.pop %v3047
        %v3049 = vmul.f32 %v2997, 1.442695
        %v3050 = vpow.pop %v3049
        %v3051 = vmul.f32 %v2998, 1.442695
        %v3052 = vpow.pop %v3051
        %v3053 = vmul.f32 %v2999, 1.442695
        %v3054 = vpow.pop %v3053
        %v3055 = vmul.f32 %v3000, 1.442695
        %v3056 = vpow.pop %v3055
        %v3057 = vmul.f32 %v3001, 1.442695
        %v3058 = vpow.pop %v3057
        %v3059 = vmul.f32 %v3002, 1.442695
        %v3060 = vpow.pop %v3059
        %v3061 = vmul.f32 %v3003, 1.442695
        %v3062 = vpow.pop %v3061
        %v3063 = vmul.f32 %v3004, 1.442695
        %v3064 = vpow.pop %v3063
        %v3065 = vmul.f32 %v3005, 1.442695
        %v3066 = vpow.pop %v3065
        %v3067 = vmul.f32 %v3006, 1.442695
        %v3068 = vpow.pop %v3067
        %v3069 = vmul.f32 %v3007, 1.442695
        %v3070 = vpow.pop %v3069
        %v3071 = vmul.f32 %v3008, 1.442695
        %v3072 = vpow.pop %v3071
        %v3073 = vadd.f32 %v3010, 1.0
        %v3074 = vadd.f32 %v3012, 1.0
        %v3075 = vadd.f32 %v3014, 1.0
        %v3076 = vadd.f32 %v3016, 1.0
        %v3077 = vadd.f32 %v3018, 1.0
        %v3078 = vadd.f32 %v3020, 1.0
        %v3079 = vadd.f32 %v3022, 1.0
        %v3080 = vadd.f32 %v3024, 1.0
        %v3081 = vadd.f32 %v3026, 1.0
        %v3082 = vadd.f32 %v3028, 1.0
        %v3083 = vadd.f32 %v3030, 1.0
        %v3084 = vadd.f32 %v3032, 1.0
        %v3085 = vadd.f32 %v3034, 1.0
        %v3086 = vadd.f32 %v3036, 1.0
        %v3087 = vadd.f32 %v3038, 1.0
        %v3088 = vadd.f32 %v3040, 1.0
        %v3089 = vadd.f32 %v3042, 1.0
        %v3090 = vadd.f32 %v3044, 1.0
        %v3091 = vadd.f32 %v3046, 1.0
        %v3092 = vadd.f32 %v3048, 1.0
        %v3093 = vadd.f32 %v3050, 1.0
        %v3094 = vadd.f32 %v3052, 1.0
        %v3095 = vadd.f32 %v3054, 1.0
        %v3096 = vadd.f32 %v3056, 1.0
        %v3097 = vadd.f32 %v3058, 1.0
        %v3098 = vadd.f32 %v3060, 1.0
        %v3099 = vadd.f32 %v3062, 1.0
        %v3100 = vadd.f32 %v3064, 1.0
        %v3101 = vadd.f32 %v3066, 1.0
        %v3102 = vadd.f32 %v3068, 1.0
        %v3103 = vadd.f32 %v3070, 1.0
        %v3104 = vadd.f32 %v3072, 1.0
        %v3105 = vrcp.pop %v3073
        %v3106 = vmul.f32 1.0, %v3105
        %v3107 = vrcp.pop %v3074
        %v3108 = vmul.f32 1.0, %v3107
        %v3109 = vrcp.pop %v3075
        %v3110 = vmul.f32 1.0, %v3109
        %v3111 = vrcp.pop %v3076
        %v3112 = vmul.f32 1.0, %v3111
        %v3113 = vrcp.pop %v3077
        %v3114 = vmul.f32 1.0, %v3113
        %v3115 = vrcp.pop %v3078
        %v3116 = vmul.f32 1.0, %v3115
        %v3117 = vrcp.pop %v3079
        %v3118 = vmul.f32 1.0, %v3117
        %v3119 = vrcp.pop %v3080
        %v3120 = vmul.f32 1.0, %v3119
        %v3121 = vrcp.pop %v3081
        %v3122 = vmul.f32 1.0, %v3121
        %v3123 = vrcp.pop %v3082
        %v3124 = vmul.f32 1.0, %v3123
        %v3125 = vrcp.pop %v3083
        %v3126 = vmul.f32 1.0, %v3125
        %v3127 = vrcp.pop %v3084
        %v3128 = vmul.f32 1.0, %v3127
        %v3129 = vrcp.pop %v3085
        %v3130 = vmul.f32 1.0, %v3129
        %v3131 = vrcp.pop %v3086
        %v3132 = vmul.f32 1.0, %v3131
        %v3133 = vrcp.pop %v3087
        %v3134 = vmul.f32 1.0, %v3133
        %v3135 = vrcp.pop %v3088
        %v3136 = vmul.f32 1.0, %v3135
        %v3137 = vrcp.pop %v3089
        %v3138 = vmul.f32 1.0, %v3137
        %v3139 = vrcp.pop %v3090
        %v3140 = vmul.f32 1.0, %v3139
        %v3141 = vrcp.pop %v3091
        %v3142 = vmul.f32 1.0, %v3141
        %v3143 = vrcp.pop %v3092
        %v3144 = vmul.f32 1.0, %v3143
        %v3145 = vrcp.pop %v3093
        %v3146 = vmul.f32 1.0, %v3145
        %v3147 = vrcp.pop %v3094
        %v3148 = vmul.f32 1.0, %v3147
        %v3149 = vrcp.pop %v3095
        %v3150 = vmul.f32 1.0, %v3149
        %v3151 = vrcp.pop %v3096
        %v3152 = vmul.f32 1.0, %v3151
        %v3153 = vrcp.pop %v3097
        %v3154 = vmul.f32 1.0, %v3153
        %v3155 = vrcp.pop %v3098
        %v3156 = vmul.f32 1.0, %v3155
        %v3157 = vrcp.pop %v3099
        %v3158 = vmul.f32 1.0, %v3157
        %v3159 = vrcp.pop %v3100
        %v3160 = vmul.f32 1.0, %v3159
        %v3161 = vrcp.pop %v3101
        %v3162 = vmul.f32 1.0, %v3161
        %v3163 = vrcp.pop %v3102
        %v3164 = vmul.f32 1.0, %v3163
        %v3165 = vrcp.pop %v3103
        %v3166 = vmul.f32 1.0, %v3165
        %v3167 = vrcp.pop %v3104
        %v3168 = vmul.f32 1.0, %v3167
        %s3169 = scalar_lea.vmem %s1279, 512 [#allocation3]
        %v3170 = vld [vmem:[%s3169] sm:$0xff]
        %v3171 = vld [vmem:[%s3169 + $0x8] sm:$0xff]
        %v3172 = vld [vmem:[%s3169 + $0x10] sm:$0xff]
        %v3173 = vld [vmem:[%s3169 + $0x18] sm:$0xff]
        %v3174 = vld [vmem:[%s3169 + $0x20] sm:$0xff]
        %v3175 = vld [vmem:[%s3169 + $0x28] sm:$0xff]
        %v3176 = vld [vmem:[%s3169 + $0x30] sm:$0xff]
        %v3177 = vld [vmem:[%s3169 + $0x38] sm:$0xff]
        %v3178 = vld [vmem:[%s3169 + $0x40] sm:$0xff]
        %v3179 = vld [vmem:[%s3169 + $0x48] sm:$0xff]
        %v3180 = vld [vmem:[%s3169 + $0x50] sm:$0xff]
        %v3181 = vld [vmem:[%s3169 + $0x58] sm:$0xff]
        %v3182 = vld [vmem:[%s3169 + $0x60] sm:$0xff]
        %v3183 = vld [vmem:[%s3169 + $0x68] sm:$0xff]
        %v3184 = vld [vmem:[%s3169 + $0x70] sm:$0xff]
        %v3185 = vld [vmem:[%s3169 + $0x78] sm:$0xff]
        %v3186 = vld [vmem:[%s3169 + $0x80] sm:$0xff]
        %v3187 = vld [vmem:[%s3169 + $0x88] sm:$0xff]
        %v3188 = vld [vmem:[%s3169 + $0x90] sm:$0xff]
        %v3189 = vld [vmem:[%s3169 + $0x98] sm:$0xff]
        %v3190 = vld [vmem:[%s3169 + $0xa0] sm:$0xff]
        %v3191 = vld [vmem:[%s3169 + $0xa8] sm:$0xff]
        %v3192 = vld [vmem:[%s3169 + $0xb0] sm:$0xff]
        %v3193 = vld [vmem:[%s3169 + $0xb8] sm:$0xff]
        %v3194 = vld [vmem:[%s3169 + $0xc0] sm:$0xff]
        %v3195 = vld [vmem:[%s3169 + $0xc8] sm:$0xff]
        %v3196 = vld [vmem:[%s3169 + $0xd0] sm:$0xff]
        %v3197 = vld [vmem:[%s3169 + $0xd8] sm:$0xff]
        %v3198 = vld [vmem:[%s3169 + $0xe0] sm:$0xff]
        %v3199 = vld [vmem:[%s3169 + $0xe8] sm:$0xff]
        %v3200 = vld [vmem:[%s3169 + $0xf0] sm:$0xff]
        %v3201 = vld [vmem:[%s3169 + $0xf8] sm:$0xff]
        %vm3202 = vcmp.lt.f32.partialorder %v3170, %v3106
        %vm3203 = vcmp.lt.f32.partialorder %v3171, %v3108
        %vm3204 = vcmp.lt.f32.partialorder %v3172, %v3110
        %vm3205 = vcmp.lt.f32.partialorder %v3173, %v3112
        %vm3206 = vcmp.lt.f32.partialorder %v3174, %v3114
        %vm3207 = vcmp.lt.f32.partialorder %v3175, %v3116
        %vm3208 = vcmp.lt.f32.partialorder %v3176, %v3118
        %vm3209 = vcmp.lt.f32.partialorder %v3177, %v3120
        %vm3210 = vcmp.lt.f32.partialorder %v3178, %v3122
        %vm3211 = vcmp.lt.f32.partialorder %v3179, %v3124
        %vm3212 = vcmp.lt.f32.partialorder %v3180, %v3126
        %vm3213 = vcmp.lt.f32.partialorder %v3181, %v3128
        %vm3214 = vcmp.lt.f32.partialorder %v3182, %v3130
        %vm3215 = vcmp.lt.f32.partialorder %v3183, %v3132
        %vm3216 = vcmp.lt.f32.partialorder %v3184, %v3134
        %vm3217 = vcmp.lt.f32.partialorder %v3185, %v3136
        %vm3218 = vcmp.lt.f32.partialorder %v3186, %v3138
        %vm3219 = vcmp.lt.f32.partialorder %v3187, %v3140
        %vm3220 = vcmp.lt.f32.partialorder %v3188, %v3142
        %vm3221 = vcmp.lt.f32.partialorder %v3189, %v3144
        %vm3222 = vcmp.lt.f32.partialorder %v3190, %v3146
        %vm3223 = vcmp.lt.f32.partialorder %v3191, %v3148
        %vm3224 = vcmp.lt.f32.partialorder %v3192, %v3150
        %vm3225 = vcmp.lt.f32.partialorder %v3193, %v3152
        %vm3226 = vcmp.lt.f32.partialorder %v3194, %v3154
        %vm3227 = vcmp.lt.f32.partialorder %v3195, %v3156
        %vm3228 = vcmp.lt.f32.partialorder %v3196, %v3158
        %vm3229 = vcmp.lt.f32.partialorder %v3197, %v3160
        %vm3230 = vcmp.lt.f32.partialorder %v3198, %v3162
        %vm3231 = vcmp.lt.f32.partialorder %v3199, %v3164
        %vm3232 = vcmp.lt.f32.partialorder %v3200, %v3166
        %vm3233 = vcmp.lt.f32.partialorder %v3201, %v3168
        %v3234 = vsel %vm3202, 1, 0
        %v3235 = vsel %vm3203, 1, 0
        %v3236 = vsel %vm3204, 1, 0
        %v3237 = vsel %vm3205, 1, 0
        %v3238 = vsel %vm3206, 1, 0
        %v3239 = vsel %vm3207, 1, 0
        %v3240 = vsel %vm3208, 1, 0
        %v3241 = vsel %vm3209, 1, 0
        %v3242 = vsel %vm3210, 1, 0
        %v3243 = vsel %vm3211, 1, 0
        %v3244 = vsel %vm3212, 1, 0
        %v3245 = vsel %vm3213, 1, 0
        %v3246 = vsel %vm3214, 1, 0
        %v3247 = vsel %vm3215, 1, 0
        %v3248 = vsel %vm3216, 1, 0
        %v3249 = vsel %vm3217, 1, 0
        %v3250 = vsel %vm3218, 1, 0
        %v3251 = vsel %vm3219, 1, 0
        %v3252 = vsel %vm3220, 1, 0
        %v3253 = vsel %vm3221, 1, 0
        %v3254 = vsel %vm3222, 1, 0
        %v3255 = vsel %vm3223, 1, 0
        %v3256 = vsel %vm3224, 1, 0
        %v3257 = vsel %vm3225, 1, 0
        %v3258 = vsel %vm3226, 1, 0
        %v3259 = vsel %vm3227, 1, 0
        %v3260 = vsel %vm3228, 1, 0
        %v3261 = vsel %vm3229, 1, 0
        %v3262 = vsel %vm3230, 1, 0
        %v3263 = vsel %vm3231, 1, 0
        %v3264 = vsel %vm3232, 1, 0
        %v3265 = vsel %vm3233, 1, 0
        %v3266 = vcvt.s32.f32 %v3234
        %v3267 = vcvt.s32.f32 %v3235
        %v3268 = vcvt.s32.f32 %v3236
        %v3269 = vcvt.s32.f32 %v3237
        %v3270 = vcvt.s32.f32 %v3238
        %v3271 = vcvt.s32.f32 %v3239
        %v3272 = vcvt.s32.f32 %v3240
        %v3273 = vcvt.s32.f32 %v3241
        %v3274 = vcvt.s32.f32 %v3242
        %v3275 = vcvt.s32.f32 %v3243
        %v3276 = vcvt.s32.f32 %v3244
        %v3277 = vcvt.s32.f32 %v3245
        %v3278 = vcvt.s32.f32 %v3246
        %v3279 = vcvt.s32.f32 %v3247
        %v3280 = vcvt.s32.f32 %v3248
        %v3281 = vcvt.s32.f32 %v3249
        %v3282 = vcvt.s32.f32 %v3250
        %v3283 = vcvt.s32.f32 %v3251
        %v3284 = vcvt.s32.f32 %v3252
        %v3285 = vcvt.s32.f32 %v3253
        %v3286 = vcvt.s32.f32 %v3254
        %v3287 = vcvt.s32.f32 %v3255
        %v3288 = vcvt.s32.f32 %v3256
        %v3289 = vcvt.s32.f32 %v3257
        %v3290 = vcvt.s32.f32 %v3258
        %v3291 = vcvt.s32.f32 %v3259
        %v3292 = vcvt.s32.f32 %v3260
        %v3293 = vcvt.s32.f32 %v3261
        %v3294 = vcvt.s32.f32 %v3262
        %v3295 = vcvt.s32.f32 %v3263
        %v3296 = vcvt.s32.f32 %v3264
        %v3297 = vcvt.s32.f32 %v3265
        %s3298 = scalar_lea.vmem %s1272, 384 [#allocation2]
        %v3299 = vld [vmem:[%s3298] sm:$0xf]
        %v3300 = vld [vmem:[%s3298 + $0x4] sm:$0xf]
        %v3301 = vld [vmem:[%s3298 + $0x8] sm:$0xf]
        %v3302 = vld [vmem:[%s3298 + $0xc] sm:$0xf]
        %v3303 = vld [vmem:[%s3298 + $0x10] sm:$0xf]
        %v3304 = vld [vmem:[%s3298 + $0x14] sm:$0xf]
        %v3305 = vld [vmem:[%s3298 + $0x18] sm:$0xf]
        %v3306 = vld [vmem:[%s3298 + $0x1c] sm:$0xf]
        %v3307 = vld [vmem:[%s3298 + $0x20] sm:$0xf]
        %v3308 = vld [vmem:[%s3298 + $0x24] sm:$0xf]
        %v3309 = vld [vmem:[%s3298 + $0x28] sm:$0xf]
        %v3310 = vld [vmem:[%s3298 + $0x2c] sm:$0xf]
        %v3311 = vld [vmem:[%s3298 + $0x30] sm:$0xf]
        %v3312 = vld [vmem:[%s3298 + $0x34] sm:$0xf]
        %v3313 = vld [vmem:[%s3298 + $0x38] sm:$0xf]
        %v3314 = vld [vmem:[%s3298 + $0x3c] sm:$0xf]
        %v3315 = vld [vmem:[%s3298 + $0x40] sm:$0xf]
        %v3316 = vld [vmem:[%s3298 + $0x44] sm:$0xf]
        %v3317 = vld [vmem:[%s3298 + $0x48] sm:$0xf]
        %v3318 = vld [vmem:[%s3298 + $0x4c] sm:$0xf]
        %v3319 = vld [vmem:[%s3298 + $0x50] sm:$0xf]
        %v3320 = vld [vmem:[%s3298 + $0x54] sm:$0xf]
        %v3321 = vld [vmem:[%s3298 + $0x58] sm:$0xf]
        %v3322 = vld [vmem:[%s3298 + $0x5c] sm:$0xf]
        %v3323 = vld [vmem:[%s3298 + $0x60] sm:$0xf]
        %v3324 = vld [vmem:[%s3298 + $0x64] sm:$0xf]
        %v3325 = vld [vmem:[%s3298 + $0x68] sm:$0xf]
        %v3326 = vld [vmem:[%s3298 + $0x6c] sm:$0xf]
        %v3327 = vld [vmem:[%s3298 + $0x70] sm:$0xf]
        %v3328 = vld [vmem:[%s3298 + $0x74] sm:$0xf]
        %v3329 = vld [vmem:[%s3298 + $0x78] sm:$0xf]
        %v3330 = vld [vmem:[%s3298 + $0x7c] sm:$0xf]
        %v3363 = vunpack.c.l.b16 %v3299
        %v3364 = vunpack.c.l.b16 %v3300
        %v3365 = vunpack.c.l.b16 %v3301
        %v3366 = vunpack.c.l.b16 %v3302
        %v3367 = vunpack.c.l.b16 %v3303
        %v3368 = vunpack.c.l.b16 %v3304
        %v3369 = vunpack.c.l.b16 %v3305
        %v3370 = vunpack.c.l.b16 %v3306
        %v3371 = vunpack.c.l.b16 %v3307
        %v3372 = vunpack.c.l.b16 %v3308
        %v3373 = vunpack.c.l.b16 %v3309
        %v3374 = vunpack.c.l.b16 %v3310
        %v3375 = vunpack.c.l.b16 %v3311
        %v3376 = vunpack.c.l.b16 %v3312
        %v3377 = vunpack.c.l.b16 %v3313
        %v3378 = vunpack.c.l.b16 %v3314
        %v3379 = vunpack.c.l.b16 %v3315
        %v3380 = vunpack.c.l.b16 %v3316
        %v3381 = vunpack.c.l.b16 %v3317
        %v3382 = vunpack.c.l.b16 %v3318
        %v3383 = vunpack.c.l.b16 %v3319
        %v3384 = vunpack.c.l.b16 %v3320
        %v3385 = vunpack.c.l.b16 %v3321
        %v3386 = vunpack.c.l.b16 %v3322
        %v3387 = vunpack.c.l.b16 %v3323
        %v3388 = vunpack.c.l.b16 %v3324
        %v3389 = vunpack.c.l.b16 %v3325
        %v3390 = vunpack.c.l.b16 %v3326
        %v3391 = vunpack.c.l.b16 %v3327
        %v3392 = vunpack.c.l.b16 %v3328
        %v3393 = vunpack.c.l.b16 %v3329
        %v3394 = vunpack.c.l.b16 %v3330
        %v3395 = vpack.c.b16 %v3364, %v3363
        %v3396 = vpack.c.b16 %v3366, %v3365
        %v3397 = vpack.c.b16 %v3368, %v3367
        %v3398 = vpack.c.b16 %v3370, %v3369
        %v3399 = vpack.c.b16 %v3372, %v3371
        %v3400 = vpack.c.b16 %v3374, %v3373
        %v3401 = vpack.c.b16 %v3376, %v3375
        %v3402 = vpack.c.b16 %v3378, %v3377
        %v3403 = vpack.c.b16 %v3380, %v3379
        %v3404 = vpack.c.b16 %v3382, %v3381
        %v3405 = vpack.c.b16 %v3384, %v3383
        %v3406 = vpack.c.b16 %v3386, %v3385
        %v3407 = vpack.c.b16 %v3388, %v3387
        %v3408 = vpack.c.b16 %v3390, %v3389
        %v3409 = vpack.c.b16 %v3392, %v3391
        %v3410 = vpack.c.b16 %v3394, %v3393
        %v3412 = vsel %vm1450, %v3395, 0
        %v3415 = vsel %vm1450, %v3396, 0
        %v3418 = vsel %vm1450, %v3397, 0
        %v3421 = vsel %vm1450, %v3398, 0
        %v3424 = vsel %vm1450, %v3399, 0
        %v3427 = vsel %vm1450, %v3400, 0
        %v3430 = vsel %vm1450, %v3401, 0
        %v3433 = vsel %vm1450, %v3402, 0
        %v3436 = vsel %vm1450, %v3403, 0
        %v3439 = vsel %vm1450, %v3404, 0
        %v3442 = vsel %vm1450, %v3405, 0
        %v3445 = vsel %vm1450, %v3406, 0
        %v3448 = vsel %vm1450, %v3407, 0
        %v3451 = vsel %vm1450, %v3408, 0
        %v3454 = vsel %vm1450, %v3409, 0
        %v3457 = vsel %vm1450, %v3410, 0
        %3459 = vmatprep.subr.bf16.mxu0 0
        %3460 = vmatpush1.bf16.msra.mxu0 %v1446
        %3461 = vmatprep.subr.bf16.mxu0 0
        %3462 = vmatpush1.bf16.msra.mxu0 %v1447
        %3463 = vmatprep.subr.bf16.mxu0 0
        %3464 = vmatpush1.bf16.msra.mxu0 0
        %3465 = vmatprep.subr.bf16.mxu0 0
        %3466 = vmatpush1.bf16.msra.mxu0 0
        %3467 = vmatprep.subr.bf16.mxu0 0
        %3468 = vmatpush1.bf16.msra.mxu0 0
        %3469 = vmatprep.subr.bf16.mxu0 0
        %3470 = vmatpush1.bf16.msra.mxu0 0
        %3471 = vmatprep.subr.bf16.mxu0 0
        %3472 = vmatpush1.bf16.msra.mxu0 0
        %3473 = vmatprep.subr.bf16.mxu0 0
        %3474 = vmatpush1.bf16.msra.mxu0 0
        %3475 = vmatprep.subr.bf16.mxu0 0
        %3476 = vmatpush1.bf16.msra.mxu0 0
        %3477 = vmatprep.subr.bf16.mxu0 0
        %3478 = vmatpush1.bf16.msra.mxu0 0
        %3479 = vmatprep.subr.bf16.mxu0 0
        %3480 = vmatpush1.bf16.msra.mxu0 0
        %3481 = vmatprep.subr.bf16.mxu0 0
        %3482 = vmatpush1.bf16.msra.mxu0 0
        %3483 = vmatprep.subr.bf16.mxu0 0
        %3484 = vmatpush1.bf16.msra.mxu0 0
        %3485 = vmatprep.subr.bf16.mxu0 0
        %3486 = vmatpush1.bf16.msra.mxu0 0
        %3487 = vmatprep.subr.bf16.mxu0 0
        %3488 = vmatpush1.bf16.msra.mxu0 0
        %3489 = vmatprep.subr.bf16.mxu0 0
        %3490 = vmatpush1.bf16.msra.mxu0 0
        %3491 = vmatprep.mubr.bf16.mxu0 0
        %3492 = vmatmul.mubr.bf16.gmra.mrb[0].mxu0 %v3412
        %v3493 = vpop.f32.mrb[0].mxu0
        %v3494 = vadd.f32 %v1356, %v3493
        %v3495 = vpop.f32.mrb[0].mxu0
        %v3496 = vpop.f32.mrb[0].mxu0
        %v3497 = vadd.f32 %v1356, %v3496
        %v3498 = vpop.f32.mrb[0].mxu0
        %3499 = vmatprep.mubr.bf16.mxu0 0
        %3500 = vmatmul.mubr.bf16.gmra.mrb[0].mxu0 %v3415
        %v3501 = vpop.f32.mrb[0].mxu0
        %v3502 = vadd.f32 %v1356, %v3501
        %v3503 = vpop.f32.mrb[0].mxu0
        %v3504 = vpop.f32.mrb[0].mxu0
        %v3505 = vadd.f32 %v1356, %v3504
        %v3506 = vpop.f32.mrb[0].mxu0
        %3507 = vmatprep.mubr.bf16.mxu0 0
        %3508 = vmatmul.mubr.bf16.gmra.mrb[0].mxu0 %v3418
        %v3509 = vpop.f32.mrb[0].mxu0
        %v3510 = vadd.f32 %v1356, %v3509
        %v3511 = vpop.f32.mrb[0].mxu0
        %v3512 = vpop.f32.mrb[0].mxu0
        %v3513 = vadd.f32 %v1356, %v3512
        %v3514 = vpop.f32.mrb[0].mxu0
        %3515 = vmatprep.mubr.bf16.mxu0 0
        %3516 = vmatmul.mubr.bf16.gmra.mrb[0].mxu0 %v3421
        %v3517 = vpop.f32.mrb[0].mxu0
        %v3518 = vadd.f32 %v1356, %v3517
        %v3519 = vpop.f32.mrb[0].mxu0
        %v3520 = vpop.f32.mrb[0].mxu0
        %v3521 = vadd.f32 %v1356, %v3520
        %v3522 = vpop.f32.mrb[0].mxu0
        %3523 = vmatprep.mubr.bf16.mxu0 0
        %3524 = vmatmul.mubr.bf16.gmra.mrb[0].mxu0 %v3424
        %v3525 = vpop.f32.mrb[0].mxu0
        %v3526 = vadd.f32 %v1356, %v3525
        %v3527 = vpop.f32.mrb[0].mxu0
        %v3528 = vpop.f32.mrb[0].mxu0
        %v3529 = vadd.f32 %v1356, %v3528
        %v3530 = vpop.f32.mrb[0].mxu0
        %3531 = vmatprep.mubr.bf16.mxu0 0
        %3532 = vmatmul.mubr.bf16.gmra.mrb[0].mxu0 %v3427
        %v3533 = vpop.f32.mrb[0].mxu0
        %v3534 = vadd.f32 %v1356, %v3533
        %v3535 = vpop.f32.mrb[0].mxu0
        %v3536 = vpop.f32.mrb[0].mxu0
        %v3537 = vadd.f32 %v1356, %v3536
        %v3538 = vpop.f32.mrb[0].mxu0
        %3539 = vmatprep.mubr.bf16.mxu0 0
        %3540 = vmatmul.mubr.bf16.gmra.mrb[0].mxu0 %v3430
        %v3541 = vpop.f32.mrb[0].mxu0
        %v3542 = vadd.f32 %v1356, %v3541
        %v3543 = vpop.f32.mrb[0].mxu0
        %v3544 = vpop.f32.mrb[0].mxu0
        %v3545 = vadd.f32 %v1356, %v3544
        %v3546 = vpop.f32.mrb[0].mxu0
        %3547 = vmatprep.mubr.bf16.mxu0 0
        %3548 = vmatmul.mubr.bf16.gmra.mrb[0].mxu0 %v3433
        %v3549 = vpop.f32.mrb[0].mxu0
        %v3550 = vadd.f32 %v1356, %v3549
        %v3551 = vpop.f32.mrb[0].mxu0
        %v3552 = vpop.f32.mrb[0].mxu0
        %v3553 = vadd.f32 %v1356, %v3552
        %v3554 = vpop.f32.mrb[0].mxu0
        %3555 = vmatprep.mubr.bf16.mxu0 0
        %3556 = vmatmul.mubr.bf16.gmra.mrb[0].mxu0 %v3436
        %v3557 = vpop.f32.mrb[0].mxu0
        %v3558 = vadd.f32 %v1356, %v3557
        %v3559 = vpop.f32.mrb[0].mxu0
        %v3560 = vpop.f32.mrb[0].mxu0
        %v3561 = vadd.f32 %v1356, %v3560
        %v3562 = vpop.f32.mrb[0].mxu0
        %3563 = vmatprep.mubr.bf16.mxu0 0
        %3564 = vmatmul.mubr.bf16.gmra.mrb[0].mxu0 %v3439
        %v3565 = vpop.f32.mrb[0].mxu0
        %v3566 = vadd.f32 %v1356, %v3565
        %v3567 = vpop.f32.mrb[0].mxu0
        %v3568 = vpop.f32.mrb[0].mxu0
        %v3569 = vadd.f32 %v1356, %v3568
        %v3570 = vpop.f32.mrb[0].mxu0
        %3571 = vmatprep.mubr.bf16.mxu0 0
        %3572 = vmatmul.mubr.bf16.gmra.mrb[0].mxu0 %v3442
        %v3573 = vpop.f32.mrb[0].mxu0
        %v3574 = vadd.f32 %v1356, %v3573
        %v3575 = vpop.f32.mrb[0].mxu0
        %v3576 = vpop.f32.mrb[0].mxu0
        %v3577 = vadd.f32 %v1356, %v3576
        %v3578 = vpop.f32.mrb[0].mxu0
        %3579 = vmatprep.mubr.bf16.mxu0 0
        %3580 = vmatmul.mubr.bf16.gmra.mrb[0].mxu0 %v3445
        %v3581 = vpop.f32.mrb[0].mxu0
        %v3582 = vadd.f32 %v1356, %v3581
        %v3583 = vpop.f32.mrb[0].mxu0
        %v3584 = vpop.f32.mrb[0].mxu0
        %v3585 = vadd.f32 %v1356, %v3584
        %v3586 = vpop.f32.mrb[0].mxu0
        %3587 = vmatprep.mubr.bf16.mxu0 0
        %3588 = vmatmul.mubr.bf16.gmra.mrb[0].mxu0 %v3448
        %v3589 = vpop.f32.mrb[0].mxu0
        %v3590 = vadd.f32 %v1356, %v3589
        %v3591 = vpop.f32.mrb[0].mxu0
        %v3592 = vpop.f32.mrb[0].mxu0
        %v3593 = vadd.f32 %v1356, %v3592
        %v3594 = vpop.f32.mrb[0].mxu0
        %3595 = vmatprep.mubr.bf16.mxu0 0
        %3596 = vmatmul.mubr.bf16.gmra.mrb[0].mxu0 %v3451
        %v3597 = vpop.f32.mrb[0].mxu0
        %v3598 = vadd.f32 %v1356, %v3597
        %v3599 = vpop.f32.mrb[0].mxu0
        %v3600 = vpop.f32.mrb[0].mxu0
        %v3601 = vadd.f32 %v1356, %v3600
        %v3602 = vpop.f32.mrb[0].mxu0
        %3603 = vmatprep.mubr.bf16.mxu0 0
        %3604 = vmatmul.mubr.bf16.gmra.mrb[0].mxu0 %v3454
        %v3605 = vpop.f32.mrb[0].mxu0
        %v3606 = vadd.f32 %v1356, %v3605
        %v3607 = vpop.f32.mrb[0].mxu0
        %v3608 = vpop.f32.mrb[0].mxu0
        %v3609 = vadd.f32 %v1356, %v3608
        %v3610 = vpop.f32.mrb[0].mxu0
        %3611 = vmatprep.mubr.bf16.mxu0 0
        %3612 = vmatmul.mubr.bf16.gmra.mrb[0].mxu0 %v3457
        %v3613 = vpop.f32.mrb[0].mxu0
        %v3614 = vadd.f32 %v1356, %v3613
        %v3615 = vpop.f32.mrb[0].mxu0
        %v3616 = vpop.f32.mrb[0].mxu0
        %v3617 = vadd.f32 %v1356, %v3616
        %v3618 = vpop.f32.mrb[0].mxu0
        %3619 = vdwg.mxu0
        %v3620 = vsub.f32 0.0, %v3494
        %v3621 = vsub.f32 0.0, %v3497
        %v3622 = vsub.f32 0.0, %v3502
        %v3623 = vsub.f32 0.0, %v3505
        %v3624 = vsub.f32 0.0, %v3510
        %v3625 = vsub.f32 0.0, %v3513
        %v3626 = vsub.f32 0.0, %v3518
        %v3627 = vsub.f32 0.0, %v3521
        %v3628 = vsub.f32 0.0, %v3526
        %v3629 = vsub.f32 0.0, %v3529
        %v3630 = vsub.f32 0.0, %v3534
        %v3631 = vsub.f32 0.0, %v3537
        %v3632 = vsub.f32 0.0, %v3542
        %v3633 = vsub.f32 0.0, %v3545
        %v3634 = vsub.f32 0.0, %v3550
        %v3635 = vsub.f32 0.0, %v3553
        %v3636 = vsub.f32 0.0, %v3558
        %v3637 = vsub.f32 0.0, %v3561
        %v3638 = vsub.f32 0.0, %v3566
        %v3639 = vsub.f32 0.0, %v3569
        %v3640 = vsub.f32 0.0, %v3574
        %v3641 = vsub.f32 0.0, %v3577
        %v3642 = vsub.f32 0.0, %v3582
        %v3643 = vsub.f32 0.0, %v3585
        %v3644 = vsub.f32 0.0, %v3590
        %v3645 = vsub.f32 0.0, %v3593
        %v3646 = vsub.f32 0.0, %v3598
        %v3647 = vsub.f32 0.0, %v3601
        %v3648 = vsub.f32 0.0, %v3606
        %v3649 = vsub.f32 0.0, %v3609
        %v3650 = vsub.f32 0.0, %v3614
        %v3651 = vsub.f32 0.0, %v3617
        %v3652 = vmul.f32 %v3620, 1.442695
        %v3653 = vpow.pop %v3652
        %v3654 = vmul.f32 %v3621, 1.442695
        %v3655 = vpow.pop %v3654
        %v3656 = vmul.f32 %v3622, 1.442695
        %v3657 = vpow.pop %v3656
        %v3658 = vmul.f32 %v3623, 1.442695
        %v3659 = vpow.pop %v3658
        %v3660 = vmul.f32 %v3624, 1.442695
        %v3661 = vpow.pop %v3660
        %v3662 = vmul.f32 %v3625, 1.442695
        %v3663 = vpow.pop %v3662
        %v3664 = vmul.f32 %v3626, 1.442695
        %v3665 = vpow.pop %v3664
        %v3666 = vmul.f32 %v3627, 1.442695
        %v3667 = vpow.pop %v3666
        %v3668 = vmul.f32 %v3628, 1.442695
        %v3669 = vpow.pop %v3668
        %v3670 = vmul.f32 %v3629, 1.442695
        %v3671 = vpow.pop %v3670
        %v3672 = vmul.f32 %v3630, 1.442695
        %v3673 = vpow.pop %v3672
        %v3674 = vmul.f32 %v3631, 1.442695
        %v3675 = vpow.pop %v3674
        %v3676 = vmul.f32 %v3632, 1.442695
        %v3677 = vpow.pop %v3676
        %v3678 = vmul.f32 %v3633, 1.442695
        %v3679 = vpow.pop %v3678
        %v3680 = vmul.f32 %v3634, 1.442695
        %v3681 = vpow.pop %v3680
        %v3682 = vmul.f32 %v3635, 1.442695
        %v3683 = vpow.pop %v3682
        %v3684 = vmul.f32 %v3636, 1.442695
        %v3685 = vpow.pop %v3684
        %v3686 = vmul.f32 %v3637, 1.442695
        %v3687 = vpow.pop %v3686
        %v3688 = vmul.f32 %v3638, 1.442695
        %v3689 = vpow.pop %v3688
        %v3690 = vmul.f32 %v3639, 1.442695
        %v3691 = vpow.pop %v3690
        %v3692 = vmul.f32 %v3640, 1.442695
        %v3693 = vpow.pop %v3692
        %v3694 = vmul.f32 %v3641, 1.442695
        %v3695 = vpow.pop %v3694
        %v3696 = vmul.f32 %v3642, 1.442695
        %v3697 = vpow.pop %v3696
        %v3698 = vmul.f32 %v3643, 1.442695
        %v3699 = vpow.pop %v3698
        %v3700 = vmul.f32 %v3644, 1.442695
        %v3701 = vpow.pop %v3700
        %v3702 = vmul.f32 %v3645, 1.442695
        %v3703 = vpow.pop %v3702
        %v3704 = vmul.f32 %v3646, 1.442695
        %v3705 = vpow.pop %v3704
        %v3706 = vmul.f32 %v3647, 1.442695
        %v3707 = vpow.pop %v3706
        %v3708 = vmul.f32 %v3648, 1.442695
        %v3709 = vpow.pop %v3708
        %v3710 = vmul.f32 %v3649, 1.442695
        %v3711 = vpow.pop %v3710
        %v3712 = vmul.f32 %v3650, 1.442695
        %v3713 = vpow.pop %v3712
        %v3714 = vmul.f32 %v3651, 1.442695
        %v3715 = vpow.pop %v3714
        %v3716 = vadd.f32 %v3653, 1.0
        %v3717 = vadd.f32 %v3655, 1.0
        %v3718 = vadd.f32 %v3657, 1.0
        %v3719 = vadd.f32 %v3659, 1.0
        %v3720 = vadd.f32 %v3661, 1.0
        %v3721 = vadd.f32 %v3663, 1.0
        %v3722 = vadd.f32 %v3665, 1.0
        %v3723 = vadd.f32 %v3667, 1.0
        %v3724 = vadd.f32 %v3669, 1.0
        %v3725 = vadd.f32 %v3671, 1.0
        %v3726 = vadd.f32 %v3673, 1.0
        %v3727 = vadd.f32 %v3675, 1.0
        %v3728 = vadd.f32 %v3677, 1.0
        %v3729 = vadd.f32 %v3679, 1.0
        %v3730 = vadd.f32 %v3681, 1.0
        %v3731 = vadd.f32 %v3683, 1.0
        %v3732 = vadd.f32 %v3685, 1.0
        %v3733 = vadd.f32 %v3687, 1.0
        %v3734 = vadd.f32 %v3689, 1.0
        %v3735 = vadd.f32 %v3691, 1.0
        %v3736 = vadd.f32 %v3693, 1.0
        %v3737 = vadd.f32 %v3695, 1.0
        %v3738 = vadd.f32 %v3697, 1.0
        %v3739 = vadd.f32 %v3699, 1.0
        %v3740 = vadd.f32 %v3701, 1.0
        %v3741 = vadd.f32 %v3703, 1.0
        %v3742 = vadd.f32 %v3705, 1.0
        %v3743 = vadd.f32 %v3707, 1.0
        %v3744 = vadd.f32 %v3709, 1.0
        %v3745 = vadd.f32 %v3711, 1.0
        %v3746 = vadd.f32 %v3713, 1.0
        %v3747 = vadd.f32 %v3715, 1.0
        %v3748 = vrcp.pop %v3716
        %v3749 = vmul.f32 1.0, %v3748
        %v3750 = vrcp.pop %v3717
        %v3751 = vmul.f32 1.0, %v3750
        %v3752 = vrcp.pop %v3718
        %v3753 = vmul.f32 1.0, %v3752
        %v3754 = vrcp.pop %v3719
        %v3755 = vmul.f32 1.0, %v3754
        %v3756 = vrcp.pop %v3720
        %v3757 = vmul.f32 1.0, %v3756
        %v3758 = vrcp.pop %v3721
        %v3759 = vmul.f32 1.0, %v3758
        %v3760 = vrcp.pop %v3722
        %v3761 = vmul.f32 1.0, %v3760
        %v3762 = vrcp.pop %v3723
        %v3763 = vmul.f32 1.0, %v3762
        %v3764 = vrcp.pop %v3724
        %v3765 = vmul.f32 1.0, %v3764
        %v3766 = vrcp.pop %v3725
        %v3767 = vmul.f32 1.0, %v3766
        %v3768 = vrcp.pop %v3726
        %v3769 = vmul.f32 1.0, %v3768
        %v3770 = vrcp.pop %v3727
        %v3771 = vmul.f32 1.0, %v3770
        %v3772 = vrcp.pop %v3728
        %v3773 = vmul.f32 1.0, %v3772
        %v3774 = vrcp.pop %v3729
        %v3775 = vmul.f32 1.0, %v3774
        %v3776 = vrcp.pop %v3730
        %v3777 = vmul.f32 1.0, %v3776
        %v3778 = vrcp.pop %v3731
        %v3779 = vmul.f32 1.0, %v3778
        %v3780 = vrcp.pop %v3732
        %v3781 = vmul.f32 1.0, %v3780
        %v3782 = vrcp.pop %v3733
        %v3783 = vmul.f32 1.0, %v3782
        %v3784 = vrcp.pop %v3734
        %v3785 = vmul.f32 1.0, %v3784
        %v3786 = vrcp.pop %v3735
        %v3787 = vmul.f32 1.0, %v3786
        %v3788 = vrcp.pop %v3736
        %v3789 = vmul.f32 1.0, %v3788
        %v3790 = vrcp.pop %v3737
        %v3791 = vmul.f32 1.0, %v3790
        %v3792 = vrcp.pop %v3738
        %v3793 = vmul.f32 1.0, %v3792
        %v3794 = vrcp.pop %v3739
        %v3795 = vmul.f32 1.0, %v3794
        %v3796 = vrcp.pop %v3740
        %v3797 = vmul.f32 1.0, %v3796
        %v3798 = vrcp.pop %v3741
        %v3799 = vmul.f32 1.0, %v3798
        %v3800 = vrcp.pop %v3742
        %v3801 = vmul.f32 1.0, %v3800
        %v3802 = vrcp.pop %v3743
        %v3803 = vmul.f32 1.0, %v3802
        %v3804 = vrcp.pop %v3744
        %v3805 = vmul.f32 1.0, %v3804
        %v3806 = vrcp.pop %v3745
        %v3807 = vmul.f32 1.0, %v3806
        %v3808 = vrcp.pop %v3746
        %v3809 = vmul.f32 1.0, %v3808
        %v3810 = vrcp.pop %v3747
        %v3811 = vmul.f32 1.0, %v3810
        %s3812 = scalar_lea.vmem %s1279, 768 [#allocation3]
        %v3813 = vld [vmem:[%s3812] sm:$0xff]
        %v3814 = vld [vmem:[%s3812 + $0x8] sm:$0xff]
        %v3815 = vld [vmem:[%s3812 + $0x10] sm:$0xff]
        %v3816 = vld [vmem:[%s3812 + $0x18] sm:$0xff]
        %v3817 = vld [vmem:[%s3812 + $0x20] sm:$0xff]
        %v3818 = vld [vmem:[%s3812 + $0x28] sm:$0xff]
        %v3819 = vld [vmem:[%s3812 + $0x30] sm:$0xff]
        %v3820 = vld [vmem:[%s3812 + $0x38] sm:$0xff]
        %v3821 = vld [vmem:[%s3812 + $0x40] sm:$0xff]
        %v3822 = vld [vmem:[%s3812 + $0x48] sm:$0xff]
        %v3823 = vld [vmem:[%s3812 + $0x50] sm:$0xff]
        %v3824 = vld [vmem:[%s3812 + $0x58] sm:$0xff]
        %v3825 = vld [vmem:[%s3812 + $0x60] sm:$0xff]
        %v3826 = vld [vmem:[%s3812 + $0x68] sm:$0xff]
        %v3827 = vld [vmem:[%s3812 + $0x70] sm:$0xff]
        %v3828 = vld [vmem:[%s3812 + $0x78] sm:$0xff]
        %v3829 = vld [vmem:[%s3812 + $0x80] sm:$0xff]
        %v3830 = vld [vmem:[%s3812 + $0x88] sm:$0xff]
        %v3831 = vld [vmem:[%s3812 + $0x90] sm:$0xff]
        %v3832 = vld [vmem:[%s3812 + $0x98] sm:$0xff]
        %v3833 = vld [vmem:[%s3812 + $0xa0] sm:$0xff]
        %v3834 = vld [vmem:[%s3812 + $0xa8] sm:$0xff]
        %v3835 = vld [vmem:[%s3812 + $0xb0] sm:$0xff]
        %v3836 = vld [vmem:[%s3812 + $0xb8] sm:$0xff]
        %v3837 = vld [vmem:[%s3812 + $0xc0] sm:$0xff]
        %v3838 = vld [vmem:[%s3812 + $0xc8] sm:$0xff]
        %v3839 = vld [vmem:[%s3812 + $0xd0] sm:$0xff]
        %v3840 = vld [vmem:[%s3812 + $0xd8] sm:$0xff]
        %v3841 = vld [vmem:[%s3812 + $0xe0] sm:$0xff]
        %v3842 = vld [vmem:[%s3812 + $0xe8] sm:$0xff]
        %v3843 = vld [vmem:[%s3812 + $0xf0] sm:$0xff]
        %v3844 = vld [vmem:[%s3812 + $0xf8] sm:$0xff]
        %vm3845 = vcmp.lt.f32.partialorder %v3813, %v3749
        %vm3846 = vcmp.lt.f32.partialorder %v3814, %v3751
        %vm3847 = vcmp.lt.f32.partialorder %v3815, %v3753
        %vm3848 = vcmp.lt.f32.partialorder %v3816, %v3755
        %vm3849 = vcmp.lt.f32.partialorder %v3817, %v3757
        %vm3850 = vcmp.lt.f32.partialorder %v3818, %v3759
        %vm3851 = vcmp.lt.f32.partialorder %v3819, %v3761
        %vm3852 = vcmp.lt.f32.partialorder %v3820, %v3763
        %vm3853 = vcmp.lt.f32.partialorder %v3821, %v3765
        %vm3854 = vcmp.lt.f32.partialorder %v3822, %v3767
        %vm3855 = vcmp.lt.f32.partialorder %v3823, %v3769
        %vm3856 = vcmp.lt.f32.partialorder %v3824, %v3771
        %vm3857 = vcmp.lt.f32.partialorder %v3825, %v3773
        %vm3858 = vcmp.lt.f32.partialorder %v3826, %v3775
        %vm3859 = vcmp.lt.f32.partialorder %v3827, %v3777
        %vm3860 = vcmp.lt.f32.partialorder %v3828, %v3779
        %vm3861 = vcmp.lt.f32.partialorder %v3829, %v3781
        %vm3862 = vcmp.lt.f32.partialorder %v3830, %v3783
        %vm3863 = vcmp.lt.f32.partialorder %v3831, %v3785
        %vm3864 = vcmp.lt.f32.partialorder %v3832, %v3787
        %vm3865 = vcmp.lt.f32.partialorder %v3833, %v3789
        %vm3866 = vcmp.lt.f32.partialorder %v3834, %v3791
        %vm3867 = vcmp.lt.f32.partialorder %v3835, %v3793
        %vm3868 = vcmp.lt.f32.partialorder %v3836, %v3795
        %vm3869 = vcmp.lt.f32.partialorder %v3837, %v3797
        %vm3870 = vcmp.lt.f32.partialorder %v3838, %v3799
        %vm3871 = vcmp.lt.f32.partialorder %v3839, %v3801
        %vm3872 = vcmp.lt.f32.partialorder %v3840, %v3803
        %vm3873 = vcmp.lt.f32.partialorder %v3841, %v3805
        %vm3874 = vcmp.lt.f32.partialorder %v3842, %v3807
        %vm3875 = vcmp.lt.f32.partialorder %v3843, %v3809
        %vm3876 = vcmp.lt.f32.partialorder %v3844, %v3811
        %v3877 = vsel %vm3845, 1, 0
        %v3878 = vsel %vm3846, 1, 0
        %v3879 = vsel %vm3847, 1, 0
        %v3880 = vsel %vm3848, 1, 0
        %v3881 = vsel %vm3849, 1, 0
        %v3882 = vsel %vm3850, 1, 0
        %v3883 = vsel %vm3851, 1, 0
        %v3884 = vsel %vm3852, 1, 0
        %v3885 = vsel %vm3853, 1, 0
        %v3886 = vsel %vm3854, 1, 0
        %v3887 = vsel %vm3855, 1, 0
        %v3888 = vsel %vm3856, 1, 0
        %v3889 = vsel %vm3857, 1, 0
        %v3890 = vsel %vm3858, 1, 0
        %v3891 = vsel %vm3859, 1, 0
        %v3892 = vsel %vm3860, 1, 0
        %v3893 = vsel %vm3861, 1, 0
        %v3894 = vsel %vm3862, 1, 0
        %v3895 = vsel %vm3863, 1, 0
        %v3896 = vsel %vm3864, 1, 0
        %v3897 = vsel %vm3865, 1, 0
        %v3898 = vsel %vm3866, 1, 0
        %v3899 = vsel %vm3867, 1, 0
        %v3900 = vsel %vm3868, 1, 0
        %v3901 = vsel %vm3869, 1, 0
        %v3902 = vsel %vm3870, 1, 0
        %v3903 = vsel %vm3871, 1, 0
        %v3904 = vsel %vm3872, 1, 0
        %v3905 = vsel %vm3873, 1, 0
        %v3906 = vsel %vm3874, 1, 0
        %v3907 = vsel %vm3875, 1, 0
        %v3908 = vsel %vm3876, 1, 0
        %v3909 = vcvt.s32.f32 %v3877
        %v3910 = vcvt.s32.f32 %v3878
        %v3911 = vcvt.s32.f32 %v3879
        %v3912 = vcvt.s32.f32 %v3880
        %v3913 = vcvt.s32.f32 %v3881
        %v3914 = vcvt.s32.f32 %v3882
        %v3915 = vcvt.s32.f32 %v3883
        %v3916 = vcvt.s32.f32 %v3884
        %v3917 = vcvt.s32.f32 %v3885
        %v3918 = vcvt.s32.f32 %v3886
        %v3919 = vcvt.s32.f32 %v3887
        %v3920 = vcvt.s32.f32 %v3888
        %v3921 = vcvt.s32.f32 %v3889
        %v3922 = vcvt.s32.f32 %v3890
        %v3923 = vcvt.s32.f32 %v3891
        %v3924 = vcvt.s32.f32 %v3892
        %v3925 = vcvt.s32.f32 %v3893
        %v3926 = vcvt.s32.f32 %v3894
        %v3927 = vcvt.s32.f32 %v3895
        %v3928 = vcvt.s32.f32 %v3896
        %v3929 = vcvt.s32.f32 %v3897
        %v3930 = vcvt.s32.f32 %v3898
        %v3931 = vcvt.s32.f32 %v3899
        %v3932 = vcvt.s32.f32 %v3900
        %v3933 = vcvt.s32.f32 %v3901
        %v3934 = vcvt.s32.f32 %v3902
        %v3935 = vcvt.s32.f32 %v3903
        %v3936 = vcvt.s32.f32 %v3904
        %v3937 = vcvt.s32.f32 %v3905
        %v3938 = vcvt.s32.f32 %v3906
        %v3939 = vcvt.s32.f32 %v3907
        %v3940 = vcvt.s32.f32 %v3908
        %v3941 = vmax.f32 %v3266, %v3909
        %v3942 = vmax.f32 %v3267, %v3910
        %v3943 = vmax.f32 %v3268, %v3911
        %v3944 = vmax.f32 %v3269, %v3912
        %v3945 = vmax.f32 %v3270, %v3913
        %v3946 = vmax.f32 %v3271, %v3914
        %v3947 = vmax.f32 %v3272, %v3915
        %v3948 = vmax.f32 %v3273, %v3916
        %v3949 = vmax.f32 %v3274, %v3917
        %v3950 = vmax.f32 %v3275, %v3918
        %v3951 = vmax.f32 %v3276, %v3919
        %v3952 = vmax.f32 %v3277, %v3920
        %v3953 = vmax.f32 %v3278, %v3921
        %v3954 = vmax.f32 %v3279, %v3922
        %v3955 = vmax.f32 %v3280, %v3923
        %v3956 = vmax.f32 %v3281, %v3924
        %v3957 = vmax.f32 %v3282, %v3925
        %v3958 = vmax.f32 %v3283, %v3926
        %v3959 = vmax.f32 %v3284, %v3927
        %v3960 = vmax.f32 %v3285, %v3928
        %v3961 = vmax.f32 %v3286, %v3929
        %v3962 = vmax.f32 %v3287, %v3930
        %v3963 = vmax.f32 %v3288, %v3931
        %v3964 = vmax.f32 %v3289, %v3932
        %v3965 = vmax.f32 %v3290, %v3933
        %v3966 = vmax.f32 %v3291, %v3934
        %v3967 = vmax.f32 %v3292, %v3935
        %v3968 = vmax.f32 %v3293, %v3936
        %v3969 = vmax.f32 %v3294, %v3937
        %v3970 = vmax.f32 %v3295, %v3938
        %v3971 = vmax.f32 %v3296, %v3939
        %v3972 = vmax.f32 %v3297, %v3940
        %v3973 = vmax.f32 %v2623, %v3941
        %v3974 = vmax.f32 %v2624, %v3942
        %v3975 = vmax.f32 %v2625, %v3943
        %v3976 = vmax.f32 %v2626, %v3944
        %v3977 = vmax.f32 %v2627, %v3945
        %v3978 = vmax.f32 %v2628, %v3946
        %v3979 = vmax.f32 %v2629, %v3947
        %v3980 = vmax.f32 %v2630, %v3948
        %v3981 = vmax.f32 %v2631, %v3949
        %v3982 = vmax.f32 %v2632, %v3950
        %v3983 = vmax.f32 %v2633, %v3951
        %v3984 = vmax.f32 %v2634, %v3952
        %v3985 = vmax.f32 %v2635, %v3953
        %v3986 = vmax.f32 %v2636, %v3954
        %v3987 = vmax.f32 %v2637, %v3955
        %v3988 = vmax.f32 %v2638, %v3956
        %v3989 = vmax.f32 %v2639, %v3957
        %v3990 = vmax.f32 %v2640, %v3958
        %v3991 = vmax.f32 %v2641, %v3959
        %v3992 = vmax.f32 %v2642, %v3960
        %v3993 = vmax.f32 %v2643, %v3961
        %v3994 = vmax.f32 %v2644, %v3962
        %v3995 = vmax.f32 %v2645, %v3963
        %v3996 = vmax.f32 %v2646, %v3964
        %v3997 = vmax.f32 %v2647, %v3965
        %v3998 = vmax.f32 %v2648, %v3966
        %v3999 = vmax.f32 %v2649, %v3967
        %v4000 = vmax.f32 %v2650, %v3968
        %v4001 = vmax.f32 %v2651, %v3969
        %v4002 = vmax.f32 %v2652, %v3970
        %v4003 = vmax.f32 %v2653, %v3971
        %v4004 = vmax.f32 %v2654, %v3972
        %v4005 = vpack.c.bf16 %v3974, %v3973
        %v4006 = vpack.c.bf16 %v3976, %v3975
        %v4007 = vpack.c.bf16 %v3978, %v3977
        %v4008 = vpack.c.bf16 %v3980, %v3979
        %v4009 = vpack.c.bf16 %v3982, %v3981
        %v4010 = vpack.c.bf16 %v3984, %v3983
        %v4011 = vpack.c.bf16 %v3986, %v3985
        %v4012 = vpack.c.bf16 %v3988, %v3987
        %v4013 = vpack.c.bf16 %v3990, %v3989
        %v4014 = vpack.c.bf16 %v3992, %v3991
        %v4015 = vpack.c.bf16 %v3994, %v3993
        %v4016 = vpack.c.bf16 %v3996, %v3995
        %v4017 = vpack.c.bf16 %v3998, %v3997
        %v4018 = vpack.c.bf16 %v4000, %v3999
        %v4019 = vpack.c.bf16 %v4002, %v4001
        %v4020 = vpack.c.bf16 %v4004, %v4003
        %v4037 = vunpack.c.l.b16 %v4005
        %v4038 = vunpack.c.h.b16 %v4005
        %v4039 = vunpack.c.l.b16 %v4006
        %v4040 = vunpack.c.h.b16 %v4006
        %v4041 = vunpack.c.l.b16 %v4007
        %v4042 = vunpack.c.h.b16 %v4007
        %v4043 = vunpack.c.l.b16 %v4008
        %v4044 = vunpack.c.h.b16 %v4008
        %v4045 = vunpack.c.l.b16 %v4009
        %v4046 = vunpack.c.h.b16 %v4009
        %v4047 = vunpack.c.l.b16 %v4010
        %v4048 = vunpack.c.h.b16 %v4010
        %v4049 = vunpack.c.l.b16 %v4011
        %v4050 = vunpack.c.h.b16 %v4011
        %v4051 = vunpack.c.l.b16 %v4012
        %v4052 = vunpack.c.h.b16 %v4012
        %v4053 = vunpack.c.l.b16 %v4013
        %v4054 = vunpack.c.h.b16 %v4013
        %v4055 = vunpack.c.l.b16 %v4014
        %v4056 = vunpack.c.h.b16 %v4014
        %v4057 = vunpack.c.l.b16 %v4015
        %v4058 = vunpack.c.h.b16 %v4015
        %v4059 = vunpack.c.l.b16 %v4016
        %v4060 = vunpack.c.h.b16 %v4016
        %v4061 = vunpack.c.l.b16 %v4017
        %v4062 = vunpack.c.h.b16 %v4017
        %v4063 = vunpack.c.l.b16 %v4018
        %v4064 = vunpack.c.h.b16 %v4018
        %v4065 = vunpack.c.l.b16 %v4019
        %v4066 = vunpack.c.h.b16 %v4019
        %v4067 = vunpack.c.l.b16 %v4020
        %v4068 = vunpack.c.h.b16 %v4020
        %v4069 = vpack.c.b16 %v4037, %v4037
        %v4070 = vpack.c.b16 %v4038, %v4038
        %v4071 = vpack.c.b16 %v4039, %v4039
        %v4072 = vpack.c.b16 %v4040, %v4040
        %v4073 = vpack.c.b16 %v4041, %v4041
        %v4074 = vpack.c.b16 %v4042, %v4042
        %v4075 = vpack.c.b16 %v4043, %v4043
        %v4076 = vpack.c.b16 %v4044, %v4044
        %v4077 = vpack.c.b16 %v4045, %v4045
        %v4078 = vpack.c.b16 %v4046, %v4046
        %v4079 = vpack.c.b16 %v4047, %v4047
        %v4080 = vpack.c.b16 %v4048, %v4048
        %v4081 = vpack.c.b16 %v4049, %v4049
        %v4082 = vpack.c.b16 %v4050, %v4050
        %v4083 = vpack.c.b16 %v4051, %v4051
        %v4084 = vpack.c.b16 %v4052, %v4052
        %v4085 = vpack.c.b16 %v4053, %v4053
        %v4086 = vpack.c.b16 %v4054, %v4054
        %v4087 = vpack.c.b16 %v4055, %v4055
        %v4088 = vpack.c.b16 %v4056, %v4056
        %v4089 = vpack.c.b16 %v4057, %v4057
        %v4090 = vpack.c.b16 %v4058, %v4058
        %v4091 = vpack.c.b16 %v4059, %v4059
        %v4092 = vpack.c.b16 %v4060, %v4060
        %v4093 = vpack.c.b16 %v4061, %v4061
        %v4094 = vpack.c.b16 %v4062, %v4062
        %v4095 = vpack.c.b16 %v4063, %v4063
        %v4096 = vpack.c.b16 %v4064, %v4064
        %v4097 = vpack.c.b16 %v4065, %v4065
        %v4098 = vpack.c.b16 %v4066, %v4066
        %v4099 = vpack.c.b16 %v4067, %v4067
        %v4100 = vpack.c.b16 %v4068, %v4068
        %4133 = vst [vmem:[%s1312] sm:$0xf] %v4069
        %4134 = vst [vmem:[%s1312 + $0x4] sm:$0xf] %v4070
        %4135 = vst [vmem:[%s1312 + $0x8] sm:$0xf] %v4071
        %4136 = vst [vmem:[%s1312 + $0xc] sm:$0xf] %v4072
        %4137 = vst [vmem:[%s1312 + $0x10] sm:$0xf] %v4073
        %4138 = vst [vmem:[%s1312 + $0x14] sm:$0xf] %v4074
        %4139 = vst [vmem:[%s1312 + $0x18] sm:$0xf] %v4075
        %4140 = vst [vmem:[%s1312 + $0x1c] sm:$0xf] %v4076
        %4141 = vst [vmem:[%s1312 + $0x20] sm:$0xf] %v4077
        %4142 = vst [vmem:[%s1312 + $0x24] sm:$0xf] %v4078
        %4143 = vst [vmem:[%s1312 + $0x28] sm:$0xf] %v4079
        %4144 = vst [vmem:[%s1312 + $0x2c] sm:$0xf] %v4080
        %4145 = vst [vmem:[%s1312 + $0x30] sm:$0xf] %v4081
        %4146 = vst [vmem:[%s1312 + $0x34] sm:$0xf] %v4082
        %4147 = vst [vmem:[%s1312 + $0x38] sm:$0xf] %v4083
        %4148 = vst [vmem:[%s1312 + $0x3c] sm:$0xf] %v4084
        %4149 = vst [vmem:[%s1312 + $0x40] sm:$0xf] %v4085
        %4150 = vst [vmem:[%s1312 + $0x44] sm:$0xf] %v4086
        %4151 = vst [vmem:[%s1312 + $0x48] sm:$0xf] %v4087
        %4152 = vst [vmem:[%s1312 + $0x4c] sm:$0xf] %v4088
        %4153 = vst [vmem:[%s1312 + $0x50] sm:$0xf] %v4089
        %4154 = vst [vmem:[%s1312 + $0x54] sm:$0xf] %v4090
        %4155 = vst [vmem:[%s1312 + $0x58] sm:$0xf] %v4091
        %4156 = vst [vmem:[%s1312 + $0x5c] sm:$0xf] %v4092
        %4157 = vst [vmem:[%s1312 + $0x60] sm:$0xf] %v4093
        %4158 = vst [vmem:[%s1312 + $0x64] sm:$0xf] %v4094
        %4159 = vst [vmem:[%s1312 + $0x68] sm:$0xf] %v4095
        %4160 = vst [vmem:[%s1312 + $0x6c] sm:$0xf] %v4096
        %4161 = vst [vmem:[%s1312 + $0x70] sm:$0xf] %v4097
        %4162 = vst [vmem:[%s1312 + $0x74] sm:$0xf] %v4098
        %4163 = vst [vmem:[%s1312 + $0x78] sm:$0xf] %v4099
        %4164 = vst [vmem:[%s1312 + $0x7c] sm:$0xf] %v4100
        %s4165 = smul.u32 32, %s15
        %p4166 = scmp.lt.s32.totalorder %s4165, 63
        %s4167 = scalar_select %p4166, %s4165, 63
        %s4168 = smul.addr %s4167, 4
        %s4169 = scalar_lea.vmem %s4, %s4168
        // Predicated region
        $region116: #{lenet5_forward.5} parent=106 // pred_check
          %p4170 = pneg %p127
        $region117: #{lenet5_forward.5} parent=106 // pred_check_branch
          %4172 = sbr.rel (%p4170) target = $region119
        $region118: #{lenet5_forward.5} parent=106 // pred_region
          %s4173 = smul.u32 32, %s15
        $region119: #{lenet5_forward.5} parent=106 // pred_fallthru
          _
      $region107: #{lenet5_forward.5} parent=5 // pred_fallthru
        _
      %p4174 = scmp.le.s32.totalorder 2, %s10
      // Predicated region
      $region120: #{lenet5_forward.5} parent=5 // pred_check
        %p4175 = pneg %p4174
      $region121: #{lenet5_forward.5} parent=5 // pred_check_branch
        %4177 = sbr.rel (%p4175) target = $region123
      $region122: #{lenet5_forward.5} parent=5 // pred_region
        %s4178 = ssub.s32 %s10, 2
        // Predicated region
        $region124: #{lenet5_forward.5} parent=122 // pred_check
          %p4179 = pneg %p133
        $region125: #{lenet5_forward.5} parent=122 // pred_check_branch
          %4181 = sbr.rel (%p4179) target = $region127
        $region126: #{lenet5_forward.5} parent=122 // pred_region
          %s4182 = smul.u32 32, %s16
          %p4183 = scmp.lt.s32.totalorder %s4182, 63
          %s4184 = scalar_select %p4183, %s4182, 63
          %s4185 = smul.addr %s4184, 4
          %s4186 = scalar_lea.vmem %s4, %s4185
        $region127: #{lenet5_forward.5} parent=122 // pred_fallthru
          _
      $region123: #{lenet5_forward.5} parent=5 // pred_fallthru
        _
    $region6: #{lenet5_forward.5} parent=1 // loop_footer
      %s14 = sadd.s32 1, %s10
    $region7: #{lenet5_forward.5} parent=1 // loop_footer_branch
      %9 = sbr.rel target = $region3
    $region8: #{lenet5_forward.5} parent=1 // loop_exit
      _

// kernel: lenet5_forward.6
$region0: #{lenet5_forward.6}
  #allocation0 [shape = 'u32[]', space=smem, size = 0x4, offset = 0x4, fixed_abs, tag = 'smem constant byte address 0x4 - core index']
  #allocation1 [shape = 'u32[144,128]{1,0:T(1,128)}', space=vmem, size = 0x12000, scoped, tag = 'internal scratch']
  %s0 = inlined_call_operand.vmem [shape: bf16[4,56,200], index: 0, kind: input, shape index: {}]
  %s1 = inlined_call_operand.vmem [shape: f32[4,56,128], index: 1, kind: input, shape index: {}]
  %s2 = inlined_call_operand.vmem [shape: bf16[200,128], index: 2, kind: input, shape index: {}]
  %s3 = inlined_call_operand.vmem [shape: f32[1,128], index: 3, kind: input, shape index: {}]
  %s4 = inlined_call_operand.vmem [shape: bf16[56,128], index: 4, kind: output, shape index: {}]
  %s5 = sld [smem:[#allocation0]]
  $region26: #{lenet5_forward.6} parent=0
    _
  %s7 = ssub.s32 1, %s5
  %s8 = scalar_select 0, %s7, %s5
  // Predicated region
  $region2: #{lenet5_forward.6} parent=0 // pred_check
    _
  $region3: #{lenet5_forward.6} parent=0 // pred_check_branch
    %10 = sbr.rel (0) target = $region5
  $region4: #{lenet5_forward.6} parent=0 // pred_region
    _
  $region5: #{lenet5_forward.6} parent=0 // pred_fallthru
    _
  // Predicated region
  $region6: #{lenet5_forward.6} parent=0 // pred_check
    _
  $region7: #{lenet5_forward.6} parent=0 // pred_check_branch
    %12 = sbr.rel (0) target = $region9
  $region8: #{lenet5_forward.6} parent=0 // pred_region
    _
  $region9: #{lenet5_forward.6} parent=0 // pred_fallthru
    _
  // Predicated region
  $region10: #{lenet5_forward.6} parent=0 // pred_check
    _
  $region11: #{lenet5_forward.6} parent=0 // pred_check_branch
    %14 = sbr.rel (0) target = $region13
  $region12: #{lenet5_forward.6} parent=0 // pred_region
    _
  $region13: #{lenet5_forward.6} parent=0 // pred_fallthru
    _
  // Predicated region
  $region14: #{lenet5_forward.6} parent=0 // pred_check
    _
  $region15: #{lenet5_forward.6} parent=0 // pred_check_branch
    %16 = sbr.rel (0) target = $region17
  $region16: #{lenet5_forward.6} parent=0 // pred_region
    _
  $region17: #{lenet5_forward.6} parent=0 // pred_fallthru
    _
  %v18 = vld [vmem:[%s2] sm:$0xf]
  %v19 = vld [vmem:[%s2 + $0x4] sm:$0xf]
  %v20 = vld [vmem:[%s2 + $0x8] sm:$0xf]
  %v21 = vld [vmem:[%s2 + $0xc] sm:$0xf]
  %v22 = vld [vmem:[%s2 + $0x10] sm:$0xf]
  %v23 = vld [vmem:[%s2 + $0x14] sm:$0xf]
  %v24 = vld [vmem:[%s2 + $0x18] sm:$0xf]
  %v25 = vld [vmem:[%s2 + $0x1c] sm:$0xf]
  %v26 = vld [vmem:[%s2 + $0x20] sm:$0xf]
  %v27 = vld [vmem:[%s2 + $0x24] sm:$0xf]
  %v28 = vld [vmem:[%s2 + $0x28] sm:$0xf]
  %v29 = vld [vmem:[%s2 + $0x2c] sm:$0xf]
  %v30 = vld [vmem:[%s2 + $0x30] sm:$0xf]
  %v31 = vld [vmem:[%s2 + $0x34] sm:$0xf]
  %v32 = vld [vmem:[%s2 + $0x38] sm:$0xf]
  %v33 = vld [vmem:[%s2 + $0x3c] sm:$0xf]
  %v34 = vld [vmem:[%s2 + $0x40] sm:$0xf]
  %v35 = vld [vmem:[%s2 + $0x44] sm:$0xf]
  %v36 = vld [vmem:[%s2 + $0x48] sm:$0xf]
  %v37 = vld [vmem:[%s2 + $0x4c] sm:$0xf]
  %v38 = vld [vmem:[%s2 + $0x50] sm:$0xf]
  %v39 = vld [vmem:[%s2 + $0x54] sm:$0xf]
  %v40 = vld [vmem:[%s2 + $0x58] sm:$0xf]
  %v41 = vld [vmem:[%s2 + $0x5c] sm:$0xf]
  %v42 = vld [vmem:[%s2 + $0x60] sm:$0xf]
  %v43 = vld [vmem:[%s3] sm:$0x1]
  %v44 = vld [vmem:[%s0] sm:$0xff]
  %v45 = vld [vmem:[%s0 + $0x8] sm:$0xff]
  %v46 = vld [vmem:[%s0 + $0x10] sm:$0xff]
  %v47 = vld [vmem:[%s0 + $0x18] sm:$0xff]
  %v48 = vld [vmem:[%s0 + $0x20] sm:$0xff]
  %v49 = vld [vmem:[%s0 + $0x28] sm:$0xff]
  %v50 = vld [vmem:[%s0 + $0x30] sm:$0xff]
  %v52 = vlaneseq
  %v53 = vshrl.u32 %v52, 7
  %v54 = vsub.s32 0, %v53
  %v55 = vrot.slane %v43, %v54
  %v64 = vunpack.c.l.b16 %v44
  %v65 = vunpack.c.h.b16 %v44
  %v66 = vunpack.c.l.b16 %v45
  %v67 = vunpack.c.h.b16 %v45
  %v68 = vunpack.c.l.b16 %v46
  %v69 = vunpack.c.h.b16 %v46
  %v70 = vunpack.c.l.b16 %v47
  %v71 = vunpack.c.h.b16 %v47
  %v72 = vunpack.c.l.b16 %v48
  %v73 = vunpack.c.h.b16 %v48
  %v74 = vunpack.c.l.b16 %v49
  %v75 = vunpack.c.h.b16 %v49
  %v76 = vunpack.c.l.b16 %v50
  %v77 = vunpack.c.h.b16 %v50
  %v78 = vpack.c.b16 %v66, %v64
  %v79 = vpack.c.b16 %v67, %v65
  %v80 = vpack.c.b16 %v70, %v68
  %v81 = vpack.c.b16 %v71, %v69
  %v82 = vpack.c.b16 %v74, %v72
  %v83 = vpack.c.b16 %v75, %v73
  %v84 = vpack.c.b16 %v76, %v76
  %v85 = vpack.c.b16 %v77, %v77
  %v115 = vunpack.c.l.b16 %v18
  %v116 = vunpack.c.l.b16 %v19
  %v117 = vunpack.c.l.b16 %v20
  %v118 = vunpack.c.l.b16 %v21
  %v119 = vunpack.c.l.b16 %v22
  %v120 = vunpack.c.l.b16 %v23
  %v121 = vunpack.c.l.b16 %v24
  %v122 = vunpack.c.l.b16 %v25
  %v123 = vunpack.c.l.b16 %v26
  %v124 = vunpack.c.l.b16 %v27
  %v125 = vunpack.c.l.b16 %v28
  %v126 = vunpack.c.l.b16 %v29
  %v127 = vunpack.c.l.b16 %v30
  %v128 = vunpack.c.l.b16 %v31
  %v129 = vunpack.c.l.b16 %v32
  %v130 = vunpack.c.l.b16 %v33
  %v131 = vunpack.c.l.b16 %v34
  %v132 = vunpack.c.l.b16 %v35
  %v133 = vunpack.c.l.b16 %v36
  %v134 = vunpack.c.l.b16 %v37
  %v135 = vunpack.c.l.b16 %v38
  %v136 = vunpack.c.l.b16 %v39
  %v137 = vunpack.c.l.b16 %v40
  %v138 = vunpack.c.l.b16 %v41
  %v139 = vunpack.c.l.b16 %v42
  %v140 = vpack.c.b16 %v116, %v115
  %v141 = vpack.c.b16 %v118, %v117
  %v142 = vpack.c.b16 %v120, %v119
  %v143 = vpack.c.b16 %v122, %v121
  %v144 = vpack.c.b16 %v124, %v123
  %v145 = vpack.c.b16 %v126, %v125
  %v146 = vpack.c.b16 %v128, %v127
  %v147 = vpack.c.b16 %v130, %v129
  %v148 = vpack.c.b16 %v132, %v131
  %v149 = vpack.c.b16 %v134, %v133
  %v150 = vpack.c.b16 %v136, %v135
  %v151 = vpack.c.b16 %v138, %v137
  %v152 = vpack.c.b16 %v139, %v139
  %vm165 = vcmask 588800
  %v167 = vsel %vm165, %v79, 0
  %v170 = vsel %vm165, %v81, 0
  %v173 = vsel %vm165, %v83, 0
  %v176 = vsel %vm165, %v85, 0
  %vm178 = vcmask 1043456
  %v180 = vsel %vm178, %v152, 0
  %182 = vmatprep.subr.bf16.mxu0 0
  %183 = vmatpush1.bf16.msra.mxu0 %v140
  %184 = vmatprep.subr.bf16.mxu0 0
  %185 = vmatpush1.bf16.msra.mxu0 %v141
  %186 = vmatprep.subr.bf16.mxu0 0
  %187 = vmatpush1.bf16.msra.mxu0 %v142
  %188 = vmatprep.subr.bf16.mxu0 0
  %189 = vmatpush1.bf16.msra.mxu0 %v143
  %190 = vmatprep.subr.bf16.mxu0 0
  %191 = vmatpush1.bf16.msra.mxu0 %v144
  %192 = vmatprep.subr.bf16.mxu0 0
  %193 = vmatpush1.bf16.msra.mxu0 %v145
  %194 = vmatprep.subr.bf16.mxu0 0
  %195 = vmatpush1.bf16.msra.mxu0 %v146
  %196 = vmatprep.subr.bf16.mxu0 0
  %197 = vmatpush1.bf16.msra.mxu0 %v147
  %198 = vmatprep.subr.bf16.mxu0 0
  %199 = vmatpush1.bf16.msra.mxu0 %v148
  %200 = vmatprep.subr.bf16.mxu0 0
  %201 = vmatpush1.bf16.msra.mxu0 %v149
  %202 = vmatprep.subr.bf16.mxu0 0
  %203 = vmatpush1.bf16.msra.mxu0 %v150
  %204 = vmatprep.subr.bf16.mxu0 0
  %205 = vmatpush1.bf16.msra.mxu0 %v151
  %206 = vmatprep.subr.bf16.mxu0 0
  %207 = vmatpush1.bf16.msra.mxu0 %v180
  %208 = vmatprep.subr.bf16.mxu0 0
  %209 = vmatpush1.bf16.msra.mxu0 0
  %210 = vmatprep.subr.bf16.mxu0 0
  %211 = vmatpush1.bf16.msra.mxu0 0
  %212 = vmatprep.subr.bf16.mxu0 0
  %213 = vmatpush1.bf16.msra.mxu0 0
  %214 = vmatprep.mubr.bf16.mxu0 %v167
  %215 = vmatmul.mubr.bf16.gmra.mrb[0].mxu0 %v78
  %v216 = vpop.f32.mrb[0].mxu0
  %v217 = vadd.f32 %v55, %v216
  %v218 = vpop.f32.mrb[0].mxu0
  %v219 = vpop.f32.mrb[0].mxu0
  %v220 = vadd.f32 %v55, %v219
  %v221 = vpop.f32.mrb[0].mxu0
  %222 = vmatprep.mubr.bf16.mxu0 %v170
  %223 = vmatmul.mubr.bf16.gmra.mrb[0].mxu0 %v80
  %v224 = vpop.f32.mrb[0].mxu0
  %v225 = vadd.f32 %v55, %v224
  %v226 = vpop.f32.mrb[0].mxu0
  %v227 = vpop.f32.mrb[0].mxu0
  %v228 = vadd.f32 %v55, %v227
  %v229 = vpop.f32.mrb[0].mxu0
  %230 = vmatprep.mubr.bf16.mxu0 %v173
  %231 = vmatmul.mubr.bf16.gmra.mrb[0].mxu0 %v82
  %v232 = vpop.f32.mrb[0].mxu0
  %v233 = vadd.f32 %v55, %v232
  %v234 = vpop.f32.mrb[0].mxu0
  %v235 = vpop.f32.mrb[0].mxu0
  %v236 = vadd.f32 %v55, %v235
  %v237 = vpop.f32.mrb[0].mxu0
  %238 = vmatprep.mubr.bf16.mxu0 %v176
  %239 = vmatmul.mubr.bf16.gmra.mrb[0].mxu0 %v84
  %v240 = vpop.f32.mrb[0].mxu0
  %v241 = vadd.f32 %v55, %v240
  %v242 = vpop.f32.mrb[0].mxu0
  %v243 = vpop.f32.mrb[0].mxu0
  %v244 = vpop.f32.mrb[0].mxu0
  %245 = vdwg.mxu0
  %v246 = vsub.f32 0.0, %v217
  %v247 = vsub.f32 0.0, %v220
  %v248 = vsub.f32 0.0, %v225
  %v249 = vsub.f32 0.0, %v228
  %v250 = vsub.f32 0.0, %v233
  %v251 = vsub.f32 0.0, %v236
  %v252 = vsub.f32 0.0, %v241
  %v253 = vmul.f32 %v246, 1.442695
  %v254 = vpow.pop %v253
  %v255 = vmul.f32 %v247, 1.442695
  %v256 = vpow.pop %v255
  %v257 = vmul.f32 %v248, 1.442695
  %v258 = vpow.pop %v257
  %v259 = vmul.f32 %v249, 1.442695
  %v260 = vpow.pop %v259
  %v261 = vmul.f32 %v250, 1.442695
  %v262 = vpow.pop %v261
  %v263 = vmul.f32 %v251, 1.442695
  %v264 = vpow.pop %v263
  %v265 = vmul.f32 %v252, 1.442695
  %v266 = vpow.pop %v265
  %v267 = vadd.f32 %v254, 1.0
  %v268 = vadd.f32 %v256, 1.0
  %v269 = vadd.f32 %v258, 1.0
  %v270 = vadd.f32 %v260, 1.0
  %v271 = vadd.f32 %v262, 1.0
  %v272 = vadd.f32 %v264, 1.0
  %v273 = vadd.f32 %v266, 1.0
  %v274 = vrcp.pop %v267
  %v275 = vmul.f32 1.0, %v274
  %v276 = vrcp.pop %v268
  %v277 = vmul.f32 1.0, %v276
  %v278 = vrcp.pop %v269
  %v279 = vmul.f32 1.0, %v278
  %v280 = vrcp.pop %v270
  %v281 = vmul.f32 1.0, %v280
  %v282 = vrcp.pop %v271
  %v283 = vmul.f32 1.0, %v282
  %v284 = vrcp.pop %v272
  %v285 = vmul.f32 1.0, %v284
  %v286 = vrcp.pop %v273
  %v287 = vmul.f32 1.0, %v286
  %v288 = vld [vmem:[%s1] sm:$0xff]
  %v289 = vld [vmem:[%s1 + $0x8] sm:$0xff]
  %v290 = vld [vmem:[%s1 + $0x10] sm:$0xff]
  %v291 = vld [vmem:[%s1 + $0x18] sm:$0xff]
  %v292 = vld [vmem:[%s1 + $0x20] sm:$0xff]
  %v293 = vld [vmem:[%s1 + $0x28] sm:$0xff]
  %v294 = vld [vmem:[%s1 + $0x30] sm:$0xff]
  %vm295 = vcmp.lt.f32.partialorder %v288, %v275
  %vm296 = vcmp.lt.f32.partialorder %v289, %v277
  %vm297 = vcmp.lt.f32.partialorder %v290, %v279
  %vm298 = vcmp.lt.f32.partialorder %v291, %v281
  %vm299 = vcmp.lt.f32.partialorder %v292, %v283
  %vm300 = vcmp.lt.f32.partialorder %v293, %v285
  %vm301 = vcmp.lt.f32.partialorder %v294, %v287
  %v302 = vsel %vm295, 1, 0
  %v303 = vsel %vm296, 1, 0
  %v304 = vsel %vm297, 1, 0
  %v305 = vsel %vm298, 1, 0
  %v306 = vsel %vm299, 1, 0
  %v307 = vsel %vm300, 1, 0
  %v308 = vsel %vm301, 1, 0
  %v309 = vcvt.s32.f32 %v302
  %v310 = vcvt.s32.f32 %v303
  %v311 = vcvt.s32.f32 %v304
  %v312 = vcvt.s32.f32 %v305
  %v313 = vcvt.s32.f32 %v306
  %v314 = vcvt.s32.f32 %v307
  %v315 = vcvt.s32.f32 %v308
  %s316 = scalar_lea.vmem %s0, 56
  %v317 = vld [vmem:[%s316] sm:$0xff]
  %v318 = vld [vmem:[%s316 + $0x8] sm:$0xff]
  %v319 = vld [vmem:[%s316 + $0x10] sm:$0xff]
  %v320 = vld [vmem:[%s316 + $0x18] sm:$0xff]
  %v321 = vld [vmem:[%s316 + $0x20] sm:$0xff]
  %v322 = vld [vmem:[%s316 + $0x28] sm:$0xff]
  %v323 = vld [vmem:[%s316 + $0x30] sm:$0xff]
  %v331 = vunpack.c.l.b16 %v317
  %v332 = vunpack.c.h.b16 %v317
  %v333 = vunpack.c.l.b16 %v318
  %v334 = vunpack.c.h.b16 %v318
  %v335 = vunpack.c.l.b16 %v319
  %v336 = vunpack.c.h.b16 %v319
  %v337 = vunpack.c.l.b16 %v320
  %v338 = vunpack.c.h.b16 %v320
  %v339 = vunpack.c.l.b16 %v321
  %v340 = vunpack.c.h.b16 %v321
  %v341 = vunpack.c.l.b16 %v322
  %v342 = vunpack.c.h.b16 %v322
  %v343 = vunpack.c.l.b16 %v323
  %v344 = vunpack.c.h.b16 %v323
  %v345 = vpack.c.b16 %v333, %v331
  %v346 = vpack.c.b16 %v334, %v332
  %v347 = vpack.c.b16 %v337, %v335
  %v348 = vpack.c.b16 %v338, %v336
  %v349 = vpack.c.b16 %v341, %v339
  %v350 = vpack.c.b16 %v342, %v340
  %v351 = vpack.c.b16 %v343, %v343
  %v352 = vpack.c.b16 %v344, %v344
  %v358 = vsel %vm165, %v346, 0
  %v361 = vsel %vm165, %v348, 0
  %v364 = vsel %vm165, %v350, 0
  %v367 = vsel %vm165, %v352, 0
  %369 = vmatprep.subr.bf16.mxu0 0
  %370 = vmatpush1.bf16.msra.mxu0 %v140
  %371 = vmatprep.subr.bf16.mxu0 0
  %372 = vmatpush1.bf16.msra.mxu0 %v141
  %373 = vmatprep.subr.bf16.mxu0 0
  %374 = vmatpush1.bf16.msra.mxu0 %v142
  %375 = vmatprep.subr.bf16.mxu0 0
  %376 = vmatpush1.bf16.msra.mxu0 %v143
  %377 = vmatprep.subr.bf16.mxu0 0
  %378 = vmatpush1.bf16.msra.mxu0 %v144
  %379 = vmatprep.subr.bf16.mxu0 0
  %380 = vmatpush1.bf16.msra.mxu0 %v145
  %381 = vmatprep.subr.bf16.mxu0 0
  %382 = vmatpush1.bf16.msra.mxu0 %v146
  %383 = vmatprep.subr.bf16.mxu0 0
  %384 = vmatpush1.bf16.msra.mxu0 %v147
  %385 = vmatprep.subr.bf16.mxu0 0
  %386 = vmatpush1.bf16.msra.mxu0 %v148
  %387 = vmatprep.subr.bf16.mxu0 0
  %388 = vmatpush1.bf16.msra.mxu0 %v149
  %389 = vmatprep.subr.bf16.mxu0 0
  %390 = vmatpush1.bf16.msra.mxu0 %v150
  %391 = vmatprep.subr.bf16.mxu0 0
  %392 = vmatpush1.bf16.msra.mxu0 %v151
  %393 = vmatprep.subr.bf16.mxu0 0
  %394 = vmatpush1.bf16.msra.mxu0 %v180
  %395 = vmatprep.subr.bf16.mxu0 0
  %396 = vmatpush1.bf16.msra.mxu0 0
  %397 = vmatprep.subr.bf16.mxu0 0
  %398 = vmatpush1.bf16.msra.mxu0 0
  %399 = vmatprep.subr.bf16.mxu0 0
  %400 = vmatpush1.bf16.msra.mxu0 0
  %401 = vmatprep.mubr.bf16.mxu0 %v358
  %402 = vmatmul.mubr.bf16.gmra.mrb[0].mxu0 %v345
  %v403 = vpop.f32.mrb[0].mxu0
  %v404 = vadd.f32 %v55, %v403
  %v405 = vpop.f32.mrb[0].mxu0
  %v406 = vpop.f32.mrb[0].mxu0
  %v407 = vadd.f32 %v55, %v406
  %v408 = vpop.f32.mrb[0].mxu0
  %409 = vmatprep.mubr.bf16.mxu0 %v361
  %410 = vmatmul.mubr.bf16.gmra.mrb[0].mxu0 %v347
  %v411 = vpop.f32.mrb[0].mxu0
  %v412 = vadd.f32 %v55, %v411
  %v413 = vpop.f32.mrb[0].mxu0
  %v414 = vpop.f32.mrb[0].mxu0
  %v415 = vadd.f32 %v55, %v414
  %v416 = vpop.f32.mrb[0].mxu0
  %417 = vmatprep.mubr.bf16.mxu0 %v364
  %418 = vmatmul.mubr.bf16.gmra.mrb[0].mxu0 %v349
  %v419 = vpop.f32.mrb[0].mxu0
  %v420 = vadd.f32 %v55, %v419
  %v421 = vpop.f32.mrb[0].mxu0
  %v422 = vpop.f32.mrb[0].mxu0
  %v423 = vadd.f32 %v55, %v422
  %v424 = vpop.f32.mrb[0].mxu0
  %425 = vmatprep.mubr.bf16.mxu0 %v367
  %426 = vmatmul.mubr.bf16.gmra.mrb[0].mxu0 %v351
  %v427 = vpop.f32.mrb[0].mxu0
  %v428 = vadd.f32 %v55, %v427
  %v429 = vpop.f32.mrb[0].mxu0
  %v430 = vpop.f32.mrb[0].mxu0
  %v431 = vpop.f32.mrb[0].mxu0
  %432 = vdwg.mxu0
  %v433 = vsub.f32 0.0, %v404
  %v434 = vsub.f32 0.0, %v407
  %v435 = vsub.f32 0.0, %v412
  %v436 = vsub.f32 0.0, %v415
  %v437 = vsub.f32 0.0, %v420
  %v438 = vsub.f32 0.0, %v423
  %v439 = vsub.f32 0.0, %v428
  %v440 = vmul.f32 %v433, 1.442695
  %v441 = vpow.pop %v440
  %v442 = vmul.f32 %v434, 1.442695
  %v443 = vpow.pop %v442
  %v444 = vmul.f32 %v435, 1.442695
  %v445 = vpow.pop %v444
  %v446 = vmul.f32 %v436, 1.442695
  %v447 = vpow.pop %v446
  %v448 = vmul.f32 %v437, 1.442695
  %v449 = vpow.pop %v448
  %v450 = vmul.f32 %v438, 1.442695
  %v451 = vpow.pop %v450
  %v452 = vmul.f32 %v439, 1.442695
  %v453 = vpow.pop %v452
  %v454 = vadd.f32 %v441, 1.0
  %v455 = vadd.f32 %v443, 1.0
  %v456 = vadd.f32 %v445, 1.0
  %v457 = vadd.f32 %v447, 1.0
  %v458 = vadd.f32 %v449, 1.0
  %v459 = vadd.f32 %v451, 1.0
  %v460 = vadd.f32 %v453, 1.0
  %v461 = vrcp.pop %v454
  %v462 = vmul.f32 1.0, %v461
  %v463 = vrcp.pop %v455
  %v464 = vmul.f32 1.0, %v463
  %v465 = vrcp.pop %v456
  %v466 = vmul.f32 1.0, %v465
  %v467 = vrcp.pop %v457
  %v468 = vmul.f32 1.0, %v467
  %v469 = vrcp.pop %v458
  %v470 = vmul.f32 1.0, %v469
  %v471 = vrcp.pop %v459
  %v472 = vmul.f32 1.0, %v471
  %v473 = vrcp.pop %v460
  %v474 = vmul.f32 1.0, %v473
  %s475 = scalar_lea.vmem %s1, 56
  %v476 = vld [vmem:[%s475] sm:$0xff]
  %v477 = vld [vmem:[%s475 + $0x8] sm:$0xff]
  %v478 = vld [vmem:[%s475 + $0x10] sm:$0xff]
  %v479 = vld [vmem:[%s475 + $0x18] sm:$0xff]
  %v480 = vld [vmem:[%s475 + $0x20] sm:$0xff]
  %v481 = vld [vmem:[%s475 + $0x28] sm:$0xff]
  %v482 = vld [vmem:[%s475 + $0x30] sm:$0xff]
  %vm483 = vcmp.lt.f32.partialorder %v476, %v462
  %vm484 = vcmp.lt.f32.partialorder %v477, %v464
  %vm485 = vcmp.lt.f32.partialorder %v478, %v466
  %vm486 = vcmp.lt.f32.partialorder %v479, %v468
  %vm487 = vcmp.lt.f32.partialorder %v480, %v470
  %vm488 = vcmp.lt.f32.partialorder %v481, %v472
  %vm489 = vcmp.lt.f32.partialorder %v482, %v474
  %v490 = vsel %vm483, 1, 0
  %v491 = vsel %vm484, 1, 0
  %v492 = vsel %vm485, 1, 0
  %v493 = vsel %vm486, 1, 0
  %v494 = vsel %vm487, 1, 0
  %v495 = vsel %vm488, 1, 0
  %v496 = vsel %vm489, 1, 0
  %v497 = vcvt.s32.f32 %v490
  %v498 = vcvt.s32.f32 %v491
  %v499 = vcvt.s32.f32 %v492
  %v500 = vcvt.s32.f32 %v493
  %v501 = vcvt.s32.f32 %v494
  %v502 = vcvt.s32.f32 %v495
  %v503 = vcvt.s32.f32 %v496
  %v504 = vmax.f32 %v309, %v497
  %v505 = vmax.f32 %v310, %v498
  %v506 = vmax.f32 %v311, %v499
  %v507 = vmax.f32 %v312, %v500
  %v508 = vmax.f32 %v313, %v501
  %v509 = vmax.f32 %v314, %v502
  %v510 = vmax.f32 %v315, %v503
  %s511 = scalar_lea.vmem %s0, 112
  %v512 = vld [vmem:[%s511] sm:$0xff]
  %v513 = vld [vmem:[%s511 + $0x8] sm:$0xff]
  %v514 = vld [vmem:[%s511 + $0x10] sm:$0xff]
  %v515 = vld [vmem:[%s511 + $0x18] sm:$0xff]
  %v516 = vld [vmem:[%s511 + $0x20] sm:$0xff]
  %v517 = vld [vmem:[%s511 + $0x28] sm:$0xff]
  %v518 = vld [vmem:[%s511 + $0x30] sm:$0xff]
  %v526 = vunpack.c.l.b16 %v512
  %v527 = vunpack.c.h.b16 %v512
  %v528 = vunpack.c.l.b16 %v513
  %v529 = vunpack.c.h.b16 %v513
  %v530 = vunpack.c.l.b16 %v514
  %v531 = vunpack.c.h.b16 %v514
  %v532 = vunpack.c.l.b16 %v515
  %v533 = vunpack.c.h.b16 %v515
  %v534 = vunpack.c.l.b16 %v516
  %v535 = vunpack.c.h.b16 %v516
  %v536 = vunpack.c.l.b16 %v517
  %v537 = vunpack.c.h.b16 %v517
  %v538 = vunpack.c.l.b16 %v518
  %v539 = vunpack.c.h.b16 %v518
  %v540 = vpack.c.b16 %v528, %v526
  %v541 = vpack.c.b16 %v529, %v527
  %v542 = vpack.c.b16 %v532, %v530
  %v543 = vpack.c.b16 %v533, %v531
  %v544 = vpack.c.b16 %v536, %v534
  %v545 = vpack.c.b16 %v537, %v535
  %v546 = vpack.c.b16 %v538, %v538
  %v547 = vpack.c.b16 %v539, %v539
  %v553 = vsel %vm165, %v541, 0
  %v556 = vsel %vm165, %v543, 0
  %v559 = vsel %vm165, %v545, 0
  %v562 = vsel %vm165, %v547, 0
  %564 = vmatprep.subr.bf16.mxu0 0
  %565 = vmatpush1.bf16.msra.mxu0 %v140
  %566 = vmatprep.subr.bf16.mxu0 0
  %567 = vmatpush1.bf16.msra.mxu0 %v141
  %568 = vmatprep.subr.bf16.mxu0 0
  %569 = vmatpush1.bf16.msra.mxu0 %v142
  %570 = vmatprep.subr.bf16.mxu0 0
  %571 = vmatpush1.bf16.msra.mxu0 %v143
  %572 = vmatprep.subr.bf16.mxu0 0
  %573 = vmatpush1.bf16.msra.mxu0 %v144
  %574 = vmatprep.subr.bf16.mxu0 0
  %575 = vmatpush1.bf16.msra.mxu0 %v145
  %576 = vmatprep.subr.bf16.mxu0 0
  %577 = vmatpush1.bf16.msra.mxu0 %v146
  %578 = vmatprep.subr.bf16.mxu0 0
  %579 = vmatpush1.bf16.msra.mxu0 %v147
  %580 = vmatprep.subr.bf16.mxu0 0
  %581 = vmatpush1.bf16.msra.mxu0 %v148
  %582 = vmatprep.subr.bf16.mxu0 0
  %583 = vmatpush1.bf16.msra.mxu0 %v149
  %584 = vmatprep.subr.bf16.mxu0 0
  %585 = vmatpush1.bf16.msra.mxu0 %v150
  %586 = vmatprep.subr.bf16.mxu0 0
  %587 = vmatpush1.bf16.msra.mxu0 %v151
  %588 = vmatprep.subr.bf16.mxu0 0
  %589 = vmatpush1.bf16.msra.mxu0 %v180
  %590 = vmatprep.subr.bf16.mxu0 0
  %591 = vmatpush1.bf16.msra.mxu0 0
  %592 = vmatprep.subr.bf16.mxu0 0
  %593 = vmatpush1.bf16.msra.mxu0 0
  %594 = vmatprep.subr.bf16.mxu0 0
  %595 = vmatpush1.bf16.msra.mxu0 0
  %596 = vmatprep.mubr.bf16.mxu0 %v553
  %597 = vmatmul.mubr.bf16.gmra.mrb[0].mxu0 %v540
  %v598 = vpop.f32.mrb[0].mxu0
  %v599 = vadd.f32 %v55, %v598
  %v600 = vpop.f32.mrb[0].mxu0
  %v601 = vpop.f32.mrb[0].mxu0
  %v602 = vadd.f32 %v55, %v601
  %v603 = vpop.f32.mrb[0].mxu0
  %604 = vmatprep.mubr.bf16.mxu0 %v556
  %605 = vmatmul.mubr.bf16.gmra.mrb[0].mxu0 %v542
  %v606 = vpop.f32.mrb[0].mxu0
  %v607 = vadd.f32 %v55, %v606
  %v608 = vpop.f32.mrb[0].mxu0
  %v609 = vpop.f32.mrb[0].mxu0
  %v610 = vadd.f32 %v55, %v609
  %v611 = vpop.f32.mrb[0].mxu0
  %612 = vmatprep.mubr.bf16.mxu0 %v559
  %613 = vmatmul.mubr.bf16.gmra.mrb[0].mxu0 %v544
  %v614 = vpop.f32.mrb[0].mxu0
  %v615 = vadd.f32 %v55, %v614
  %v616 = vpop.f32.mrb[0].mxu0
  %v617 = vpop.f32.mrb[0].mxu0
  %v618 = vadd.f32 %v55, %v617
  %v619 = vpop.f32.mrb[0].mxu0
  %620 = vmatprep.mubr.bf16.mxu0 %v562
  %621 = vmatmul.mubr.bf16.gmra.mrb[0].mxu0 %v546
  %v622 = vpop.f32.mrb[0].mxu0
  %v623 = vadd.f32 %v55, %v622
  %v624 = vpop.f32.mrb[0].mxu0
  %v625 = vpop.f32.mrb[0].mxu0
  %v626 = vpop.f32.mrb[0].mxu0
  %627 = vdwg.mxu0
  %v628 = vsub.f32 0.0, %v599
  %v629 = vsub.f32 0.0, %v602
  %v630 = vsub.f32 0.0, %v607
  %v631 = vsub.f32 0.0, %v610
  %v632 = vsub.f32 0.0, %v615
  %v633 = vsub.f32 0.0, %v618
  %v634 = vsub.f32 0.0, %v623
  %v635 = vmul.f32 %v628, 1.442695
  %v636 = vpow.pop %v635
  %v637 = vmul.f32 %v629, 1.442695
  %v638 = vpow.pop %v637
  %v639 = vmul.f32 %v630, 1.442695
  %v640 = vpow.pop %v639
  %v641 = vmul.f32 %v631, 1.442695
  %v642 = vpow.pop %v641
  %v643 = vmul.f32 %v632, 1.442695
  %v644 = vpow.pop %v643
  %v645 = vmul.f32 %v633, 1.442695
  %v646 = vpow.pop %v645
  %v647 = vmul.f32 %v634, 1.442695
  %v648 = vpow.pop %v647
  %v649 = vadd.f32 %v636, 1.0
  %v650 = vadd.f32 %v638, 1.0
  %v651 = vadd.f32 %v640, 1.0
  %v652 = vadd.f32 %v642, 1.0
  %v653 = vadd.f32 %v644, 1.0
  %v654 = vadd.f32 %v646, 1.0
  %v655 = vadd.f32 %v648, 1.0
  %v656 = vrcp.pop %v649
  %v657 = vmul.f32 1.0, %v656
  %v658 = vrcp.pop %v650
  %v659 = vmul.f32 1.0, %v658
  %v660 = vrcp.pop %v651
  %v661 = vmul.f32 1.0, %v660
  %v662 = vrcp.pop %v652
  %v663 = vmul.f32 1.0, %v662
  %v664 = vrcp.pop %v653
  %v665 = vmul.f32 1.0, %v664
  %v666 = vrcp.pop %v654
  %v667 = vmul.f32 1.0, %v666
  %v668 = vrcp.pop %v655
  %v669 = vmul.f32 1.0, %v668
  %s670 = scalar_lea.vmem %s1, 112
  %v671 = vld [vmem:[%s670] sm:$0xff]
  %v672 = vld [vmem:[%s670 + $0x8] sm:$0xff]
  %v673 = vld [vmem:[%s670 + $0x10] sm:$0xff]
  %v674 = vld [vmem:[%s670 + $0x18] sm:$0xff]
  %v675 = vld [vmem:[%s670 + $0x20] sm:$0xff]
  %v676 = vld [vmem:[%s670 + $0x28] sm:$0xff]
  %v677 = vld [vmem:[%s670 + $0x30] sm:$0xff]
  %vm678 = vcmp.lt.f32.partialorder %v671, %v657
  %vm679 = vcmp.lt.f32.partialorder %v672, %v659
  %vm680 = vcmp.lt.f32.partialorder %v673, %v661
  %vm681 = vcmp.lt.f32.partialorder %v674, %v663
  %vm682 = vcmp.lt.f32.partialorder %v675, %v665
  %vm683 = vcmp.lt.f32.partialorder %v676, %v667
  %vm684 = vcmp.lt.f32.partialorder %v677, %v669
  %v685 = vsel %vm678, 1, 0
  %v686 = vsel %vm679, 1, 0
  %v687 = vsel %vm680, 1, 0
  %v688 = vsel %vm681, 1, 0
  %v689 = vsel %vm682, 1, 0
  %v690 = vsel %vm683, 1, 0
  %v691 = vsel %vm684, 1, 0
  %v692 = vcvt.s32.f32 %v685
  %v693 = vcvt.s32.f32 %v686
  %v694 = vcvt.s32.f32 %v687
  %v695 = vcvt.s32.f32 %v688
  %v696 = vcvt.s32.f32 %v689
  %v697 = vcvt.s32.f32 %v690
  %v698 = vcvt.s32.f32 %v691
  %s699 = scalar_lea.vmem %s0, 168
  %v700 = vld [vmem:[%s699] sm:$0xff]
  %v701 = vld [vmem:[%s699 + $0x8] sm:$0xff]
  %v702 = vld [vmem:[%s699 + $0x10] sm:$0xff]
  %v703 = vld [vmem:[%s699 + $0x18] sm:$0xff]
  %v704 = vld [vmem:[%s699 + $0x20] sm:$0xff]
  %v705 = vld [vmem:[%s699 + $0x28] sm:$0xff]
  %v706 = vld [vmem:[%s699 + $0x30] sm:$0xff]
  %v714 = vunpack.c.l.b16 %v700
  %v715 = vunpack.c.h.b16 %v700
  %v716 = vunpack.c.l.b16 %v701
  %v717 = vunpack.c.h.b16 %v701
  %v718 = vunpack.c.l.b16 %v702
  %v719 = vunpack.c.h.b16 %v702
  %v720 = vunpack.c.l.b16 %v703
  %v721 = vunpack.c.h.b16 %v703
  %v722 = vunpack.c.l.b16 %v704
  %v723 = vunpack.c.h.b16 %v704
  %v724 = vunpack.c.l.b16 %v705
  %v725 = vunpack.c.h.b16 %v705
  %v726 = vunpack.c.l.b16 %v706
  %v727 = vunpack.c.h.b16 %v706
  %v728 = vpack.c.b16 %v716, %v714
  %v729 = vpack.c.b16 %v717, %v715
  %v730 = vpack.c.b16 %v720, %v718
  %v731 = vpack.c.b16 %v721, %v719
  %v732 = vpack.c.b16 %v724, %v722
  %v733 = vpack.c.b16 %v725, %v723
  %v734 = vpack.c.b16 %v726, %v726
  %v735 = vpack.c.b16 %v727, %v727
  %v741 = vsel %vm165, %v729, 0
  %v744 = vsel %vm165, %v731, 0
  %v747 = vsel %vm165, %v733, 0
  %v750 = vsel %vm165, %v735, 0
  %752 = vmatprep.subr.bf16.mxu0 0
  %753 = vmatpush1.bf16.msra.mxu0 %v140
  %754 = vmatprep.subr.bf16.mxu0 0
  %755 = vmatpush1.bf16.msra.mxu0 %v141
  %756 = vmatprep.subr.bf16.mxu0 0
  %757 = vmatpush1.bf16.msra.mxu0 %v142
  %758 = vmatprep.subr.bf16.mxu0 0
  %759 = vmatpush1.bf16.msra.mxu0 %v143
  %760 = vmatprep.subr.bf16.mxu0 0
  %761 = vmatpush1.bf16.msra.mxu0 %v144
  %762 = vmatprep.subr.bf16.mxu0 0
  %763 = vmatpush1.bf16.msra.mxu0 %v145
  %764 = vmatprep.subr.bf16.mxu0 0
  %765 = vmatpush1.bf16.msra.mxu0 %v146
  %766 = vmatprep.subr.bf16.mxu0 0
  %767 = vmatpush1.bf16.msra.mxu0 %v147
  %768 = vmatprep.subr.bf16.mxu0 0
  %769 = vmatpush1.bf16.msra.mxu0 %v148
  %770 = vmatprep.subr.bf16.mxu0 0
  %771 = vmatpush1.bf16.msra.mxu0 %v149
  %772 = vmatprep.subr.bf16.mxu0 0
  %773 = vmatpush1.bf16.msra.mxu0 %v150
  %774 = vmatprep.subr.bf16.mxu0 0
  %775 = vmatpush1.bf16.msra.mxu0 %v151
  %776 = vmatprep.subr.bf16.mxu0 0
  %777 = vmatpush1.bf16.msra.mxu0 %v180
  %778 = vmatprep.subr.bf16.mxu0 0
  %779 = vmatpush1.bf16.msra.mxu0 0
  %780 = vmatprep.subr.bf16.mxu0 0
  %781 = vmatpush1.bf16.msra.mxu0 0
  %782 = vmatprep.subr.bf16.mxu0 0
  %783 = vmatpush1.bf16.msra.mxu0 0
  %784 = vmatprep.mubr.bf16.mxu0 %v741
  %785 = vmatmul.mubr.bf16.gmra.mrb[0].mxu0 %v728
  %v786 = vpop.f32.mrb[0].mxu0
  %v787 = vadd.f32 %v55, %v786
  %v788 = vpop.f32.mrb[0].mxu0
  %v789 = vpop.f32.mrb[0].mxu0
  %v790 = vadd.f32 %v55, %v789
  %v791 = vpop.f32.mrb[0].mxu0
  %792 = vmatprep.mubr.bf16.mxu0 %v744
  %793 = vmatmul.mubr.bf16.gmra.mrb[0].mxu0 %v730
  %v794 = vpop.f32.mrb[0].mxu0
  %v795 = vadd.f32 %v55, %v794
  %v796 = vpop.f32.mrb[0].mxu0
  %v797 = vpop.f32.mrb[0].mxu0
  %v798 = vadd.f32 %v55, %v797
  %v799 = vpop.f32.mrb[0].mxu0
  %800 = vmatprep.mubr.bf16.mxu0 %v747
  %801 = vmatmul.mubr.bf16.gmra.mrb[0].mxu0 %v732
  %v802 = vpop.f32.mrb[0].mxu0
  %v803 = vadd.f32 %v55, %v802
  %v804 = vpop.f32.mrb[0].mxu0
  %v805 = vpop.f32.mrb[0].mxu0
  %v806 = vadd.f32 %v55, %v805
  %v807 = vpop.f32.mrb[0].mxu0
  %808 = vmatprep.mubr.bf16.mxu0 %v750
  %809 = vmatmul.mubr.bf16.gmra.mrb[0].mxu0 %v734
  %v810 = vpop.f32.mrb[0].mxu0
  %v811 = vadd.f32 %v55, %v810
  %v812 = vpop.f32.mrb[0].mxu0
  %v813 = vpop.f32.mrb[0].mxu0
  %v814 = vpop.f32.mrb[0].mxu0
  %815 = vdwg.mxu0
  %v816 = vsub.f32 0.0, %v787
  %v817 = vsub.f32 0.0, %v790
  %v818 = vsub.f32 0.0, %v795
  %v819 = vsub.f32 0.0, %v798
  %v820 = vsub.f32 0.0, %v803
  %v821 = vsub.f32 0.0, %v806
  %v822 = vsub.f32 0.0, %v811
  %v823 = vmul.f32 %v816, 1.442695
  %v824 = vpow.pop %v823
  %v825 = vmul.f32 %v817, 1.442695
  %v826 = vpow.pop %v825
  %v827 = vmul.f32 %v818, 1.442695
  %v828 = vpow.pop %v827
  %v829 = vmul.f32 %v819, 1.442695
  %v830 = vpow.pop %v829
  %v831 = vmul.f32 %v820, 1.442695
  %v832 = vpow.pop %v831
  %v833 = vmul.f32 %v821, 1.442695
  %v834 = vpow.pop %v833
  %v835 = vmul.f32 %v822, 1.442695
  %v836 = vpow.pop %v835
  %v837 = vadd.f32 %v824, 1.0
  %v838 = vadd.f32 %v826, 1.0
  %v839 = vadd.f32 %v828, 1.0
  %v840 = vadd.f32 %v830, 1.0
  %v841 = vadd.f32 %v832, 1.0
  %v842 = vadd.f32 %v834, 1.0
  %v843 = vadd.f32 %v836, 1.0
  %v844 = vrcp.pop %v837
  %v845 = vmul.f32 1.0, %v844
  %v846 = vrcp.pop %v838
  %v847 = vmul.f32 1.0, %v846
  %v848 = vrcp.pop %v839
  %v849 = vmul.f32 1.0, %v848
  %v850 = vrcp.pop %v840
  %v851 = vmul.f32 1.0, %v850
  %v852 = vrcp.pop %v841
  %v853 = vmul.f32 1.0, %v852
  %v854 = vrcp.pop %v842
  %v855 = vmul.f32 1.0, %v854
  %v856 = vrcp.pop %v843
  %v857 = vmul.f32 1.0, %v856
  %s858 = scalar_lea.vmem %s1, 168
  %v859 = vld [vmem:[%s858] sm:$0xff]
  %v860 = vld [vmem:[%s858 + $0x8] sm:$0xff]
  %v861 = vld [vmem:[%s858 + $0x10] sm:$0xff]
  %v862 = vld [vmem:[%s858 + $0x18] sm:$0xff]
  %v863 = vld [vmem:[%s858 + $0x20] sm:$0xff]
  %v864 = vld [vmem:[%s858 + $0x28] sm:$0xff]
  %v865 = vld [vmem:[%s858 + $0x30] sm:$0xff]
  %vm866 = vcmp.lt.f32.partialorder %v859, %v845
  %vm867 = vcmp.lt.f32.partialorder %v860, %v847
  %vm868 = vcmp.lt.f32.partialorder %v861, %v849
  %vm869 = vcmp.lt.f32.partialorder %v862, %v851
  %vm870 = vcmp.lt.f32.partialorder %v863, %v853
  %vm871 = vcmp.lt.f32.partialorder %v864, %v855
  %vm872 = vcmp.lt.f32.partialorder %v865, %v857
  %v873 = vsel %vm866, 1, 0
  %v874 = vsel %vm867, 1, 0
  %v875 = vsel %vm868, 1, 0
  %v876 = vsel %vm869, 1, 0
  %v877 = vsel %vm870, 1, 0
  %v878 = vsel %vm871, 1, 0
  %v879 = vsel %vm872, 1, 0
  %v880 = vcvt.s32.f32 %v873
  %v881 = vcvt.s32.f32 %v874
  %v882 = vcvt.s32.f32 %v875
  %v883 = vcvt.s32.f32 %v876
  %v884 = vcvt.s32.f32 %v877
  %v885 = vcvt.s32.f32 %v878
  %v886 = vcvt.s32.f32 %v879
  %v887 = vmax.f32 %v692, %v880
  %v888 = vmax.f32 %v693, %v881
  %v889 = vmax.f32 %v694, %v882
  %v890 = vmax.f32 %v695, %v883
  %v891 = vmax.f32 %v696, %v884
  %v892 = vmax.f32 %v697, %v885
  %v893 = vmax.f32 %v698, %v886
  %v894 = vmax.f32 %v504, %v887
  %v895 = vmax.f32 %v505, %v888
  %v896 = vmax.f32 %v506, %v889
  %v897 = vmax.f32 %v507, %v890
  %v898 = vmax.f32 %v508, %v891
  %v899 = vmax.f32 %v509, %v892
  %v900 = vmax.f32 %v510, %v893
  %v901 = vpack.c.bf16 %v895, %v894
  %v902 = vpack.c.bf16 %v897, %v896
  %v903 = vpack.c.bf16 %v899, %v898
  %v904 = vpack.c.bf16 %v900, %v900
  %v909 = vunpack.c.l.b16 %v901
  %v910 = vunpack.c.h.b16 %v901
  %v911 = vunpack.c.l.b16 %v902
  %v912 = vunpack.c.h.b16 %v902
  %v913 = vunpack.c.l.b16 %v903
  %v914 = vunpack.c.h.b16 %v903
  %v915 = vunpack.c.l.b16 %v904
  %v916 = vpack.c.b16 %v909, %v909
  %v917 = vpack.c.b16 %v910, %v910
  %v918 = vpack.c.b16 %v911, %v911
  %v919 = vpack.c.b16 %v912, %v912
  %v920 = vpack.c.b16 %v913, %v913
  %v921 = vpack.c.b16 %v914, %v914
  %v922 = vpack.c.b16 %v915, %v915
  %930 = vst [vmem:[%s4] sm:$0xf] %v916
  %931 = vst [vmem:[%s4 + $0x4] sm:$0xf] %v917
  %932 = vst [vmem:[%s4 + $0x8] sm:$0xf] %v918
  %933 = vst [vmem:[%s4 + $0xc] sm:$0xf] %v919
  %934 = vst [vmem:[%s4 + $0x10] sm:$0xf] %v920
  %935 = vst [vmem:[%s4 + $0x14] sm:$0xf] %v921
  %936 = vst [vmem:[%s4 + $0x18] sm:$0xf] %v922
  // Predicated region
  $region18: #{lenet5_forward.6} parent=0 // pred_check
    _
  $region19: #{lenet5_forward.6} parent=0 // pred_check_branch
    %938 = sbr.rel (0) target = $region21
  $region20: #{lenet5_forward.6} parent=0 // pred_region
    _
  $region21: #{lenet5_forward.6} parent=0 // pred_fallthru
    _
  // Predicated region
  $region22: #{lenet5_forward.6} parent=0 // pred_check
    _
  $region23: #{lenet5_forward.6} parent=0 // pred_check_branch
    %940 = sbr.rel (0) target = $region25
  $region24: #{lenet5_forward.6} parent=0 // pred_region
    _
  $region25: #{lenet5_forward.6} parent=0 // pred_fallthru
    _

// kernel: lenet5_forward.7
$region0: #{lenet5_forward.7}
  #allocation0 [shape = 'u32[]', space=smem, size = 0x4, offset = 0x4, fixed_abs, tag = 'smem constant byte address 0x4 - core index']
  #allocation1 [shape = 'u32[144,128]{1,0:T(1,128)}', space=vmem, size = 0x12000, scoped, tag = 'internal scratch']
  %s0 = inlined_call_operand.vmem [shape: bf16[8,3200], index: 0, kind: input, shape index: {}]
  %s1 = inlined_call_operand.vmem [shape: bf16[3200,128], index: 1, kind: input, shape index: {}]
  %s2 = inlined_call_operand.vmem [shape: f32[1,128], index: 2, kind: input, shape index: {}]
  %s3 = inlined_call_operand.vmem [shape: f32[8,128], index: 3, kind: input, shape index: {}]
  %s4 = inlined_call_operand.vmem [shape: bf16[128,128], index: 4, kind: input, shape index: {}]
  %s5 = inlined_call_operand.vmem [shape: f32[1,128], index: 5, kind: input, shape index: {}]
  %s6 = inlined_call_operand.vmem [shape: f32[8,128], index: 6, kind: input, shape index: {}]
  %s7 = inlined_call_operand.vmem [shape: bf16[128,128], index: 7, kind: input, shape index: {}]
  %s8 = inlined_call_operand.vmem [shape: f32[1,128], index: 8, kind: input, shape index: {}]
  %s9 = inlined_call_operand.vmem [shape: f32[8,128], index: 9, kind: output, shape index: {}]
  %s10 = sld [smem:[#allocation0]]
  $region46: #{lenet5_forward.7} parent=0
    _
  %s12 = ssub.s32 1, %s10
  %s13 = scalar_select 0, %s12, %s10
  // Predicated region
  $region2: #{lenet5_forward.7} parent=0 // pred_check
    _
  $region3: #{lenet5_forward.7} parent=0 // pred_check_branch
    %15 = sbr.rel (0) target = $region5
  $region4: #{lenet5_forward.7} parent=0 // pred_region
    _
  $region5: #{lenet5_forward.7} parent=0 // pred_fallthru
    _
  // Predicated region
  $region6: #{lenet5_forward.7} parent=0 // pred_check
    _
  $region7: #{lenet5_forward.7} parent=0 // pred_check_branch
    %17 = sbr.rel (0) target = $region9
  $region8: #{lenet5_forward.7} parent=0 // pred_region
    _
  $region9: #{lenet5_forward.7} parent=0 // pred_fallthru
    _
  // Predicated region
  $region10: #{lenet5_forward.7} parent=0 // pred_check
    _
  $region11: #{lenet5_forward.7} parent=0 // pred_check_branch
    %19 = sbr.rel (0) target = $region13
  $region12: #{lenet5_forward.7} parent=0 // pred_region
    _
  $region13: #{lenet5_forward.7} parent=0 // pred_fallthru
    _
  // Predicated region
  $region14: #{lenet5_forward.7} parent=0 // pred_check
    _
  $region15: #{lenet5_forward.7} parent=0 // pred_check_branch
    %21 = sbr.rel (0) target = $region17
  $region16: #{lenet5_forward.7} parent=0 // pred_region
    _
  $region17: #{lenet5_forward.7} parent=0 // pred_fallthru
    _
  // Predicated region
  $region18: #{lenet5_forward.7} parent=0 // pred_check
    _
  $region19: #{lenet5_forward.7} parent=0 // pred_check_branch
    %23 = sbr.rel (0) target = $region21
  $region20: #{lenet5_forward.7} parent=0 // pred_region
    _
  $region21: #{lenet5_forward.7} parent=0 // pred_fallthru
    _
  // Predicated region
  $region22: #{lenet5_forward.7} parent=0 // pred_check
    _
  $region23: #{lenet5_forward.7} parent=0 // pred_check_branch
    %25 = sbr.rel (0) target = $region25
  $region24: #{lenet5_forward.7} parent=0 // pred_region
    _
  $region25: #{lenet5_forward.7} parent=0 // pred_fallthru
    _
  // Predicated region
  $region26: #{lenet5_forward.7} parent=0 // pred_check
    _
  $region27: #{lenet5_forward.7} parent=0 // pred_check_branch
    %27 = sbr.rel (0) target = $region29
  $region28: #{lenet5_forward.7} parent=0 // pred_region
    _
  $region29: #{lenet5_forward.7} parent=0 // pred_fallthru
    _
  // Predicated region
  $region30: #{lenet5_forward.7} parent=0 // pred_check
    _
  $region31: #{lenet5_forward.7} parent=0 // pred_check_branch
    %29 = sbr.rel (0) target = $region33
  $region32: #{lenet5_forward.7} parent=0 // pred_region
    _
  $region33: #{lenet5_forward.7} parent=0 // pred_fallthru
    _
  // Predicated region
  $region34: #{lenet5_forward.7} parent=0 // pred_check
    _
  $region35: #{lenet5_forward.7} parent=0 // pred_check_branch
    %31 = sbr.rel (0) target = $region37
  $region36: #{lenet5_forward.7} parent=0 // pred_region
    _
  $region37: #{lenet5_forward.7} parent=0 // pred_fallthru
    _
  %v33 = vld [vmem:[%s0] sm:$0xff]
  %v34 = vld [vmem:[%s0 + $0x8] sm:$0xff]
  %v35 = vld [vmem:[%s0 + $0x10] sm:$0xff]
  %v36 = vld [vmem:[%s0 + $0x18] sm:$0xff]
  %v37 = vld [vmem:[%s0 + $0x20] sm:$0xff]
  %v38 = vld [vmem:[%s0 + $0x28] sm:$0xff]
  %v39 = vld [vmem:[%s0 + $0x30] sm:$0xff]
  %v40 = vld [vmem:[%s0 + $0x38] sm:$0xff]
  %v41 = vld [vmem:[%s0 + $0x40] sm:$0xff]
  %v42 = vld [vmem:[%s0 + $0x48] sm:$0xff]
  %v43 = vld [vmem:[%s0 + $0x50] sm:$0xff]
  %v44 = vld [vmem:[%s0 + $0x58] sm:$0xff]
  %v45 = vld [vmem:[%s0 + $0x60] sm:$0xf]
  %v46 = vld [vmem:[%s1] sm:$0xf]
  %v47 = vld [vmem:[%s1 + $0x4] sm:$0xf]
  %v48 = vld [vmem:[%s1 + $0x8] sm:$0xf]
  %v49 = vld [vmem:[%s1 + $0xc] sm:$0xf]
  %v50 = vld [vmem:[%s1 + $0x10] sm:$0xf]
  %v51 = vld [vmem:[%s1 + $0x14] sm:$0xf]
  %v52 = vld [vmem:[%s1 + $0x18] sm:$0xf]
  %v53 = vld [vmem:[%s1 + $0x1c] sm:$0xf]
  %v54 = vld [vmem:[%s1 + $0x20] sm:$0xf]
  %v55 = vld [vmem:[%s1 + $0x24] sm:$0xf]
  %v56 = vld [vmem:[%s1 + $0x28] sm:$0xf]
  %v57 = vld [vmem:[%s1 + $0x2c] sm:$0xf]
  %v58 = vld [vmem:[%s1 + $0x30] sm:$0xf]
  %v59 = vld [vmem:[%s1 + $0x34] sm:$0xf]
  %v60 = vld [vmem:[%s1 + $0x38] sm:$0xf]
  %v61 = vld [vmem:[%s1 + $0x3c] sm:$0xf]
  %v62 = vld [vmem:[%s1 + $0x40] sm:$0xf]
  %v63 = vld [vmem:[%s1 + $0x44] sm:$0xf]
  %v64 = vld [vmem:[%s1 + $0x48] sm:$0xf]
  %v65 = vld [vmem:[%s1 + $0x4c] sm:$0xf]
  %v66 = vld [vmem:[%s1 + $0x50] sm:$0xf]
  %v67 = vld [vmem:[%s1 + $0x54] sm:$0xf]
  %v68 = vld [vmem:[%s1 + $0x58] sm:$0xf]
  %v69 = vld [vmem:[%s1 + $0x5c] sm:$0xf]
  %v70 = vld [vmem:[%s1 + $0x60] sm:$0xf]
  %v71 = vld [vmem:[%s1 + $0x64] sm:$0xf]
  %v72 = vld [vmem:[%s1 + $0x68] sm:$0xf]
  %v73 = vld [vmem:[%s1 + $0x6c] sm:$0xf]
  %v74 = vld [vmem:[%s1 + $0x70] sm:$0xf]
  %v75 = vld [vmem:[%s1 + $0x74] sm:$0xf]
  %v76 = vld [vmem:[%s1 + $0x78] sm:$0xf]
  %v77 = vld [vmem:[%s1 + $0x7c] sm:$0xf]
  %v78 = vld [vmem:[%s1 + $0x80] sm:$0xf]
  %v79 = vld [vmem:[%s1 + $0x84] sm:$0xf]
  %v80 = vld [vmem:[%s1 + $0x88] sm:$0xf]
  %v81 = vld [vmem:[%s1 + $0x8c] sm:$0xf]
  %v82 = vld [vmem:[%s1 + $0x90] sm:$0xf]
  %v83 = vld [vmem:[%s1 + $0x94] sm:$0xf]
  %v84 = vld [vmem:[%s1 + $0x98] sm:$0xf]
  %v85 = vld [vmem:[%s1 + $0x9c] sm:$0xf]
  %v86 = vld [vmem:[%s1 + $0xa0] sm:$0xf]
  %v87 = vld [vmem:[%s1 + $0xa4] sm:$0xf]
  %v88 = vld [vmem:[%s1 + $0xa8] sm:$0xf]
  %v89 = vld [vmem:[%s1 + $0xac] sm:$0xf]
  %v90 = vld [vmem:[%s1 + $0xb0] sm:$0xf]
  %v91 = vld [vmem:[%s1 + $0xb4] sm:$0xf]
  %v92 = vld [vmem:[%s1 + $0xb8] sm:$0xf]
  %v93 = vld [vmem:[%s1 + $0xbc] sm:$0xf]
  %v94 = vld [vmem:[%s1 + $0xc0] sm:$0xf]
  %v95 = vld [vmem:[%s1 + $0xc4] sm:$0xf]
  %v96 = vld [vmem:[%s1 + $0xc8] sm:$0xf]
  %v97 = vld [vmem:[%s1 + $0xcc] sm:$0xf]
  %v98 = vld [vmem:[%s1 + $0xd0] sm:$0xf]
  %v99 = vld [vmem:[%s1 + $0xd4] sm:$0xf]
  %v100 = vld [vmem:[%s1 + $0xd8] sm:$0xf]
  %v101 = vld [vmem:[%s1 + $0xdc] sm:$0xf]
  %v102 = vld [vmem:[%s1 + $0xe0] sm:$0xf]
  %v103 = vld [vmem:[%s1 + $0xe4] sm:$0xf]
  %v104 = vld [vmem:[%s1 + $0xe8] sm:$0xf]
  %v105 = vld [vmem:[%s1 + $0xec] sm:$0xf]
  %v106 = vld [vmem:[%s1 + $0xf0] sm:$0xf]
  %v107 = vld [vmem:[%s1 + $0xf4] sm:$0xf]
  %v108 = vld [vmem:[%s1 + $0xf8] sm:$0xf]
  %v109 = vld [vmem:[%s1 + $0xfc] sm:$0xf]
  %v110 = vld [vmem:[%s1 + $0x100] sm:$0xf]
  %v111 = vld [vmem:[%s1 + $0x104] sm:$0xf]
  %v112 = vld [vmem:[%s1 + $0x108] sm:$0xf]
  %v113 = vld [vmem:[%s1 + $0x10c] sm:$0xf]
  %v114 = vld [vmem:[%s1 + $0x110] sm:$0xf]
  %v115 = vld [vmem:[%s1 + $0x114] sm:$0xf]
  %v116 = vld [vmem:[%s1 + $0x118] sm:$0xf]
  %v117 = vld [vmem:[%s1 + $0x11c] sm:$0xf]
  %v118 = vld [vmem:[%s1 + $0x120] sm:$0xf]
  %v119 = vld [vmem:[%s1 + $0x124] sm:$0xf]
  %v120 = vld [vmem:[%s1 + $0x128] sm:$0xf]
  %v121 = vld [vmem:[%s1 + $0x12c] sm:$0xf]
  %v122 = vld [vmem:[%s1 + $0x130] sm:$0xf]
  %v123 = vld [vmem:[%s1 + $0x134] sm:$0xf]
  %v124 = vld [vmem:[%s1 + $0x138] sm:$0xf]
  %v125 = vld [vmem:[%s1 + $0x13c] sm:$0xf]
  %v126 = vld [vmem:[%s1 + $0x140] sm:$0xf]
  %v127 = vld [vmem:[%s1 + $0x144] sm:$0xf]
  %v128 = vld [vmem:[%s1 + $0x148] sm:$0xf]
  %v129 = vld [vmem:[%s1 + $0x14c] sm:$0xf]
  %v130 = vld [vmem:[%s1 + $0x150] sm:$0xf]
  %v131 = vld [vmem:[%s1 + $0x154] sm:$0xf]
  %v132 = vld [vmem:[%s1 + $0x158] sm:$0xf]
  %v133 = vld [vmem:[%s1 + $0x15c] sm:$0xf]
  %v134 = vld [vmem:[%s1 + $0x160] sm:$0xf]
  %v135 = vld [vmem:[%s1 + $0x164] sm:$0xf]
  %v136 = vld [vmem:[%s1 + $0x168] sm:$0xf]
  %v137 = vld [vmem:[%s1 + $0x16c] sm:$0xf]
  %v138 = vld [vmem:[%s1 + $0x170] sm:$0xf]
  %v139 = vld [vmem:[%s1 + $0x174] sm:$0xf]
  %v140 = vld [vmem:[%s1 + $0x178] sm:$0xf]
  %v141 = vld [vmem:[%s1 + $0x17c] sm:$0xf]
  %v142 = vld [vmem:[%s1 + $0x180] sm:$0xf]
  %v143 = vld [vmem:[%s1 + $0x184] sm:$0xf]
  %v144 = vld [vmem:[%s1 + $0x188] sm:$0xf]
  %v145 = vld [vmem:[%s1 + $0x18c] sm:$0xf]
  %v146 = vld [vmem:[%s1 + $0x190] sm:$0xf]
  %v147 = vld [vmem:[%s1 + $0x194] sm:$0xf]
  %v148 = vld [vmem:[%s1 + $0x198] sm:$0xf]
  %v149 = vld [vmem:[%s1 + $0x19c] sm:$0xf]
  %v150 = vld [vmem:[%s1 + $0x1a0] sm:$0xf]
  %v151 = vld [vmem:[%s1 + $0x1a4] sm:$0xf]
  %v152 = vld [vmem:[%s1 + $0x1a8] sm:$0xf]
  %v153 = vld [vmem:[%s1 + $0x1ac] sm:$0xf]
  %v154 = vld [vmem:[%s1 + $0x1b0] sm:$0xf]
  %v155 = vld [vmem:[%s1 + $0x1b4] sm:$0xf]
  %v156 = vld [vmem:[%s1 + $0x1b8] sm:$0xf]
  %v157 = vld [vmem:[%s1 + $0x1bc] sm:$0xf]
  %v158 = vld [vmem:[%s1 + $0x1c0] sm:$0xf]
  %v159 = vld [vmem:[%s1 + $0x1c4] sm:$0xf]
  %v160 = vld [vmem:[%s1 + $0x1c8] sm:$0xf]
  %v161 = vld [vmem:[%s1 + $0x1cc] sm:$0xf]
  %v162 = vld [vmem:[%s1 + $0x1d0] sm:$0xf]
  %v163 = vld [vmem:[%s1 + $0x1d4] sm:$0xf]
  %v164 = vld [vmem:[%s1 + $0x1d8] sm:$0xf]
  %v165 = vld [vmem:[%s1 + $0x1dc] sm:$0xf]
  %v166 = vld [vmem:[%s1 + $0x1e0] sm:$0xf]
  %v167 = vld [vmem:[%s1 + $0x1e4] sm:$0xf]
  %v168 = vld [vmem:[%s1 + $0x1e8] sm:$0xf]
  %v169 = vld [vmem:[%s1 + $0x1ec] sm:$0xf]
  %v170 = vld [vmem:[%s1 + $0x1f0] sm:$0xf]
  %v171 = vld [vmem:[%s1 + $0x1f4] sm:$0xf]
  %v172 = vld [vmem:[%s1 + $0x1f8] sm:$0xf]
  %v173 = vld [vmem:[%s1 + $0x1fc] sm:$0xf]
  %v174 = vld [vmem:[%s1 + $0x200] sm:$0xf]
  %v175 = vld [vmem:[%s1 + $0x204] sm:$0xf]
  %v176 = vld [vmem:[%s1 + $0x208] sm:$0xf]
  %v177 = vld [vmem:[%s1 + $0x20c] sm:$0xf]
  %v178 = vld [vmem:[%s1 + $0x210] sm:$0xf]
  %v179 = vld [vmem:[%s1 + $0x214] sm:$0xf]
  %v180 = vld [vmem:[%s1 + $0x218] sm:$0xf]
  %v181 = vld [vmem:[%s1 + $0x21c] sm:$0xf]
  %v182 = vld [vmem:[%s1 + $0x220] sm:$0xf]
  %v183 = vld [vmem:[%s1 + $0x224] sm:$0xf]
  %v184 = vld [vmem:[%s1 + $0x228] sm:$0xf]
  %v185 = vld [vmem:[%s1 + $0x22c] sm:$0xf]
  %v186 = vld [vmem:[%s1 + $0x230] sm:$0xf]
  %v187 = vld [vmem:[%s1 + $0x234] sm:$0xf]
  %v188 = vld [vmem:[%s1 + $0x238] sm:$0xf]
  %v189 = vld [vmem:[%s1 + $0x23c] sm:$0xf]
  %v190 = vld [vmem:[%s1 + $0x240] sm:$0xf]
  %v191 = vld [vmem:[%s1 + $0x244] sm:$0xf]
  %v192 = vld [vmem:[%s1 + $0x248] sm:$0xf]
  %v193 = vld [vmem:[%s1 + $0x24c] sm:$0xf]
  %v194 = vld [vmem:[%s1 + $0x250] sm:$0xf]
  %v195 = vld [vmem:[%s1 + $0x254] sm:$0xf]
  %v196 = vld [vmem:[%s1 + $0x258] sm:$0xf]
  %v197 = vld [vmem:[%s1 + $0x25c] sm:$0xf]
  %v198 = vld [vmem:[%s1 + $0x260] sm:$0xf]
  %v199 = vld [vmem:[%s1 + $0x264] sm:$0xf]
  %v200 = vld [vmem:[%s1 + $0x268] sm:$0xf]
  %v201 = vld [vmem:[%s1 + $0x26c] sm:$0xf]
  %v202 = vld [vmem:[%s1 + $0x270] sm:$0xf]
  %v203 = vld [vmem:[%s1 + $0x274] sm:$0xf]
  %v204 = vld [vmem:[%s1 + $0x278] sm:$0xf]
  %v205 = vld [vmem:[%s1 + $0x27c] sm:$0xf]
  %v206 = vld [vmem:[%s1 + $0x280] sm:$0xf]
  %v207 = vld [vmem:[%s1 + $0x284] sm:$0xf]
  %v208 = vld [vmem:[%s1 + $0x288] sm:$0xf]
  %v209 = vld [vmem:[%s1 + $0x28c] sm:$0xf]
  %v210 = vld [vmem:[%s1 + $0x290] sm:$0xf]
  %v211 = vld [vmem:[%s1 + $0x294] sm:$0xf]
  %v212 = vld [vmem:[%s1 + $0x298] sm:$0xf]
  %v213 = vld [vmem:[%s1 + $0x29c] sm:$0xf]
  %v214 = vld [vmem:[%s1 + $0x2a0] sm:$0xf]
  %v215 = vld [vmem:[%s1 + $0x2a4] sm:$0xf]
  %v216 = vld [vmem:[%s1 + $0x2a8] sm:$0xf]
  %v217 = vld [vmem:[%s1 + $0x2ac] sm:$0xf]
  %v218 = vld [vmem:[%s1 + $0x2b0] sm:$0xf]
  %v219 = vld [vmem:[%s1 + $0x2b4] sm:$0xf]
  %v220 = vld [vmem:[%s1 + $0x2b8] sm:$0xf]
  %v221 = vld [vmem:[%s1 + $0x2bc] sm:$0xf]
  %v222 = vld [vmem:[%s1 + $0x2c0] sm:$0xf]
  %v223 = vld [vmem:[%s1 + $0x2c4] sm:$0xf]
  %v224 = vld [vmem:[%s1 + $0x2c8] sm:$0xf]
  %v225 = vld [vmem:[%s1 + $0x2cc] sm:$0xf]
  %v226 = vld [vmem:[%s1 + $0x2d0] sm:$0xf]
  %v227 = vld [vmem:[%s1 + $0x2d4] sm:$0xf]
  %v228 = vld [vmem:[%s1 + $0x2d8] sm:$0xf]
  %v229 = vld [vmem:[%s1 + $0x2dc] sm:$0xf]
  %v230 = vld [vmem:[%s1 + $0x2e0] sm:$0xf]
  %v231 = vld [vmem:[%s1 + $0x2e4] sm:$0xf]
  %v232 = vld [vmem:[%s1 + $0x2e8] sm:$0xf]
  %v233 = vld [vmem:[%s1 + $0x2ec] sm:$0xf]
  %v234 = vld [vmem:[%s1 + $0x2f0] sm:$0xf]
  %v235 = vld [vmem:[%s1 + $0x2f4] sm:$0xf]
  %v236 = vld [vmem:[%s1 + $0x2f8] sm:$0xf]
  %v237 = vld [vmem:[%s1 + $0x2fc] sm:$0xf]
  %v238 = vld [vmem:[%s1 + $0x300] sm:$0xf]
  %v239 = vld [vmem:[%s1 + $0x304] sm:$0xf]
  %v240 = vld [vmem:[%s1 + $0x308] sm:$0xf]
  %v241 = vld [vmem:[%s1 + $0x30c] sm:$0xf]
  %v242 = vld [vmem:[%s1 + $0x310] sm:$0xf]
  %v243 = vld [vmem:[%s1 + $0x314] sm:$0xf]
  %v244 = vld [vmem:[%s1 + $0x318] sm:$0xf]
  %v245 = vld [vmem:[%s1 + $0x31c] sm:$0xf]
  %v246 = vld [vmem:[%s1 + $0x320] sm:$0xf]
  %v247 = vld [vmem:[%s1 + $0x324] sm:$0xf]
  %v248 = vld [vmem:[%s1 + $0x328] sm:$0xf]
  %v249 = vld [vmem:[%s1 + $0x32c] sm:$0xf]
  %v250 = vld [vmem:[%s1 + $0x330] sm:$0xf]
  %v251 = vld [vmem:[%s1 + $0x334] sm:$0xf]
  %v252 = vld [vmem:[%s1 + $0x338] sm:$0xf]
  %v253 = vld [vmem:[%s1 + $0x33c] sm:$0xf]
  %v254 = vld [vmem:[%s1 + $0x340] sm:$0xf]
  %v255 = vld [vmem:[%s1 + $0x344] sm:$0xf]
  %v256 = vld [vmem:[%s1 + $0x348] sm:$0xf]
  %v257 = vld [vmem:[%s1 + $0x34c] sm:$0xf]
  %v258 = vld [vmem:[%s1 + $0x350] sm:$0xf]
  %v259 = vld [vmem:[%s1 + $0x354] sm:$0xf]
  %v260 = vld [vmem:[%s1 + $0x358] sm:$0xf]
  %v261 = vld [vmem:[%s1 + $0x35c] sm:$0xf]
  %v262 = vld [vmem:[%s1 + $0x360] sm:$0xf]
  %v263 = vld [vmem:[%s1 + $0x364] sm:$0xf]
  %v264 = vld [vmem:[%s1 + $0x368] sm:$0xf]
  %v265 = vld [vmem:[%s1 + $0x36c] sm:$0xf]
  %v266 = vld [vmem:[%s1 + $0x370] sm:$0xf]
  %v267 = vld [vmem:[%s1 + $0x374] sm:$0xf]
  %v268 = vld [vmem:[%s1 + $0x378] sm:$0xf]
  %v269 = vld [vmem:[%s1 + $0x37c] sm:$0xf]
  %v270 = vld [vmem:[%s1 + $0x380] sm:$0xf]
  %v271 = vld [vmem:[%s1 + $0x384] sm:$0xf]
  %v272 = vld [vmem:[%s1 + $0x388] sm:$0xf]
  %v273 = vld [vmem:[%s1 + $0x38c] sm:$0xf]
  %v274 = vld [vmem:[%s1 + $0x390] sm:$0xf]
  %v275 = vld [vmem:[%s1 + $0x394] sm:$0xf]
  %v276 = vld [vmem:[%s1 + $0x398] sm:$0xf]
  %v277 = vld [vmem:[%s1 + $0x39c] sm:$0xf]
  %v278 = vld [vmem:[%s1 + $0x3a0] sm:$0xf]
  %v279 = vld [vmem:[%s1 + $0x3a4] sm:$0xf]
  %v280 = vld [vmem:[%s1 + $0x3a8] sm:$0xf]
  %v281 = vld [vmem:[%s1 + $0x3ac] sm:$0xf]
  %v282 = vld [vmem:[%s1 + $0x3b0] sm:$0xf]
  %v283 = vld [vmem:[%s1 + $0x3b4] sm:$0xf]
  %v284 = vld [vmem:[%s1 + $0x3b8] sm:$0xf]
  %v285 = vld [vmem:[%s1 + $0x3bc] sm:$0xf]
  %v286 = vld [vmem:[%s1 + $0x3c0] sm:$0xf]
  %v287 = vld [vmem:[%s1 + $0x3c4] sm:$0xf]
  %v288 = vld [vmem:[%s1 + $0x3c8] sm:$0xf]
  %v289 = vld [vmem:[%s1 + $0x3cc] sm:$0xf]
  %v290 = vld [vmem:[%s1 + $0x3d0] sm:$0xf]
  %v291 = vld [vmem:[%s1 + $0x3d4] sm:$0xf]
  %v292 = vld [vmem:[%s1 + $0x3d8] sm:$0xf]
  %v293 = vld [vmem:[%s1 + $0x3dc] sm:$0xf]
  %v294 = vld [vmem:[%s1 + $0x3e0] sm:$0xf]
  %v295 = vld [vmem:[%s1 + $0x3e4] sm:$0xf]
  %v296 = vld [vmem:[%s1 + $0x3e8] sm:$0xf]
  %v297 = vld [vmem:[%s1 + $0x3ec] sm:$0xf]
  %v298 = vld [vmem:[%s1 + $0x3f0] sm:$0xf]
  %v299 = vld [vmem:[%s1 + $0x3f4] sm:$0xf]
  %v300 = vld [vmem:[%s1 + $0x3f8] sm:$0xf]
  %v301 = vld [vmem:[%s1 + $0x3fc] sm:$0xf]
  %v302 = vld [vmem:[%s1 + $0x400] sm:$0xf]
  %v303 = vld [vmem:[%s1 + $0x404] sm:$0xf]
  %v304 = vld [vmem:[%s1 + $0x408] sm:$0xf]
  %v305 = vld [vmem:[%s1 + $0x40c] sm:$0xf]
  %v306 = vld [vmem:[%s1 + $0x410] sm:$0xf]
  %v307 = vld [vmem:[%s1 + $0x414] sm:$0xf]
  %v308 = vld [vmem:[%s1 + $0x418] sm:$0xf]
  %v309 = vld [vmem:[%s1 + $0x41c] sm:$0xf]
  %v310 = vld [vmem:[%s1 + $0x420] sm:$0xf]
  %v311 = vld [vmem:[%s1 + $0x424] sm:$0xf]
  %v312 = vld [vmem:[%s1 + $0x428] sm:$0xf]
  %v313 = vld [vmem:[%s1 + $0x42c] sm:$0xf]
  %v314 = vld [vmem:[%s1 + $0x430] sm:$0xf]
  %v315 = vld [vmem:[%s1 + $0x434] sm:$0xf]
  %v316 = vld [vmem:[%s1 + $0x438] sm:$0xf]
  %v317 = vld [vmem:[%s1 + $0x43c] sm:$0xf]
  %v318 = vld [vmem:[%s1 + $0x440] sm:$0xf]
  %v319 = vld [vmem:[%s1 + $0x444] sm:$0xf]
  %v320 = vld [vmem:[%s1 + $0x448] sm:$0xf]
  %v321 = vld [vmem:[%s1 + $0x44c] sm:$0xf]
  %v322 = vld [vmem:[%s1 + $0x450] sm:$0xf]
  %v323 = vld [vmem:[%s1 + $0x454] sm:$0xf]
  %v324 = vld [vmem:[%s1 + $0x458] sm:$0xf]
  %v325 = vld [vmem:[%s1 + $0x45c] sm:$0xf]
  %v326 = vld [vmem:[%s1 + $0x460] sm:$0xf]
  %v327 = vld [vmem:[%s1 + $0x464] sm:$0xf]
  %v328 = vld [vmem:[%s1 + $0x468] sm:$0xf]
  %v329 = vld [vmem:[%s1 + $0x46c] sm:$0xf]
  %v330 = vld [vmem:[%s1 + $0x470] sm:$0xf]
  %v331 = vld [vmem:[%s1 + $0x474] sm:$0xf]
  %v332 = vld [vmem:[%s1 + $0x478] sm:$0xf]
  %v333 = vld [vmem:[%s1 + $0x47c] sm:$0xf]
  %v334 = vld [vmem:[%s1 + $0x480] sm:$0xf]
  %v335 = vld [vmem:[%s1 + $0x484] sm:$0xf]
  %v336 = vld [vmem:[%s1 + $0x488] sm:$0xf]
  %v337 = vld [vmem:[%s1 + $0x48c] sm:$0xf]
  %v338 = vld [vmem:[%s1 + $0x490] sm:$0xf]
  %v339 = vld [vmem:[%s1 + $0x494] sm:$0xf]
  %v340 = vld [vmem:[%s1 + $0x498] sm:$0xf]
  %v341 = vld [vmem:[%s1 + $0x49c] sm:$0xf]
  %v342 = vld [vmem:[%s1 + $0x4a0] sm:$0xf]
  %v343 = vld [vmem:[%s1 + $0x4a4] sm:$0xf]
  %v344 = vld [vmem:[%s1 + $0x4a8] sm:$0xf]
  %v345 = vld [vmem:[%s1 + $0x4ac] sm:$0xf]
  %v346 = vld [vmem:[%s1 + $0x4b0] sm:$0xf]
  %v347 = vld [vmem:[%s1 + $0x4b4] sm:$0xf]
  %v348 = vld [vmem:[%s1 + $0x4b8] sm:$0xf]
  %v349 = vld [vmem:[%s1 + $0x4bc] sm:$0xf]
  %v350 = vld [vmem:[%s1 + $0x4c0] sm:$0xf]
  %v351 = vld [vmem:[%s1 + $0x4c4] sm:$0xf]
  %v352 = vld [vmem:[%s1 + $0x4c8] sm:$0xf]
  %v353 = vld [vmem:[%s1 + $0x4cc] sm:$0xf]
  %v354 = vld [vmem:[%s1 + $0x4d0] sm:$0xf]
  %v355 = vld [vmem:[%s1 + $0x4d4] sm:$0xf]
  %v356 = vld [vmem:[%s1 + $0x4d8] sm:$0xf]
  %v357 = vld [vmem:[%s1 + $0x4dc] sm:$0xf]
  %v358 = vld [vmem:[%s1 + $0x4e0] sm:$0xf]
  %v359 = vld [vmem:[%s1 + $0x4e4] sm:$0xf]
  %v360 = vld [vmem:[%s1 + $0x4e8] sm:$0xf]
  %v361 = vld [vmem:[%s1 + $0x4ec] sm:$0xf]
  %v362 = vld [vmem:[%s1 + $0x4f0] sm:$0xf]
  %v363 = vld [vmem:[%s1 + $0x4f4] sm:$0xf]
  %v364 = vld [vmem:[%s1 + $0x4f8] sm:$0xf]
  %v365 = vld [vmem:[%s1 + $0x4fc] sm:$0xf]
  %v366 = vld [vmem:[%s1 + $0x500] sm:$0xf]
  %v367 = vld [vmem:[%s1 + $0x504] sm:$0xf]
  %v368 = vld [vmem:[%s1 + $0x508] sm:$0xf]
  %v369 = vld [vmem:[%s1 + $0x50c] sm:$0xf]
  %v370 = vld [vmem:[%s1 + $0x510] sm:$0xf]
  %v371 = vld [vmem:[%s1 + $0x514] sm:$0xf]
  %v372 = vld [vmem:[%s1 + $0x518] sm:$0xf]
  %v373 = vld [vmem:[%s1 + $0x51c] sm:$0xf]
  %v374 = vld [vmem:[%s1 + $0x520] sm:$0xf]
  %v375 = vld [vmem:[%s1 + $0x524] sm:$0xf]
  %v376 = vld [vmem:[%s1 + $0x528] sm:$0xf]
  %v377 = vld [vmem:[%s1 + $0x52c] sm:$0xf]
  %v378 = vld [vmem:[%s1 + $0x530] sm:$0xf]
  %v379 = vld [vmem:[%s1 + $0x534] sm:$0xf]
  %v380 = vld [vmem:[%s1 + $0x538] sm:$0xf]
  %v381 = vld [vmem:[%s1 + $0x53c] sm:$0xf]
  %v382 = vld [vmem:[%s1 + $0x540] sm:$0xf]
  %v383 = vld [vmem:[%s1 + $0x544] sm:$0xf]
  %v384 = vld [vmem:[%s1 + $0x548] sm:$0xf]
  %v385 = vld [vmem:[%s1 + $0x54c] sm:$0xf]
  %v386 = vld [vmem:[%s1 + $0x550] sm:$0xf]
  %v387 = vld [vmem:[%s1 + $0x554] sm:$0xf]
  %v388 = vld [vmem:[%s1 + $0x558] sm:$0xf]
  %v389 = vld [vmem:[%s1 + $0x55c] sm:$0xf]
  %v390 = vld [vmem:[%s1 + $0x560] sm:$0xf]
  %v391 = vld [vmem:[%s1 + $0x564] sm:$0xf]
  %v392 = vld [vmem:[%s1 + $0x568] sm:$0xf]
  %v393 = vld [vmem:[%s1 + $0x56c] sm:$0xf]
  %v394 = vld [vmem:[%s1 + $0x570] sm:$0xf]
  %v395 = vld [vmem:[%s1 + $0x574] sm:$0xf]
  %v396 = vld [vmem:[%s1 + $0x578] sm:$0xf]
  %v397 = vld [vmem:[%s1 + $0x57c] sm:$0xf]
  %v398 = vld [vmem:[%s1 + $0x580] sm:$0xf]
  %v399 = vld [vmem:[%s1 + $0x584] sm:$0xf]
  %v400 = vld [vmem:[%s1 + $0x588] sm:$0xf]
  %v401 = vld [vmem:[%s1 + $0x58c] sm:$0xf]
  %v402 = vld [vmem:[%s1 + $0x590] sm:$0xf]
  %v403 = vld [vmem:[%s1 + $0x594] sm:$0xf]
  %v404 = vld [vmem:[%s1 + $0x598] sm:$0xf]
  %v405 = vld [vmem:[%s1 + $0x59c] sm:$0xf]
  %v406 = vld [vmem:[%s1 + $0x5a0] sm:$0xf]
  %v407 = vld [vmem:[%s1 + $0x5a4] sm:$0xf]
  %v408 = vld [vmem:[%s1 + $0x5a8] sm:$0xf]
  %v409 = vld [vmem:[%s1 + $0x5ac] sm:$0xf]
  %v410 = vld [vmem:[%s1 + $0x5b0] sm:$0xf]
  %v411 = vld [vmem:[%s1 + $0x5b4] sm:$0xf]
  %v412 = vld [vmem:[%s1 + $0x5b8] sm:$0xf]
  %v413 = vld [vmem:[%s1 + $0x5bc] sm:$0xf]
  %v414 = vld [vmem:[%s1 + $0x5c0] sm:$0xf]
  %v415 = vld [vmem:[%s1 + $0x5c4] sm:$0xf]
  %v416 = vld [vmem:[%s1 + $0x5c8] sm:$0xf]
  %v417 = vld [vmem:[%s1 + $0x5cc] sm:$0xf]
  %v418 = vld [vmem:[%s1 + $0x5d0] sm:$0xf]
  %v419 = vld [vmem:[%s1 + $0x5d4] sm:$0xf]
  %v420 = vld [vmem:[%s1 + $0x5d8] sm:$0xf]
  %v421 = vld [vmem:[%s1 + $0x5dc] sm:$0xf]
  %v422 = vld [vmem:[%s1 + $0x5e0] sm:$0xf]
  %v423 = vld [vmem:[%s1 + $0x5e4] sm:$0xf]
  %v424 = vld [vmem:[%s1 + $0x5e8] sm:$0xf]
  %v425 = vld [vmem:[%s1 + $0x5ec] sm:$0xf]
  %v426 = vld [vmem:[%s1 + $0x5f0] sm:$0xf]
  %v427 = vld [vmem:[%s1 + $0x5f4] sm:$0xf]
  %v428 = vld [vmem:[%s1 + $0x5f8] sm:$0xf]
  %v429 = vld [vmem:[%s1 + $0x5fc] sm:$0xf]
  %v430 = vld [vmem:[%s1 + $0x600] sm:$0xf]
  %v431 = vld [vmem:[%s1 + $0x604] sm:$0xf]
  %v432 = vld [vmem:[%s1 + $0x608] sm:$0xf]
  %v433 = vld [vmem:[%s1 + $0x60c] sm:$0xf]
  %v434 = vld [vmem:[%s1 + $0x610] sm:$0xf]
  %v435 = vld [vmem:[%s1 + $0x614] sm:$0xf]
  %v436 = vld [vmem:[%s1 + $0x618] sm:$0xf]
  %v437 = vld [vmem:[%s1 + $0x61c] sm:$0xf]
  %v438 = vld [vmem:[%s1 + $0x620] sm:$0xf]
  %v439 = vld [vmem:[%s1 + $0x624] sm:$0xf]
  %v440 = vld [vmem:[%s1 + $0x628] sm:$0xf]
  %v441 = vld [vmem:[%s1 + $0x62c] sm:$0xf]
  %v442 = vld [vmem:[%s1 + $0x630] sm:$0xf]
  %v443 = vld [vmem:[%s1 + $0x634] sm:$0xf]
  %v444 = vld [vmem:[%s1 + $0x638] sm:$0xf]
  %v445 = vld [vmem:[%s1 + $0x63c] sm:$0xf]
  %v446 = vld [vmem:[%s2] sm:$0x1]
  %v448 = vlaneseq
  %v449 = vshrl.u32 %v448, 7
  %v450 = vsub.s32 0, %v449
  %v451 = vrot.slane %v446, %v450
  %v466 = vunpack.c.l.b16 %v33
  %v467 = vunpack.c.h.b16 %v33
  %v468 = vunpack.c.l.b16 %v34
  %v469 = vunpack.c.h.b16 %v34
  %v470 = vunpack.c.l.b16 %v35
  %v471 = vunpack.c.h.b16 %v35
  %v472 = vunpack.c.l.b16 %v36
  %v473 = vunpack.c.h.b16 %v36
  %v474 = vunpack.c.l.b16 %v37
  %v475 = vunpack.c.h.b16 %v37
  %v476 = vunpack.c.l.b16 %v38
  %v477 = vunpack.c.h.b16 %v38
  %v478 = vunpack.c.l.b16 %v39
  %v479 = vunpack.c.h.b16 %v39
  %v480 = vunpack.c.l.b16 %v40
  %v481 = vunpack.c.h.b16 %v40
  %v482 = vunpack.c.l.b16 %v41
  %v483 = vunpack.c.h.b16 %v41
  %v484 = vunpack.c.l.b16 %v42
  %v485 = vunpack.c.h.b16 %v42
  %v486 = vunpack.c.l.b16 %v43
  %v487 = vunpack.c.h.b16 %v43
  %v488 = vunpack.c.l.b16 %v44
  %v489 = vunpack.c.h.b16 %v44
  %v490 = vunpack.c.l.b16 %v45
  %v491 = vpack.c.b16 %v466, %v466
  %v492 = vpack.c.b16 %v467, %v467
  %v493 = vpack.c.b16 %v468, %v468
  %v494 = vpack.c.b16 %v469, %v469
  %v495 = vpack.c.b16 %v470, %v470
  %v496 = vpack.c.b16 %v471, %v471
  %v497 = vpack.c.b16 %v472, %v472
  %v498 = vpack.c.b16 %v473, %v473
  %v499 = vpack.c.b16 %v474, %v474
  %v500 = vpack.c.b16 %v475, %v475
  %v501 = vpack.c.b16 %v476, %v476
  %v502 = vpack.c.b16 %v477, %v477
  %v503 = vpack.c.b16 %v478, %v478
  %v504 = vpack.c.b16 %v479, %v479
  %v505 = vpack.c.b16 %v480, %v480
  %v506 = vpack.c.b16 %v481, %v481
  %v507 = vpack.c.b16 %v482, %v482
  %v508 = vpack.c.b16 %v483, %v483
  %v509 = vpack.c.b16 %v484, %v484
  %v510 = vpack.c.b16 %v485, %v485
  %v511 = vpack.c.b16 %v486, %v486
  %v512 = vpack.c.b16 %v487, %v487
  %v513 = vpack.c.b16 %v488, %v488
  %v514 = vpack.c.b16 %v489, %v489
  %v515 = vpack.c.b16 %v490, %v490
  %v941 = vunpack.c.l.b16 %v46
  %v942 = vunpack.c.l.b16 %v47
  %v943 = vunpack.c.l.b16 %v48
  %v944 = vunpack.c.l.b16 %v49
  %v945 = vunpack.c.l.b16 %v50
  %v946 = vunpack.c.l.b16 %v51
  %v947 = vunpack.c.l.b16 %v52
  %v948 = vunpack.c.l.b16 %v53
  %v949 = vunpack.c.l.b16 %v54
  %v950 = vunpack.c.l.b16 %v55
  %v951 = vunpack.c.l.b16 %v56
  %v952 = vunpack.c.l.b16 %v57
  %v953 = vunpack.c.l.b16 %v58
  %v954 = vunpack.c.l.b16 %v59
  %v955 = vunpack.c.l.b16 %v60
  %v956 = vunpack.c.l.b16 %v61
  %v957 = vunpack.c.l.b16 %v62
  %v958 = vunpack.c.l.b16 %v63
  %v959 = vunpack.c.l.b16 %v64
  %v960 = vunpack.c.l.b16 %v65
  %v961 = vunpack.c.l.b16 %v66
  %v962 = vunpack.c.l.b16 %v67
  %v963 = vunpack.c.l.b16 %v68
  %v964 = vunpack.c.l.b16 %v69
  %v965 = vunpack.c.l.b16 %v70
  %v966 = vunpack.c.l.b16 %v71
  %v967 = vunpack.c.l.b16 %v72
  %v968 = vunpack.c.l.b16 %v73
  %v969 = vunpack.c.l.b16 %v74
  %v970 = vunpack.c.l.b16 %v75
  %v971 = vunpack.c.l.b16 %v76
  %v972 = vunpack.c.l.b16 %v77
  %v973 = vunpack.c.l.b16 %v78
  %v974 = vunpack.c.l.b16 %v79
  %v975 = vunpack.c.l.b16 %v80
  %v976 = vunpack.c.l.b16 %v81
  %v977 = vunpack.c.l.b16 %v82
  %v978 = vunpack.c.l.b16 %v83
  %v979 = vunpack.c.l.b16 %v84
  %v980 = vunpack.c.l.b16 %v85
  %v981 = vunpack.c.l.b16 %v86
  %v982 = vunpack.c.l.b16 %v87
  %v983 = vunpack.c.l.b16 %v88
  %v984 = vunpack.c.l.b16 %v89
  %v985 = vunpack.c.l.b16 %v90
  %v986 = vunpack.c.l.b16 %v91
  %v987 = vunpack.c.l.b16 %v92
  %v988 = vunpack.c.l.b16 %v93
  %v989 = vunpack.c.l.b16 %v94
  %v990 = vunpack.c.l.b16 %v95
  %v991 = vunpack.c.l.b16 %v96
  %v992 = vunpack.c.l.b16 %v97
  %v993 = vunpack.c.l.b16 %v98
  %v994 = vunpack.c.l.b16 %v99
  %v995 = vunpack.c.l.b16 %v100
  %v996 = vunpack.c.l.b16 %v101
  %v997 = vunpack.c.l.b16 %v102
  %v998 = vunpack.c.l.b16 %v103
  %v999 = vunpack.c.l.b16 %v104
  %v1000 = vunpack.c.l.b16 %v105
  %v1001 = vunpack.c.l.b16 %v106
  %v1002 = vunpack.c.l.b16 %v107
  %v1003 = vunpack.c.l.b16 %v108
  %v1004 = vunpack.c.l.b16 %v109
  %v1005 = vunpack.c.l.b16 %v110
  %v1006 = vunpack.c.l.b16 %v111
  %v1007 = vunpack.c.l.b16 %v112
  %v1008 = vunpack.c.l.b16 %v113
  %v1009 = vunpack.c.l.b16 %v114
  %v1010 = vunpack.c.l.b16 %v115
  %v1011 = vunpack.c.l.b16 %v116
  %v1012 = vunpack.c.l.b16 %v117
  %v1013 = vunpack.c.l.b16 %v118
  %v1014 = vunpack.c.l.b16 %v119
  %v1015 = vunpack.c.l.b16 %v120
  %v1016 = vunpack.c.l.b16 %v121
  %v1017 = vunpack.c.l.b16 %v122
  %v1018 = vunpack.c.l.b16 %v123
  %v1019 = vunpack.c.l.b16 %v124
  %v1020 = vunpack.c.l.b16 %v125
  %v1021 = vunpack.c.l.b16 %v126
  %v1022 = vunpack.c.l.b16 %v127
  %v1023 = vunpack.c.l.b16 %v128
  %v1024 = vunpack.c.l.b16 %v129
  %v1025 = vunpack.c.l.b16 %v130
  %v1026 = vunpack.c.l.b16 %v131
  %v1027 = vunpack.c.l.b16 %v132
  %v1028 = vunpack.c.l.b16 %v133
  %v1029 = vunpack.c.l.b16 %v134
  %v1030 = vunpack.c.l.b16 %v135
  %v1031 = vunpack.c.l.b16 %v136
  %v1032 = vunpack.c.l.b16 %v137
  %v1033 = vunpack.c.l.b16 %v138
  %v1034 = vunpack.c.l.b16 %v139
  %v1035 = vunpack.c.l.b16 %v140
  %v1036 = vunpack.c.l.b16 %v141
  %v1037 = vunpack.c.l.b16 %v142
  %v1038 = vunpack.c.l.b16 %v143
  %v1039 = vunpack.c.l.b16 %v144
  %v1040 = vunpack.c.l.b16 %v145
  %v1041 = vunpack.c.l.b16 %v146
  %v1042 = vunpack.c.l.b16 %v147
  %v1043 = vunpack.c.l.b16 %v148
  %v1044 = vunpack.c.l.b16 %v149
  %v1045 = vunpack.c.l.b16 %v150
  %v1046 = vunpack.c.l.b16 %v151
  %v1047 = vunpack.c.l.b16 %v152
  %v1048 = vunpack.c.l.b16 %v153
  %v1049 = vunpack.c.l.b16 %v154
  %v1050 = vunpack.c.l.b16 %v155
  %v1051 = vunpack.c.l.b16 %v156
  %v1052 = vunpack.c.l.b16 %v157
  %v1053 = vunpack.c.l.b16 %v158
  %v1054 = vunpack.c.l.b16 %v159
  %v1055 = vunpack.c.l.b16 %v160
  %v1056 = vunpack.c.l.b16 %v161
  %v1057 = vunpack.c.l.b16 %v162
  %v1058 = vunpack.c.l.b16 %v163
  %v1059 = vunpack.c.l.b16 %v164
  %v1060 = vunpack.c.l.b16 %v165
  %v1061 = vunpack.c.l.b16 %v166
  %v1062 = vunpack.c.l.b16 %v167
  %v1063 = vunpack.c.l.b16 %v168
  %v1064 = vunpack.c.l.b16 %v169
  %v1065 = vunpack.c.l.b16 %v170
  %v1066 = vunpack.c.l.b16 %v171
  %v1067 = vunpack.c.l.b16 %v172
  %v1068 = vunpack.c.l.b16 %v173
  %v1069 = vunpack.c.l.b16 %v174
  %v1070 = vunpack.c.l.b16 %v175
  %v1071 = vunpack.c.l.b16 %v176
  %v1072 = vunpack.c.l.b16 %v177
  %v1073 = vunpack.c.l.b16 %v178
  %v1074 = vunpack.c.l.b16 %v179
  %v1075 = vunpack.c.l.b16 %v180
  %v1076 = vunpack.c.l.b16 %v181
  %v1077 = vunpack.c.l.b16 %v182
  %v1078 = vunpack.c.l.b16 %v183
  %v1079 = vunpack.c.l.b16 %v184
  %v1080 = vunpack.c.l.b16 %v185
  %v1081 = vunpack.c.l.b16 %v186
  %v1082 = vunpack.c.l.b16 %v187
  %v1083 = vunpack.c.l.b16 %v188
  %v1084 = vunpack.c.l.b16 %v189
  %v1085 = vunpack.c.l.b16 %v190
  %v1086 = vunpack.c.l.b16 %v191
  %v1087 = vunpack.c.l.b16 %v192
  %v1088 = vunpack.c.l.b16 %v193
  %v1089 = vunpack.c.l.b16 %v194
  %v1090 = vunpack.c.l.b16 %v195
  %v1091 = vunpack.c.l.b16 %v196
  %v1092 = vunpack.c.l.b16 %v197
  %v1093 = vunpack.c.l.b16 %v198
  %v1094 = vunpack.c.l.b16 %v199
  %v1095 = vunpack.c.l.b16 %v200
  %v1096 = vunpack.c.l.b16 %v201
  %v1097 = vunpack.c.l.b16 %v202
  %v1098 = vunpack.c.l.b16 %v203
  %v1099 = vunpack.c.l.b16 %v204
  %v1100 = vunpack.c.l.b16 %v205
  %v1101 = vunpack.c.l.b16 %v206
  %v1102 = vunpack.c.l.b16 %v207
  %v1103 = vunpack.c.l.b16 %v208
  %v1104 = vunpack.c.l.b16 %v209
  %v1105 = vunpack.c.l.b16 %v210
  %v1106 = vunpack.c.l.b16 %v211
  %v1107 = vunpack.c.l.b16 %v212
  %v1108 = vunpack.c.l.b16 %v213
  %v1109 = vunpack.c.l.b16 %v214
  %v1110 = vunpack.c.l.b16 %v215
  %v1111 = vunpack.c.l.b16 %v216
  %v1112 = vunpack.c.l.b16 %v217
  %v1113 = vunpack.c.l.b16 %v218
  %v1114 = vunpack.c.l.b16 %v219
  %v1115 = vunpack.c.l.b16 %v220
  %v1116 = vunpack.c.l.b16 %v221
  %v1117 = vunpack.c.l.b16 %v222
  %v1118 = vunpack.c.l.b16 %v223
  %v1119 = vunpack.c.l.b16 %v224
  %v1120 = vunpack.c.l.b16 %v225
  %v1121 = vunpack.c.l.b16 %v226
  %v1122 = vunpack.c.l.b16 %v227
  %v1123 = vunpack.c.l.b16 %v228
  %v1124 = vunpack.c.l.b16 %v229
  %v1125 = vunpack.c.l.b16 %v230
  %v1126 = vunpack.c.l.b16 %v231
  %v1127 = vunpack.c.l.b16 %v232
  %v1128 = vunpack.c.l.b16 %v233
  %v1129 = vunpack.c.l.b16 %v234
  %v1130 = vunpack.c.l.b16 %v235
  %v1131 = vunpack.c.l.b16 %v236
  %v1132 = vunpack.c.l.b16 %v237
  %v1133 = vunpack.c.l.b16 %v238
  %v1134 = vunpack.c.l.b16 %v239
  %v1135 = vunpack.c.l.b16 %v240
  %v1136 = vunpack.c.l.b16 %v241
  %v1137 = vunpack.c.l.b16 %v242
  %v1138 = vunpack.c.l.b16 %v243
  %v1139 = vunpack.c.l.b16 %v244
  %v1140 = vunpack.c.l.b16 %v245
  %v1141 = vunpack.c.l.b16 %v246
  %v1142 = vunpack.c.l.b16 %v247
  %v1143 = vunpack.c.l.b16 %v248
  %v1144 = vunpack.c.l.b16 %v249
  %v1145 = vunpack.c.l.b16 %v250
  %v1146 = vunpack.c.l.b16 %v251
  %v1147 = vunpack.c.l.b16 %v252
  %v1148 = vunpack.c.l.b16 %v253
  %v1149 = vunpack.c.l.b16 %v254
  %v1150 = vunpack.c.l.b16 %v255
  %v1151 = vunpack.c.l.b16 %v256
  %v1152 = vunpack.c.l.b16 %v257
  %v1153 = vunpack.c.l.b16 %v258
  %v1154 = vunpack.c.l.b16 %v259
  %v1155 = vunpack.c.l.b16 %v260
  %v1156 = vunpack.c.l.b16 %v261
  %v1157 = vunpack.c.l.b16 %v262
  %v1158 = vunpack.c.l.b16 %v263
  %v1159 = vunpack.c.l.b16 %v264
  %v1160 = vunpack.c.l.b16 %v265
  %v1161 = vunpack.c.l.b16 %v266
  %v1162 = vunpack.c.l.b16 %v267
  %v1163 = vunpack.c.l.b16 %v268
  %v1164 = vunpack.c.l.b16 %v269
  %v1165 = vunpack.c.l.b16 %v270
  %v1166 = vunpack.c.l.b16 %v271
  %v1167 = vunpack.c.l.b16 %v272
  %v1168 = vunpack.c.l.b16 %v273
  %v1169 = vunpack.c.l.b16 %v274
  %v1170 = vunpack.c.l.b16 %v275
  %v1171 = vunpack.c.l.b16 %v276
  %v1172 = vunpack.c.l.b16 %v277
  %v1173 = vunpack.c.l.b16 %v278
  %v1174 = vunpack.c.l.b16 %v279
  %v1175 = vunpack.c.l.b16 %v280
  %v1176 = vunpack.c.l.b16 %v281
  %v1177 = vunpack.c.l.b16 %v282
  %v1178 = vunpack.c.l.b16 %v283
  %v1179 = vunpack.c.l.b16 %v284
  %v1180 = vunpack.c.l.b16 %v285
  %v1181 = vunpack.c.l.b16 %v286
  %v1182 = vunpack.c.l.b16 %v287
  %v1183 = vunpack.c.l.b16 %v288
  %v1184 = vunpack.c.l.b16 %v289
  %v1185 = vunpack.c.l.b16 %v290
  %v1186 = vunpack.c.l.b16 %v291
  %v1187 = vunpack.c.l.b16 %v292
  %v1188 = vunpack.c.l.b16 %v293
  %v1189 = vunpack.c.l.b16 %v294
  %v1190 = vunpack.c.l.b16 %v295
  %v1191 = vunpack.c.l.b16 %v296
  %v1192 = vunpack.c.l.b16 %v297
  %v1193 = vunpack.c.l.b16 %v298
  %v1194 = vunpack.c.l.b16 %v299
  %v1195 = vunpack.c.l.b16 %v300
  %v1196 = vunpack.c.l.b16 %v301
  %v1197 = vunpack.c.l.b16 %v302
  %v1198 = vunpack.c.l.b16 %v303
  %v1199 = vunpack.c.l.b16 %v304
  %v1200 = vunpack.c.l.b16 %v305
  %v1201 = vunpack.c.l.b16 %v306
  %v1202 = vunpack.c.l.b16 %v307
  %v1203 = vunpack.c.l.b16 %v308
  %v1204 = vunpack.c.l.b16 %v309
  %v1205 = vunpack.c.l.b16 %v310
  %v1206 = vunpack.c.l.b16 %v311
  %v1207 = vunpack.c.l.b16 %v312
  %v1208 = vunpack.c.l.b16 %v313
  %v1209 = vunpack.c.l.b16 %v314
  %v1210 = vunpack.c.l.b16 %v315
  %v1211 = vunpack.c.l.b16 %v316
  %v1212 = vunpack.c.l.b16 %v317
  %v1213 = vunpack.c.l.b16 %v318
  %v1214 = vunpack.c.l.b16 %v319
  %v1215 = vunpack.c.l.b16 %v320
  %v1216 = vunpack.c.l.b16 %v321
  %v1217 = vunpack.c.l.b16 %v322
  %v1218 = vunpack.c.l.b16 %v323
  %v1219 = vunpack.c.l.b16 %v324
  %v1220 = vunpack.c.l.b16 %v325
  %v1221 = vunpack.c.l.b16 %v326
  %v1222 = vunpack.c.l.b16 %v327
  %v1223 = vunpack.c.l.b16 %v328
  %v1224 = vunpack.c.l.b16 %v329
  %v1225 = vunpack.c.l.b16 %v330
  %v1226 = vunpack.c.l.b16 %v331
  %v1227 = vunpack.c.l.b16 %v332
  %v1228 = vunpack.c.l.b16 %v333
  %v1229 = vunpack.c.l.b16 %v334
  %v1230 = vunpack.c.l.b16 %v335
  %v1231 = vunpack.c.l.b16 %v336
  %v1232 = vunpack.c.l.b16 %v337
  %v1233 = vunpack.c.l.b16 %v338
  %v1234 = vunpack.c.l.b16 %v339
  %v1235 = vunpack.c.l.b16 %v340
  %v1236 = vunpack.c.l.b16 %v341
  %v1237 = vunpack.c.l.b16 %v342
  %v1238 = vunpack.c.l.b16 %v343
  %v1239 = vunpack.c.l.b16 %v344
  %v1240 = vunpack.c.l.b16 %v345
  %v1241 = vunpack.c.l.b16 %v346
  %v1242 = vunpack.c.l.b16 %v347
  %v1243 = vunpack.c.l.b16 %v348
  %v1244 = vunpack.c.l.b16 %v349
  %v1245 = vunpack.c.l.b16 %v350
  %v1246 = vunpack.c.l.b16 %v351
  %v1247 = vunpack.c.l.b16 %v352
  %v1248 = vunpack.c.l.b16 %v353
  %v1249 = vunpack.c.l.b16 %v354
  %v1250 = vunpack.c.l.b16 %v355
  %v1251 = vunpack.c.l.b16 %v356
  %v1252 = vunpack.c.l.b16 %v357
  %v1253 = vunpack.c.l.b16 %v358
  %v1254 = vunpack.c.l.b16 %v359
  %v1255 = vunpack.c.l.b16 %v360
  %v1256 = vunpack.c.l.b16 %v361
  %v1257 = vunpack.c.l.b16 %v362
  %v1258 = vunpack.c.l.b16 %v363
  %v1259 = vunpack.c.l.b16 %v364
  %v1260 = vunpack.c.l.b16 %v365
  %v1261 = vunpack.c.l.b16 %v366
  %v1262 = vunpack.c.l.b16 %v367
  %v1263 = vunpack.c.l.b16 %v368
  %v1264 = vunpack.c.l.b16 %v369
  %v1265 = vunpack.c.l.b16 %v370
  %v1266 = vunpack.c.l.b16 %v371
  %v1267 = vunpack.c.l.b16 %v372
  %v1268 = vunpack.c.l.b16 %v373
  %v1269 = vunpack.c.l.b16 %v374
  %v1270 = vunpack.c.l.b16 %v375
  %v1271 = vunpack.c.l.b16 %v376
  %v1272 = vunpack.c.l.b16 %v377
  %v1273 = vunpack.c.l.b16 %v378
  %v1274 = vunpack.c.l.b16 %v379
  %v1275 = vunpack.c.l.b16 %v380
  %v1276 = vunpack.c.l.b16 %v381
  %v1277 = vunpack.c.l.b16 %v382
  %v1278 = vunpack.c.l.b16 %v383
  %v1279 = vunpack.c.l.b16 %v384
  %v1280 = vunpack.c.l.b16 %v385
  %v1281 = vunpack.c.l.b16 %v386
  %v1282 = vunpack.c.l.b16 %v387
  %v1283 = vunpack.c.l.b16 %v388
  %v1284 = vunpack.c.l.b16 %v389
  %v1285 = vunpack.c.l.b16 %v390
  %v1286 = vunpack.c.l.b16 %v391
  %v1287 = vunpack.c.l.b16 %v392
  %v1288 = vunpack.c.l.b16 %v393
  %v1289 = vunpack.c.l.b16 %v394
  %v1290 = vunpack.c.l.b16 %v395
  %v1291 = vunpack.c.l.b16 %v396
  %v1292 = vunpack.c.l.b16 %v397
  %v1293 = vunpack.c.l.b16 %v398
  %v1294 = vunpack.c.l.b16 %v399
  %v1295 = vunpack.c.l.b16 %v400
  %v1296 = vunpack.c.l.b16 %v401
  %v1297 = vunpack.c.l.b16 %v402
  %v1298 = vunpack.c.l.b16 %v403
  %v1299 = vunpack.c.l.b16 %v404
  %v1300 = vunpack.c.l.b16 %v405
  %v1301 = vunpack.c.l.b16 %v406
  %v1302 = vunpack.c.l.b16 %v407
  %v1303 = vunpack.c.l.b16 %v408
  %v1304 = vunpack.c.l.b16 %v409
  %v1305 = vunpack.c.l.b16 %v410
  %v1306 = vunpack.c.l.b16 %v411
  %v1307 = vunpack.c.l.b16 %v412
  %v1308 = vunpack.c.l.b16 %v413
  %v1309 = vunpack.c.l.b16 %v414
  %v1310 = vunpack.c.l.b16 %v415
  %v1311 = vunpack.c.l.b16 %v416
  %v1312 = vunpack.c.l.b16 %v417
  %v1313 = vunpack.c.l.b16 %v418
  %v1314 = vunpack.c.l.b16 %v419
  %v1315 = vunpack.c.l.b16 %v420
  %v1316 = vunpack.c.l.b16 %v421
  %v1317 = vunpack.c.l.b16 %v422
  %v1318 = vunpack.c.l.b16 %v423
  %v1319 = vunpack.c.l.b16 %v424
  %v1320 = vunpack.c.l.b16 %v425
  %v1321 = vunpack.c.l.b16 %v426
  %v1322 = vunpack.c.l.b16 %v427
  %v1323 = vunpack.c.l.b16 %v428
  %v1324 = vunpack.c.l.b16 %v429
  %v1325 = vunpack.c.l.b16 %v430
  %v1326 = vunpack.c.l.b16 %v431
  %v1327 = vunpack.c.l.b16 %v432
  %v1328 = vunpack.c.l.b16 %v433
  %v1329 = vunpack.c.l.b16 %v434
  %v1330 = vunpack.c.l.b16 %v435
  %v1331 = vunpack.c.l.b16 %v436
  %v1332 = vunpack.c.l.b16 %v437
  %v1333 = vunpack.c.l.b16 %v438
  %v1334 = vunpack.c.l.b16 %v439
  %v1335 = vunpack.c.l.b16 %v440
  %v1336 = vunpack.c.l.b16 %v441
  %v1337 = vunpack.c.l.b16 %v442
  %v1338 = vunpack.c.l.b16 %v443
  %v1339 = vunpack.c.l.b16 %v444
  %v1340 = vunpack.c.l.b16 %v445
  %v1341 = vpack.c.b16 %v942, %v941
  %v1342 = vpack.c.b16 %v944, %v943
  %v1343 = vpack.c.b16 %v946, %v945
  %v1344 = vpack.c.b16 %v948, %v947
  %v1345 = vpack.c.b16 %v950, %v949
  %v1346 = vpack.c.b16 %v952, %v951
  %v1347 = vpack.c.b16 %v954, %v953
  %v1348 = vpack.c.b16 %v956, %v955
  %v1349 = vpack.c.b16 %v958, %v957
  %v1350 = vpack.c.b16 %v960, %v959
  %v1351 = vpack.c.b16 %v962, %v961
  %v1352 = vpack.c.b16 %v964, %v963
  %v1353 = vpack.c.b16 %v966, %v965
  %v1354 = vpack.c.b16 %v968, %v967
  %v1355 = vpack.c.b16 %v970, %v969
  %v1356 = vpack.c.b16 %v972, %v971
  %v1357 = vpack.c.b16 %v974, %v973
  %v1358 = vpack.c.b16 %v976, %v975
  %v1359 = vpack.c.b16 %v978, %v977
  %v1360 = vpack.c.b16 %v980, %v979
  %v1361 = vpack.c.b16 %v982, %v981
  %v1362 = vpack.c.b16 %v984, %v983
  %v1363 = vpack.c.b16 %v986, %v985
  %v1364 = vpack.c.b16 %v988, %v987
  %v1365 = vpack.c.b16 %v990, %v989
  %v1366 = vpack.c.b16 %v992, %v991
  %v1367 = vpack.c.b16 %v994, %v993
  %v1368 = vpack.c.b16 %v996, %v995
  %v1369 = vpack.c.b16 %v998, %v997
  %v1370 = vpack.c.b16 %v1000, %v999
  %v1371 = vpack.c.b16 %v1002, %v1001
  %v1372 = vpack.c.b16 %v1004, %v1003
  %v1373 = vpack.c.b16 %v1006, %v1005
  %v1374 = vpack.c.b16 %v1008, %v1007
  %v1375 = vpack.c.b16 %v1010, %v1009
  %v1376 = vpack.c.b16 %v1012, %v1011
  %v1377 = vpack.c.b16 %v1014, %v1013
  %v1378 = vpack.c.b16 %v1016, %v1015
  %v1379 = vpack.c.b16 %v1018, %v1017
  %v1380 = vpack.c.b16 %v1020, %v1019
  %v1381 = vpack.c.b16 %v1022, %v1021
  %v1382 = vpack.c.b16 %v1024, %v1023
  %v1383 = vpack.c.b16 %v1026, %v1025
  %v1384 = vpack.c.b16 %v1028, %v1027
  %v1385 = vpack.c.b16 %v1030, %v1029
  %v1386 = vpack.c.b16 %v1032, %v1031
  %v1387 = vpack.c.b16 %v1034, %v1033
  %v1388 = vpack.c.b16 %v1036, %v1035
  %v1389 = vpack.c.b16 %v1038, %v1037
  %v1390 = vpack.c.b16 %v1040, %v1039
  %v1391 = vpack.c.b16 %v1042, %v1041
  %v1392 = vpack.c.b16 %v1044, %v1043
  %v1393 = vpack.c.b16 %v1046, %v1045
  %v1394 = vpack.c.b16 %v1048, %v1047
  %v1395 = vpack.c.b16 %v1050, %v1049
  %v1396 = vpack.c.b16 %v1052, %v1051
  %v1397 = vpack.c.b16 %v1054, %v1053
  %v1398 = vpack.c.b16 %v1056, %v1055
  %v1399 = vpack.c.b16 %v1058, %v1057
  %v1400 = vpack.c.b16 %v1060, %v1059
  %v1401 = vpack.c.b16 %v1062, %v1061
  %v1402 = vpack.c.b16 %v1064, %v1063
  %v1403 = vpack.c.b16 %v1066, %v1065
  %v1404 = vpack.c.b16 %v1068, %v1067
  %v1405 = vpack.c.b16 %v1070, %v1069
  %v1406 = vpack.c.b16 %v1072, %v1071
  %v1407 = vpack.c.b16 %v1074, %v1073
  %v1408 = vpack.c.b16 %v1076, %v1075
  %v1409 = vpack.c.b16 %v1078, %v1077
  %v1410 = vpack.c.b16 %v1080, %v1079
  %v1411 = vpack.c.b16 %v1082, %v1081
  %v1412 = vpack.c.b16 %v1084, %v1083
  %v1413 = vpack.c.b16 %v1086, %v1085
  %v1414 = vpack.c.b16 %v1088, %v1087
  %v1415 = vpack.c.b16 %v1090, %v1089
  %v1416 = vpack.c.b16 %v1092, %v1091
  %v1417 = vpack.c.b16 %v1094, %v1093
  %v1418 = vpack.c.b16 %v1096, %v1095
  %v1419 = vpack.c.b16 %v1098, %v1097
  %v1420 = vpack.c.b16 %v1100, %v1099
  %v1421 = vpack.c.b16 %v1102, %v1101
  %v1422 = vpack.c.b16 %v1104, %v1103
  %v1423 = vpack.c.b16 %v1106, %v1105
  %v1424 = vpack.c.b16 %v1108, %v1107
  %v1425 = vpack.c.b16 %v1110, %v1109
  %v1426 = vpack.c.b16 %v1112, %v1111
  %v1427 = vpack.c.b16 %v1114, %v1113
  %v1428 = vpack.c.b16 %v1116, %v1115
  %v1429 = vpack.c.b16 %v1118, %v1117
  %v1430 = vpack.c.b16 %v1120, %v1119
  %v1431 = vpack.c.b16 %v1122, %v1121
  %v1432 = vpack.c.b16 %v1124, %v1123
  %v1433 = vpack.c.b16 %v1126, %v1125
  %v1434 = vpack.c.b16 %v1128, %v1127
  %v1435 = vpack.c.b16 %v1130, %v1129
  %v1436 = vpack.c.b16 %v1132, %v1131
  %v1437 = vpack.c.b16 %v1134, %v1133
  %v1438 = vpack.c.b16 %v1136, %v1135
  %v1439 = vpack.c.b16 %v1138, %v1137
  %v1440 = vpack.c.b16 %v1140, %v1139
  %v1441 = vpack.c.b16 %v1142, %v1141
  %v1442 = vpack.c.b16 %v1144, %v1143
  %v1443 = vpack.c.b16 %v1146, %v1145
  %v1444 = vpack.c.b16 %v1148, %v1147
  %v1445 = vpack.c.b16 %v1150, %v1149
  %v1446 = vpack.c.b16 %v1152, %v1151
  %v1447 = vpack.c.b16 %v1154, %v1153
  %v1448 = vpack.c.b16 %v1156, %v1155
  %v1449 = vpack.c.b16 %v1158, %v1157
  %v1450 = vpack.c.b16 %v1160, %v1159
  %v1451 = vpack.c.b16 %v1162, %v1161
  %v1452 = vpack.c.b16 %v1164, %v1163
  %v1453 = vpack.c.b16 %v1166, %v1165
  %v1454 = vpack.c.b16 %v1168, %v1167
  %v1455 = vpack.c.b16 %v1170, %v1169
  %v1456 = vpack.c.b16 %v1172, %v1171
  %v1457 = vpack.c.b16 %v1174, %v1173
  %v1458 = vpack.c.b16 %v1176, %v1175
  %v1459 = vpack.c.b16 %v1178, %v1177
  %v1460 = vpack.c.b16 %v1180, %v1179
  %v1461 = vpack.c.b16 %v1182, %v1181
  %v1462 = vpack.c.b16 %v1184, %v1183
  %v1463 = vpack.c.b16 %v1186, %v1185
  %v1464 = vpack.c.b16 %v1188, %v1187
  %v1465 = vpack.c.b16 %v1190, %v1189
  %v1466 = vpack.c.b16 %v1192, %v1191
  %v1467 = vpack.c.b16 %v1194, %v1193
  %v1468 = vpack.c.b16 %v1196, %v1195
  %v1469 = vpack.c.b16 %v1198, %v1197
  %v1470 = vpack.c.b16 %v1200, %v1199
  %v1471 = vpack.c.b16 %v1202, %v1201
  %v1472 = vpack.c.b16 %v1204, %v1203
  %v1473 = vpack.c.b16 %v1206, %v1205
  %v1474 = vpack.c.b16 %v1208, %v1207
  %v1475 = vpack.c.b16 %v1210, %v1209
  %v1476 = vpack.c.b16 %v1212, %v1211
  %v1477 = vpack.c.b16 %v1214, %v1213
  %v1478 = vpack.c.b16 %v1216, %v1215
  %v1479 = vpack.c.b16 %v1218, %v1217
  %v1480 = vpack.c.b16 %v1220, %v1219
  %v1481 = vpack.c.b16 %v1222, %v1221
  %v1482 = vpack.c.b16 %v1224, %v1223
  %v1483 = vpack.c.b16 %v1226, %v1225
  %v1484 = vpack.c.b16 %v1228, %v1227
  %v1485 = vpack.c.b16 %v1230, %v1229
  %v1486 = vpack.c.b16 %v1232, %v1231
  %v1487 = vpack.c.b16 %v1234, %v1233
  %v1488 = vpack.c.b16 %v1236, %v1235
  %v1489 = vpack.c.b16 %v1238, %v1237
  %v1490 = vpack.c.b16 %v1240, %v1239
  %v1491 = vpack.c.b16 %v1242, %v1241
  %v1492 = vpack.c.b16 %v1244, %v1243
  %v1493 = vpack.c.b16 %v1246, %v1245
  %v1494 = vpack.c.b16 %v1248, %v1247
  %v1495 = vpack.c.b16 %v1250, %v1249
  %v1496 = vpack.c.b16 %v1252, %v1251
  %v1497 = vpack.c.b16 %v1254, %v1253
  %v1498 = vpack.c.b16 %v1256, %v1255
  %v1499 = vpack.c.b16 %v1258, %v1257
  %v1500 = vpack.c.b16 %v1260, %v1259
  %v1501 = vpack.c.b16 %v1262, %v1261
  %v1502 = vpack.c.b16 %v1264, %v1263
  %v1503 = vpack.c.b16 %v1266, %v1265
  %v1504 = vpack.c.b16 %v1268, %v1267
  %v1505 = vpack.c.b16 %v1270, %v1269
  %v1506 = vpack.c.b16 %v1272, %v1271
  %v1507 = vpack.c.b16 %v1274, %v1273
  %v1508 = vpack.c.b16 %v1276, %v1275
  %v1509 = vpack.c.b16 %v1278, %v1277
  %v1510 = vpack.c.b16 %v1280, %v1279
  %v1511 = vpack.c.b16 %v1282, %v1281
  %v1512 = vpack.c.b16 %v1284, %v1283
  %v1513 = vpack.c.b16 %v1286, %v1285
  %v1514 = vpack.c.b16 %v1288, %v1287
  %v1515 = vpack.c.b16 %v1290, %v1289
  %v1516 = vpack.c.b16 %v1292, %v1291
  %v1517 = vpack.c.b16 %v1294, %v1293
  %v1518 = vpack.c.b16 %v1296, %v1295
  %v1519 = vpack.c.b16 %v1298, %v1297
  %v1520 = vpack.c.b16 %v1300, %v1299
  %v1521 = vpack.c.b16 %v1302, %v1301
  %v1522 = vpack.c.b16 %v1304, %v1303
  %v1523 = vpack.c.b16 %v1306, %v1305
  %v1524 = vpack.c.b16 %v1308, %v1307
  %v1525 = vpack.c.b16 %v1310, %v1309
  %v1526 = vpack.c.b16 %v1312, %v1311
  %v1527 = vpack.c.b16 %v1314, %v1313
  %v1528 = vpack.c.b16 %v1316, %v1315
  %v1529 = vpack.c.b16 %v1318, %v1317
  %v1530 = vpack.c.b16 %v1320, %v1319
  %v1531 = vpack.c.b16 %v1322, %v1321
  %v1532 = vpack.c.b16 %v1324, %v1323
  %v1533 = vpack.c.b16 %v1326, %v1325
  %v1534 = vpack.c.b16 %v1328, %v1327
  %v1535 = vpack.c.b16 %v1330, %v1329
  %v1536 = vpack.c.b16 %v1332, %v1331
  %v1537 = vpack.c.b16 %v1334, %v1333
  %v1538 = vpack.c.b16 %v1336, %v1335
  %v1539 = vpack.c.b16 %v1338, %v1337
  %v1540 = vpack.c.b16 %v1340, %v1339
  %1741 = vmatprep.subr.bf16.mxu0 0
  %1742 = vmatpush1.bf16.msra.mxu0 %v1341
  %1743 = vmatprep.subr.bf16.mxu0 0
  %1744 = vmatpush1.bf16.msra.mxu0 %v1342
  %1745 = vmatprep.subr.bf16.mxu0 0
  %1746 = vmatpush1.bf16.msra.mxu0 %v1343
  %1747 = vmatprep.subr.bf16.mxu0 0
  %1748 = vmatpush1.bf16.msra.mxu0 %v1344
  %1749 = vmatprep.subr.bf16.mxu0 0
  %1750 = vmatpush1.bf16.msra.mxu0 %v1345
  %1751 = vmatprep.subr.bf16.mxu0 0
  %1752 = vmatpush1.bf16.msra.mxu0 %v1346
  %1753 = vmatprep.subr.bf16.mxu0 0
  %1754 = vmatpush1.bf16.msra.mxu0 %v1347
  %1755 = vmatprep.subr.bf16.mxu0 0
  %1756 = vmatpush1.bf16.msra.mxu0 %v1348
  %1757 = vmatprep.subr.bf16.mxu0 0
  %1758 = vmatpush1.bf16.msra.mxu0 %v1349
  %1759 = vmatprep.subr.bf16.mxu0 0
  %1760 = vmatpush1.bf16.msra.mxu0 %v1350
  %1761 = vmatprep.subr.bf16.mxu0 0
  %1762 = vmatpush1.bf16.msra.mxu0 %v1351
  %1763 = vmatprep.subr.bf16.mxu0 0
  %1764 = vmatpush1.bf16.msra.mxu0 %v1352
  %1765 = vmatprep.subr.bf16.mxu0 0
  %1766 = vmatpush1.bf16.msra.mxu0 %v1353
  %1767 = vmatprep.subr.bf16.mxu0 0
  %1768 = vmatpush1.bf16.msra.mxu0 %v1354
  %1769 = vmatprep.subr.bf16.mxu0 0
  %1770 = vmatpush1.bf16.msra.mxu0 %v1355
  %1771 = vmatprep.subr.bf16.mxu0 0
  %1772 = vmatpush1.bf16.msra.mxu0 %v1356
  %1773 = vmatprep.mubr.bf16.mxu0 %v492
  %1774 = vmatmul.mubr.bf16.gmra.mrb[0].mxu0 %v491
  %v1775 = vpop.f32.mrb[0].mxu0
  %v1776 = vadd.f32 %v451, %v1775
  %v1777 = vpop.f32.mrb[0].mxu0
  %v1778 = vpop.f32.mrb[0].mxu0
  %v1779 = vpop.f32.mrb[0].mxu0
  %1780 = vdwg.mxu0
  %1781 = vmatprep.subr.bf16.mxu0 0
  %1782 = vmatpush1.bf16.msra.mxu0 %v1357
  %1783 = vmatprep.subr.bf16.mxu0 0
  %1784 = vmatpush1.bf16.msra.mxu0 %v1358
  %1785 = vmatprep.subr.bf16.mxu0 0
  %1786 = vmatpush1.bf16.msra.mxu0 %v1359
  %1787 = vmatprep.subr.bf16.mxu0 0
  %1788 = vmatpush1.bf16.msra.mxu0 %v1360
  %1789 = vmatprep.subr.bf16.mxu0 0
  %1790 = vmatpush1.bf16.msra.mxu0 %v1361
  %1791 = vmatprep.subr.bf16.mxu0 0
  %1792 = vmatpush1.bf16.msra.mxu0 %v1362
  %1793 = vmatprep.subr.bf16.mxu0 0
  %1794 = vmatpush1.bf16.msra.mxu0 %v1363
  %1795 = vmatprep.subr.bf16.mxu0 0
  %1796 = vmatpush1.bf16.msra.mxu0 %v1364
  %1797 = vmatprep.subr.bf16.mxu0 0
  %1798 = vmatpush1.bf16.msra.mxu0 %v1365
  %1799 = vmatprep.subr.bf16.mxu0 0
  %1800 = vmatpush1.bf16.msra.mxu0 %v1366
  %1801 = vmatprep.subr.bf16.mxu0 0
  %1802 = vmatpush1.bf16.msra.mxu0 %v1367
  %1803 = vmatprep.subr.bf16.mxu0 0
  %1804 = vmatpush1.bf16.msra.mxu0 %v1368
  %1805 = vmatprep.subr.bf16.mxu0 0
  %1806 = vmatpush1.bf16.msra.mxu0 %v1369
  %1807 = vmatprep.subr.bf16.mxu0 0
  %1808 = vmatpush1.bf16.msra.mxu0 %v1370
  %1809 = vmatprep.subr.bf16.mxu0 0
  %1810 = vmatpush1.bf16.msra.mxu0 %v1371
  %1811 = vmatprep.subr.bf16.mxu0 0
  %1812 = vmatpush1.bf16.msra.mxu0 %v1372
  %1813 = vmatprep.mubr.bf16.mxu0 %v494
  %1814 = vmatmul.mubr.bf16.gmra.mrb[0].mxu0 %v493
  %v1815 = vpop.f32.mrb[0].mxu0
  %v1816 = vadd.f32 %v1776, %v1815
  %v1817 = vpop.f32.mrb[0].mxu0
  %v1818 = vpop.f32.mrb[0].mxu0
  %v1819 = vpop.f32.mrb[0].mxu0
  %1820 = vdwg.mxu0
  %1821 = vmatprep.subr.bf16.mxu0 0
  %1822 = vmatpush1.bf16.msra.mxu0 %v1373
  %1823 = vmatprep.subr.bf16.mxu0 0
  %1824 = vmatpush1.bf16.msra.mxu0 %v1374
  %1825 = vmatprep.subr.bf16.mxu0 0
  %1826 = vmatpush1.bf16.msra.mxu0 %v1375
  %1827 = vmatprep.subr.bf16.mxu0 0
  %1828 = vmatpush1.bf16.msra.mxu0 %v1376
  %1829 = vmatprep.subr.bf16.mxu0 0
  %1830 = vmatpush1.bf16.msra.mxu0 %v1377
  %1831 = vmatprep.subr.bf16.mxu0 0
  %1832 = vmatpush1.bf16.msra.mxu0 %v1378
  %1833 = vmatprep.subr.bf16.mxu0 0
  %1834 = vmatpush1.bf16.msra.mxu0 %v1379
  %1835 = vmatprep.subr.bf16.mxu0 0
  %1836 = vmatpush1.bf16.msra.mxu0 %v1380
  %1837 = vmatprep.subr.bf16.mxu0 0
  %1838 = vmatpush1.bf16.msra.mxu0 %v1381
  %1839 = vmatprep.subr.bf16.mxu0 0
  %1840 = vmatpush1.bf16.msra.mxu0 %v1382
  %1841 = vmatprep.subr.bf16.mxu0 0
  %1842 = vmatpush1.bf16.msra.mxu0 %v1383
  %1843 = vmatprep.subr.bf16.mxu0 0
  %1844 = vmatpush1.bf16.msra.mxu0 %v1384
  %1845 = vmatprep.subr.bf16.mxu0 0
  %1846 = vmatpush1.bf16.msra.mxu0 %v1385
  %1847 = vmatprep.subr.bf16.mxu0 0
  %1848 = vmatpush1.bf16.msra.mxu0 %v1386
  %1849 = vmatprep.subr.bf16.mxu0 0
  %1850 = vmatpush1.bf16.msra.mxu0 %v1387
  %1851 = vmatprep.subr.bf16.mxu0 0
  %1852 = vmatpush1.bf16.msra.mxu0 %v1388
  %1853 = vmatprep.mubr.bf16.mxu0 %v496
  %1854 = vmatmul.mubr.bf16.gmra.mrb[0].mxu0 %v495
  %v1855 = vpop.f32.mrb[0].mxu0
  %v1856 = vadd.f32 %v1816, %v1855
  %v1857 = vpop.f32.mrb[0].mxu0
  %v1858 = vpop.f32.mrb[0].mxu0
  %v1859 = vpop.f32.mrb[0].mxu0
  %1860 = vdwg.mxu0
  %1861 = vmatprep.subr.bf16.mxu0 0
  %1862 = vmatpush1.bf16.msra.mxu0 %v1389
  %1863 = vmatprep.subr.bf16.mxu0 0
  %1864 = vmatpush1.bf16.msra.mxu0 %v1390
  %1865 = vmatprep.subr.bf16.mxu0 0
  %1866 = vmatpush1.bf16.msra.mxu0 %v1391
  %1867 = vmatprep.subr.bf16.mxu0 0
  %1868 = vmatpush1.bf16.msra.mxu0 %v1392
  %1869 = vmatprep.subr.bf16.mxu0 0
  %1870 = vmatpush1.bf16.msra.mxu0 %v1393
  %1871 = vmatprep.subr.bf16.mxu0 0
  %1872 = vmatpush1.bf16.msra.mxu0 %v1394
  %1873 = vmatprep.subr.bf16.mxu0 0
  %1874 = vmatpush1.bf16.msra.mxu0 %v1395
  %1875 = vmatprep.subr.bf16.mxu0 0
  %1876 = vmatpush1.bf16.msra.mxu0 %v1396
  %1877 = vmatprep.subr.bf16.mxu0 0
  %1878 = vmatpush1.bf16.msra.mxu0 %v1397
  %1879 = vmatprep.subr.bf16.mxu0 0
  %1880 = vmatpush1.bf16.msra.mxu0 %v1398
  %1881 = vmatprep.subr.bf16.mxu0 0
  %1882 = vmatpush1.bf16.msra.mxu0 %v1399
  %1883 = vmatprep.subr.bf16.mxu0 0
  %1884 = vmatpush1.bf16.msra.mxu0 %v1400
  %1885 = vmatprep.subr.bf16.mxu0 0
  %1886 = vmatpush1.bf16.msra.mxu0 %v1401
  %1887 = vmatprep.subr.bf16.mxu0 0
  %1888 = vmatpush1.bf16.msra.mxu0 %v1402
  %1889 = vmatprep.subr.bf16.mxu0 0
  %1890 = vmatpush1.bf16.msra.mxu0 %v1403
  %1891 = vmatprep.subr.bf16.mxu0 0
  %1892 = vmatpush1.bf16.msra.mxu0 %v1404
  %1893 = vmatprep.mubr.bf16.mxu0 %v498
  %1894 = vmatmul.mubr.bf16.gmra.mrb[0].mxu0 %v497
  %v1895 = vpop.f32.mrb[0].mxu0
  %v1896 = vadd.f32 %v1856, %v1895
  %v1897 = vpop.f32.mrb[0].mxu0
  %v1898 = vpop.f32.mrb[0].mxu0
  %v1899 = vpop.f32.mrb[0].mxu0
  %1900 = vdwg.mxu0
  %1901 = vmatprep.subr.bf16.mxu0 0
  %1902 = vmatpush1.bf16.msra.mxu0 %v1405
  %1903 = vmatprep.subr.bf16.mxu0 0
  %1904 = vmatpush1.bf16.msra.mxu0 %v1406
  %1905 = vmatprep.subr.bf16.mxu0 0
  %1906 = vmatpush1.bf16.msra.mxu0 %v1407
  %1907 = vmatprep.subr.bf16.mxu0 0
  %1908 = vmatpush1.bf16.msra.mxu0 %v1408
  %1909 = vmatprep.subr.bf16.mxu0 0
  %1910 = vmatpush1.bf16.msra.mxu0 %v1409
  %1911 = vmatprep.subr.bf16.mxu0 0
  %1912 = vmatpush1.bf16.msra.mxu0 %v1410
  %1913 = vmatprep.subr.bf16.mxu0 0
  %1914 = vmatpush1.bf16.msra.mxu0 %v1411
  %1915 = vmatprep.subr.bf16.mxu0 0
  %1916 = vmatpush1.bf16.msra.mxu0 %v1412
  %1917 = vmatprep.subr.bf16.mxu0 0
  %1918 = vmatpush1.bf16.msra.mxu0 %v1413
  %1919 = vmatprep.subr.bf16.mxu0 0
  %1920 = vmatpush1.bf16.msra.mxu0 %v1414
  %1921 = vmatprep.subr.bf16.mxu0 0
  %1922 = vmatpush1.bf16.msra.mxu0 %v1415
  %1923 = vmatprep.subr.bf16.mxu0 0
  %1924 = vmatpush1.bf16.msra.mxu0 %v1416
  %1925 = vmatprep.subr.bf16.mxu0 0
  %1926 = vmatpush1.bf16.msra.mxu0 %v1417
  %1927 = vmatprep.subr.bf16.mxu0 0
  %1928 = vmatpush1.bf16.msra.mxu0 %v1418
  %1929 = vmatprep.subr.bf16.mxu0 0
  %1930 = vmatpush1.bf16.msra.mxu0 %v1419
  %1931 = vmatprep.subr.bf16.mxu0 0
  %1932 = vmatpush1.bf16.msra.mxu0 %v1420
  %1933 = vmatprep.mubr.bf16.mxu0 %v500
  %1934 = vmatmul.mubr.bf16.gmra.mrb[0].mxu0 %v499
  %v1935 = vpop.f32.mrb[0].mxu0
  %v1936 = vadd.f32 %v1896, %v1935
  %v1937 = vpop.f32.mrb[0].mxu0
  %v1938 = vpop.f32.mrb[0].mxu0
  %v1939 = vpop.f32.mrb[0].mxu0
  %1940 = vdwg.mxu0
  %1941 = vmatprep.subr.bf16.mxu0 0
  %1942 = vmatpush1.bf16.msra.mxu0 %v1421
  %1943 = vmatprep.subr.bf16.mxu0 0
  %1944 = vmatpush1.bf16.msra.mxu0 %v1422
  %1945 = vmatprep.subr.bf16.mxu0 0
  %1946 = vmatpush1.bf16.msra.mxu0 %v1423
  %1947 = vmatprep.subr.bf16.mxu0 0
  %1948 = vmatpush1.bf16.msra.mxu0 %v1424
  %1949 = vmatprep.subr.bf16.mxu0 0
  %1950 = vmatpush1.bf16.msra.mxu0 %v1425
  %1951 = vmatprep.subr.bf16.mxu0 0
  %1952 = vmatpush1.bf16.msra.mxu0 %v1426
  %1953 = vmatprep.subr.bf16.mxu0 0
  %1954 = vmatpush1.bf16.msra.mxu0 %v1427
  %1955 = vmatprep.subr.bf16.mxu0 0
  %1956 = vmatpush1.bf16.msra.mxu0 %v1428
  %1957 = vmatprep.subr.bf16.mxu0 0
  %1958 = vmatpush1.bf16.msra.mxu0 %v1429
  %1959 = vmatprep.subr.bf16.mxu0 0
  %1960 = vmatpush1.bf16.msra.mxu0 %v1430
  %1961 = vmatprep.subr.bf16.mxu0 0
  %1962 = vmatpush1.bf16.msra.mxu0 %v1431
  %1963 = vmatprep.subr.bf16.mxu0 0
  %1964 = vmatpush1.bf16.msra.mxu0 %v1432
  %1965 = vmatprep.subr.bf16.mxu0 0
  %1966 = vmatpush1.bf16.msra.mxu0 %v1433
  %1967 = vmatprep.subr.bf16.mxu0 0
  %1968 = vmatpush1.bf16.msra.mxu0 %v1434
  %1969 = vmatprep.subr.bf16.mxu0 0
  %1970 = vmatpush1.bf16.msra.mxu0 %v1435
  %1971 = vmatprep.subr.bf16.mxu0 0
  %1972 = vmatpush1.bf16.msra.mxu0 %v1436
  %1973 = vmatprep.mubr.bf16.mxu0 %v502
  %1974 = vmatmul.mubr.bf16.gmra.mrb[0].mxu0 %v501
  %v1975 = vpop.f32.mrb[0].mxu0
  %v1976 = vadd.f32 %v1936, %v1975
  %v1977 = vpop.f32.mrb[0].mxu0
  %v1978 = vpop.f32.mrb[0].mxu0
  %v1979 = vpop.f32.mrb[0].mxu0
  %1980 = vdwg.mxu0
  %1981 = vmatprep.subr.bf16.mxu0 0
  %1982 = vmatpush1.bf16.msra.mxu0 %v1437
  %1983 = vmatprep.subr.bf16.mxu0 0
  %1984 = vmatpush1.bf16.msra.mxu0 %v1438
  %1985 = vmatprep.subr.bf16.mxu0 0
  %1986 = vmatpush1.bf16.msra.mxu0 %v1439
  %1987 = vmatprep.subr.bf16.mxu0 0
  %1988 = vmatpush1.bf16.msra.mxu0 %v1440
  %1989 = vmatprep.subr.bf16.mxu0 0
  %1990 = vmatpush1.bf16.msra.mxu0 %v1441
  %1991 = vmatprep.subr.bf16.mxu0 0
  %1992 = vmatpush1.bf16.msra.mxu0 %v1442
  %1993 = vmatprep.subr.bf16.mxu0 0
  %1994 = vmatpush1.bf16.msra.mxu0 %v1443
  %1995 = vmatprep.subr.bf16.mxu0 0
  %1996 = vmatpush1.bf16.msra.mxu0 %v1444
  %1997 = vmatprep.subr.bf16.mxu0 0
  %1998 = vmatpush1.bf16.msra.mxu0 %v1445
  %1999 = vmatprep.subr.bf16.mxu0 0
  %2000 = vmatpush1.bf16.msra.mxu0 %v1446
  %2001 = vmatprep.subr.bf16.mxu0 0
  %2002 = vmatpush1.bf16.msra.mxu0 %v1447
  %2003 = vmatprep.subr.bf16.mxu0 0
  %2004 = vmatpush1.bf16.msra.mxu0 %v1448
  %2005 = vmatprep.subr.bf16.mxu0 0
  %2006 = vmatpush1.bf16.msra.mxu0 %v1449
  %2007 = vmatprep.subr.bf16.mxu0 0
  %2008 = vmatpush1.bf16.msra.mxu0 %v1450
  %2009 = vmatprep.subr.bf16.mxu0 0
  %2010 = vmatpush1.bf16.msra.mxu0 %v1451
  %2011 = vmatprep.subr.bf16.mxu0 0
  %2012 = vmatpush1.bf16.msra.mxu0 %v1452
  %2013 = vmatprep.mubr.bf16.mxu0 %v504
  %2014 = vmatmul.mubr.bf16.gmra.mrb[0].mxu0 %v503
  %v2015 = vpop.f32.mrb[0].mxu0
  %v2016 = vadd.f32 %v1976, %v2015
  %v2017 = vpop.f32.mrb[0].mxu0
  %v2018 = vpop.f32.mrb[0].mxu0
  %v2019 = vpop.f32.mrb[0].mxu0
  %2020 = vdwg.mxu0
  %2021 = vmatprep.subr.bf16.mxu0 0
  %2022 = vmatpush1.bf16.msra.mxu0 %v1453
  %2023 = vmatprep.subr.bf16.mxu0 0
  %2024 = vmatpush1.bf16.msra.mxu0 %v1454
  %2025 = vmatprep.subr.bf16.mxu0 0
  %2026 = vmatpush1.bf16.msra.mxu0 %v1455
  %2027 = vmatprep.subr.bf16.mxu0 0
  %2028 = vmatpush1.bf16.msra.mxu0 %v1456
  %2029 = vmatprep.subr.bf16.mxu0 0
  %2030 = vmatpush1.bf16.msra.mxu0 %v1457
  %2031 = vmatprep.subr.bf16.mxu0 0
  %2032 = vmatpush1.bf16.msra.mxu0 %v1458
  %2033 = vmatprep.subr.bf16.mxu0 0
  %2034 = vmatpush1.bf16.msra.mxu0 %v1459
  %2035 = vmatprep.subr.bf16.mxu0 0
  %2036 = vmatpush1.bf16.msra.mxu0 %v1460
  %2037 = vmatprep.subr.bf16.mxu0 0
  %2038 = vmatpush1.bf16.msra.mxu0 %v1461
  %2039 = vmatprep.subr.bf16.mxu0 0
  %2040 = vmatpush1.bf16.msra.mxu0 %v1462
  %2041 = vmatprep.subr.bf16.mxu0 0
  %2042 = vmatpush1.bf16.msra.mxu0 %v1463
  %2043 = vmatprep.subr.bf16.mxu0 0
  %2044 = vmatpush1.bf16.msra.mxu0 %v1464
  %2045 = vmatprep.subr.bf16.mxu0 0
  %2046 = vmatpush1.bf16.msra.mxu0 %v1465
  %2047 = vmatprep.subr.bf16.mxu0 0
  %2048 = vmatpush1.bf16.msra.mxu0 %v1466
  %2049 = vmatprep.subr.bf16.mxu0 0
  %2050 = vmatpush1.bf16.msra.mxu0 %v1467
  %2051 = vmatprep.subr.bf16.mxu0 0
  %2052 = vmatpush1.bf16.msra.mxu0 %v1468
  %2053 = vmatprep.mubr.bf16.mxu0 %v506
  %2054 = vmatmul.mubr.bf16.gmra.mrb[0].mxu0 %v505
  %v2055 = vpop.f32.mrb[0].mxu0
  %v2056 = vadd.f32 %v2016, %v2055
  %v2057 = vpop.f32.mrb[0].mxu0
  %v2058 = vpop.f32.mrb[0].mxu0
  %v2059 = vpop.f32.mrb[0].mxu0
  %2060 = vdwg.mxu0
  %2061 = vmatprep.subr.bf16.mxu0 0
  %2062 = vmatpush1.bf16.msra.mxu0 %v1469
  %2063 = vmatprep.subr.bf16.mxu0 0
  %2064 = vmatpush1.bf16.msra.mxu0 %v1470
  %2065 = vmatprep.subr.bf16.mxu0 0
  %2066 = vmatpush1.bf16.msra.mxu0 %v1471
  %2067 = vmatprep.subr.bf16.mxu0 0
  %2068 = vmatpush1.bf16.msra.mxu0 %v1472
  %2069 = vmatprep.subr.bf16.mxu0 0
  %2070 = vmatpush1.bf16.msra.mxu0 %v1473
  %2071 = vmatprep.subr.bf16.mxu0 0
  %2072 = vmatpush1.bf16.msra.mxu0 %v1474
  %2073 = vmatprep.subr.bf16.mxu0 0
  %2074 = vmatpush1.bf16.msra.mxu0 %v1475
  %2075 = vmatprep.subr.bf16.mxu0 0
  %2076 = vmatpush1.bf16.msra.mxu0 %v1476
  %2077 = vmatprep.subr.bf16.mxu0 0
  %2078 = vmatpush1.bf16.msra.mxu0 %v1477
  %2079 = vmatprep.subr.bf16.mxu0 0
  %2080 = vmatpush1.bf16.msra.mxu0 %v1478
  %2081 = vmatprep.subr.bf16.mxu0 0
  %2082 = vmatpush1.bf16.msra.mxu0 %v1479
  %2083 = vmatprep.subr.bf16.mxu0 0
  %2084 = vmatpush1.bf16.msra.mxu0 %v1480
  %2085 = vmatprep.subr.bf16.mxu0 0
  %2086 = vmatpush1.bf16.msra.mxu0 %v1481
  %2087 = vmatprep.subr.bf16.mxu0 0
  %2088 = vmatpush1.bf16.msra.mxu0 %v1482
  %2089 = vmatprep.subr.bf16.mxu0 0
  %2090 = vmatpush1.bf16.msra.mxu0 %v1483
  %2091 = vmatprep.subr.bf16.mxu0 0
  %2092 = vmatpush1.bf16.msra.mxu0 %v1484
  %2093 = vmatprep.mubr.bf16.mxu0 %v508
  %2094 = vmatmul.mubr.bf16.gmra.mrb[0].mxu0 %v507
  %v2095 = vpop.f32.mrb[0].mxu0
  %v2096 = vadd.f32 %v2056, %v2095
  %v2097 = vpop.f32.mrb[0].mxu0
  %v2098 = vpop.f32.mrb[0].mxu0
  %v2099 = vpop.f32.mrb[0].mxu0
  %2100 = vdwg.mxu0
  %2101 = vmatprep.subr.bf16.mxu0 0
  %2102 = vmatpush1.bf16.msra.mxu0 %v1485
  %2103 = vmatprep.subr.bf16.mxu0 0
  %2104 = vmatpush1.bf16.msra.mxu0 %v1486
  %2105 = vmatprep.subr.bf16.mxu0 0
  %2106 = vmatpush1.bf16.msra.mxu0 %v1487
  %2107 = vmatprep.subr.bf16.mxu0 0
  %2108 = vmatpush1.bf16.msra.mxu0 %v1488
  %2109 = vmatprep.subr.bf16.mxu0 0
  %2110 = vmatpush1.bf16.msra.mxu0 %v1489
  %2111 = vmatprep.subr.bf16.mxu0 0
  %2112 = vmatpush1.bf16.msra.mxu0 %v1490
  %2113 = vmatprep.subr.bf16.mxu0 0
  %2114 = vmatpush1.bf16.msra.mxu0 %v1491
  %2115 = vmatprep.subr.bf16.mxu0 0
  %2116 = vmatpush1.bf16.msra.mxu0 %v1492
  %2117 = vmatprep.subr.bf16.mxu0 0
  %2118 = vmatpush1.bf16.msra.mxu0 %v1493
  %2119 = vmatprep.subr.bf16.mxu0 0
  %2120 = vmatpush1.bf16.msra.mxu0 %v1494
  %2121 = vmatprep.subr.bf16.mxu0 0
  %2122 = vmatpush1.bf16.msra.mxu0 %v1495
  %2123 = vmatprep.subr.bf16.mxu0 0
  %2124 = vmatpush1.bf16.msra.mxu0 %v1496
  %2125 = vmatprep.subr.bf16.mxu0 0
  %2126 = vmatpush1.bf16.msra.mxu0 %v1497
  %2127 = vmatprep.subr.bf16.mxu0 0
  %2128 = vmatpush1.bf16.msra.mxu0 %v1498
  %2129 = vmatprep.subr.bf16.mxu0 0
  %2130 = vmatpush1.bf16.msra.mxu0 %v1499
  %2131 = vmatprep.subr.bf16.mxu0 0
  %2132 = vmatpush1.bf16.msra.mxu0 %v1500
  %2133 = vmatprep.mubr.bf16.mxu0 %v510
  %2134 = vmatmul.mubr.bf16.gmra.mrb[0].mxu0 %v509
  %v2135 = vpop.f32.mrb[0].mxu0
  %v2136 = vadd.f32 %v2096, %v2135
  %v2137 = vpop.f32.mrb[0].mxu0
  %v2138 = vpop.f32.mrb[0].mxu0
  %v2139 = vpop.f32.mrb[0].mxu0
  %2140 = vdwg.mxu0
  %2141 = vmatprep.subr.bf16.mxu0 0
  %2142 = vmatpush1.bf16.msra.mxu0 %v1501
  %2143 = vmatprep.subr.bf16.mxu0 0
  %2144 = vmatpush1.bf16.msra.mxu0 %v1502
  %2145 = vmatprep.subr.bf16.mxu0 0
  %2146 = vmatpush1.bf16.msra.mxu0 %v1503
  %2147 = vmatprep.subr.bf16.mxu0 0
  %2148 = vmatpush1.bf16.msra.mxu0 %v1504
  %2149 = vmatprep.subr.bf16.mxu0 0
  %2150 = vmatpush1.bf16.msra.mxu0 %v1505
  %2151 = vmatprep.subr.bf16.mxu0 0
  %2152 = vmatpush1.bf16.msra.mxu0 %v1506
  %2153 = vmatprep.subr.bf16.mxu0 0
  %2154 = vmatpush1.bf16.msra.mxu0 %v1507
  %2155 = vmatprep.subr.bf16.mxu0 0
  %2156 = vmatpush1.bf16.msra.mxu0 %v1508
  %2157 = vmatprep.subr.bf16.mxu0 0
  %2158 = vmatpush1.bf16.msra.mxu0 %v1509
  %2159 = vmatprep.subr.bf16.mxu0 0
  %2160 = vmatpush1.bf16.msra.mxu0 %v1510
  %2161 = vmatprep.subr.bf16.mxu0 0
  %2162 = vmatpush1.bf16.msra.mxu0 %v1511
  %2163 = vmatprep.subr.bf16.mxu0 0
  %2164 = vmatpush1.bf16.msra.mxu0 %v1512
  %2165 = vmatprep.subr.bf16.mxu0 0
  %2166 = vmatpush1.bf16.msra.mxu0 %v1513
  %2167 = vmatprep.subr.bf16.mxu0 0
  %2168 = vmatpush1.bf16.msra.mxu0 %v1514
  %2169 = vmatprep.subr.bf16.mxu0 0
  %2170 = vmatpush1.bf16.msra.mxu0 %v1515
  %2171 = vmatprep.subr.bf16.mxu0 0
  %2172 = vmatpush1.bf16.msra.mxu0 %v1516
  %2173 = vmatprep.mubr.bf16.mxu0 %v512
  %2174 = vmatmul.mubr.bf16.gmra.mrb[0].mxu0 %v511
  %v2175 = vpop.f32.mrb[0].mxu0
  %v2176 = vadd.f32 %v2136, %v2175
  %v2177 = vpop.f32.mrb[0].mxu0
  %v2178 = vpop.f32.mrb[0].mxu0
  %v2179 = vpop.f32.mrb[0].mxu0
  %2180 = vdwg.mxu0
  %2181 = vmatprep.subr.bf16.mxu0 0
  %2182 = vmatpush1.bf16.msra.mxu0 %v1517
  %2183 = vmatprep.subr.bf16.mxu0 0
  %2184 = vmatpush1.bf16.msra.mxu0 %v1518
  %2185 = vmatprep.subr.bf16.mxu0 0
  %2186 = vmatpush1.bf16.msra.mxu0 %v1519
  %2187 = vmatprep.subr.bf16.mxu0 0
  %2188 = vmatpush1.bf16.msra.mxu0 %v1520
  %2189 = vmatprep.subr.bf16.mxu0 0
  %2190 = vmatpush1.bf16.msra.mxu0 %v1521
  %2191 = vmatprep.subr.bf16.mxu0 0
  %2192 = vmatpush1.bf16.msra.mxu0 %v1522
  %2193 = vmatprep.subr.bf16.mxu0 0
  %2194 = vmatpush1.bf16.msra.mxu0 %v1523
  %2195 = vmatprep.subr.bf16.mxu0 0
  %2196 = vmatpush1.bf16.msra.mxu0 %v1524
  %2197 = vmatprep.subr.bf16.mxu0 0
  %2198 = vmatpush1.bf16.msra.mxu0 %v1525
  %2199 = vmatprep.subr.bf16.mxu0 0
  %2200 = vmatpush1.bf16.msra.mxu0 %v1526
  %2201 = vmatprep.subr.bf16.mxu0 0
  %2202 = vmatpush1.bf16.msra.mxu0 %v1527
  %2203 = vmatprep.subr.bf16.mxu0 0
  %2204 = vmatpush1.bf16.msra.mxu0 %v1528
  %2205 = vmatprep.subr.bf16.mxu0 0
  %2206 = vmatpush1.bf16.msra.mxu0 %v1529
  %2207 = vmatprep.subr.bf16.mxu0 0
  %2208 = vmatpush1.bf16.msra.mxu0 %v1530
  %2209 = vmatprep.subr.bf16.mxu0 0
  %2210 = vmatpush1.bf16.msra.mxu0 %v1531
  %2211 = vmatprep.subr.bf16.mxu0 0
  %2212 = vmatpush1.bf16.msra.mxu0 %v1532
  %2213 = vmatprep.mubr.bf16.mxu0 %v514
  %2214 = vmatmul.mubr.bf16.gmra.mrb[0].mxu0 %v513
  %v2215 = vpop.f32.mrb[0].mxu0
  %v2216 = vadd.f32 %v2176, %v2215
  %v2217 = vpop.f32.mrb[0].mxu0
  %v2218 = vpop.f32.mrb[0].mxu0
  %v2219 = vpop.f32.mrb[0].mxu0
  %2220 = vdwg.mxu0
  %2221 = vmatprep.subr.bf16.mxu0 0
  %2222 = vmatpush1.bf16.msra.mxu0 %v1533
  %2223 = vmatprep.subr.bf16.mxu0 0
  %2224 = vmatpush1.bf16.msra.mxu0 %v1534
  %2225 = vmatprep.subr.bf16.mxu0 0
  %2226 = vmatpush1.bf16.msra.mxu0 %v1535
  %2227 = vmatprep.subr.bf16.mxu0 0
  %2228 = vmatpush1.bf16.msra.mxu0 %v1536
  %2229 = vmatprep.subr.bf16.mxu0 0
  %2230 = vmatpush1.bf16.msra.mxu0 %v1537
  %2231 = vmatprep.subr.bf16.mxu0 0
  %2232 = vmatpush1.bf16.msra.mxu0 %v1538
  %2233 = vmatprep.subr.bf16.mxu0 0
  %2234 = vmatpush1.bf16.msra.mxu0 %v1539
  %2235 = vmatprep.subr.bf16.mxu0 0
  %2236 = vmatpush1.bf16.msra.mxu0 %v1540
  %2237 = vmatprep.subr.bf16.mxu0 0
  %2238 = vmatpush1.bf16.msra.mxu0 0
  %2239 = vmatprep.subr.bf16.mxu0 0
  %2240 = vmatpush1.bf16.msra.mxu0 0
  %2241 = vmatprep.subr.bf16.mxu0 0
  %2242 = vmatpush1.bf16.msra.mxu0 0
  %2243 = vmatprep.subr.bf16.mxu0 0
  %2244 = vmatpush1.bf16.msra.mxu0 0
  %2245 = vmatprep.subr.bf16.mxu0 0
  %2246 = vmatpush1.bf16.msra.mxu0 0
  %2247 = vmatprep.subr.bf16.mxu0 0
  %2248 = vmatpush1.bf16.msra.mxu0 0
  %2249 = vmatprep.subr.bf16.mxu0 0
  %2250 = vmatpush1.bf16.msra.mxu0 0
  %2251 = vmatprep.subr.bf16.mxu0 0
  %2252 = vmatpush1.bf16.msra.mxu0 0
  %2253 = vmatprep.mubr.bf16.mxu0 0
  %2254 = vmatmul.mubr.bf16.gmra.mrb[0].mxu0 %v515
  %v2255 = vpop.f32.mrb[0].mxu0
  %v2256 = vadd.f32 %v2216, %v2255
  %v2257 = vpop.f32.mrb[0].mxu0
  %v2258 = vpop.f32.mrb[0].mxu0
  %v2259 = vpop.f32.mrb[0].mxu0
  %2260 = vdwg.mxu0
  %v2261 = vld [vmem:[%s3] sm:$0xff]
  %v2262 = vsub.f32 0.0, %v2256
  %v2263 = vmul.f32 %v2262, 1.442695
  %v2264 = vpow.pop %v2263
  %v2265 = vadd.f32 %v2264, 1.0
  %v2266 = vrcp.pop %v2265
  %v2267 = vmul.f32 1.0, %v2266
  %vm2268 = vcmp.lt.f32.partialorder %v2261, %v2267
  %v2269 = vsel %vm2268, 1, 0
  %v2270 = vcvt.s32.f32 %v2269
  %v2271 = vpack.c.bf16 %v2270, %v2270
  %v2272 = vld [vmem:[%s4] sm:$0xf]
  %v2273 = vld [vmem:[%s4 + $0x4] sm:$0xf]
  %v2274 = vld [vmem:[%s4 + $0x8] sm:$0xf]
  %v2275 = vld [vmem:[%s4 + $0xc] sm:$0xf]
  %v2276 = vld [vmem:[%s4 + $0x10] sm:$0xf]
  %v2277 = vld [vmem:[%s4 + $0x14] sm:$0xf]
  %v2278 = vld [vmem:[%s4 + $0x18] sm:$0xf]
  %v2279 = vld [vmem:[%s4 + $0x1c] sm:$0xf]
  %v2280 = vld [vmem:[%s4 + $0x20] sm:$0xf]
  %v2281 = vld [vmem:[%s4 + $0x24] sm:$0xf]
  %v2282 = vld [vmem:[%s4 + $0x28] sm:$0xf]
  %v2283 = vld [vmem:[%s4 + $0x2c] sm:$0xf]
  %v2284 = vld [vmem:[%s4 + $0x30] sm:$0xf]
  %v2285 = vld [vmem:[%s4 + $0x34] sm:$0xf]
  %v2286 = vld [vmem:[%s4 + $0x38] sm:$0xf]
  %v2287 = vld [vmem:[%s4 + $0x3c] sm:$0xf]
  %v2288 = vld [vmem:[%s5] sm:$0x1]
  %v2290 = vlaneseq
  %v2291 = vshrl.u32 %v2290, 7
  %v2292 = vsub.s32 0, %v2291
  %v2293 = vrot.slane %v2288, %v2292
  %v2311 = vunpack.c.l.b16 %v2272
  %v2312 = vunpack.c.l.b16 %v2273
  %v2313 = vunpack.c.l.b16 %v2274
  %v2314 = vunpack.c.l.b16 %v2275
  %v2315 = vunpack.c.l.b16 %v2276
  %v2316 = vunpack.c.l.b16 %v2277
  %v2317 = vunpack.c.l.b16 %v2278
  %v2318 = vunpack.c.l.b16 %v2279
  %v2319 = vunpack.c.l.b16 %v2280
  %v2320 = vunpack.c.l.b16 %v2281
  %v2321 = vunpack.c.l.b16 %v2282
  %v2322 = vunpack.c.l.b16 %v2283
  %v2323 = vunpack.c.l.b16 %v2284
  %v2324 = vunpack.c.l.b16 %v2285
  %v2325 = vunpack.c.l.b16 %v2286
  %v2326 = vunpack.c.l.b16 %v2287
  %v2327 = vpack.c.b16 %v2312, %v2311
  %v2328 = vpack.c.b16 %v2314, %v2313
  %v2329 = vpack.c.b16 %v2316, %v2315
  %v2330 = vpack.c.b16 %v2318, %v2317
  %v2331 = vpack.c.b16 %v2320, %v2319
  %v2332 = vpack.c.b16 %v2322, %v2321
  %v2333 = vpack.c.b16 %v2324, %v2323
  %v2334 = vpack.c.b16 %v2326, %v2325
  %2343 = vmatprep.subr.bf16.mxu0 0
  %2344 = vmatpush1.bf16.msra.mxu0 %v2327
  %2345 = vmatprep.subr.bf16.mxu0 0
  %2346 = vmatpush1.bf16.msra.mxu0 %v2328
  %2347 = vmatprep.subr.bf16.mxu0 0
  %2348 = vmatpush1.bf16.msra.mxu0 %v2329
  %2349 = vmatprep.subr.bf16.mxu0 0
  %2350 = vmatpush1.bf16.msra.mxu0 %v2330
  %2351 = vmatprep.subr.bf16.mxu0 0
  %2352 = vmatpush1.bf16.msra.mxu0 %v2331
  %2353 = vmatprep.subr.bf16.mxu0 0
  %2354 = vmatpush1.bf16.msra.mxu0 %v2332
  %2355 = vmatprep.subr.bf16.mxu0 0
  %2356 = vmatpush1.bf16.msra.mxu0 %v2333
  %2357 = vmatprep.subr.bf16.mxu0 0
  %2358 = vmatpush1.bf16.msra.mxu0 %v2334
  %2359 = vmatprep.subr.bf16.mxu0 0
  %2360 = vmatpush1.bf16.msra.mxu0 0
  %2361 = vmatprep.subr.bf16.mxu0 0
  %2362 = vmatpush1.bf16.msra.mxu0 0
  %2363 = vmatprep.subr.bf16.mxu0 0
  %2364 = vmatpush1.bf16.msra.mxu0 0
  %2365 = vmatprep.subr.bf16.mxu0 0
  %2366 = vmatpush1.bf16.msra.mxu0 0
  %2367 = vmatprep.subr.bf16.mxu0 0
  %2368 = vmatpush1.bf16.msra.mxu0 0
  %2369 = vmatprep.subr.bf16.mxu0 0
  %2370 = vmatpush1.bf16.msra.mxu0 0
  %2371 = vmatprep.subr.bf16.mxu0 0
  %2372 = vmatpush1.bf16.msra.mxu0 0
  %2373 = vmatprep.subr.bf16.mxu0 0
  %2374 = vmatpush1.bf16.msra.mxu0 0
  %2375 = vmatprep.mubr.bf16.mxu0 0
  %2376 = vmatmul.mubr.bf16.gmra.mrb[0].mxu0 %v2271
  %v2377 = vpop.f32.mrb[0].mxu0
  %v2378 = vadd.f32 %v2293, %v2377
  %v2379 = vpop.f32.mrb[0].mxu0
  %v2380 = vpop.f32.mrb[0].mxu0
  %v2381 = vpop.f32.mrb[0].mxu0
  %2382 = vdwg.mxu0
  %v2383 = vld [vmem:[%s6] sm:$0xff]
  %v2384 = vsub.f32 0.0, %v2378
  %v2385 = vmul.f32 %v2384, 1.442695
  %v2386 = vpow.pop %v2385
  %v2387 = vadd.f32 %v2386, 1.0
  %v2388 = vrcp.pop %v2387
  %v2389 = vmul.f32 1.0, %v2388
  %vm2390 = vcmp.lt.f32.partialorder %v2383, %v2389
  %v2391 = vsel %vm2390, 1, 0
  %v2392 = vcvt.s32.f32 %v2391
  %v2393 = vpack.c.bf16 %v2392, %v2392
  %v2394 = vld [vmem:[%s7] sm:$0xf]
  %v2395 = vld [vmem:[%s7 + $0x4] sm:$0xf]
  %v2396 = vld [vmem:[%s7 + $0x8] sm:$0xf]
  %v2397 = vld [vmem:[%s7 + $0xc] sm:$0xf]
  %v2398 = vld [vmem:[%s7 + $0x10] sm:$0xf]
  %v2399 = vld [vmem:[%s7 + $0x14] sm:$0xf]
  %v2400 = vld [vmem:[%s7 + $0x18] sm:$0xf]
  %v2401 = vld [vmem:[%s7 + $0x1c] sm:$0xf]
  %v2402 = vld [vmem:[%s7 + $0x20] sm:$0xf]
  %v2403 = vld [vmem:[%s7 + $0x24] sm:$0xf]
  %v2404 = vld [vmem:[%s7 + $0x28] sm:$0xf]
  %v2405 = vld [vmem:[%s7 + $0x2c] sm:$0xf]
  %v2406 = vld [vmem:[%s7 + $0x30] sm:$0xf]
  %v2407 = vld [vmem:[%s7 + $0x34] sm:$0xf]
  %v2408 = vld [vmem:[%s7 + $0x38] sm:$0xf]
  %v2409 = vld [vmem:[%s7 + $0x3c] sm:$0xf]
  %v2410 = vld [vmem:[%s8] sm:$0x1]
  %v2412 = vlaneseq
  %v2413 = vshrl.u32 %v2412, 7
  %v2414 = vsub.s32 0, %v2413
  %v2415 = vrot.slane %v2410, %v2414
  %v2433 = vunpack.c.l.b16 %v2394
  %v2434 = vunpack.c.l.b16 %v2395
  %v2435 = vunpack.c.l.b16 %v2396
  %v2436 = vunpack.c.l.b16 %v2397
  %v2437 = vunpack.c.l.b16 %v2398
  %v2438 = vunpack.c.l.b16 %v2399
  %v2439 = vunpack.c.l.b16 %v2400
  %v2440 = vunpack.c.l.b16 %v2401
  %v2441 = vunpack.c.l.b16 %v2402
  %v2442 = vunpack.c.l.b16 %v2403
  %v2443 = vunpack.c.l.b16 %v2404
  %v2444 = vunpack.c.l.b16 %v2405
  %v2445 = vunpack.c.l.b16 %v2406
  %v2446 = vunpack.c.l.b16 %v2407
  %v2447 = vunpack.c.l.b16 %v2408
  %v2448 = vunpack.c.l.b16 %v2409
  %v2449 = vpack.c.b16 %v2434, %v2433
  %v2450 = vpack.c.b16 %v2436, %v2435
  %v2451 = vpack.c.b16 %v2438, %v2437
  %v2452 = vpack.c.b16 %v2440, %v2439
  %v2453 = vpack.c.b16 %v2442, %v2441
  %v2454 = vpack.c.b16 %v2444, %v2443
  %v2455 = vpack.c.b16 %v2446, %v2445
  %v2456 = vpack.c.b16 %v2448, %v2447
  %2465 = vmatprep.subr.bf16.mxu0 0
  %2466 = vmatpush1.bf16.msra.mxu0 %v2449
  %2467 = vmatprep.subr.bf16.mxu0 0
  %2468 = vmatpush1.bf16.msra.mxu0 %v2450
  %2469 = vmatprep.subr.bf16.mxu0 0
  %2470 = vmatpush1.bf16.msra.mxu0 %v2451
  %2471 = vmatprep.subr.bf16.mxu0 0
  %2472 = vmatpush1.bf16.msra.mxu0 %v2452
  %2473 = vmatprep.subr.bf16.mxu0 0
  %2474 = vmatpush1.bf16.msra.mxu0 %v2453
  %2475 = vmatprep.subr.bf16.mxu0 0
  %2476 = vmatpush1.bf16.msra.mxu0 %v2454
  %2477 = vmatprep.subr.bf16.mxu0 0
  %2478 = vmatpush1.bf16.msra.mxu0 %v2455
  %2479 = vmatprep.subr.bf16.mxu0 0
  %2480 = vmatpush1.bf16.msra.mxu0 %v2456
  %2481 = vmatprep.subr.bf16.mxu0 0
  %2482 = vmatpush1.bf16.msra.mxu0 0
  %2483 = vmatprep.subr.bf16.mxu0 0
  %2484 = vmatpush1.bf16.msra.mxu0 0
  %2485 = vmatprep.subr.bf16.mxu0 0
  %2486 = vmatpush1.bf16.msra.mxu0 0
  %2487 = vmatprep.subr.bf16.mxu0 0
  %2488 = vmatpush1.bf16.msra.mxu0 0
  %2489 = vmatprep.subr.bf16.mxu0 0
  %2490 = vmatpush1.bf16.msra.mxu0 0
  %2491 = vmatprep.subr.bf16.mxu0 0
  %2492 = vmatpush1.bf16.msra.mxu0 0
  %2493 = vmatprep.subr.bf16.mxu0 0
  %2494 = vmatpush1.bf16.msra.mxu0 0
  %2495 = vmatprep.subr.bf16.mxu0 0
  %2496 = vmatpush1.bf16.msra.mxu0 0
  %2497 = vmatprep.mubr.bf16.mxu0 0
  %2498 = vmatmul.mubr.bf16.gmra.mrb[0].mxu0 %v2393
  %v2499 = vpop.f32.mrb[0].mxu0
  %v2500 = vadd.f32 %v2415, %v2499
  %v2501 = vpop.f32.mrb[0].mxu0
  %v2502 = vpop.f32.mrb[0].mxu0
  %v2503 = vpop.f32.mrb[0].mxu0
  %2504 = vdwg.mxu0
  %2505 = vst [vmem:[%s9] sm:$0xff] %v2500
  // Predicated region
  $region38: #{lenet5_forward.7} parent=0 // pred_check
    _
  $region39: #{lenet5_forward.7} parent=0 // pred_check_branch
    %2507 = sbr.rel (0) target = $region41
  $region40: #{lenet5_forward.7} parent=0 // pred_region
    _
  $region41: #{lenet5_forward.7} parent=0 // pred_fallthru
    _
  // Predicated region
  $region42: #{lenet5_forward.7} parent=0 // pred_check
    _
  $region43: #{lenet5_forward.7} parent=0 // pred_check_branch
    %2509 = sbr.rel (0) target = $region45
  $region44: #{lenet5_forward.7} parent=0 // pred_region
    _
  $region45: #{lenet5_forward.7} parent=0 // pred_fallthru
    _

</llo_original>
